<compile_context>
chip_gen: v5e
topology: v5e:2x2
jax: 0.10.0
libtpu: 0.0.40
codegen_flags: <defaults>
</compile_context>

<pallas_src>
import jax
import jax.numpy as jnp
import numpy as np
from jax.experimental import pallas as pl
from jax.experimental.pallas import tpu as pltpu


NEG_INF = -3.0e38   # masked-max fill (matches reference semantics)
T_CHUNK = 8         # timesteps per grid step; 4-8 fits v7x, can be raised to 16-32 on v5e/v6e


def _round_up(v, m):
    return ((v + m - 1) // m) * m


def _const_block_kwargs():
    """kwargs that single-buffer a grid-invariant block (halves its VMEM footprint)."""
    try:
        pl.BlockSpec((8, 128), lambda i: (0, 0), pipeline_mode=pl.Buffered(1))
        return {"pipeline_mode": pl.Buffered(1)}
    except Exception:       # older JAX without pipeline_mode on BlockSpec
        return {}


_CONST_BLOCK = _const_block_kwargs()


# ----------------------------------------------------------------------------
# Kernel 1 (main): fused input projection + bidirectional LSTM recurrence
# (both sentences in one batch) + running length-masked time-max accumulator.
# Output block is resident across the serial time axis (accumulator pattern).
# ----------------------------------------------------------------------------
def _fused_bilstm_max_kernel(xf_ref, xb_ref, wihf_ref, wihb_ref, whhf_ref, whhb_ref,
                             bf_ref, bb_ref, len_ref, out_ref, hf, cf, hb, cb):
    chunk = pl.program_id(1)
    t_chunk = xf_ref.shape[0]
    t_total = pl.num_programs(1) * t_chunk

    @pl.when(chunk == 0)
    def _init():
        z = jnp.zeros(hf.shape, jnp.float32)
        hf[...] = z
        cf[...] = z
        hb[...] = z
        cb[...] = z
        out_ref[...] = jnp.full(out_ref.shape, NEG_INF, jnp.float32)

    lens = len_ref[...]                              # (b_blk, 1) int32, tiny & resident

    # Value-carried (vreg) state for the whole chunk: one VMEM load/store per chunk
    # instead of one per timestep.
    h_f = hf[...]
    c_f = cf[...]
    h_b = hb[...]
    c_b = cb[...]
    mx_f = out_ref[0]
    mx_b = out_ref[1]

    def _cell(x_t, h, c, wih_ref, whh_ref, b_ref):
        # Per-gate matmuls keep gates on a leading axis (no lane-axis slicing of 4H).
        # NOTE: if H < 256 on v6e/v7x, fusing all 4 gates into one N=4H matmul would
        # fill the MXU better; irrelevant at production H (>= 256).
        h16 = h.astype(jnp.bfloat16)

        def gate(g):
            return (b_ref[g]
                    + jnp.dot(x_t, wih_ref[g], preferred_element_type=jnp.float32)
                    + jnp.dot(h16, whh_ref[g], preferred_element_type=jnp.float32))

        i = jax.nn.sigmoid(gate(0))
        f = jax.nn.sigmoid(gate(1))
        g = jnp.tanh(gate(2))
        o = jax.nn.sigmoid(gate(3))
        c_new = f * c + i * g
        h_new = o * jnp.tanh(c_new)
        return h_new, c_new

    # Static Python unroll over the chunk so every ref index is static and the LLO
    # scheduler can overlap the (independent) x@W_ih pushes with gate math / EUP ops.
    for s in range(t_chunk):
        tau = chunk * t_chunk + s                    # forward time index

        # ---- forward direction ----
        h_new, c_new = _cell(xf_ref[s], h_f, c_f, wihf_ref, whhf_ref, bf_ref)
        keep = lens > tau                            # (b_blk, 1) bool
        hm = jnp.where(keep, h_new, NEG_INF)         # masked hidden, computed once
        h_f = jnp.where(keep, h_new, h_f)
        c_f = jnp.where(keep, c_new, c_f)
        mx_f = jnp.maximum(mx_f, hm)

        # ---- backward direction (processes time index t_total - 1 - tau) ----
        sb = t_chunk - 1 - s
        tb = t_total - 1 - tau
        h_new, c_new = _cell(xb_ref[sb], h_b, c_b, wihb_ref, whhb_ref, bb_ref)
        keep = lens > tb
        hm = jnp.where(keep, h_new, NEG_INF)
        h_b = jnp.where(keep, h_new, h_b)
        c_b = jnp.where(keep, c_new, c_b)
        mx_b = jnp.maximum(mx_b, hm)

    hf[...] = h_f
    cf[...] = c_f
    hb[...] = h_b
    cb[...] = c_b
    out_ref[0] = mx_f
    out_ref[1] = mx_b


def _vmem_limit_bytes(t_chunk, b_blk, d_p, h_p, single_buffer_weights):
    bf16, f32 = 2, 4
    wbuf = 1 if single_buffer_weights else 2
    b = 0
    b += 2 * 2 * t_chunk * b_blk * d_p * bf16        # 2 x specs, double-buffered
    b += wbuf * 2 * 4 * d_p * h_p * bf16             # W_ih fwd + bwd
    b += wbuf * 2 * 4 * h_p * h_p * bf16             # W_hh fwd + bwd
    b += wbuf * 2 * 4 * h_p * f32                    # biases
    b += 2 * _round_up(b_blk, 8) * f32               # lengths
    b += 2 * 2 * b_blk * h_p * f32                   # out block
    b += 4 * b_blk * h_p * f32                       # h/c scratch
    # x2 headroom for gate temporaries + compiler internal scratch
    return int(min(100 * 2**20, max(8 * 2**20, 2 * b)))


def fused_bilstm_masked_max(x_tm, wih_f, wih_b, whh_f, whh_b, b_f, b_b, lengths):
    """x_tm: (T_pad, B2_pad, D_pad) bf16 time-major input (both sentences along batch).
    Returns (2, B2_pad, H_pad) f32: length-masked max over time of [fwd, bwd] hidden states."""
    t_pad, b2p, d_p = x_tm.shape
    h_p = whh_f.shape[-1]
    n_chunks = t_pad // T_CHUNK

    # Split the batch over the "parallel" axis (one sentence per TensorCore on v7x),
    # provided each half stays sublane-aligned.
    n_b = 2 if (b2p % 16 == 0) else 1
    b_blk = b2p // n_b

    lens2d = lengths.astype(jnp.int32)[:, None]      # (B2_pad, 1)
    vmem_limit = _vmem_limit_bytes(T_CHUNK, b_blk, d_p, h_p, bool(_CONST_BLOCK))

    return pl.pallas_call(
        _fused_bilstm_max_kernel,
        out_shape=jax.ShapeDtypeStruct((2, b2p, h_p), jnp.float32),
        grid_spec=pltpu.PrefetchScalarGridSpec(
            num_scalar_prefetch=0,
            grid=(n_b, n_chunks),
            in_specs=[
                # same x tensor passed twice: forward time order ...
                pl.BlockSpec((T_CHUNK, b_blk, d_p), lambda b, c: (c, b, 0)),
                # ... and reversed chunk order for the backward direction
                pl.BlockSpec((T_CHUNK, b_blk, d_p),
                             lambda b, c: (n_chunks - 1 - c, b, 0)),
                # grid-invariant weights / biases: single-buffered where supported
                pl.BlockSpec((4, d_p, h_p), lambda b, c: (0, 0, 0), **_CONST_BLOCK),
                pl.BlockSpec((4, d_p, h_p), lambda b, c: (0, 0, 0), **_CONST_BLOCK),
                pl.BlockSpec((4, h_p, h_p), lambda b, c: (0, 0, 0), **_CONST_BLOCK),
                pl.BlockSpec((4, h_p, h_p), lambda b, c: (0, 0, 0), **_CONST_BLOCK),
                pl.BlockSpec((4, 1, h_p), lambda b, c: (0, 0, 0), **_CONST_BLOCK),
                pl.BlockSpec((4, 1, h_p), lambda b, c: (0, 0, 0), **_CONST_BLOCK),
                pl.BlockSpec((b_blk, 1), lambda b, c: (b, 0)),        # lengths
            ],
            # running-max accumulator: resident across the (serial) time-chunk axis
            out_specs=pl.BlockSpec((2, b_blk, h_p), lambda b, c: (0, b, 0)),
            scratch_shapes=[pltpu.VMEM((b_blk, h_p), jnp.float32)] * 4,  # h_f, c_f, h_b, c_b
        ),
        compiler_params=pltpu.CompilerParams(
            dimension_semantics=("parallel", "arbitrary"),
            vmem_limit_bytes=vmem_limit,
        ),
    )(x_tm, x_tm, wih_f, wih_b, whh_f, whh_b, b_f, b_b, lens2d)


# ----------------------------------------------------------------------------
# Kernel 2: classifier MLP (tiny; feature concat replaced by four partial matmuls
# summed against the four (2H, mlp_d) row blocks of W1).  Whole arrays in VMEM.
# ----------------------------------------------------------------------------
def _classifier_kernel(m1_ref, m2_ref, w1_ref, b1_ref, w2_ref, b2_ref, out_ref):
    m1 = m1_ref[...]
    m2 = m2_ref[...]
    acc = jnp.dot(m1, w1_ref[0], preferred_element_type=jnp.float32)
    acc = acc + jnp.dot(m2, w1_ref[1], preferred_element_type=jnp.float32)
    acc = acc + jnp.dot(jnp.abs(m1 - m2), w1_ref[2], preferred_element_type=jnp.float32)
    acc = acc + jnp.dot(m1 * m2, w1_ref[3], preferred_element_type=jnp.float32)
    h = jnp.maximum(acc + b1_ref[...], 0.0)                                   # ReLU
    out_ref[...] = (jnp.dot(h, w2_ref[...], preferred_element_type=jnp.float32)
                    + b2_ref[...])


def classifier_apply(m1, m2, w1_4, b1, w2, b2):
    B = m1.shape[0]
    C = w2.shape[1]
    vspec = pl.BlockSpec(memory_space=pltpu.MemorySpace.VMEM)
    return pl.pallas_call(
        _classifier_kernel,
        out_shape=jax.ShapeDtypeStruct((B, C), jnp.float32),
        in_specs=[vspec] * 6,
        out_specs=vspec,
    )(m1, m2, w1_4, b1, w2, b2)


# ----------------------------------------------------------------------------
# Full forward (glue + padding in plain JAX, hot paths in the kernels above).
# ----------------------------------------------------------------------------
@jax.jit
def fast_maxout_forward(layer1_s1, layer2_s1, l1, layer1_s2, layer2_s2, l2, params):
    del layer2_s1, layer2_s2          # unused by FastMaxout.forward (matches reference)
    # dropout layers are identity in eval mode
    B, T, D = layer1_s1.shape
    H = params["whh_f4"].shape[-1]

    # Lane/sublane-dense padding targets (padding with zeros is exact for this LSTM).
    d_p = _round_up(D, 128)
    h_p = _round_up(H, 128)
    b2 = 2 * B
    b2_p = _round_up(b2, 8)
    t_p = _round_up(T, T_CHUNK)

    # Fuse the two sentences along batch; both directions are fused inside the kernel.
    x_all = jnp.concatenate([layer1_s1, layer1_s2], axis=0)                  # (2B, T, D)
    x_all = jnp.pad(x_all, ((0, b2_p - b2), (0, t_p - T), (0, d_p - D)))
    lengths = jnp.concatenate([l1, l2], axis=0).astype(jnp.int32)
    lengths = jnp.pad(lengths, (0, b2_p - b2))               # padded rows: length 0 (masked)

    # Time-major bf16 stream for the recurrent kernel (batch on sublanes, D on lanes).
    x_tm = jnp.transpose(x_all, (1, 0, 2)).astype(jnp.bfloat16)              # (T_p, 2B_p, D_p)

    # bf16, zero-padded weights (in production these casts/pads would be done once).
    wih_f = jnp.pad(params["wih_f4"], ((0, 0), (0, d_p - D), (0, h_p - H))).astype(jnp.bfloat16)
    wih_b = jnp.pad(params["wih_b4"], ((0, 0), (0, d_p - D), (0, h_p - H))).astype(jnp.bfloat16)
    whh_f = jnp.pad(params["whh_f4"], ((0, 0), (0, h_p - H), (0, h_p - H))).astype(jnp.bfloat16)
    whh_b = jnp.pad(params["whh_b4"], ((0, 0), (0, h_p - H), (0, h_p - H))).astype(jnp.bfloat16)
    b_f = jnp.pad(params["b_f4"], ((0, 0), (0, 0), (0, h_p - H)))            # f32
    b_b = jnp.pad(params["b_b4"], ((0, 0), (0, 0), (0, h_p - H)))            # f32

    # Single fused sweep: projection + recurrence + running masked time-max.
    maxh = fused_bilstm_masked_max(x_tm, wih_f, wih_b, whh_f, whh_b, b_f, b_b, lengths)

    # Per-sentence maxout features, [fwd || bwd] like PyTorch's bidirectional output.
    m1 = jnp.concatenate([maxh[0, :B, :H], maxh[1, :B, :H]], axis=-1)        # (B, 2H)
    m2 = jnp.concatenate([maxh[0, B:2 * B, :H], maxh[1, B:2 * B, :H]], axis=-1)

    return classifier_apply(m1, m2, params["w1_4"], params["b1"],
                            params["w2"], params["b2"])


# ----------------------------------------------------------------------------
# Pure-JAX reference (for correctness check), f32 end-to-end.
# ----------------------------------------------------------------------------
def _lstm_ref_dir(x_btd, mask_bt, wih, whh, b, reverse):
    B, T, D = x_btd.shape
    H = whh.shape[0]
    xs = jnp.transpose(x_btd, (1, 0, 2))
    ms = jnp.transpose(mask_bt)[:, :, None]
    if reverse:
        xs, ms = xs[::-1], ms[::-1]

    def step(carry, inp):
        h, c = carry
        x_t, m_t = inp
        gates = x_t @ wih + h @ whh + b
        i = jax.nn.sigmoid(gates[:, :H])
        f = jax.nn.sigmoid(gates[:, H:2 * H])
        g = jnp.tanh(gates[:, 2 * H:3 * H])
        o = jax.nn.sigmoid(gates[:, 3 * H:])
        c_new = f * c + i * g
        h_new = o * jnp.tanh(c_new)
        h2 = jnp.where(m_t > 0, h_new, h)
        c2 = jnp.where(m_t > 0, c_new, c)
        return (h2, c2), jnp.where(m_t > 0, h_new, 0.0)

    init = (jnp.zeros((B, H), jnp.float32), jnp.zeros((B, H), jnp.float32))
    _, outs = jax.lax.scan(step, init, (xs, ms))
    if reverse:
        outs = outs[::-1]
    return jnp.transpose(outs, (1, 0, 2))


def fast_maxout_ref(s1, l1, s2, l2, p, T):
    D = s1.shape[-1]
    H = p["whh_f4"].shape[-1]

    def flat_ih(w4):  # (4, D, H) -> (D, 4H), gate order i,f,g,o
        return jnp.transpose(w4, (1, 0, 2)).reshape(D, 4 * H)

    def flat_hh(w4):  # (4, H, H) -> (H, 4H)
        return jnp.transpose(w4, (1, 0, 2)).reshape(H, 4 * H)

    def flat_b(b4):   # (4, 1, H) -> (1, 4H)
        return jnp.transpose(b4, (1, 0, 2)).reshape(1, 4 * H)

    wih_f, whh_f, b_f = flat_ih(p["wih_f4"]), flat_hh(p["whh_f4"]), flat_b(p["b_f4"])
    wih_b, whh_b, b_b = flat_ih(p["wih_b4"]), flat_hh(p["whh_b4"]), flat_b(p["b_b4"])
    w1 = p["w1_4"].reshape(-1, p["w1_4"].shape[-1])      # (8H, mlp_d)

    def branch(x, l):
        mask = (jnp.arange(T)[None, :] < l[:, None]).astype(jnp.float32)
        fwd = _lstm_ref_dir(x, mask, wih_f, whh_f, b_f, False)
        bwd = _lstm_ref_dir(x, mask, wih_b, whh_b, b_b, True)
        out = jnp.concatenate([fwd, bwd], axis=-1)
        neg = jnp.full_like(out, NEG_INF)
        return jnp.max(jnp.where(mask[:, :, None] > 0, out, neg), axis=1)

    m1, m2 = branch(s1, l1), branch(s2, l2)
    feats = jnp.concatenate([m1, m2, jnp.abs(m1 - m2), m1 * m2], axis=1)
    h = jnp.maximum(feats @ w1 + p["b1"], 0.0)
    return h @ p["w2"] + p["b2"]


# ----------------------------------------------------------------------------
if __name__ == "__main__":
    B, T = 2, 8
    D_IN = 32       # rnn_size_in (scaled down)
    H = 32          # rnn_size_out (scaled down)
    MLP_D = 64
    N_CLASS = 3

    key = jax.random.PRNGKey(0)
    ks = jax.random.split(key, 16)
    sc = 0.1
    params = {
        # bidirectional LSTM weights in kernel-friendly gate-major layout (i, f, g, o)
        "wih_f4": sc * jax.random.normal(ks[0], (4, D_IN, H), jnp.float32),
        "whh_f4": sc * jax.random.normal(ks[1], (4, H, H), jnp.float32),
        "b_f4":   sc * jax.random.normal(ks[2], (4, 1, H), jnp.float32),  # b_ih + b_hh folded
        "wih_b4": sc * jax.random.normal(ks[3], (4, D_IN, H), jnp.float32),
        "whh_b4": sc * jax.random.normal(ks[4], (4, H, H), jnp.float32),
        "b_b4":   sc * jax.random.normal(ks[5], (4, 1, H), jnp.float32),
        # mlp_1: Linear(2H*4 -> MLP_D) stored as 4 row blocks of (2H, MLP_D); sm: Linear(MLP_D -> C)
        "w1_4": sc * jax.random.normal(ks[6], (4, 2 * H, MLP_D), jnp.float32),
        "b1":   sc * jax.random.normal(ks[7], (1, MLP_D), jnp.float32),
        "w2":   sc * jax.random.normal(ks[8], (MLP_D, N_CLASS), jnp.float32),
        "b2":   sc * jax.random.normal(ks[9], (1, N_CLASS), jnp.float32),
    }

    layer1_s1 = jax.random.normal(ks[10], (B, T, D_IN), jnp.float32)
    layer1_s2 = jax.random.normal(ks[11], (B, T, D_IN), jnp.float32)
    layer2_s1 = jax.random.normal(ks[12], (B, T, D_IN), jnp.float32)  # unused by forward
    layer2_s2 = jax.random.normal(ks[13], (B, T, D_IN), jnp.float32)  # unused by forward
    l1 = jnp.array([8, 5], jnp.int32)
    l2 = jnp.array([6, 8], jnp.int32)

    out = fast_maxout_forward(layer1_s1, layer2_s1, l1, layer1_s2, layer2_s2, l2, params)
    out = jax.block_until_ready(out)

    ref = jax.block_until_ready(fast_maxout_ref(layer1_s1, l1, layer1_s2, l2, params, T))
    # bf16 weights/activations in the kernel path (f32 accumulation) -> slightly looser tol.
    np.testing.assert_allclose(np.asarray(out), np.asarray(ref), rtol=2e-2, atol=2e-2)

    print("KERNEL_OK")
</pallas_src>

<mosaic_0001>
module attributes {stable_mosaic.version = 11 : i64} {
  func.func @_classifier_kernel(%arg0: memref<2x64xf32, #tpu.memory_space<vmem>>, %arg1: memref<2x64xf32, #tpu.memory_space<vmem>>, %arg2: memref<4x64x64xf32, #tpu.memory_space<vmem>>, %arg3: memref<1x64xf32, #tpu.memory_space<vmem>>, %arg4: memref<64x3xf32, #tpu.memory_space<vmem>>, %arg5: memref<1x3xf32, #tpu.memory_space<vmem>>, %arg6: memref<2x3xf32, #tpu.memory_space<vmem>>) attributes {dimension_semantics = [], scalar_prefetch = 0 : i64, scratch_operands = 0 : i64, tpu.core_type = #tpu.core_type<tc>} {
    %c0 = arith.constant 0 : index
    %c0_0 = arith.constant 0 : index
    %0 = vector.load %arg0[%c0, %c0_0] : memref<2x64xf32, #tpu.memory_space<vmem>>, vector<2x64xf32>
    %c0_1 = arith.constant 0 : index
    %c0_2 = arith.constant 0 : index
    %1 = vector.load %arg1[%c0_1, %c0_2] : memref<2x64xf32, #tpu.memory_space<vmem>>, vector<2x64xf32>
    %c0_3 = arith.constant 0 : index
    %c0_4 = arith.constant 0 : index
    %c0_5 = arith.constant 0 : index
    %2 = vector.load %arg2[%c0_3, %c0_4, %c0_5] : memref<4x64x64xf32, #tpu.memory_space<vmem>>, vector<1x64x64xf32>
    %3 = vector.shape_cast %2 : vector<1x64x64xf32> to vector<64x64xf32>
    %cst = arith.constant dense<0.000000e+00> : vector<2x64xf32>
    %4 = tpu.matmul %0, %3, %cst {dimension_numbers = #tpu.dot_dimension_numbers<[1], [0], [0], [1], [0, 0, 1, 1], [], []>} : vector<2x64xf32>, vector<64x64xf32>, vector<2x64xf32> -> vector<2x64xf32>
    %c1 = arith.constant 1 : index
    %c0_6 = arith.constant 0 : index
    %c0_7 = arith.constant 0 : index
    %5 = vector.load %arg2[%c1, %c0_6, %c0_7] : memref<4x64x64xf32, #tpu.memory_space<vmem>>, vector<1x64x64xf32>
    %6 = vector.shape_cast %5 : vector<1x64x64xf32> to vector<64x64xf32>
    %cst_8 = arith.constant dense<0.000000e+00> : vector<2x64xf32>
    %7 = tpu.matmul %1, %6, %cst_8 {dimension_numbers = #tpu.dot_dimension_numbers<[1], [0], [0], [1], [0, 0, 1, 1], [], []>} : vector<2x64xf32>, vector<64x64xf32>, vector<2x64xf32> -> vector<2x64xf32>
    %8 = arith.addf %4, %7 : vector<2x64xf32>
    %9 = arith.subf %0, %1 : vector<2x64xf32>
    %10 = math.absf %9 : vector<2x64xf32>
    %c2 = arith.constant 2 : index
    %c0_9 = arith.constant 0 : index
    %c0_10 = arith.constant 0 : index
    %11 = vector.load %arg2[%c2, %c0_9, %c0_10] : memref<4x64x64xf32, #tpu.memory_space<vmem>>, vector<1x64x64xf32>
    %12 = vector.shape_cast %11 : vector<1x64x64xf32> to vector<64x64xf32>
    %cst_11 = arith.constant dense<0.000000e+00> : vector<2x64xf32>
    %13 = tpu.matmul %10, %12, %cst_11 {dimension_numbers = #tpu.dot_dimension_numbers<[1], [0], [0], [1], [0, 0, 1, 1], [], []>} : vector<2x64xf32>, vector<64x64xf32>, vector<2x64xf32> -> vector<2x64xf32>
    %14 = arith.addf %8, %13 : vector<2x64xf32>
    %15 = arith.mulf %0, %1 : vector<2x64xf32>
    %c3 = arith.constant 3 : index
    %c0_12 = arith.constant 0 : index
    %c0_13 = arith.constant 0 : index
    %16 = vector.load %arg2[%c3, %c0_12, %c0_13] : memref<4x64x64xf32, #tpu.memory_space<vmem>>, vector<1x64x64xf32>
    %17 = vector.shape_cast %16 : vector<1x64x64xf32> to vector<64x64xf32>
    %cst_14 = arith.constant dense<0.000000e+00> : vector<2x64xf32>
    %18 = tpu.matmul %15, %17, %cst_14 {dimension_numbers = #tpu.dot_dimension_numbers<[1], [0], [0], [1], [0, 0, 1, 1], [], []>} : vector<2x64xf32>, vector<64x64xf32>, vector<2x64xf32> -> vector<2x64xf32>
    %19 = arith.addf %14, %18 : vector<2x64xf32>
    %c0_15 = arith.constant 0 : index
    %c0_16 = arith.constant 0 : index
    %20 = vector.load %arg3[%c0_15, %c0_16] : memref<1x64xf32, #tpu.memory_space<vmem>>, vector<1x64xf32>
    %21 = vector.broadcast %20 : vector<1x64xf32> to vector<2x64xf32>
    %22 = arith.addf %19, %21 : vector<2x64xf32>
    %cst_17 = arith.constant 0.000000e+00 : f32
    %23 = vector.broadcast %cst_17 : f32 to vector<2x64xf32>
    %24 = arith.maximumf %22, %23 : vector<2x64xf32>
    %c0_18 = arith.constant 0 : index
    %c0_19 = arith.constant 0 : index
    %25 = vector.load %arg4[%c0_18, %c0_19] : memref<64x3xf32, #tpu.memory_space<vmem>>, vector<64x3xf32>
    %cst_20 = arith.constant dense<0.000000e+00> : vector<2x3xf32>
    %26 = tpu.matmul %24, %25, %cst_20 {dimension_numbers = #tpu.dot_dimension_numbers<[1], [0], [0], [1], [0, 0, 1, 1], [], []>} : vector<2x64xf32>, vector<64x3xf32>, vector<2x3xf32> -> vector<2x3xf32>
    %c0_21 = arith.constant 0 : index
    %c0_22 = arith.constant 0 : index
    %27 = vector.load %arg5[%c0_21, %c0_22] : memref<1x3xf32, #tpu.memory_space<vmem>>, vector<1x3xf32>
    %28 = vector.broadcast %27 : vector<1x3xf32> to vector<2x3xf32>
    %29 = arith.addf %26, %28 : vector<2x3xf32>
    %c0_23 = arith.constant 0 : index
    %c0_24 = arith.constant 0 : index
    %30 = vector.load %arg6[%c0_23, %c0_24] : memref<2x3xf32, #tpu.memory_space<vmem>>, vector<2x3xf32>
    tpu.vector_store %arg6[%c0_23, %c0_24], %29 {strides = array<i32>} : memref<2x3xf32, #tpu.memory_space<vmem>>, vector<2x3xf32>,
    return
  }
}

module attributes {stable_mosaic.version = 11 : i64} {
  func.func @_fused_bilstm_max_kernel(%arg0: i32, %arg1: i32, %arg2: memref<8x8x128xbf16, #tpu.memory_space<vmem>>, %arg3: memref<8x8x128xbf16, #tpu.memory_space<vmem>>, %arg4: memref<4x128x128xbf16, #tpu.memory_space<vmem>>, %arg5: memref<4x128x128xbf16, #tpu.memory_space<vmem>>, %arg6: memref<4x128x128xbf16, #tpu.memory_space<vmem>>, %arg7: memref<4x128x128xbf16, #tpu.memory_space<vmem>>, %arg8: memref<4x1x128xf32, #tpu.memory_space<vmem>>, %arg9: memref<4x1x128xf32, #tpu.memory_space<vmem>>, %arg10: memref<8x1xi32, #tpu.memory_space<vmem>>, %arg11: memref<2x8x128xf32, #tpu.memory_space<vmem>>, %arg12: memref<8x128xf32, #tpu.memory_space<vmem>>, %arg13: memref<8x128xf32, #tpu.memory_space<vmem>>, %arg14: memref<8x128xf32, #tpu.memory_space<vmem>>, %arg15: memref<8x128xf32, #tpu.memory_space<vmem>>) attributes {dimension_semantics = [#tpu.dimension_semantics<parallel>, #tpu.dimension_semantics<arbitrary>], iteration_bounds = array<i64: 1, 1>, scalar_prefetch = 0 : i64, scratch_operands = 4 : i64, tpu.core_type = #tpu.core_type<tc>, window_params = [{transform_indices = @transform_0, window_bounds = array<i64: 8, 8, 128>}, {transform_indices = @transform_1, window_bounds = array<i64: 8, 8, 128>}, {pipeline_mode = #tpu.pipeline_mode<synchronous>, transform_indices = @transform_2, window_bounds = array<i64: 4, 128, 128>}, {pipeline_mode = #tpu.pipeline_mode<synchronous>, transform_indices = @transform_3, window_bounds = array<i64: 4, 128, 128>}, {pipeline_mode = #tpu.pipeline_mode<synchronous>, transform_indices = @transform_4, window_bounds = array<i64: 4, 128, 128>}, {pipeline_mode = #tpu.pipeline_mode<synchronous>, transform_indices = @transform_5, window_bounds = array<i64: 4, 128, 128>}, {pipeline_mode = #tpu.pipeline_mode<synchronous>, transform_indices = @transform_6, window_bounds = array<i64: 4, 1, 128>}, {pipeline_mode = #tpu.pipeline_mode<synchronous>, transform_indices = @transform_7, window_bounds = array<i64: 4, 1, 128>}, {transform_indices = @transform_8, window_bounds = array<i64: 8, 1>}, {transform_indices = @transform_9, window_bounds = array<i64: 2, 8, 128>}]} {
    %c0_i32 = arith.constant 0 : i32
    %0 = arith.cmpi eq, %arg1, %c0_i32 : i32
    %1 = arith.extui %0 : i1 to i32
    %c0_i32_0 = arith.constant 0 : i32
    %2 = arith.cmpi ne, %1, %c0_i32_0 : i32
    scf.if %2 {
      %cst_854 = arith.constant 0.000000e+00 : f32
      %1342 = vector.broadcast %cst_854 : f32 to vector<8x128xf32>
      %c0_855 = arith.constant 0 : index
      %c0_856 = arith.constant 0 : index
      %1343 = vector.load %arg12[%c0_855, %c0_856] : memref<8x128xf32, #tpu.memory_space<vmem>>, vector<8x128xf32>
      tpu.vector_store %arg12[%c0_855, %c0_856], %1342 {strides = array<i32>} : memref<8x128xf32, #tpu.memory_space<vmem>>, vector<8x128xf32>,
      %c0_857 = arith.constant 0 : index
      %c0_858 = arith.constant 0 : index
      %1344 = vector.load %arg13[%c0_857, %c0_858] : memref<8x128xf32, #tpu.memory_space<vmem>>, vector<8x128xf32>
      tpu.vector_store %arg13[%c0_857, %c0_858], %1342 {strides = array<i32>} : memref<8x128xf32, #tpu.memory_space<vmem>>, vector<8x128xf32>,
      %c0_859 = arith.constant 0 : index
      %c0_860 = arith.constant 0 : index
      %1345 = vector.load %arg14[%c0_859, %c0_860] : memref<8x128xf32, #tpu.memory_space<vmem>>, vector<8x128xf32>
      tpu.vector_store %arg14[%c0_859, %c0_860], %1342 {strides = array<i32>} : memref<8x128xf32, #tpu.memory_space<vmem>>, vector<8x128xf32>,
      %c0_861 = arith.constant 0 : index
      %c0_862 = arith.constant 0 : index
      %1346 = vector.load %arg15[%c0_861, %c0_862] : memref<8x128xf32, #tpu.memory_space<vmem>>, vector<8x128xf32>
      tpu.vector_store %arg15[%c0_861, %c0_862], %1342 {strides = array<i32>} : memref<8x128xf32, #tpu.memory_space<vmem>>, vector<8x128xf32>,
      %cst_863 = arith.constant -3.000000e+38 : f32
      %1347 = vector.broadcast %cst_863 : f32 to vector<2x8x128xf32>
      %c0_864 = arith.constant 0 : index
      %c0_865 = arith.constant 0 : index
      %c0_866 = arith.constant 0 : index
      %1348 = vector.load %arg11[%c0_864, %c0_865, %c0_866] : memref<2x8x128xf32, #tpu.memory_space<vmem>>, vector<2x8x128xf32>
      tpu.vector_store %arg11[%c0_864, %c0_865, %c0_866], %1347 {strides = array<i32>} : memref<2x8x128xf32, #tpu.memory_space<vmem>>, vector<2x8x128xf32>,
    } else {
    }
    %c0 = arith.constant 0 : index
    %c0_1 = arith.constant 0 : index
    %3 = vector.load %arg10[%c0, %c0_1] : memref<8x1xi32, #tpu.memory_space<vmem>>, vector<8x1xi32>
    %c0_2 = arith.constant 0 : index
    %c0_3 = arith.constant 0 : index
    %4 = vector.load %arg12[%c0_2, %c0_3] : memref<8x128xf32, #tpu.memory_space<vmem>>, vector<8x128xf32>
    %c0_4 = arith.constant 0 : index
    %c0_5 = arith.constant 0 : index
    %5 = vector.load %arg13[%c0_4, %c0_5] : memref<8x128xf32, #tpu.memory_space<vmem>>, vector<8x128xf32>
    %c0_6 = arith.constant 0 : index
    %c0_7 = arith.constant 0 : index
    %6 = vector.load %arg14[%c0_6, %c0_7] : memref<8x128xf32, #tpu.memory_space<vmem>>, vector<8x128xf32>
    %c0_8 = arith.constant 0 : index
    %c0_9 = arith.constant 0 : index
    %7 = vector.load %arg15[%c0_8, %c0_9] : memref<8x128xf32, #tpu.memory_space<vmem>>, vector<8x128xf32>
    %c0_10 = arith.constant 0 : index
    %c0_11 = arith.constant 0 : index
    %c0_12 = arith.constant 0 : index
    %8 = vector.load %arg11[%c0_10, %c0_11, %c0_12] : memref<2x8x128xf32, #tpu.memory_space<vmem>>, vector<1x8x128xf32>
    %9 = vector.shape_cast %8 : vector<1x8x128xf32> to vector<8x128xf32>
    %c1 = arith.constant 1 : index
    %c0_13 = arith.constant 0 : index
    %c0_14 = arith.constant 0 : index
    %10 = vector.load %arg11[%c1, %c0_13, %c0_14] : memref<2x8x128xf32, #tpu.memory_space<vmem>>, vector<1x8x128xf32>
    %11 = vector.shape_cast %10 : vector<1x8x128xf32> to vector<8x128xf32>
    %c8_i32 = arith.constant 8 : i32
    %12 = arith.muli %arg1, %c8_i32 : i32
    %c0_i32_15 = arith.constant 0 : i32
    %13 = arith.addi %12, %c0_i32_15 : i32
    %c0_16 = arith.constant 0 : index
    %c0_17 = arith.constant 0 : index
    %c0_18 = arith.constant 0 : index
    %14 = vector.load %arg2[%c0_16, %c0_17, %c0_18] : memref<8x8x128xbf16, #tpu.memory_space<vmem>>, vector<1x8x128xbf16>
    %15 = vector.shape_cast %14 : vector<1x8x128xbf16> to vector<8x128xbf16>
    %16 = arith.truncf %4 : vector<8x128xf32> to vector<8x128xbf16>
    %c0_19 = arith.constant 0 : index
    %c0_20 = arith.constant 0 : index
    %c0_21 = arith.constant 0 : index
    %17 = vector.load %arg8[%c0_19, %c0_20, %c0_21] : memref<4x1x128xf32, #tpu.memory_space<vmem>>, vector<1x1x128xf32>
    %18 = vector.shape_cast %17 : vector<1x1x128xf32> to vector<1x128xf32>
    %c0_22 = arith.constant 0 : index
    %c0_23 = arith.constant 0 : index
    %c0_24 = arith.constant 0 : index
    %19 = vector.load %arg4[%c0_22, %c0_23, %c0_24] : memref<4x128x128xbf16, #tpu.memory_space<vmem>>, vector<1x128x128xbf16>
    %20 = vector.shape_cast %19 : vector<1x128x128xbf16> to vector<128x128xbf16>
    %cst = arith.constant dense<0.000000e+00> : vector<8x128xf32>
    %21 = tpu.matmul %15, %20, %cst {dimension_numbers = #tpu.dot_dimension_numbers<[1], [0], [0], [1], [0, 0, 1, 1], [], []>} : vector<8x128xbf16>, vector<128x128xbf16>, vector<8x128xf32> -> vector<8x128xf32>
    %22 = vector.broadcast %18 : vector<1x128xf32> to vector<8x128xf32>
    %23 = arith.addf %22, %21 : vector<8x128xf32>
    %c0_25 = arith.constant 0 : index
    %c0_26 = arith.constant 0 : index
    %c0_27 = arith.constant 0 : index
    %24 = vector.load %arg6[%c0_25, %c0_26, %c0_27] : memref<4x128x128xbf16, #tpu.memory_space<vmem>>, vector<1x128x128xbf16>
    %25 = vector.shape_cast %24 : vector<1x128x128xbf16> to vector<128x128xbf16>
    %cst_28 = arith.constant dense<0.000000e+00> : vector<8x128xf32>
    %26 = tpu.matmul %16, %25, %cst_28 {dimension_numbers = #tpu.dot_dimension_numbers<[1], [0], [0], [1], [0, 0, 1, 1], [], []>} : vector<8x128xbf16>, vector<128x128xbf16>, vector<8x128xf32> -> vector<8x128xf32>
    %27 = arith.addf %23, %26 : vector<8x128xf32>
    %28 = arith.negf %27 : vector<8x128xf32>
    %29 = math.exp %28 : vector<8x128xf32>
    %cst_29 = arith.constant 1.000000e+00 : f32
    %30 = vector.broadcast %cst_29 : f32 to vector<8x128xf32>
    %31 = arith.addf %30, %29 : vector<8x128xf32>
    %32 = arith.divf %30, %31 : vector<8x128xf32>
    %c1_30 = arith.constant 1 : index
    %c0_31 = arith.constant 0 : index
    %c0_32 = arith.constant 0 : index
    %33 = vector.load %arg8[%c1_30, %c0_31, %c0_32] : memref<4x1x128xf32, #tpu.memory_space<vmem>>, vector<1x1x128xf32>
    %34 = vector.shape_cast %33 : vector<1x1x128xf32> to vector<1x128xf32>
    %c1_33 = arith.constant 1 : index
    %c0_34 = arith.constant 0 : index
    %c0_35 = arith.constant 0 : index
    %35 = vector.load %arg4[%c1_33, %c0_34, %c0_35] : memref<4x128x128xbf16, #tpu.memory_space<vmem>>, vector<1x128x128xbf16>
    %36 = vector.shape_cast %35 : vector<1x128x128xbf16> to vector<128x128xbf16>
    %cst_36 = arith.constant dense<0.000000e+00> : vector<8x128xf32>
    %37 = tpu.matmul %15, %36, %cst_36 {dimension_numbers = #tpu.dot_dimension_numbers<[1], [0], [0], [1], [0, 0, 1, 1], [], []>} : vector<8x128xbf16>, vector<128x128xbf16>, vector<8x128xf32> -> vector<8x128xf32>
    %38 = vector.broadcast %34 : vector<1x128xf32> to vector<8x128xf32>
    %39 = arith.addf %38, %37 : vector<8x128xf32>
    %c1_37 = arith.constant 1 : index
    %c0_38 = arith.constant 0 : index
    %c0_39 = arith.constant 0 : index
    %40 = vector.load %arg6[%c1_37, %c0_38, %c0_39] : memref<4x128x128xbf16, #tpu.memory_space<vmem>>, vector<1x128x128xbf16>
    %41 = vector.shape_cast %40 : vector<1x128x128xbf16> to vector<128x128xbf16>
    %cst_40 = arith.constant dense<0.000000e+00> : vector<8x128xf32>
    %42 = tpu.matmul %16, %41, %cst_40 {dimension_numbers = #tpu.dot_dimension_numbers<[1], [0], [0], [1], [0, 0, 1, 1], [], []>} : vector<8x128xbf16>, vector<128x128xbf16>, vector<8x128xf32> -> vector<8x128xf32>
    %43 = arith.addf %39, %42 : vector<8x128xf32>
    %44 = arith.negf %43 : vector<8x128xf32>
    %45 = math.exp %44 : vector<8x128xf32>
    %cst_41 = arith.constant 1.000000e+00 : f32
    %46 = vector.broadcast %cst_41 : f32 to vector<8x128xf32>
    %47 = arith.addf %46, %45 : vector<8x128xf32>
    %48 = arith.divf %46, %47 : vector<8x128xf32>
    %c2 = arith.constant 2 : index
    %c0_42 = arith.constant 0 : index
    %c0_43 = arith.constant 0 : index
    %49 = vector.load %arg8[%c2, %c0_42, %c0_43] : memref<4x1x128xf32, #tpu.memory_space<vmem>>, vector<1x1x128xf32>
    %50 = vector.shape_cast %49 : vector<1x1x128xf32> to vector<1x128xf32>
    %c2_44 = arith.constant 2 : index
    %c0_45 = arith.constant 0 : index
    %c0_46 = arith.constant 0 : index
    %51 = vector.load %arg4[%c2_44, %c0_45, %c0_46] : memref<4x128x128xbf16, #tpu.memory_space<vmem>>, vector<1x128x128xbf16>
    %52 = vector.shape_cast %51 : vector<1x128x128xbf16> to vector<128x128xbf16>
    %cst_47 = arith.constant dense<0.000000e+00> : vector<8x128xf32>
    %53 = tpu.matmul %15, %52, %cst_47 {dimension_numbers = #tpu.dot_dimension_numbers<[1], [0], [0], [1], [0, 0, 1, 1], [], []>} : vector<8x128xbf16>, vector<128x128xbf16>, vector<8x128xf32> -> vector<8x128xf32>
    %54 = vector.broadcast %50 : vector<1x128xf32> to vector<8x128xf32>
    %55 = arith.addf %54, %53 : vector<8x128xf32>
    %c2_48 = arith.constant 2 : index
    %c0_49 = arith.constant 0 : index
    %c0_50 = arith.constant 0 : index
    %56 = vector.load %arg6[%c2_48, %c0_49, %c0_50] : memref<4x128x128xbf16, #tpu.memory_space<vmem>>, vector<1x128x128xbf16>
    %57 = vector.shape_cast %56 : vector<1x128x128xbf16> to vector<128x128xbf16>
    %cst_51 = arith.constant dense<0.000000e+00> : vector<8x128xf32>
    %58 = tpu.matmul %16, %57, %cst_51 {dimension_numbers = #tpu.dot_dimension_numbers<[1], [0], [0], [1], [0, 0, 1, 1], [], []>} : vector<8x128xbf16>, vector<128x128xbf16>, vector<8x128xf32> -> vector<8x128xf32>
    %59 = arith.addf %55, %58 : vector<8x128xf32>
    %60 = math.tanh %59 : vector<8x128xf32>
    %c3 = arith.constant 3 : index
    %c0_52 = arith.constant 0 : index
    %c0_53 = arith.constant 0 : index
    %61 = vector.load %arg8[%c3, %c0_52, %c0_53] : memref<4x1x128xf32, #tpu.memory_space<vmem>>, vector<1x1x128xf32>
    %62 = vector.shape_cast %61 : vector<1x1x128xf32> to vector<1x128xf32>
    %c3_54 = arith.constant 3 : index
    %c0_55 = arith.constant 0 : index
    %c0_56 = arith.constant 0 : index
    %63 = vector.load %arg4[%c3_54, %c0_55, %c0_56] : memref<4x128x128xbf16, #tpu.memory_space<vmem>>, vector<1x128x128xbf16>
    %64 = vector.shape_cast %63 : vector<1x128x128xbf16> to vector<128x128xbf16>
    %cst_57 = arith.constant dense<0.000000e+00> : vector<8x128xf32>
    %65 = tpu.matmul %15, %64, %cst_57 {dimension_numbers = #tpu.dot_dimension_numbers<[1], [0], [0], [1], [0, 0, 1, 1], [], []>} : vector<8x128xbf16>, vector<128x128xbf16>, vector<8x128xf32> -> vector<8x128xf32>
    %66 = vector.broadcast %62 : vector<1x128xf32> to vector<8x128xf32>
    %67 = arith.addf %66, %65 : vector<8x128xf32>
    %c3_58 = arith.constant 3 : index
    %c0_59 = arith.constant 0 : index
    %c0_60 = arith.constant 0 : index
    %68 = vector.load %arg6[%c3_58, %c0_59, %c0_60] : memref<4x128x128xbf16, #tpu.memory_space<vmem>>, vector<1x128x128xbf16>
    %69 = vector.shape_cast %68 : vector<1x128x128xbf16> to vector<128x128xbf16>
    %cst_61 = arith.constant dense<0.000000e+00> : vector<8x128xf32>
    %70 = tpu.matmul %16, %69, %cst_61 {dimension_numbers = #tpu.dot_dimension_numbers<[1], [0], [0], [1], [0, 0, 1, 1], [], []>} : vector<8x128xbf16>, vector<128x128xbf16>, vector<8x128xf32> -> vector<8x128xf32>
    %71 = arith.addf %67, %70 : vector<8x128xf32>
    %72 = arith.negf %71 : vector<8x128xf32>
    %73 = math.exp %72 : vector<8x128xf32>
    %cst_62 = arith.constant 1.000000e+00 : f32
    %74 = vector.broadcast %cst_62 : f32 to vector<8x128xf32>
    %75 = arith.addf %74, %73 : vector<8x128xf32>
    %76 = arith.divf %74, %75 : vector<8x128xf32>
    %77 = arith.mulf %48, %5 : vector<8x128xf32>
    %78 = arith.mulf %32, %60 : vector<8x128xf32>
    %79 = arith.addf %77, %78 : vector<8x128xf32>
    %80 = math.tanh %79 : vector<8x128xf32>
    %81 = arith.mulf %76, %80 : vector<8x128xf32>
    %82 = vector.broadcast %13 : i32 to vector<8x1xi32>
    %83 = arith.cmpi sgt, %3, %82 : vector<8x1xi32>
    %cst_63 = arith.constant -3.000000e+38 : f32
    %84 = vector.shape_cast %83 : vector<8x1xi1> to vector<8x1xi1>
    %85 = vector.broadcast %84 : vector<8x1xi1> to vector<8x128xi1>
    %86 = vector.broadcast %cst_63 : f32 to vector<8x128xf32>
    %87 = arith.select %85, %81, %86 : vector<8x128xi1>, vector<8x128xf32>
    %88 = vector.shape_cast %83 : vector<8x1xi1> to vector<8x1xi1>
    %89 = vector.broadcast %88 : vector<8x1xi1> to vector<8x128xi1>
    %90 = arith.select %89, %81, %4 : vector<8x128xi1>, vector<8x128xf32>
    %91 = vector.shape_cast %83 : vector<8x1xi1> to vector<8x1xi1>
    %92 = vector.broadcast %91 : vector<8x1xi1> to vector<8x128xi1>
    %93 = arith.select %92, %79, %5 : vector<8x128xi1>, vector<8x128xf32>
    %94 = arith.maximumf %9, %87 : vector<8x128xf32>
    %c7_i32 = arith.constant 7 : i32
    %95 = arith.subi %c7_i32, %13 : i32
    %c7 = arith.constant 7 : index
    %c0_64 = arith.constant 0 : index
    %c0_65 = arith.constant 0 : index
    %96 = vector.load %arg3[%c7, %c0_64, %c0_65] : memref<8x8x128xbf16, #tpu.memory_space<vmem>>, vector<1x8x128xbf16>
    %97 = vector.shape_cast %96 : vector<1x8x128xbf16> to vector<8x128xbf16>
    %98 = arith.truncf %6 : vector<8x128xf32> to vector<8x128xbf16>
    %c0_66 = arith.constant 0 : index
    %c0_67 = arith.constant 0 : index
    %c0_68 = arith.constant 0 : index
    %99 = vector.load %arg9[%c0_66, %c0_67, %c0_68] : memref<4x1x128xf32, #tpu.memory_space<vmem>>, vector<1x1x128xf32>
    %100 = vector.shape_cast %99 : vector<1x1x128xf32> to vector<1x128xf32>
    %c0_69 = arith.constant 0 : index
    %c0_70 = arith.constant 0 : index
    %c0_71 = arith.constant 0 : index
    %101 = vector.load %arg5[%c0_69, %c0_70, %c0_71] : memref<4x128x128xbf16, #tpu.memory_space<vmem>>, vector<1x128x128xbf16>
    %102 = vector.shape_cast %101 : vector<1x128x128xbf16> to vector<128x128xbf16>
    %cst_72 = arith.constant dense<0.000000e+00> : vector<8x128xf32>
    %103 = tpu.matmul %97, %102, %cst_72 {dimension_numbers = #tpu.dot_dimension_numbers<[1], [0], [0], [1], [0, 0, 1, 1], [], []>} : vector<8x128xbf16>, vector<128x128xbf16>, vector<8x128xf32> -> vector<8x128xf32>
    %104 = vector.broadcast %100 : vector<1x128xf32> to vector<8x128xf32>
    %105 = arith.addf %104, %103 : vector<8x128xf32>
    %c0_73 = arith.constant 0 : index
    %c0_74 = arith.constant 0 : index
    %c0_75 = arith.constant 0 : index
    %106 = vector.load %arg7[%c0_73, %c0_74, %c0_75] : memref<4x128x128xbf16, #tpu.memory_space<vmem>>, vector<1x128x128xbf16>
    %107 = vector.shape_cast %106 : vector<1x128x128xbf16> to vector<128x128xbf16>
    %cst_76 = arith.constant dense<0.000000e+00> : vector<8x128xf32>
    %108 = tpu.matmul %98, %107, %cst_76 {dimension_numbers = #tpu.dot_dimension_numbers<[1], [0], [0], [1], [0, 0, 1, 1], [], []>} : vector<8x128xbf16>, vector<128x128xbf16>, vector<8x128xf32> -> vector<8x128xf32>
    %109 = arith.addf %105, %108 : vector<8x128xf32>
    %110 = arith.negf %109 : vector<8x128xf32>
    %111 = math.exp %110 : vector<8x128xf32>
    %cst_77 = arith.constant 1.000000e+00 : f32
    %112 = vector.broadcast %cst_77 : f32 to vector<8x128xf32>
    %113 = arith.addf %112, %111 : vector<8x128xf32>
    %114 = arith.divf %112, %113 : vector<8x128xf32>
    %c1_78 = arith.constant 1 : index
    %c0_79 = arith.constant 0 : index
    %c0_80 = arith.constant 0 : index
    %115 = vector.load %arg9[%c1_78, %c0_79, %c0_80] : memref<4x1x128xf32, #tpu.memory_space<vmem>>, vector<1x1x128xf32>
    %116 = vector.shape_cast %115 : vector<1x1x128xf32> to vector<1x128xf32>
    %c1_81 = arith.constant 1 : index
    %c0_82 = arith.constant 0 : index
    %c0_83 = arith.constant 0 : index
    %117 = vector.load %arg5[%c1_81, %c0_82, %c0_83] : memref<4x128x128xbf16, #tpu.memory_space<vmem>>, vector<1x128x128xbf16>
    %118 = vector.shape_cast %117 : vector<1x128x128xbf16> to vector<128x128xbf16>
    %cst_84 = arith.constant dense<0.000000e+00> : vector<8x128xf32>
    %119 = tpu.matmul %97, %118, %cst_84 {dimension_numbers = #tpu.dot_dimension_numbers<[1], [0], [0], [1], [0, 0, 1, 1], [], []>} : vector<8x128xbf16>, vector<128x128xbf16>, vector<8x128xf32> -> vector<8x128xf32>
    %120 = vector.broadcast %116 : vector<1x128xf32> to vector<8x128xf32>
    %121 = arith.addf %120, %119 : vector<8x128xf32>
    %c1_85 = arith.constant 1 : index
    %c0_86 = arith.constant 0 : index
    %c0_87 = arith.constant 0 : index
    %122 = vector.load %arg7[%c1_85, %c0_86, %c0_87] : memref<4x128x128xbf16, #tpu.memory_space<vmem>>, vector<1x128x128xbf16>
    %123 = vector.shape_cast %122 : vector<1x128x128xbf16> to vector<128x128xbf16>
    %cst_88 = arith.constant dense<0.000000e+00> : vector<8x128xf32>
    %124 = tpu.matmul %98, %123, %cst_88 {dimension_numbers = #tpu.dot_dimension_numbers<[1], [0], [0], [1], [0, 0, 1, 1], [], []>} : vector<8x128xbf16>, vector<128x128xbf16>, vector<8x128xf32> -> vector<8x128xf32>
    %125 = arith.addf %121, %124 : vector<8x128xf32>
    %126 = arith.negf %125 : vector<8x128xf32>
    %127 = math.exp %126 : vector<8x128xf32>
    %cst_89 = arith.constant 1.000000e+00 : f32
    %128 = vector.broadcast %cst_89 : f32 to vector<8x128xf32>
    %129 = arith.addf %128, %127 : vector<8x128xf32>
    %130 = arith.divf %128, %129 : vector<8x128xf32>
    %c2_90 = arith.constant 2 : index
    %c0_91 = arith.constant 0 : index
    %c0_92 = arith.constant 0 : index
    %131 = vector.load %arg9[%c2_90, %c0_91, %c0_92] : memref<4x1x128xf32, #tpu.memory_space<vmem>>, vector<1x1x128xf32>
    %132 = vector.shape_cast %131 : vector<1x1x128xf32> to vector<1x128xf32>
    %c2_93 = arith.constant 2 : index
    %c0_94 = arith.constant 0 : index
    %c0_95 = arith.constant 0 : index
    %133 = vector.load %arg5[%c2_93, %c0_94, %c0_95] : memref<4x128x128xbf16, #tpu.memory_space<vmem>>, vector<1x128x128xbf16>
    %134 = vector.shape_cast %133 : vector<1x128x128xbf16> to vector<128x128xbf16>
    %cst_96 = arith.constant dense<0.000000e+00> : vector<8x128xf32>
    %135 = tpu.matmul %97, %134, %cst_96 {dimension_numbers = #tpu.dot_dimension_numbers<[1], [0], [0], [1], [0, 0, 1, 1], [], []>} : vector<8x128xbf16>, vector<128x128xbf16>, vector<8x128xf32> -> vector<8x128xf32>
    %136 = vector.broadcast %132 : vector<1x128xf32> to vector<8x128xf32>
    %137 = arith.addf %136, %135 : vector<8x128xf32>
    %c2_97 = arith.constant 2 : index
    %c0_98 = arith.constant 0 : index
    %c0_99 = arith.constant 0 : index
    %138 = vector.load %arg7[%c2_97, %c0_98, %c0_99] : memref<4x128x128xbf16, #tpu.memory_space<vmem>>, vector<1x128x128xbf16>
    %139 = vector.shape_cast %138 : vector<1x128x128xbf16> to vector<128x128xbf16>
    %cst_100 = arith.constant dense<0.000000e+00> : vector<8x128xf32>
    %140 = tpu.matmul %98, %139, %cst_100 {dimension_numbers = #tpu.dot_dimension_numbers<[1], [0], [0], [1], [0, 0, 1, 1], [], []>} : vector<8x128xbf16>, vector<128x128xbf16>, vector<8x128xf32> -> vector<8x128xf32>
    %141 = arith.addf %137, %140 : vector<8x128xf32>
    %142 = math.tanh %141 : vector<8x128xf32>
    %c3_101 = arith.constant 3 : index
    %c0_102 = arith.constant 0 : index
    %c0_103 = arith.constant 0 : index
    %143 = vector.load %arg9[%c3_101, %c0_102, %c0_103] : memref<4x1x128xf32, #tpu.memory_space<vmem>>, vector<1x1x128xf32>
    %144 = vector.shape_cast %143 : vector<1x1x128xf32> to vector<1x128xf32>
    %c3_104 = arith.constant 3 : index
    %c0_105 = arith.constant 0 : index
    %c0_106 = arith.constant 0 : index
    %145 = vector.load %arg5[%c3_104, %c0_105, %c0_106] : memref<4x128x128xbf16, #tpu.memory_space<vmem>>, vector<1x128x128xbf16>
    %146 = vector.shape_cast %145 : vector<1x128x128xbf16> to vector<128x128xbf16>
    %cst_107 = arith.constant dense<0.000000e+00> : vector<8x128xf32>
    %147 = tpu.matmul %97, %146, %cst_107 {dimension_numbers = #tpu.dot_dimension_numbers<[1], [0], [0], [1], [0, 0, 1, 1], [], []>} : vector<8x128xbf16>, vector<128x128xbf16>, vector<8x128xf32> -> vector<8x128xf32>
    %148 = vector.broadcast %144 : vector<1x128xf32> to vector<8x128xf32>
    %149 = arith.addf %148, %147 : vector<8x128xf32>
    %c3_108 = arith.constant 3 : index
    %c0_109 = arith.constant 0 : index
    %c0_110 = arith.constant 0 : index
    %150 = vector.load %arg7[%c3_108, %c0_109, %c0_110] : memref<4x128x128xbf16, #tpu.memory_space<vmem>>, vector<1x128x128xbf16>
    %151 = vector.shape_cast %150 : vector<1x128x128xbf16> to vector<128x128xbf16>
    %cst_111 = arith.constant dense<0.000000e+00> : vector<8x128xf32>
    %152 = tpu.matmul %98, %151, %cst_111 {dimension_numbers = #tpu.dot_dimension_numbers<[1], [0], [0], [1], [0, 0, 1, 1], [], []>} : vector<8x128xbf16>, vector<128x128xbf16>, vector<8x128xf32> -> vector<8x128xf32>
    %153 = arith.addf %149, %152 : vector<8x128xf32>
    %154 = arith.negf %153 : vector<8x128xf32>
    %155 = math.exp %154 : vector<8x128xf32>
    %cst_112 = arith.constant 1.000000e+00 : f32
    %156 = vector.broadcast %cst_112 : f32 to vector<8x128xf32>
    %157 = arith.addf %156, %155 : vector<8x128xf32>
    %158 = arith.divf %156, %157 : vector<8x128xf32>
    %159 = arith.mulf %130, %7 : vector<8x128xf32>
    %160 = arith.mulf %114, %142 : vector<8x128xf32>
    %161 = arith.addf %159, %160 : vector<8x128xf32>
    %162 = math.tanh %161 : vector<8x128xf32>
    %163 = arith.mulf %158, %162 : vector<8x128xf32>
    %164 = vector.broadcast %95 : i32 to vector<8x1xi32>
    %165 = arith.cmpi sgt, %3, %164 : vector<8x1xi32>
    %cst_113 = arith.constant -3.000000e+38 : f32
    %166 = vector.shape_cast %165 : vector<8x1xi1> to vector<8x1xi1>
    %167 = vector.broadcast %166 : vector<8x1xi1> to vector<8x128xi1>
    %168 = vector.broadcast %cst_113 : f32 to vector<8x128xf32>
    %169 = arith.select %167, %163, %168 : vector<8x128xi1>, vector<8x128xf32>
    %170 = vector.shape_cast %165 : vector<8x1xi1> to vector<8x1xi1>
    %171 = vector.broadcast %170 : vector<8x1xi1> to vector<8x128xi1>
    %172 = arith.select %171, %163, %6 : vector<8x128xi1>, vector<8x128xf32>
    %173 = vector.shape_cast %165 : vector<8x1xi1> to vector<8x1xi1>
    %174 = vector.broadcast %173 : vector<8x1xi1> to vector<8x128xi1>
    %175 = arith.select %174, %161, %7 : vector<8x128xi1>, vector<8x128xf32>
    %176 = arith.maximumf %11, %169 : vector<8x128xf32>
    %c8_i32_114 = arith.constant 8 : i32
    %177 = arith.muli %arg1, %c8_i32_114 : i32
    %c1_i32 = arith.constant 1 : i32
    %178 = arith.addi %177, %c1_i32 : i32
    %c1_115 = arith.constant 1 : index
    %c0_116 = arith.constant 0 : index
    %c0_117 = arith.constant 0 : index
    %179 = vector.load %arg2[%c1_115, %c0_116, %c0_117] : memref<8x8x128xbf16, #tpu.memory_space<vmem>>, vector<1x8x128xbf16>
    %180 = vector.shape_cast %179 : vector<1x8x128xbf16> to vector<8x128xbf16>
    %181 = arith.truncf %90 : vector<8x128xf32> to vector<8x128xbf16>
    %c0_118 = arith.constant 0 : index
    %c0_119 = arith.constant 0 : index
    %c0_120 = arith.constant 0 : index
    %182 = vector.load %arg8[%c0_118, %c0_119, %c0_120] : memref<4x1x128xf32, #tpu.memory_space<vmem>>, vector<1x1x128xf32>
    %183 = vector.shape_cast %182 : vector<1x1x128xf32> to vector<1x128xf32>
    %c0_121 = arith.constant 0 : index
    %c0_122 = arith.constant 0 : index
    %c0_123 = arith.constant 0 : index
    %184 = vector.load %arg4[%c0_121, %c0_122, %c0_123] : memref<4x128x128xbf16, #tpu.memory_space<vmem>>, vector<1x128x128xbf16>
    %185 = vector.shape_cast %184 : vector<1x128x128xbf16> to vector<128x128xbf16>
    %cst_124 = arith.constant dense<0.000000e+00> : vector<8x128xf32>
    %186 = tpu.matmul %180, %185, %cst_124 {dimension_numbers = #tpu.dot_dimension_numbers<[1], [0], [0], [1], [0, 0, 1, 1], [], []>} : vector<8x128xbf16>, vector<128x128xbf16>, vector<8x128xf32> -> vector<8x128xf32>
    %187 = vector.broadcast %183 : vector<1x128xf32> to vector<8x128xf32>
    %188 = arith.addf %187, %186 : vector<8x128xf32>
    %c0_125 = arith.constant 0 : index
    %c0_126 = arith.constant 0 : index
    %c0_127 = arith.constant 0 : index
    %189 = vector.load %arg6[%c0_125, %c0_126, %c0_127] : memref<4x128x128xbf16, #tpu.memory_space<vmem>>, vector<1x128x128xbf16>
    %190 = vector.shape_cast %189 : vector<1x128x128xbf16> to vector<128x128xbf16>
    %cst_128 = arith.constant dense<0.000000e+00> : vector<8x128xf32>
    %191 = tpu.matmul %181, %190, %cst_128 {dimension_numbers = #tpu.dot_dimension_numbers<[1], [0], [0], [1], [0, 0, 1, 1], [], []>} : vector<8x128xbf16>, vector<128x128xbf16>, vector<8x128xf32> -> vector<8x128xf32>
    %192 = arith.addf %188, %191 : vector<8x128xf32>
    %193 = arith.negf %192 : vector<8x128xf32>
    %194 = math.exp %193 : vector<8x128xf32>
    %cst_129 = arith.constant 1.000000e+00 : f32
    %195 = vector.broadcast %cst_129 : f32 to vector<8x128xf32>
    %196 = arith.addf %195, %194 : vector<8x128xf32>
    %197 = arith.divf %195, %196 : vector<8x128xf32>
    %c1_130 = arith.constant 1 : index
    %c0_131 = arith.constant 0 : index
    %c0_132 = arith.constant 0 : index
    %198 = vector.load %arg8[%c1_130, %c0_131, %c0_132] : memref<4x1x128xf32, #tpu.memory_space<vmem>>, vector<1x1x128xf32>
    %199 = vector.shape_cast %198 : vector<1x1x128xf32> to vector<1x128xf32>
    %c1_133 = arith.constant 1 : index
    %c0_134 = arith.constant 0 : index
    %c0_135 = arith.constant 0 : index
    %200 = vector.load %arg4[%c1_133, %c0_134, %c0_135] : memref<4x128x128xbf16, #tpu.memory_space<vmem>>, vector<1x128x128xbf16>
    %201 = vector.shape_cast %200 : vector<1x128x128xbf16> to vector<128x128xbf16>
    %cst_136 = arith.constant dense<0.000000e+00> : vector<8x128xf32>
    %202 = tpu.matmul %180, %201, %cst_136 {dimension_numbers = #tpu.dot_dimension_numbers<[1], [0], [0], [1], [0, 0, 1, 1], [], []>} : vector<8x128xbf16>, vector<128x128xbf16>, vector<8x128xf32> -> vector<8x128xf32>
    %203 = vector.broadcast %199 : vector<1x128xf32> to vector<8x128xf32>
    %204 = arith.addf %203, %202 : vector<8x128xf32>
    %c1_137 = arith.constant 1 : index
    %c0_138 = arith.constant 0 : index
    %c0_139 = arith.constant 0 : index
    %205 = vector.load %arg6[%c1_137, %c0_138, %c0_139] : memref<4x128x128xbf16, #tpu.memory_space<vmem>>, vector<1x128x128xbf16>
    %206 = vector.shape_cast %205 : vector<1x128x128xbf16> to vector<128x128xbf16>
    %cst_140 = arith.constant dense<0.000000e+00> : vector<8x128xf32>
    %207 = tpu.matmul %181, %206, %cst_140 {dimension_numbers = #tpu.dot_dimension_numbers<[1], [0], [0], [1], [0, 0, 1, 1], [], []>} : vector<8x128xbf16>, vector<128x128xbf16>, vector<8x128xf32> -> vector<8x128xf32>
    %208 = arith.addf %204, %207 : vector<8x128xf32>
    %209 = arith.negf %208 : vector<8x128xf32>
    %210 = math.exp %209 : vector<8x128xf32>
    %cst_141 = arith.constant 1.000000e+00 : f32
    %211 = vector.broadcast %cst_141 : f32 to vector<8x128xf32>
    %212 = arith.addf %211, %210 : vector<8x128xf32>
    %213 = arith.divf %211, %212 : vector<8x128xf32>
    %c2_142 = arith.constant 2 : index
    %c0_143 = arith.constant 0 : index
    %c0_144 = arith.constant 0 : index
    %214 = vector.load %arg8[%c2_142, %c0_143, %c0_144] : memref<4x1x128xf32, #tpu.memory_space<vmem>>, vector<1x1x128xf32>
    %215 = vector.shape_cast %214 : vector<1x1x128xf32> to vector<1x128xf32>
    %c2_145 = arith.constant 2 : index
    %c0_146 = arith.constant 0 : index
    %c0_147 = arith.constant 0 : index
    %216 = vector.load %arg4[%c2_145, %c0_146, %c0_147] : memref<4x128x128xbf16, #tpu.memory_space<vmem>>, vector<1x128x128xbf16>
    %217 = vector.shape_cast %216 : vector<1x128x128xbf16> to vector<128x128xbf16>
    %cst_148 = arith.constant dense<0.000000e+00> : vector<8x128xf32>
    %218 = tpu.matmul %180, %217, %cst_148 {dimension_numbers = #tpu.dot_dimension_numbers<[1], [0], [0], [1], [0, 0, 1, 1], [], []>} : vector<8x128xbf16>, vector<128x128xbf16>, vector<8x128xf32> -> vector<8x128xf32>
    %219 = vector.broadcast %215 : vector<1x128xf32> to vector<8x128xf32>
    %220 = arith.addf %219, %218 : vector<8x128xf32>
    %c2_149 = arith.constant 2 : index
    %c0_150 = arith.constant 0 : index
    %c0_151 = arith.constant 0 : index
    %221 = vector.load %arg6[%c2_149, %c0_150, %c0_151] : memref<4x128x128xbf16, #tpu.memory_space<vmem>>, vector<1x128x128xbf16>
    %222 = vector.shape_cast %221 : vector<1x128x128xbf16> to vector<128x128xbf16>
    %cst_152 = arith.constant dense<0.000000e+00> : vector<8x128xf32>
    %223 = tpu.matmul %181, %222, %cst_152 {dimension_numbers = #tpu.dot_dimension_numbers<[1], [0], [0], [1], [0, 0, 1, 1], [], []>} : vector<8x128xbf16>, vector<128x128xbf16>, vector<8x128xf32> -> vector<8x128xf32>
    %224 = arith.addf %220, %223 : vector<8x128xf32>
    %225 = math.tanh %224 : vector<8x128xf32>
    %c3_153 = arith.constant 3 : index
    %c0_154 = arith.constant 0 : index
    %c0_155 = arith.constant 0 : index
    %226 = vector.load %arg8[%c3_153, %c0_154, %c0_155] : memref<4x1x128xf32, #tpu.memory_space<vmem>>, vector<1x1x128xf32>
    %227 = vector.shape_cast %226 : vector<1x1x128xf32> to vector<1x128xf32>
    %c3_156 = arith.constant 3 : index
    %c0_157 = arith.constant 0 : index
    %c0_158 = arith.constant 0 : index
    %228 = vector.load %arg4[%c3_156, %c0_157, %c0_158] : memref<4x128x128xbf16, #tpu.memory_space<vmem>>, vector<1x128x128xbf16>
    %229 = vector.shape_cast %228 : vector<1x128x128xbf16> to vector<128x128xbf16>
    %cst_159 = arith.constant dense<0.000000e+00> : vector<8x128xf32>
    %230 = tpu.matmul %180, %229, %cst_159 {dimension_numbers = #tpu.dot_dimension_numbers<[1], [0], [0], [1], [0, 0, 1, 1], [], []>} : vector<8x128xbf16>, vector<128x128xbf16>, vector<8x128xf32> -> vector<8x128xf32>
    %231 = vector.broadcast %227 : vector<1x128xf32> to vector<8x128xf32>
    %232 = arith.addf %231, %230 : vector<8x128xf32>
    %c3_160 = arith.constant 3 : index
    %c0_161 = arith.constant 0 : index
    %c0_162 = arith.constant 0 : index
    %233 = vector.load %arg6[%c3_160, %c0_161, %c0_162] : memref<4x128x128xbf16, #tpu.memory_space<vmem>>, vector<1x128x128xbf16>
    %234 = vector.shape_cast %233 : vector<1x128x128xbf16> to vector<128x128xbf16>
    %cst_163 = arith.constant dense<0.000000e+00> : vector<8x128xf32>
    %235 = tpu.matmul %181, %234, %cst_163 {dimension_numbers = #tpu.dot_dimension_numbers<[1], [0], [0], [1], [0, 0, 1, 1], [], []>} : vector<8x128xbf16>, vector<128x128xbf16>, vector<8x128xf32> -> vector<8x128xf32>
    %236 = arith.addf %232, %235 : vector<8x128xf32>
    %237 = arith.negf %236 : vector<8x128xf32>
    %238 = math.exp %237 : vector<8x128xf32>
    %cst_164 = arith.constant 1.000000e+00 : f32
    %239 = vector.broadcast %cst_164 : f32 to vector<8x128xf32>
    %240 = arith.addf %239, %238 : vector<8x128xf32>
    %241 = arith.divf %239, %240 : vector<8x128xf32>
    %242 = arith.mulf %213, %93 : vector<8x128xf32>
    %243 = arith.mulf %197, %225 : vector<8x128xf32>
    %244 = arith.addf %242, %243 : vector<8x128xf32>
    %245 = math.tanh %244 : vector<8x128xf32>
    %246 = arith.mulf %241, %245 : vector<8x128xf32>
    %247 = vector.broadcast %178 : i32 to vector<8x1xi32>
    %248 = arith.cmpi sgt, %3, %247 : vector<8x1xi32>
    %cst_165 = arith.constant -3.000000e+38 : f32
    %249 = vector.shape_cast %248 : vector<8x1xi1> to vector<8x1xi1>
    %250 = vector.broadcast %249 : vector<8x1xi1> to vector<8x128xi1>
    %251 = vector.broadcast %cst_165 : f32 to vector<8x128xf32>
    %252 = arith.select %250, %246, %251 : vector<8x128xi1>, vector<8x128xf32>
    %253 = vector.shape_cast %248 : vector<8x1xi1> to vector<8x1xi1>
    %254 = vector.broadcast %253 : vector<8x1xi1> to vector<8x128xi1>
    %255 = arith.select %254, %246, %90 : vector<8x128xi1>, vector<8x128xf32>
    %256 = vector.shape_cast %248 : vector<8x1xi1> to vector<8x1xi1>
    %257 = vector.broadcast %256 : vector<8x1xi1> to vector<8x128xi1>
    %258 = arith.select %257, %244, %93 : vector<8x128xi1>, vector<8x128xf32>
    %259 = arith.maximumf %94, %252 : vector<8x128xf32>
    %c7_i32_166 = arith.constant 7 : i32
    %260 = arith.subi %c7_i32_166, %178 : i32
    %c6 = arith.constant 6 : index
    %c0_167 = arith.constant 0 : index
    %c0_168 = arith.constant 0 : index
    %261 = vector.load %arg3[%c6, %c0_167, %c0_168] : memref<8x8x128xbf16, #tpu.memory_space<vmem>>, vector<1x8x128xbf16>
    %262 = vector.shape_cast %261 : vector<1x8x128xbf16> to vector<8x128xbf16>
    %263 = arith.truncf %172 : vector<8x128xf32> to vector<8x128xbf16>
    %c0_169 = arith.constant 0 : index
    %c0_170 = arith.constant 0 : index
    %c0_171 = arith.constant 0 : index
    %264 = vector.load %arg9[%c0_169, %c0_170, %c0_171] : memref<4x1x128xf32, #tpu.memory_space<vmem>>, vector<1x1x128xf32>
    %265 = vector.shape_cast %264 : vector<1x1x128xf32> to vector<1x128xf32>
    %c0_172 = arith.constant 0 : index
    %c0_173 = arith.constant 0 : index
    %c0_174 = arith.constant 0 : index
    %266 = vector.load %arg5[%c0_172, %c0_173, %c0_174] : memref<4x128x128xbf16, #tpu.memory_space<vmem>>, vector<1x128x128xbf16>
    %267 = vector.shape_cast %266 : vector<1x128x128xbf16> to vector<128x128xbf16>
    %cst_175 = arith.constant dense<0.000000e+00> : vector<8x128xf32>
    %268 = tpu.matmul %262, %267, %cst_175 {dimension_numbers = #tpu.dot_dimension_numbers<[1], [0], [0], [1], [0, 0, 1, 1], [], []>} : vector<8x128xbf16>, vector<128x128xbf16>, vector<8x128xf32> -> vector<8x128xf32>
    %269 = vector.broadcast %265 : vector<1x128xf32> to vector<8x128xf32>
    %270 = arith.addf %269, %268 : vector<8x128xf32>
    %c0_176 = arith.constant 0 : index
    %c0_177 = arith.constant 0 : index
    %c0_178 = arith.constant 0 : index
    %271 = vector.load %arg7[%c0_176, %c0_177, %c0_178] : memref<4x128x128xbf16, #tpu.memory_space<vmem>>, vector<1x128x128xbf16>
    %272 = vector.shape_cast %271 : vector<1x128x128xbf16> to vector<128x128xbf16>
    %cst_179 = arith.constant dense<0.000000e+00> : vector<8x128xf32>
    %273 = tpu.matmul %263, %272, %cst_179 {dimension_numbers = #tpu.dot_dimension_numbers<[1], [0], [0], [1], [0, 0, 1, 1], [], []>} : vector<8x128xbf16>, vector<128x128xbf16>, vector<8x128xf32> -> vector<8x128xf32>
    %274 = arith.addf %270, %273 : vector<8x128xf32>
    %275 = arith.negf %274 : vector<8x128xf32>
    %276 = math.exp %275 : vector<8x128xf32>
    %cst_180 = arith.constant 1.000000e+00 : f32
    %277 = vector.broadcast %cst_180 : f32 to vector<8x128xf32>
    %278 = arith.addf %277, %276 : vector<8x128xf32>
    %279 = arith.divf %277, %278 : vector<8x128xf32>
    %c1_181 = arith.constant 1 : index
    %c0_182 = arith.constant 0 : index
    %c0_183 = arith.constant 0 : index
    %280 = vector.load %arg9[%c1_181, %c0_182, %c0_183] : memref<4x1x128xf32, #tpu.memory_space<vmem>>, vector<1x1x128xf32>
    %281 = vector.shape_cast %280 : vector<1x1x128xf32> to vector<1x128xf32>
    %c1_184 = arith.constant 1 : index
    %c0_185 = arith.constant 0 : index
    %c0_186 = arith.constant 0 : index
    %282 = vector.load %arg5[%c1_184, %c0_185, %c0_186] : memref<4x128x128xbf16, #tpu.memory_space<vmem>>, vector<1x128x128xbf16>
    %283 = vector.shape_cast %282 : vector<1x128x128xbf16> to vector<128x128xbf16>
    %cst_187 = arith.constant dense<0.000000e+00> : vector<8x128xf32>
    %284 = tpu.matmul %262, %283, %cst_187 {dimension_numbers = #tpu.dot_dimension_numbers<[1], [0], [0], [1], [0, 0, 1, 1], [], []>} : vector<8x128xbf16>, vector<128x128xbf16>, vector<8x128xf32> -> vector<8x128xf32>
    %285 = vector.broadcast %281 : vector<1x128xf32> to vector<8x128xf32>
    %286 = arith.addf %285, %284 : vector<8x128xf32>
    %c1_188 = arith.constant 1 : index
    %c0_189 = arith.constant 0 : index
    %c0_190 = arith.constant 0 : index
    %287 = vector.load %arg7[%c1_188, %c0_189, %c0_190] : memref<4x128x128xbf16, #tpu.memory_space<vmem>>, vector<1x128x128xbf16>
    %288 = vector.shape_cast %287 : vector<1x128x128xbf16> to vector<128x128xbf16>
    %cst_191 = arith.constant dense<0.000000e+00> : vector<8x128xf32>
    %289 = tpu.matmul %263, %288, %cst_191 {dimension_numbers = #tpu.dot_dimension_numbers<[1], [0], [0], [1], [0, 0, 1, 1], [], []>} : vector<8x128xbf16>, vector<128x128xbf16>, vector<8x128xf32> -> vector<8x128xf32>
    %290 = arith.addf %286, %289 : vector<8x128xf32>
    %291 = arith.negf %290 : vector<8x128xf32>
    %292 = math.exp %291 : vector<8x128xf32>
    %cst_192 = arith.constant 1.000000e+00 : f32
    %293 = vector.broadcast %cst_192 : f32 to vector<8x128xf32>
    %294 = arith.addf %293, %292 : vector<8x128xf32>
    %295 = arith.divf %293, %294 : vector<8x128xf32>
    %c2_193 = arith.constant 2 : index
    %c0_194 = arith.constant 0 : index
    %c0_195 = arith.constant 0 : index
    %296 = vector.load %arg9[%c2_193, %c0_194, %c0_195] : memref<4x1x128xf32, #tpu.memory_space<vmem>>, vector<1x1x128xf32>
    %297 = vector.shape_cast %296 : vector<1x1x128xf32> to vector<1x128xf32>
    %c2_196 = arith.constant 2 : index
    %c0_197 = arith.constant 0 : index
    %c0_198 = arith.constant 0 : index
    %298 = vector.load %arg5[%c2_196, %c0_197, %c0_198] : memref<4x128x128xbf16, #tpu.memory_space<vmem>>, vector<1x128x128xbf16>
    %299 = vector.shape_cast %298 : vector<1x128x128xbf16> to vector<128x128xbf16>
    %cst_199 = arith.constant dense<0.000000e+00> : vector<8x128xf32>
    %300 = tpu.matmul %262, %299, %cst_199 {dimension_numbers = #tpu.dot_dimension_numbers<[1], [0], [0], [1], [0, 0, 1, 1], [], []>} : vector<8x128xbf16>, vector<128x128xbf16>, vector<8x128xf32> -> vector<8x128xf32>
    %301 = vector.broadcast %297 : vector<1x128xf32> to vector<8x128xf32>
    %302 = arith.addf %301, %300 : vector<8x128xf32>
    %c2_200 = arith.constant 2 : index
    %c0_201 = arith.constant 0 : index
    %c0_202 = arith.constant 0 : index
    %303 = vector.load %arg7[%c2_200, %c0_201, %c0_202] : memref<4x128x128xbf16, #tpu.memory_space<vmem>>, vector<1x128x128xbf16>
    %304 = vector.shape_cast %303 : vector<1x128x128xbf16> to vector<128x128xbf16>
    %cst_203 = arith.constant dense<0.000000e+00> : vector<8x128xf32>
    %305 = tpu.matmul %263, %304, %cst_203 {dimension_numbers = #tpu.dot_dimension_numbers<[1], [0], [0], [1], [0, 0, 1, 1], [], []>} : vector<8x128xbf16>, vector<128x128xbf16>, vector<8x128xf32> -> vector<8x128xf32>
    %306 = arith.addf %302, %305 : vector<8x128xf32>
    %307 = math.tanh %306 : vector<8x128xf32>
    %c3_204 = arith.constant 3 : index
    %c0_205 = arith.constant 0 : index
    %c0_206 = arith.constant 0 : index
    %308 = vector.load %arg9[%c3_204, %c0_205, %c0_206] : memref<4x1x128xf32, #tpu.memory_space<vmem>>, vector<1x1x128xf32>
    %309 = vector.shape_cast %308 : vector<1x1x128xf32> to vector<1x128xf32>
    %c3_207 = arith.constant 3 : index
    %c0_208 = arith.constant 0 : index
    %c0_209 = arith.constant 0 : index
    %310 = vector.load %arg5[%c3_207, %c0_208, %c0_209] : memref<4x128x128xbf16, #tpu.memory_space<vmem>>, vector<1x128x128xbf16>
    %311 = vector.shape_cast %310 : vector<1x128x128xbf16> to vector<128x128xbf16>
    %cst_210 = arith.constant dense<0.000000e+00> : vector<8x128xf32>
    %312 = tpu.matmul %262, %311, %cst_210 {dimension_numbers = #tpu.dot_dimension_numbers<[1], [0], [0], [1], [0, 0, 1, 1], [], []>} : vector<8x128xbf16>, vector<128x128xbf16>, vector<8x128xf32> -> vector<8x128xf32>
    %313 = vector.broadcast %309 : vector<1x128xf32> to vector<8x128xf32>
    %314 = arith.addf %313, %312 : vector<8x128xf32>
    %c3_211 = arith.constant 3 : index
    %c0_212 = arith.constant 0 : index
    %c0_213 = arith.constant 0 : index
    %315 = vector.load %arg7[%c3_211, %c0_212, %c0_213] : memref<4x128x128xbf16, #tpu.memory_space<vmem>>, vector<1x128x128xbf16>
    %316 = vector.shape_cast %315 : vector<1x128x128xbf16> to vector<128x128xbf16>
    %cst_214 = arith.constant dense<0.000000e+00> : vector<8x128xf32>
    %317 = tpu.matmul %263, %316, %cst_214 {dimension_numbers = #tpu.dot_dimension_numbers<[1], [0], [0], [1], [0, 0, 1, 1], [], []>} : vector<8x128xbf16>, vector<128x128xbf16>, vector<8x128xf32> -> vector<8x128xf32>
    %318 = arith.addf %314, %317 : vector<8x128xf32>
    %319 = arith.negf %318 : vector<8x128xf32>
    %320 = math.exp %319 : vector<8x128xf32>
    %cst_215 = arith.constant 1.000000e+00 : f32
    %321 = vector.broadcast %cst_215 : f32 to vector<8x128xf32>
    %322 = arith.addf %321, %320 : vector<8x128xf32>
    %323 = arith.divf %321, %322 : vector<8x128xf32>
    %324 = arith.mulf %295, %175 : vector<8x128xf32>
    %325 = arith.mulf %279, %307 : vector<8x128xf32>
    %326 = arith.addf %324, %325 : vector<8x128xf32>
    %327 = math.tanh %326 : vector<8x128xf32>
    %328 = arith.mulf %323, %327 : vector<8x128xf32>
    %329 = vector.broadcast %260 : i32 to vector<8x1xi32>
    %330 = arith.cmpi sgt, %3, %329 : vector<8x1xi32>
    %cst_216 = arith.constant -3.000000e+38 : f32
    %331 = vector.shape_cast %330 : vector<8x1xi1> to vector<8x1xi1>
    %332 = vector.broadcast %331 : vector<8x1xi1> to vector<8x128xi1>
    %333 = vector.broadcast %cst_216 : f32 to vector<8x128xf32>
    %334 = arith.select %332, %328, %333 : vector<8x128xi1>, vector<8x128xf32>
    %335 = vector.shape_cast %330 : vector<8x1xi1> to vector<8x1xi1>
    %336 = vector.broadcast %335 : vector<8x1xi1> to vector<8x128xi1>
    %337 = arith.select %336, %328, %172 : vector<8x128xi1>, vector<8x128xf32>
    %338 = vector.shape_cast %330 : vector<8x1xi1> to vector<8x1xi1>
    %339 = vector.broadcast %338 : vector<8x1xi1> to vector<8x128xi1>
    %340 = arith.select %339, %326, %175 : vector<8x128xi1>, vector<8x128xf32>
    %341 = arith.maximumf %176, %334 : vector<8x128xf32>
    %c8_i32_217 = arith.constant 8 : i32
    %342 = arith.muli %arg1, %c8_i32_217 : i32
    %c2_i32 = arith.constant 2 : i32
    %343 = arith.addi %342, %c2_i32 : i32
    %c2_218 = arith.constant 2 : index
    %c0_219 = arith.constant 0 : index
    %c0_220 = arith.constant 0 : index
    %344 = vector.load %arg2[%c2_218, %c0_219, %c0_220] : memref<8x8x128xbf16, #tpu.memory_space<vmem>>, vector<1x8x128xbf16>
    %345 = vector.shape_cast %344 : vector<1x8x128xbf16> to vector<8x128xbf16>
    %346 = arith.truncf %255 : vector<8x128xf32> to vector<8x128xbf16>
    %c0_221 = arith.constant 0 : index
    %c0_222 = arith.constant 0 : index
    %c0_223 = arith.constant 0 : index
    %347 = vector.load %arg8[%c0_221, %c0_222, %c0_223] : memref<4x1x128xf32, #tpu.memory_space<vmem>>, vector<1x1x128xf32>
    %348 = vector.shape_cast %347 : vector<1x1x128xf32> to vector<1x128xf32>
    %c0_224 = arith.constant 0 : index
    %c0_225 = arith.constant 0 : index
    %c0_226 = arith.constant 0 : index
    %349 = vector.load %arg4[%c0_224, %c0_225, %c0_226] : memref<4x128x128xbf16, #tpu.memory_space<vmem>>, vector<1x128x128xbf16>
    %350 = vector.shape_cast %349 : vector<1x128x128xbf16> to vector<128x128xbf16>
    %cst_227 = arith.constant dense<0.000000e+00> : vector<8x128xf32>
    %351 = tpu.matmul %345, %350, %cst_227 {dimension_numbers = #tpu.dot_dimension_numbers<[1], [0], [0], [1], [0, 0, 1, 1], [], []>} : vector<8x128xbf16>, vector<128x128xbf16>, vector<8x128xf32> -> vector<8x128xf32>
    %352 = vector.broadcast %348 : vector<1x128xf32> to vector<8x128xf32>
    %353 = arith.addf %352, %351 : vector<8x128xf32>
    %c0_228 = arith.constant 0 : index
    %c0_229 = arith.constant 0 : index
    %c0_230 = arith.constant 0 : index
    %354 = vector.load %arg6[%c0_228, %c0_229, %c0_230] : memref<4x128x128xbf16, #tpu.memory_space<vmem>>, vector<1x128x128xbf16>
    %355 = vector.shape_cast %354 : vector<1x128x128xbf16> to vector<128x128xbf16>
    %cst_231 = arith.constant dense<0.000000e+00> : vector<8x128xf32>
    %356 = tpu.matmul %346, %355, %cst_231 {dimension_numbers = #tpu.dot_dimension_numbers<[1], [0], [0], [1], [0, 0, 1, 1], [], []>} : vector<8x128xbf16>, vector<128x128xbf16>, vector<8x128xf32> -> vector<8x128xf32>
    %357 = arith.addf %353, %356 : vector<8x128xf32>
    %358 = arith.negf %357 : vector<8x128xf32>
    %359 = math.exp %358 : vector<8x128xf32>
    %cst_232 = arith.constant 1.000000e+00 : f32
    %360 = vector.broadcast %cst_232 : f32 to vector<8x128xf32>
    %361 = arith.addf %360, %359 : vector<8x128xf32>
    %362 = arith.divf %360, %361 : vector<8x128xf32>
    %c1_233 = arith.constant 1 : index
    %c0_234 = arith.constant 0 : index
    %c0_235 = arith.constant 0 : index
    %363 = vector.load %arg8[%c1_233, %c0_234, %c0_235] : memref<4x1x128xf32, #tpu.memory_space<vmem>>, vector<1x1x128xf32>
    %364 = vector.shape_cast %363 : vector<1x1x128xf32> to vector<1x128xf32>
    %c1_236 = arith.constant 1 : index
    %c0_237 = arith.constant 0 : index
    %c0_238 = arith.constant 0 : index
    %365 = vector.load %arg4[%c1_236, %c0_237, %c0_238] : memref<4x128x128xbf16, #tpu.memory_space<vmem>>, vector<1x128x128xbf16>
    %366 = vector.shape_cast %365 : vector<1x128x128xbf16> to vector<128x128xbf16>
    %cst_239 = arith.constant dense<0.000000e+00> : vector<8x128xf32>
    %367 = tpu.matmul %345, %366, %cst_239 {dimension_numbers = #tpu.dot_dimension_numbers<[1], [0], [0], [1], [0, 0, 1, 1], [], []>} : vector<8x128xbf16>, vector<128x128xbf16>, vector<8x128xf32> -> vector<8x128xf32>
    %368 = vector.broadcast %364 : vector<1x128xf32> to vector<8x128xf32>
    %369 = arith.addf %368, %367 : vector<8x128xf32>
    %c1_240 = arith.constant 1 : index
    %c0_241 = arith.constant 0 : index
    %c0_242 = arith.constant 0 : index
    %370 = vector.load %arg6[%c1_240, %c0_241, %c0_242] : memref<4x128x128xbf16, #tpu.memory_space<vmem>>, vector<1x128x128xbf16>
    %371 = vector.shape_cast %370 : vector<1x128x128xbf16> to vector<128x128xbf16>
    %cst_243 = arith.constant dense<0.000000e+00> : vector<8x128xf32>
    %372 = tpu.matmul %346, %371, %cst_243 {dimension_numbers = #tpu.dot_dimension_numbers<[1], [0], [0], [1], [0, 0, 1, 1], [], []>} : vector<8x128xbf16>, vector<128x128xbf16>, vector<8x128xf32> -> vector<8x128xf32>
    %373 = arith.addf %369, %372 : vector<8x128xf32>
    %374 = arith.negf %373 : vector<8x128xf32>
    %375 = math.exp %374 : vector<8x128xf32>
    %cst_244 = arith.constant 1.000000e+00 : f32
    %376 = vector.broadcast %cst_244 : f32 to vector<8x128xf32>
    %377 = arith.addf %376, %375 : vector<8x128xf32>
    %378 = arith.divf %376, %377 : vector<8x128xf32>
    %c2_245 = arith.constant 2 : index
    %c0_246 = arith.constant 0 : index
    %c0_247 = arith.constant 0 : index
    %379 = vector.load %arg8[%c2_245, %c0_246, %c0_247] : memref<4x1x128xf32, #tpu.memory_space<vmem>>, vector<1x1x128xf32>
    %380 = vector.shape_cast %379 : vector<1x1x128xf32> to vector<1x128xf32>
    %c2_248 = arith.constant 2 : index
    %c0_249 = arith.constant 0 : index
    %c0_250 = arith.constant 0 : index
    %381 = vector.load %arg4[%c2_248, %c0_249, %c0_250] : memref<4x128x128xbf16, #tpu.memory_space<vmem>>, vector<1x128x128xbf16>
    %382 = vector.shape_cast %381 : vector<1x128x128xbf16> to vector<128x128xbf16>
    %cst_251 = arith.constant dense<0.000000e+00> : vector<8x128xf32>
    %383 = tpu.matmul %345, %382, %cst_251 {dimension_numbers = #tpu.dot_dimension_numbers<[1], [0], [0], [1], [0, 0, 1, 1], [], []>} : vector<8x128xbf16>, vector<128x128xbf16>, vector<8x128xf32> -> vector<8x128xf32>
    %384 = vector.broadcast %380 : vector<1x128xf32> to vector<8x128xf32>
    %385 = arith.addf %384, %383 : vector<8x128xf32>
    %c2_252 = arith.constant 2 : index
    %c0_253 = arith.constant 0 : index
    %c0_254 = arith.constant 0 : index
    %386 = vector.load %arg6[%c2_252, %c0_253, %c0_254] : memref<4x128x128xbf16, #tpu.memory_space<vmem>>, vector<1x128x128xbf16>
    %387 = vector.shape_cast %386 : vector<1x128x128xbf16> to vector<128x128xbf16>
    %cst_255 = arith.constant dense<0.000000e+00> : vector<8x128xf32>
    %388 = tpu.matmul %346, %387, %cst_255 {dimension_numbers = #tpu.dot_dimension_numbers<[1], [0], [0], [1], [0, 0, 1, 1], [], []>} : vector<8x128xbf16>, vector<128x128xbf16>, vector<8x128xf32> -> vector<8x128xf32>
    %389 = arith.addf %385, %388 : vector<8x128xf32>
    %390 = math.tanh %389 : vector<8x128xf32>
    %c3_256 = arith.constant 3 : index
    %c0_257 = arith.constant 0 : index
    %c0_258 = arith.constant 0 : index
    %391 = vector.load %arg8[%c3_256, %c0_257, %c0_258] : memref<4x1x128xf32, #tpu.memory_space<vmem>>, vector<1x1x128xf32>
    %392 = vector.shape_cast %391 : vector<1x1x128xf32> to vector<1x128xf32>
    %c3_259 = arith.constant 3 : index
    %c0_260 = arith.constant 0 : index
    %c0_261 = arith.constant 0 : index
    %393 = vector.load %arg4[%c3_259, %c0_260, %c0_261] : memref<4x128x128xbf16, #tpu.memory_space<vmem>>, vector<1x128x128xbf16>
    %394 = vector.shape_cast %393 : vector<1x128x128xbf16> to vector<128x128xbf16>
    %cst_262 = arith.constant dense<0.000000e+00> : vector<8x128xf32>
    %395 = tpu.matmul %345, %394, %cst_262 {dimension_numbers = #tpu.dot_dimension_numbers<[1], [0], [0], [1], [0, 0, 1, 1], [], []>} : vector<8x128xbf16>, vector<128x128xbf16>, vector<8x128xf32> -> vector<8x128xf32>
    %396 = vector.broadcast %392 : vector<1x128xf32> to vector<8x128xf32>
    %397 = arith.addf %396, %395 : vector<8x128xf32>
    %c3_263 = arith.constant 3 : index
    %c0_264 = arith.constant 0 : index
    %c0_265 = arith.constant 0 : index
    %398 = vector.load %arg6[%c3_263, %c0_264, %c0_265] : memref<4x128x128xbf16, #tpu.memory_space<vmem>>, vector<1x128x128xbf16>
    %399 = vector.shape_cast %398 : vector<1x128x128xbf16> to vector<128x128xbf16>
    %cst_266 = arith.constant dense<0.000000e+00> : vector<8x128xf32>
    %400 = tpu.matmul %346, %399, %cst_266 {dimension_numbers = #tpu.dot_dimension_numbers<[1], [0], [0], [1], [0, 0, 1, 1], [], []>} : vector<8x128xbf16>, vector<128x128xbf16>, vector<8x128xf32> -> vector<8x128xf32>
    %401 = arith.addf %397, %400 : vector<8x128xf32>
    %402 = arith.negf %401 : vector<8x128xf32>
    %403 = math.exp %402 : vector<8x128xf32>
    %cst_267 = arith.constant 1.000000e+00 : f32
    %404 = vector.broadcast %cst_267 : f32 to vector<8x128xf32>
    %405 = arith.addf %404, %403 : vector<8x128xf32>
    %406 = arith.divf %404, %405 : vector<8x128xf32>
    %407 = arith.mulf %378, %258 : vector<8x128xf32>
    %408 = arith.mulf %362, %390 : vector<8x128xf32>
    %409 = arith.addf %407, %408 : vector<8x128xf32>
    %410 = math.tanh %409 : vector<8x128xf32>
    %411 = arith.mulf %406, %410 : vector<8x128xf32>
    %412 = vector.broadcast %343 : i32 to vector<8x1xi32>
    %413 = arith.cmpi sgt, %3, %412 : vector<8x1xi32>
    %cst_268 = arith.constant -3.000000e+38 : f32
    %414 = vector.shape_cast %413 : vector<8x1xi1> to vector<8x1xi1>
    %415 = vector.broadcast %414 : vector<8x1xi1> to vector<8x128xi1>
    %416 = vector.broadcast %cst_268 : f32 to vector<8x128xf32>
    %417 = arith.select %415, %411, %416 : vector<8x128xi1>, vector<8x128xf32>
    %418 = vector.shape_cast %413 : vector<8x1xi1> to vector<8x1xi1>
    %419 = vector.broadcast %418 : vector<8x1xi1> to vector<8x128xi1>
    %420 = arith.select %419, %411, %255 : vector<8x128xi1>, vector<8x128xf32>
    %421 = vector.shape_cast %413 : vector<8x1xi1> to vector<8x1xi1>
    %422 = vector.broadcast %421 : vector<8x1xi1> to vector<8x128xi1>
    %423 = arith.select %422, %409, %258 : vector<8x128xi1>, vector<8x128xf32>
    %424 = arith.maximumf %259, %417 : vector<8x128xf32>
    %c7_i32_269 = arith.constant 7 : i32
    %425 = arith.subi %c7_i32_269, %343 : i32
    %c5 = arith.constant 5 : index
    %c0_270 = arith.constant 0 : index
    %c0_271 = arith.constant 0 : index
    %426 = vector.load %arg3[%c5, %c0_270, %c0_271] : memref<8x8x128xbf16, #tpu.memory_space<vmem>>, vector<1x8x128xbf16>
    %427 = vector.shape_cast %426 : vector<1x8x128xbf16> to vector<8x128xbf16>
    %428 = arith.truncf %337 : vector<8x128xf32> to vector<8x128xbf16>
    %c0_272 = arith.constant 0 : index
    %c0_273 = arith.constant 0 : index
    %c0_274 = arith.constant 0 : index
    %429 = vector.load %arg9[%c0_272, %c0_273, %c0_274] : memref<4x1x128xf32, #tpu.memory_space<vmem>>, vector<1x1x128xf32>
    %430 = vector.shape_cast %429 : vector<1x1x128xf32> to vector<1x128xf32>
    %c0_275 = arith.constant 0 : index
    %c0_276 = arith.constant 0 : index
    %c0_277 = arith.constant 0 : index
    %431 = vector.load %arg5[%c0_275, %c0_276, %c0_277] : memref<4x128x128xbf16, #tpu.memory_space<vmem>>, vector<1x128x128xbf16>
    %432 = vector.shape_cast %431 : vector<1x128x128xbf16> to vector<128x128xbf16>
    %cst_278 = arith.constant dense<0.000000e+00> : vector<8x128xf32>
    %433 = tpu.matmul %427, %432, %cst_278 {dimension_numbers = #tpu.dot_dimension_numbers<[1], [0], [0], [1], [0, 0, 1, 1], [], []>} : vector<8x128xbf16>, vector<128x128xbf16>, vector<8x128xf32> -> vector<8x128xf32>
    %434 = vector.broadcast %430 : vector<1x128xf32> to vector<8x128xf32>
    %435 = arith.addf %434, %433 : vector<8x128xf32>
    %c0_279 = arith.constant 0 : index
    %c0_280 = arith.constant 0 : index
    %c0_281 = arith.constant 0 : index
    %436 = vector.load %arg7[%c0_279, %c0_280, %c0_281] : memref<4x128x128xbf16, #tpu.memory_space<vmem>>, vector<1x128x128xbf16>
    %437 = vector.shape_cast %436 : vector<1x128x128xbf16> to vector<128x128xbf16>
    %cst_282 = arith.constant dense<0.000000e+00> : vector<8x128xf32>
    %438 = tpu.matmul %428, %437, %cst_282 {dimension_numbers = #tpu.dot_dimension_numbers<[1], [0], [0], [1], [0, 0, 1, 1], [], []>} : vector<8x128xbf16>, vector<128x128xbf16>, vector<8x128xf32> -> vector<8x128xf32>
    %439 = arith.addf %435, %438 : vector<8x128xf32>
    %440 = arith.negf %439 : vector<8x128xf32>
    %441 = math.exp %440 : vector<8x128xf32>
    %cst_283 = arith.constant 1.000000e+00 : f32
    %442 = vector.broadcast %cst_283 : f32 to vector<8x128xf32>
    %443 = arith.addf %442, %441 : vector<8x128xf32>
    %444 = arith.divf %442, %443 : vector<8x128xf32>
    %c1_284 = arith.constant 1 : index
    %c0_285 = arith.constant 0 : index
    %c0_286 = arith.constant 0 : index
    %445 = vector.load %arg9[%c1_284, %c0_285, %c0_286] : memref<4x1x128xf32, #tpu.memory_space<vmem>>, vector<1x1x128xf32>
    %446 = vector.shape_cast %445 : vector<1x1x128xf32> to vector<1x128xf32>
    %c1_287 = arith.constant 1 : index
    %c0_288 = arith.constant 0 : index
    %c0_289 = arith.constant 0 : index
    %447 = vector.load %arg5[%c1_287, %c0_288, %c0_289] : memref<4x128x128xbf16, #tpu.memory_space<vmem>>, vector<1x128x128xbf16>
    %448 = vector.shape_cast %447 : vector<1x128x128xbf16> to vector<128x128xbf16>
    %cst_290 = arith.constant dense<0.000000e+00> : vector<8x128xf32>
    %449 = tpu.matmul %427, %448, %cst_290 {dimension_numbers = #tpu.dot_dimension_numbers<[1], [0], [0], [1], [0, 0, 1, 1], [], []>} : vector<8x128xbf16>, vector<128x128xbf16>, vector<8x128xf32> -> vector<8x128xf32>
    %450 = vector.broadcast %446 : vector<1x128xf32> to vector<8x128xf32>
    %451 = arith.addf %450, %449 : vector<8x128xf32>
    %c1_291 = arith.constant 1 : index
    %c0_292 = arith.constant 0 : index
    %c0_293 = arith.constant 0 : index
    %452 = vector.load %arg7[%c1_291, %c0_292, %c0_293] : memref<4x128x128xbf16, #tpu.memory_space<vmem>>, vector<1x128x128xbf16>
    %453 = vector.shape_cast %452 : vector<1x128x128xbf16> to vector<128x128xbf16>
    %cst_294 = arith.constant dense<0.000000e+00> : vector<8x128xf32>
    %454 = tpu.matmul %428, %453, %cst_294 {dimension_numbers = #tpu.dot_dimension_numbers<[1], [0], [0], [1], [0, 0, 1, 1], [], []>} : vector<8x128xbf16>, vector<128x128xbf16>, vector<8x128xf32> -> vector<8x128xf32>
    %455 = arith.addf %451, %454 : vector<8x128xf32>
    %456 = arith.negf %455 : vector<8x128xf32>
    %457 = math.exp %456 : vector<8x128xf32>
    %cst_295 = arith.constant 1.000000e+00 : f32
    %458 = vector.broadcast %cst_295 : f32 to vector<8x128xf32>
    %459 = arith.addf %458, %457 : vector<8x128xf32>
    %460 = arith.divf %458, %459 : vector<8x128xf32>
    %c2_296 = arith.constant 2 : index
    %c0_297 = arith.constant 0 : index
    %c0_298 = arith.constant 0 : index
    %461 = vector.load %arg9[%c2_296, %c0_297, %c0_298] : memref<4x1x128xf32, #tpu.memory_space<vmem>>, vector<1x1x128xf32>
    %462 = vector.shape_cast %461 : vector<1x1x128xf32> to vector<1x128xf32>
    %c2_299 = arith.constant 2 : index
    %c0_300 = arith.constant 0 : index
    %c0_301 = arith.constant 0 : index
    %463 = vector.load %arg5[%c2_299, %c0_300, %c0_301] : memref<4x128x128xbf16, #tpu.memory_space<vmem>>, vector<1x128x128xbf16>
    %464 = vector.shape_cast %463 : vector<1x128x128xbf16> to vector<128x128xbf16>
    %cst_302 = arith.constant dense<0.000000e+00> : vector<8x128xf32>
    %465 = tpu.matmul %427, %464, %cst_302 {dimension_numbers = #tpu.dot_dimension_numbers<[1], [0], [0], [1], [0, 0, 1, 1], [], []>} : vector<8x128xbf16>, vector<128x128xbf16>, vector<8x128xf32> -> vector<8x128xf32>
    %466 = vector.broadcast %462 : vector<1x128xf32> to vector<8x128xf32>
    %467 = arith.addf %466, %465 : vector<8x128xf32>
    %c2_303 = arith.constant 2 : index
    %c0_304 = arith.constant 0 : index
    %c0_305 = arith.constant 0 : index
    %468 = vector.load %arg7[%c2_303, %c0_304, %c0_305] : memref<4x128x128xbf16, #tpu.memory_space<vmem>>, vector<1x128x128xbf16>
    %469 = vector.shape_cast %468 : vector<1x128x128xbf16> to vector<128x128xbf16>
    %cst_306 = arith.constant dense<0.000000e+00> : vector<8x128xf32>
    %470 = tpu.matmul %428, %469, %cst_306 {dimension_numbers = #tpu.dot_dimension_numbers<[1], [0], [0], [1], [0, 0, 1, 1], [], []>} : vector<8x128xbf16>, vector<128x128xbf16>, vector<8x128xf32> -> vector<8x128xf32>
    %471 = arith.addf %467, %470 : vector<8x128xf32>
    %472 = math.tanh %471 : vector<8x128xf32>
    %c3_307 = arith.constant 3 : index
    %c0_308 = arith.constant 0 : index
    %c0_309 = arith.constant 0 : index
    %473 = vector.load %arg9[%c3_307, %c0_308, %c0_309] : memref<4x1x128xf32, #tpu.memory_space<vmem>>, vector<1x1x128xf32>
    %474 = vector.shape_cast %473 : vector<1x1x128xf32> to vector<1x128xf32>
    %c3_310 = arith.constant 3 : index
    %c0_311 = arith.constant 0 : index
    %c0_312 = arith.constant 0 : index
    %475 = vector.load %arg5[%c3_310, %c0_311, %c0_312] : memref<4x128x128xbf16, #tpu.memory_space<vmem>>, vector<1x128x128xbf16>
    %476 = vector.shape_cast %475 : vector<1x128x128xbf16> to vector<128x128xbf16>
    %cst_313 = arith.constant dense<0.000000e+00> : vector<8x128xf32>
    %477 = tpu.matmul %427, %476, %cst_313 {dimension_numbers = #tpu.dot_dimension_numbers<[1], [0], [0], [1], [0, 0, 1, 1], [], []>} : vector<8x128xbf16>, vector<128x128xbf16>, vector<8x128xf32> -> vector<8x128xf32>
    %478 = vector.broadcast %474 : vector<1x128xf32> to vector<8x128xf32>
    %479 = arith.addf %478, %477 : vector<8x128xf32>
    %c3_314 = arith.constant 3 : index
    %c0_315 = arith.constant 0 : index
    %c0_316 = arith.constant 0 : index
    %480 = vector.load %arg7[%c3_314, %c0_315, %c0_316] : memref<4x128x128xbf16, #tpu.memory_space<vmem>>, vector<1x128x128xbf16>
    %481 = vector.shape_cast %480 : vector<1x128x128xbf16> to vector<128x128xbf16>
    %cst_317 = arith.constant dense<0.000000e+00> : vector<8x128xf32>
    %482 = tpu.matmul %428, %481, %cst_317 {dimension_numbers = #tpu.dot_dimension_numbers<[1], [0], [0], [1], [0, 0, 1, 1], [], []>} : vector<8x128xbf16>, vector<128x128xbf16>, vector<8x128xf32> -> vector<8x128xf32>
    %483 = arith.addf %479, %482 : vector<8x128xf32>
    %484 = arith.negf %483 : vector<8x128xf32>
    %485 = math.exp %484 : vector<8x128xf32>
    %cst_318 = arith.constant 1.000000e+00 : f32
    %486 = vector.broadcast %cst_318 : f32 to vector<8x128xf32>
    %487 = arith.addf %486, %485 : vector<8x128xf32>
    %488 = arith.divf %486, %487 : vector<8x128xf32>
    %489 = arith.mulf %460, %340 : vector<8x128xf32>
    %490 = arith.mulf %444, %472 : vector<8x128xf32>
    %491 = arith.addf %489, %490 : vector<8x128xf32>
    %492 = math.tanh %491 : vector<8x128xf32>
    %493 = arith.mulf %488, %492 : vector<8x128xf32>
    %494 = vector.broadcast %425 : i32 to vector<8x1xi32>
    %495 = arith.cmpi sgt, %3, %494 : vector<8x1xi32>
    %cst_319 = arith.constant -3.000000e+38 : f32
    %496 = vector.shape_cast %495 : vector<8x1xi1> to vector<8x1xi1>
    %497 = vector.broadcast %496 : vector<8x1xi1> to vector<8x128xi1>
    %498 = vector.broadcast %cst_319 : f32 to vector<8x128xf32>
    %499 = arith.select %497, %493, %498 : vector<8x128xi1>, vector<8x128xf32>
    %500 = vector.shape_cast %495 : vector<8x1xi1> to vector<8x1xi1>
    %501 = vector.broadcast %500 : vector<8x1xi1> to vector<8x128xi1>
    %502 = arith.select %501, %493, %337 : vector<8x128xi1>, vector<8x128xf32>
    %503 = vector.shape_cast %495 : vector<8x1xi1> to vector<8x1xi1>
    %504 = vector.broadcast %503 : vector<8x1xi1> to vector<8x128xi1>
    %505 = arith.select %504, %491, %340 : vector<8x128xi1>, vector<8x128xf32>
    %506 = arith.maximumf %341, %499 : vector<8x128xf32>
    %c8_i32_320 = arith.constant 8 : i32
    %507 = arith.muli %arg1, %c8_i32_320 : i32
    %c3_i32 = arith.constant 3 : i32
    %508 = arith.addi %507, %c3_i32 : i32
    %c3_321 = arith.constant 3 : index
    %c0_322 = arith.constant 0 : index
    %c0_323 = arith.constant 0 : index
    %509 = vector.load %arg2[%c3_321, %c0_322, %c0_323] : memref<8x8x128xbf16, #tpu.memory_space<vmem>>, vector<1x8x128xbf16>
    %510 = vector.shape_cast %509 : vector<1x8x128xbf16> to vector<8x128xbf16>
    %511 = arith.truncf %420 : vector<8x128xf32> to vector<8x128xbf16>
    %c0_324 = arith.constant 0 : index
    %c0_325 = arith.constant 0 : index
    %c0_326 = arith.constant 0 : index
    %512 = vector.load %arg8[%c0_324, %c0_325, %c0_326] : memref<4x1x128xf32, #tpu.memory_space<vmem>>, vector<1x1x128xf32>
    %513 = vector.shape_cast %512 : vector<1x1x128xf32> to vector<1x128xf32>
    %c0_327 = arith.constant 0 : index
    %c0_328 = arith.constant 0 : index
    %c0_329 = arith.constant 0 : index
    %514 = vector.load %arg4[%c0_327, %c0_328, %c0_329] : memref<4x128x128xbf16, #tpu.memory_space<vmem>>, vector<1x128x128xbf16>
    %515 = vector.shape_cast %514 : vector<1x128x128xbf16> to vector<128x128xbf16>
    %cst_330 = arith.constant dense<0.000000e+00> : vector<8x128xf32>
    %516 = tpu.matmul %510, %515, %cst_330 {dimension_numbers = #tpu.dot_dimension_numbers<[1], [0], [0], [1], [0, 0, 1, 1], [], []>} : vector<8x128xbf16>, vector<128x128xbf16>, vector<8x128xf32> -> vector<8x128xf32>
    %517 = vector.broadcast %513 : vector<1x128xf32> to vector<8x128xf32>
    %518 = arith.addf %517, %516 : vector<8x128xf32>
    %c0_331 = arith.constant 0 : index
    %c0_332 = arith.constant 0 : index
    %c0_333 = arith.constant 0 : index
    %519 = vector.load %arg6[%c0_331, %c0_332, %c0_333] : memref<4x128x128xbf16, #tpu.memory_space<vmem>>, vector<1x128x128xbf16>
    %520 = vector.shape_cast %519 : vector<1x128x128xbf16> to vector<128x128xbf16>
    %cst_334 = arith.constant dense<0.000000e+00> : vector<8x128xf32>
    %521 = tpu.matmul %511, %520, %cst_334 {dimension_numbers = #tpu.dot_dimension_numbers<[1], [0], [0], [1], [0, 0, 1, 1], [], []>} : vector<8x128xbf16>, vector<128x128xbf16>, vector<8x128xf32> -> vector<8x128xf32>
    %522 = arith.addf %518, %521 : vector<8x128xf32>
    %523 = arith.negf %522 : vector<8x128xf32>
    %524 = math.exp %523 : vector<8x128xf32>
    %cst_335 = arith.constant 1.000000e+00 : f32
    %525 = vector.broadcast %cst_335 : f32 to vector<8x128xf32>
    %526 = arith.addf %525, %524 : vector<8x128xf32>
    %527 = arith.divf %525, %526 : vector<8x128xf32>
    %c1_336 = arith.constant 1 : index
    %c0_337 = arith.constant 0 : index
    %c0_338 = arith.constant 0 : index
    %528 = vector.load %arg8[%c1_336, %c0_337, %c0_338] : memref<4x1x128xf32, #tpu.memory_space<vmem>>, vector<1x1x128xf32>
    %529 = vector.shape_cast %528 : vector<1x1x128xf32> to vector<1x128xf32>
    %c1_339 = arith.constant 1 : index
    %c0_340 = arith.constant 0 : index
    %c0_341 = arith.constant 0 : index
    %530 = vector.load %arg4[%c1_339, %c0_340, %c0_341] : memref<4x128x128xbf16, #tpu.memory_space<vmem>>, vector<1x128x128xbf16>
    %531 = vector.shape_cast %530 : vector<1x128x128xbf16> to vector<128x128xbf16>
    %cst_342 = arith.constant dense<0.000000e+00> : vector<8x128xf32>
    %532 = tpu.matmul %510, %531, %cst_342 {dimension_numbers = #tpu.dot_dimension_numbers<[1], [0], [0], [1], [0, 0, 1, 1], [], []>} : vector<8x128xbf16>, vector<128x128xbf16>, vector<8x128xf32> -> vector<8x128xf32>
    %533 = vector.broadcast %529 : vector<1x128xf32> to vector<8x128xf32>
    %534 = arith.addf %533, %532 : vector<8x128xf32>
    %c1_343 = arith.constant 1 : index
    %c0_344 = arith.constant 0 : index
    %c0_345 = arith.constant 0 : index
    %535 = vector.load %arg6[%c1_343, %c0_344, %c0_345] : memref<4x128x128xbf16, #tpu.memory_space<vmem>>, vector<1x128x128xbf16>
    %536 = vector.shape_cast %535 : vector<1x128x128xbf16> to vector<128x128xbf16>
    %cst_346 = arith.constant dense<0.000000e+00> : vector<8x128xf32>
    %537 = tpu.matmul %511, %536, %cst_346 {dimension_numbers = #tpu.dot_dimension_numbers<[1], [0], [0], [1], [0, 0, 1, 1], [], []>} : vector<8x128xbf16>, vector<128x128xbf16>, vector<8x128xf32> -> vector<8x128xf32>
    %538 = arith.addf %534, %537 : vector<8x128xf32>
    %539 = arith.negf %538 : vector<8x128xf32>
    %540 = math.exp %539 : vector<8x128xf32>
    %cst_347 = arith.constant 1.000000e+00 : f32
    %541 = vector.broadcast %cst_347 : f32 to vector<8x128xf32>
    %542 = arith.addf %541, %540 : vector<8x128xf32>
    %543 = arith.divf %541, %542 : vector<8x128xf32>
    %c2_348 = arith.constant 2 : index
    %c0_349 = arith.constant 0 : index
    %c0_350 = arith.constant 0 : index
    %544 = vector.load %arg8[%c2_348, %c0_349, %c0_350] : memref<4x1x128xf32, #tpu.memory_space<vmem>>, vector<1x1x128xf32>
    %545 = vector.shape_cast %544 : vector<1x1x128xf32> to vector<1x128xf32>
    %c2_351 = arith.constant 2 : index
    %c0_352 = arith.constant 0 : index
    %c0_353 = arith.constant 0 : index
    %546 = vector.load %arg4[%c2_351, %c0_352, %c0_353] : memref<4x128x128xbf16, #tpu.memory_space<vmem>>, vector<1x128x128xbf16>
    %547 = vector.shape_cast %546 : vector<1x128x128xbf16> to vector<128x128xbf16>
    %cst_354 = arith.constant dense<0.000000e+00> : vector<8x128xf32>
    %548 = tpu.matmul %510, %547, %cst_354 {dimension_numbers = #tpu.dot_dimension_numbers<[1], [0], [0], [1], [0, 0, 1, 1], [], []>} : vector<8x128xbf16>, vector<128x128xbf16>, vector<8x128xf32> -> vector<8x128xf32>
    %549 = vector.broadcast %545 : vector<1x128xf32> to vector<8x128xf32>
    %550 = arith.addf %549, %548 : vector<8x128xf32>
    %c2_355 = arith.constant 2 : index
    %c0_356 = arith.constant 0 : index
    %c0_357 = arith.constant 0 : index
    %551 = vector.load %arg6[%c2_355, %c0_356, %c0_357] : memref<4x128x128xbf16, #tpu.memory_space<vmem>>, vector<1x128x128xbf16>
    %552 = vector.shape_cast %551 : vector<1x128x128xbf16> to vector<128x128xbf16>
    %cst_358 = arith.constant dense<0.000000e+00> : vector<8x128xf32>
    %553 = tpu.matmul %511, %552, %cst_358 {dimension_numbers = #tpu.dot_dimension_numbers<[1], [0], [0], [1], [0, 0, 1, 1], [], []>} : vector<8x128xbf16>, vector<128x128xbf16>, vector<8x128xf32> -> vector<8x128xf32>
    %554 = arith.addf %550, %553 : vector<8x128xf32>
    %555 = math.tanh %554 : vector<8x128xf32>
    %c3_359 = arith.constant 3 : index
    %c0_360 = arith.constant 0 : index
    %c0_361 = arith.constant 0 : index
    %556 = vector.load %arg8[%c3_359, %c0_360, %c0_361] : memref<4x1x128xf32, #tpu.memory_space<vmem>>, vector<1x1x128xf32>
    %557 = vector.shape_cast %556 : vector<1x1x128xf32> to vector<1x128xf32>
    %c3_362 = arith.constant 3 : index
    %c0_363 = arith.constant 0 : index
    %c0_364 = arith.constant 0 : index
    %558 = vector.load %arg4[%c3_362, %c0_363, %c0_364] : memref<4x128x128xbf16, #tpu.memory_space<vmem>>, vector<1x128x128xbf16>
    %559 = vector.shape_cast %558 : vector<1x128x128xbf16> to vector<128x128xbf16>
    %cst_365 = arith.constant dense<0.000000e+00> : vector<8x128xf32>
    %560 = tpu.matmul %510, %559, %cst_365 {dimension_numbers = #tpu.dot_dimension_numbers<[1], [0], [0], [1], [0, 0, 1, 1], [], []>} : vector<8x128xbf16>, vector<128x128xbf16>, vector<8x128xf32> -> vector<8x128xf32>
    %561 = vector.broadcast %557 : vector<1x128xf32> to vector<8x128xf32>
    %562 = arith.addf %561, %560 : vector<8x128xf32>
    %c3_366 = arith.constant 3 : index
    %c0_367 = arith.constant 0 : index
    %c0_368 = arith.constant 0 : index
    %563 = vector.load %arg6[%c3_366, %c0_367, %c0_368] : memref<4x128x128xbf16, #tpu.memory_space<vmem>>, vector<1x128x128xbf16>
    %564 = vector.shape_cast %563 : vector<1x128x128xbf16> to vector<128x128xbf16>
    %cst_369 = arith.constant dense<0.000000e+00> : vector<8x128xf32>
    %565 = tpu.matmul %511, %564, %cst_369 {dimension_numbers = #tpu.dot_dimension_numbers<[1], [0], [0], [1], [0, 0, 1, 1], [], []>} : vector<8x128xbf16>, vector<128x128xbf16>, vector<8x128xf32> -> vector<8x128xf32>
    %566 = arith.addf %562, %565 : vector<8x128xf32>
    %567 = arith.negf %566 : vector<8x128xf32>
    %568 = math.exp %567 : vector<8x128xf32>
    %cst_370 = arith.constant 1.000000e+00 : f32
    %569 = vector.broadcast %cst_370 : f32 to vector<8x128xf32>
    %570 = arith.addf %569, %568 : vector<8x128xf32>
    %571 = arith.divf %569, %570 : vector<8x128xf32>
    %572 = arith.mulf %543, %423 : vector<8x128xf32>
    %573 = arith.mulf %527, %555 : vector<8x128xf32>
    %574 = arith.addf %572, %573 : vector<8x128xf32>
    %575 = math.tanh %574 : vector<8x128xf32>
    %576 = arith.mulf %571, %575 : vector<8x128xf32>
    %577 = vector.broadcast %508 : i32 to vector<8x1xi32>
    %578 = arith.cmpi sgt, %3, %577 : vector<8x1xi32>
    %cst_371 = arith.constant -3.000000e+38 : f32
    %579 = vector.shape_cast %578 : vector<8x1xi1> to vector<8x1xi1>
    %580 = vector.broadcast %579 : vector<8x1xi1> to vector<8x128xi1>
    %581 = vector.broadcast %cst_371 : f32 to vector<8x128xf32>
    %582 = arith.select %580, %576, %581 : vector<8x128xi1>, vector<8x128xf32>
    %583 = vector.shape_cast %578 : vector<8x1xi1> to vector<8x1xi1>
    %584 = vector.broadcast %583 : vector<8x1xi1> to vector<8x128xi1>
    %585 = arith.select %584, %576, %420 : vector<8x128xi1>, vector<8x128xf32>
    %586 = vector.shape_cast %578 : vector<8x1xi1> to vector<8x1xi1>
    %587 = vector.broadcast %586 : vector<8x1xi1> to vector<8x128xi1>
    %588 = arith.select %587, %574, %423 : vector<8x128xi1>, vector<8x128xf32>
    %589 = arith.maximumf %424, %582 : vector<8x128xf32>
    %c7_i32_372 = arith.constant 7 : i32
    %590 = arith.subi %c7_i32_372, %508 : i32
    %c4 = arith.constant 4 : index
    %c0_373 = arith.constant 0 : index
    %c0_374 = arith.constant 0 : index
    %591 = vector.load %arg3[%c4, %c0_373, %c0_374] : memref<8x8x128xbf16, #tpu.memory_space<vmem>>, vector<1x8x128xbf16>
    %592 = vector.shape_cast %591 : vector<1x8x128xbf16> to vector<8x128xbf16>
    %593 = arith.truncf %502 : vector<8x128xf32> to vector<8x128xbf16>
    %c0_375 = arith.constant 0 : index
    %c0_376 = arith.constant 0 : index
    %c0_377 = arith.constant 0 : index
    %594 = vector.load %arg9[%c0_375, %c0_376, %c0_377] : memref<4x1x128xf32, #tpu.memory_space<vmem>>, vector<1x1x128xf32>
    %595 = vector.shape_cast %594 : vector<1x1x128xf32> to vector<1x128xf32>
    %c0_378 = arith.constant 0 : index
    %c0_379 = arith.constant 0 : index
    %c0_380 = arith.constant 0 : index
    %596 = vector.load %arg5[%c0_378, %c0_379, %c0_380] : memref<4x128x128xbf16, #tpu.memory_space<vmem>>, vector<1x128x128xbf16>
    %597 = vector.shape_cast %596 : vector<1x128x128xbf16> to vector<128x128xbf16>
    %cst_381 = arith.constant dense<0.000000e+00> : vector<8x128xf32>
    %598 = tpu.matmul %592, %597, %cst_381 {dimension_numbers = #tpu.dot_dimension_numbers<[1], [0], [0], [1], [0, 0, 1, 1], [], []>} : vector<8x128xbf16>, vector<128x128xbf16>, vector<8x128xf32> -> vector<8x128xf32>
    %599 = vector.broadcast %595 : vector<1x128xf32> to vector<8x128xf32>
    %600 = arith.addf %599, %598 : vector<8x128xf32>
    %c0_382 = arith.constant 0 : index
    %c0_383 = arith.constant 0 : index
    %c0_384 = arith.constant 0 : index
    %601 = vector.load %arg7[%c0_382, %c0_383, %c0_384] : memref<4x128x128xbf16, #tpu.memory_space<vmem>>, vector<1x128x128xbf16>
    %602 = vector.shape_cast %601 : vector<1x128x128xbf16> to vector<128x128xbf16>
    %cst_385 = arith.constant dense<0.000000e+00> : vector<8x128xf32>
    %603 = tpu.matmul %593, %602, %cst_385 {dimension_numbers = #tpu.dot_dimension_numbers<[1], [0], [0], [1], [0, 0, 1, 1], [], []>} : vector<8x128xbf16>, vector<128x128xbf16>, vector<8x128xf32> -> vector<8x128xf32>
    %604 = arith.addf %600, %603 : vector<8x128xf32>
    %605 = arith.negf %604 : vector<8x128xf32>
    %606 = math.exp %605 : vector<8x128xf32>
    %cst_386 = arith.constant 1.000000e+00 : f32
    %607 = vector.broadcast %cst_386 : f32 to vector<8x128xf32>
    %608 = arith.addf %607, %606 : vector<8x128xf32>
    %609 = arith.divf %607, %608 : vector<8x128xf32>
    %c1_387 = arith.constant 1 : index
    %c0_388 = arith.constant 0 : index
    %c0_389 = arith.constant 0 : index
    %610 = vector.load %arg9[%c1_387, %c0_388, %c0_389] : memref<4x1x128xf32, #tpu.memory_space<vmem>>, vector<1x1x128xf32>
    %611 = vector.shape_cast %610 : vector<1x1x128xf32> to vector<1x128xf32>
    %c1_390 = arith.constant 1 : index
    %c0_391 = arith.constant 0 : index
    %c0_392 = arith.constant 0 : index
    %612 = vector.load %arg5[%c1_390, %c0_391, %c0_392] : memref<4x128x128xbf16, #tpu.memory_space<vmem>>, vector<1x128x128xbf16>
    %613 = vector.shape_cast %612 : vector<1x128x128xbf16> to vector<128x128xbf16>
    %cst_393 = arith.constant dense<0.000000e+00> : vector<8x128xf32>
    %614 = tpu.matmul %592, %613, %cst_393 {dimension_numbers = #tpu.dot_dimension_numbers<[1], [0], [0], [1], [0, 0, 1, 1], [], []>} : vector<8x128xbf16>, vector<128x128xbf16>, vector<8x128xf32> -> vector<8x128xf32>
    %615 = vector.broadcast %611 : vector<1x128xf32> to vector<8x128xf32>
    %616 = arith.addf %615, %614 : vector<8x128xf32>
    %c1_394 = arith.constant 1 : index
    %c0_395 = arith.constant 0 : index
    %c0_396 = arith.constant 0 : index
    %617 = vector.load %arg7[%c1_394, %c0_395, %c0_396] : memref<4x128x128xbf16, #tpu.memory_space<vmem>>, vector<1x128x128xbf16>
    %618 = vector.shape_cast %617 : vector<1x128x128xbf16> to vector<128x128xbf16>
    %cst_397 = arith.constant dense<0.000000e+00> : vector<8x128xf32>
    %619 = tpu.matmul %593, %618, %cst_397 {dimension_numbers = #tpu.dot_dimension_numbers<[1], [0], [0], [1], [0, 0, 1, 1], [], []>} : vector<8x128xbf16>, vector<128x128xbf16>, vector<8x128xf32> -> vector<8x128xf32>
    %620 = arith.addf %616, %619 : vector<8x128xf32>
    %621 = arith.negf %620 : vector<8x128xf32>
    %622 = math.exp %621 : vector<8x128xf32>
    %cst_398 = arith.constant 1.000000e+00 : f32
    %623 = vector.broadcast %cst_398 : f32 to vector<8x128xf32>
    %624 = arith.addf %623, %622 : vector<8x128xf32>
    %625 = arith.divf %623, %624 : vector<8x128xf32>
    %c2_399 = arith.constant 2 : index
    %c0_400 = arith.constant 0 : index
    %c0_401 = arith.constant 0 : index
    %626 = vector.load %arg9[%c2_399, %c0_400, %c0_401] : memref<4x1x128xf32, #tpu.memory_space<vmem>>, vector<1x1x128xf32>
    %627 = vector.shape_cast %626 : vector<1x1x128xf32> to vector<1x128xf32>
    %c2_402 = arith.constant 2 : index
    %c0_403 = arith.constant 0 : index
    %c0_404 = arith.constant 0 : index
    %628 = vector.load %arg5[%c2_402, %c0_403, %c0_404] : memref<4x128x128xbf16, #tpu.memory_space<vmem>>, vector<1x128x128xbf16>
    %629 = vector.shape_cast %628 : vector<1x128x128xbf16> to vector<128x128xbf16>
    %cst_405 = arith.constant dense<0.000000e+00> : vector<8x128xf32>
    %630 = tpu.matmul %592, %629, %cst_405 {dimension_numbers = #tpu.dot_dimension_numbers<[1], [0], [0], [1], [0, 0, 1, 1], [], []>} : vector<8x128xbf16>, vector<128x128xbf16>, vector<8x128xf32> -> vector<8x128xf32>
    %631 = vector.broadcast %627 : vector<1x128xf32> to vector<8x128xf32>
    %632 = arith.addf %631, %630 : vector<8x128xf32>
    %c2_406 = arith.constant 2 : index
    %c0_407 = arith.constant 0 : index
    %c0_408 = arith.constant 0 : index
    %633 = vector.load %arg7[%c2_406, %c0_407, %c0_408] : memref<4x128x128xbf16, #tpu.memory_space<vmem>>, vector<1x128x128xbf16>
    %634 = vector.shape_cast %633 : vector<1x128x128xbf16> to vector<128x128xbf16>
    %cst_409 = arith.constant dense<0.000000e+00> : vector<8x128xf32>
    %635 = tpu.matmul %593, %634, %cst_409 {dimension_numbers = #tpu.dot_dimension_numbers<[1], [0], [0], [1], [0, 0, 1, 1], [], []>} : vector<8x128xbf16>, vector<128x128xbf16>, vector<8x128xf32> -> vector<8x128xf32>
    %636 = arith.addf %632, %635 : vector<8x128xf32>
    %637 = math.tanh %636 : vector<8x128xf32>
    %c3_410 = arith.constant 3 : index
    %c0_411 = arith.constant 0 : index
    %c0_412 = arith.constant 0 : index
    %638 = vector.load %arg9[%c3_410, %c0_411, %c0_412] : memref<4x1x128xf32, #tpu.memory_space<vmem>>, vector<1x1x128xf32>
    %639 = vector.shape_cast %638 : vector<1x1x128xf32> to vector<1x128xf32>
    %c3_413 = arith.constant 3 : index
    %c0_414 = arith.constant 0 : index
    %c0_415 = arith.constant 0 : index
    %640 = vector.load %arg5[%c3_413, %c0_414, %c0_415] : memref<4x128x128xbf16, #tpu.memory_space<vmem>>, vector<1x128x128xbf16>
    %641 = vector.shape_cast %640 : vector<1x128x128xbf16> to vector<128x128xbf16>
    %cst_416 = arith.constant dense<0.000000e+00> : vector<8x128xf32>
    %642 = tpu.matmul %592, %641, %cst_416 {dimension_numbers = #tpu.dot_dimension_numbers<[1], [0], [0], [1], [0, 0, 1, 1], [], []>} : vector<8x128xbf16>, vector<128x128xbf16>, vector<8x128xf32> -> vector<8x128xf32>
    %643 = vector.broadcast %639 : vector<1x128xf32> to vector<8x128xf32>
    %644 = arith.addf %643, %642 : vector<8x128xf32>
    %c3_417 = arith.constant 3 : index
    %c0_418 = arith.constant 0 : index
    %c0_419 = arith.constant 0 : index
    %645 = vector.load %arg7[%c3_417, %c0_418, %c0_419] : memref<4x128x128xbf16, #tpu.memory_space<vmem>>, vector<1x128x128xbf16>
    %646 = vector.shape_cast %645 : vector<1x128x128xbf16> to vector<128x128xbf16>
    %cst_420 = arith.constant dense<0.000000e+00> : vector<8x128xf32>
    %647 = tpu.matmul %593, %646, %cst_420 {dimension_numbers = #tpu.dot_dimension_numbers<[1], [0], [0], [1], [0, 0, 1, 1], [], []>} : vector<8x128xbf16>, vector<128x128xbf16>, vector<8x128xf32> -> vector<8x128xf32>
    %648 = arith.addf %644, %647 : vector<8x128xf32>
    %649 = arith.negf %648 : vector<8x128xf32>
    %650 = math.exp %649 : vector<8x128xf32>
    %cst_421 = arith.constant 1.000000e+00 : f32
    %651 = vector.broadcast %cst_421 : f32 to vector<8x128xf32>
    %652 = arith.addf %651, %650 : vector<8x128xf32>
    %653 = arith.divf %651, %652 : vector<8x128xf32>
    %654 = arith.mulf %625, %505 : vector<8x128xf32>
    %655 = arith.mulf %609, %637 : vector<8x128xf32>
    %656 = arith.addf %654, %655 : vector<8x128xf32>
    %657 = math.tanh %656 : vector<8x128xf32>
    %658 = arith.mulf %653, %657 : vector<8x128xf32>
    %659 = vector.broadcast %590 : i32 to vector<8x1xi32>
    %660 = arith.cmpi sgt, %3, %659 : vector<8x1xi32>
    %cst_422 = arith.constant -3.000000e+38 : f32
    %661 = vector.shape_cast %660 : vector<8x1xi1> to vector<8x1xi1>
    %662 = vector.broadcast %661 : vector<8x1xi1> to vector<8x128xi1>
    %663 = vector.broadcast %cst_422 : f32 to vector<8x128xf32>
    %664 = arith.select %662, %658, %663 : vector<8x128xi1>, vector<8x128xf32>
    %665 = vector.shape_cast %660 : vector<8x1xi1> to vector<8x1xi1>
    %666 = vector.broadcast %665 : vector<8x1xi1> to vector<8x128xi1>
    %667 = arith.select %666, %658, %502 : vector<8x128xi1>, vector<8x128xf32>
    %668 = vector.shape_cast %660 : vector<8x1xi1> to vector<8x1xi1>
    %669 = vector.broadcast %668 : vector<8x1xi1> to vector<8x128xi1>
    %670 = arith.select %669, %656, %505 : vector<8x128xi1>, vector<8x128xf32>
    %671 = arith.maximumf %506, %664 : vector<8x128xf32>
    %c8_i32_423 = arith.constant 8 : i32
    %672 = arith.muli %arg1, %c8_i32_423 : i32
    %c4_i32 = arith.constant 4 : i32
    %673 = arith.addi %672, %c4_i32 : i32
    %c4_424 = arith.constant 4 : index
    %c0_425 = arith.constant 0 : index
    %c0_426 = arith.constant 0 : index
    %674 = vector.load %arg2[%c4_424, %c0_425, %c0_426] : memref<8x8x128xbf16, #tpu.memory_space<vmem>>, vector<1x8x128xbf16>
    %675 = vector.shape_cast %674 : vector<1x8x128xbf16> to vector<8x128xbf16>
    %676 = arith.truncf %585 : vector<8x128xf32> to vector<8x128xbf16>
    %c0_427 = arith.constant 0 : index
    %c0_428 = arith.constant 0 : index
    %c0_429 = arith.constant 0 : index
    %677 = vector.load %arg8[%c0_427, %c0_428, %c0_429] : memref<4x1x128xf32, #tpu.memory_space<vmem>>, vector<1x1x128xf32>
    %678 = vector.shape_cast %677 : vector<1x1x128xf32> to vector<1x128xf32>
    %c0_430 = arith.constant 0 : index
    %c0_431 = arith.constant 0 : index
    %c0_432 = arith.constant 0 : index
    %679 = vector.load %arg4[%c0_430, %c0_431, %c0_432] : memref<4x128x128xbf16, #tpu.memory_space<vmem>>, vector<1x128x128xbf16>
    %680 = vector.shape_cast %679 : vector<1x128x128xbf16> to vector<128x128xbf16>
    %cst_433 = arith.constant dense<0.000000e+00> : vector<8x128xf32>
    %681 = tpu.matmul %675, %680, %cst_433 {dimension_numbers = #tpu.dot_dimension_numbers<[1], [0], [0], [1], [0, 0, 1, 1], [], []>} : vector<8x128xbf16>, vector<128x128xbf16>, vector<8x128xf32> -> vector<8x128xf32>
    %682 = vector.broadcast %678 : vector<1x128xf32> to vector<8x128xf32>
    %683 = arith.addf %682, %681 : vector<8x128xf32>
    %c0_434 = arith.constant 0 : index
    %c0_435 = arith.constant 0 : index
    %c0_436 = arith.constant 0 : index
    %684 = vector.load %arg6[%c0_434, %c0_435, %c0_436] : memref<4x128x128xbf16, #tpu.memory_space<vmem>>, vector<1x128x128xbf16>
    %685 = vector.shape_cast %684 : vector<1x128x128xbf16> to vector<128x128xbf16>
    %cst_437 = arith.constant dense<0.000000e+00> : vector<8x128xf32>
    %686 = tpu.matmul %676, %685, %cst_437 {dimension_numbers = #tpu.dot_dimension_numbers<[1], [0], [0], [1], [0, 0, 1, 1], [], []>} : vector<8x128xbf16>, vector<128x128xbf16>, vector<8x128xf32> -> vector<8x128xf32>
    %687 = arith.addf %683, %686 : vector<8x128xf32>
    %688 = arith.negf %687 : vector<8x128xf32>
    %689 = math.exp %688 : vector<8x128xf32>
    %cst_438 = arith.constant 1.000000e+00 : f32
    %690 = vector.broadcast %cst_438 : f32 to vector<8x128xf32>
    %691 = arith.addf %690, %689 : vector<8x128xf32>
    %692 = arith.divf %690, %691 : vector<8x128xf32>
    %c1_439 = arith.constant 1 : index
    %c0_440 = arith.constant 0 : index
    %c0_441 = arith.constant 0 : index
    %693 = vector.load %arg8[%c1_439, %c0_440, %c0_441] : memref<4x1x128xf32, #tpu.memory_space<vmem>>, vector<1x1x128xf32>
    %694 = vector.shape_cast %693 : vector<1x1x128xf32> to vector<1x128xf32>
    %c1_442 = arith.constant 1 : index
    %c0_443 = arith.constant 0 : index
    %c0_444 = arith.constant 0 : index
    %695 = vector.load %arg4[%c1_442, %c0_443, %c0_444] : memref<4x128x128xbf16, #tpu.memory_space<vmem>>, vector<1x128x128xbf16>
    %696 = vector.shape_cast %695 : vector<1x128x128xbf16> to vector<128x128xbf16>
    %cst_445 = arith.constant dense<0.000000e+00> : vector<8x128xf32>
    %697 = tpu.matmul %675, %696, %cst_445 {dimension_numbers = #tpu.dot_dimension_numbers<[1], [0], [0], [1], [0, 0, 1, 1], [], []>} : vector<8x128xbf16>, vector<128x128xbf16>, vector<8x128xf32> -> vector<8x128xf32>
    %698 = vector.broadcast %694 : vector<1x128xf32> to vector<8x128xf32>
    %699 = arith.addf %698, %697 : vector<8x128xf32>
    %c1_446 = arith.constant 1 : index
    %c0_447 = arith.constant 0 : index
    %c0_448 = arith.constant 0 : index
    %700 = vector.load %arg6[%c1_446, %c0_447, %c0_448] : memref<4x128x128xbf16, #tpu.memory_space<vmem>>, vector<1x128x128xbf16>
    %701 = vector.shape_cast %700 : vector<1x128x128xbf16> to vector<128x128xbf16>
    %cst_449 = arith.constant dense<0.000000e+00> : vector<8x128xf32>
    %702 = tpu.matmul %676, %701, %cst_449 {dimension_numbers = #tpu.dot_dimension_numbers<[1], [0], [0], [1], [0, 0, 1, 1], [], []>} : vector<8x128xbf16>, vector<128x128xbf16>, vector<8x128xf32> -> vector<8x128xf32>
    %703 = arith.addf %699, %702 : vector<8x128xf32>
    %704 = arith.negf %703 : vector<8x128xf32>
    %705 = math.exp %704 : vector<8x128xf32>
    %cst_450 = arith.constant 1.000000e+00 : f32
    %706 = vector.broadcast %cst_450 : f32 to vector<8x128xf32>
    %707 = arith.addf %706, %705 : vector<8x128xf32>
    %708 = arith.divf %706, %707 : vector<8x128xf32>
    %c2_451 = arith.constant 2 : index
    %c0_452 = arith.constant 0 : index
    %c0_453 = arith.constant 0 : index
    %709 = vector.load %arg8[%c2_451, %c0_452, %c0_453] : memref<4x1x128xf32, #tpu.memory_space<vmem>>, vector<1x1x128xf32>
    %710 = vector.shape_cast %709 : vector<1x1x128xf32> to vector<1x128xf32>
    %c2_454 = arith.constant 2 : index
    %c0_455 = arith.constant 0 : index
    %c0_456 = arith.constant 0 : index
    %711 = vector.load %arg4[%c2_454, %c0_455, %c0_456] : memref<4x128x128xbf16, #tpu.memory_space<vmem>>, vector<1x128x128xbf16>
    %712 = vector.shape_cast %711 : vector<1x128x128xbf16> to vector<128x128xbf16>
    %cst_457 = arith.constant dense<0.000000e+00> : vector<8x128xf32>
    %713 = tpu.matmul %675, %712, %cst_457 {dimension_numbers = #tpu.dot_dimension_numbers<[1], [0], [0], [1], [0, 0, 1, 1], [], []>} : vector<8x128xbf16>, vector<128x128xbf16>, vector<8x128xf32> -> vector<8x128xf32>
    %714 = vector.broadcast %710 : vector<1x128xf32> to vector<8x128xf32>
    %715 = arith.addf %714, %713 : vector<8x128xf32>
    %c2_458 = arith.constant 2 : index
    %c0_459 = arith.constant 0 : index
    %c0_460 = arith.constant 0 : index
    %716 = vector.load %arg6[%c2_458, %c0_459, %c0_460] : memref<4x128x128xbf16, #tpu.memory_space<vmem>>, vector<1x128x128xbf16>
    %717 = vector.shape_cast %716 : vector<1x128x128xbf16> to vector<128x128xbf16>
    %cst_461 = arith.constant dense<0.000000e+00> : vector<8x128xf32>
    %718 = tpu.matmul %676, %717, %cst_461 {dimension_numbers = #tpu.dot_dimension_numbers<[1], [0], [0], [1], [0, 0, 1, 1], [], []>} : vector<8x128xbf16>, vector<128x128xbf16>, vector<8x128xf32> -> vector<8x128xf32>
    %719 = arith.addf %715, %718 : vector<8x128xf32>
    %720 = math.tanh %719 : vector<8x128xf32>
    %c3_462 = arith.constant 3 : index
    %c0_463 = arith.constant 0 : index
    %c0_464 = arith.constant 0 : index
    %721 = vector.load %arg8[%c3_462, %c0_463, %c0_464] : memref<4x1x128xf32, #tpu.memory_space<vmem>>, vector<1x1x128xf32>
    %722 = vector.shape_cast %721 : vector<1x1x128xf32> to vector<1x128xf32>
    %c3_465 = arith.constant 3 : index
    %c0_466 = arith.constant 0 : index
    %c0_467 = arith.constant 0 : index
    %723 = vector.load %arg4[%c3_465, %c0_466, %c0_467] : memref<4x128x128xbf16, #tpu.memory_space<vmem>>, vector<1x128x128xbf16>
    %724 = vector.shape_cast %723 : vector<1x128x128xbf16> to vector<128x128xbf16>
    %cst_468 = arith.constant dense<0.000000e+00> : vector<8x128xf32>
    %725 = tpu.matmul %675, %724, %cst_468 {dimension_numbers = #tpu.dot_dimension_numbers<[1], [0], [0], [1], [0, 0, 1, 1], [], []>} : vector<8x128xbf16>, vector<128x128xbf16>, vector<8x128xf32> -> vector<8x128xf32>
    %726 = vector.broadcast %722 : vector<1x128xf32> to vector<8x128xf32>
    %727 = arith.addf %726, %725 : vector<8x128xf32>
    %c3_469 = arith.constant 3 : index
    %c0_470 = arith.constant 0 : index
    %c0_471 = arith.constant 0 : index
    %728 = vector.load %arg6[%c3_469, %c0_470, %c0_471] : memref<4x128x128xbf16, #tpu.memory_space<vmem>>, vector<1x128x128xbf16>
    %729 = vector.shape_cast %728 : vector<1x128x128xbf16> to vector<128x128xbf16>
    %cst_472 = arith.constant dense<0.000000e+00> : vector<8x128xf32>
    %730 = tpu.matmul %676, %729, %cst_472 {dimension_numbers = #tpu.dot_dimension_numbers<[1], [0], [0], [1], [0, 0, 1, 1], [], []>} : vector<8x128xbf16>, vector<128x128xbf16>, vector<8x128xf32> -> vector<8x128xf32>
    %731 = arith.addf %727, %730 : vector<8x128xf32>
    %732 = arith.negf %731 : vector<8x128xf32>
    %733 = math.exp %732 : vector<8x128xf32>
    %cst_473 = arith.constant 1.000000e+00 : f32
    %734 = vector.broadcast %cst_473 : f32 to vector<8x128xf32>
    %735 = arith.addf %734, %733 : vector<8x128xf32>
    %736 = arith.divf %734, %735 : vector<8x128xf32>
    %737 = arith.mulf %708, %588 : vector<8x128xf32>
    %738 = arith.mulf %692, %720 : vector<8x128xf32>
    %739 = arith.addf %737, %738 : vector<8x128xf32>
    %740 = math.tanh %739 : vector<8x128xf32>
    %741 = arith.mulf %736, %740 : vector<8x128xf32>
    %742 = vector.broadcast %673 : i32 to vector<8x1xi32>
    %743 = arith.cmpi sgt, %3, %742 : vector<8x1xi32>
    %cst_474 = arith.constant -3.000000e+38 : f32
    %744 = vector.shape_cast %743 : vector<8x1xi1> to vector<8x1xi1>
    %745 = vector.broadcast %744 : vector<8x1xi1> to vector<8x128xi1>
    %746 = vector.broadcast %cst_474 : f32 to vector<8x128xf32>
    %747 = arith.select %745, %741, %746 : vector<8x128xi1>, vector<8x128xf32>
    %748 = vector.shape_cast %743 : vector<8x1xi1> to vector<8x1xi1>
    %749 = vector.broadcast %748 : vector<8x1xi1> to vector<8x128xi1>
    %750 = arith.select %749, %741, %585 : vector<8x128xi1>, vector<8x128xf32>
    %751 = vector.shape_cast %743 : vector<8x1xi1> to vector<8x1xi1>
    %752 = vector.broadcast %751 : vector<8x1xi1> to vector<8x128xi1>
    %753 = arith.select %752, %739, %588 : vector<8x128xi1>, vector<8x128xf32>
    %754 = arith.maximumf %589, %747 : vector<8x128xf32>
    %c7_i32_475 = arith.constant 7 : i32
    %755 = arith.subi %c7_i32_475, %673 : i32
    %c3_476 = arith.constant 3 : index
    %c0_477 = arith.constant 0 : index
    %c0_478 = arith.constant 0 : index
    %756 = vector.load %arg3[%c3_476, %c0_477, %c0_478] : memref<8x8x128xbf16, #tpu.memory_space<vmem>>, vector<1x8x128xbf16>
    %757 = vector.shape_cast %756 : vector<1x8x128xbf16> to vector<8x128xbf16>
    %758 = arith.truncf %667 : vector<8x128xf32> to vector<8x128xbf16>
    %c0_479 = arith.constant 0 : index
    %c0_480 = arith.constant 0 : index
    %c0_481 = arith.constant 0 : index
    %759 = vector.load %arg9[%c0_479, %c0_480, %c0_481] : memref<4x1x128xf32, #tpu.memory_space<vmem>>, vector<1x1x128xf32>
    %760 = vector.shape_cast %759 : vector<1x1x128xf32> to vector<1x128xf32>
    %c0_482 = arith.constant 0 : index
    %c0_483 = arith.constant 0 : index
    %c0_484 = arith.constant 0 : index
    %761 = vector.load %arg5[%c0_482, %c0_483, %c0_484] : memref<4x128x128xbf16, #tpu.memory_space<vmem>>, vector<1x128x128xbf16>
    %762 = vector.shape_cast %761 : vector<1x128x128xbf16> to vector<128x128xbf16>
    %cst_485 = arith.constant dense<0.000000e+00> : vector<8x128xf32>
    %763 = tpu.matmul %757, %762, %cst_485 {dimension_numbers = #tpu.dot_dimension_numbers<[1], [0], [0], [1], [0, 0, 1, 1], [], []>} : vector<8x128xbf16>, vector<128x128xbf16>, vector<8x128xf32> -> vector<8x128xf32>
    %764 = vector.broadcast %760 : vector<1x128xf32> to vector<8x128xf32>
    %765 = arith.addf %764, %763 : vector<8x128xf32>
    %c0_486 = arith.constant 0 : index
    %c0_487 = arith.constant 0 : index
    %c0_488 = arith.constant 0 : index
    %766 = vector.load %arg7[%c0_486, %c0_487, %c0_488] : memref<4x128x128xbf16, #tpu.memory_space<vmem>>, vector<1x128x128xbf16>
    %767 = vector.shape_cast %766 : vector<1x128x128xbf16> to vector<128x128xbf16>
    %cst_489 = arith.constant dense<0.000000e+00> : vector<8x128xf32>
    %768 = tpu.matmul %758, %767, %cst_489 {dimension_numbers = #tpu.dot_dimension_numbers<[1], [0], [0], [1], [0, 0, 1, 1], [], []>} : vector<8x128xbf16>, vector<128x128xbf16>, vector<8x128xf32> -> vector<8x128xf32>
    %769 = arith.addf %765, %768 : vector<8x128xf32>
    %770 = arith.negf %769 : vector<8x128xf32>
    %771 = math.exp %770 : vector<8x128xf32>
    %cst_490 = arith.constant 1.000000e+00 : f32
    %772 = vector.broadcast %cst_490 : f32 to vector<8x128xf32>
    %773 = arith.addf %772, %771 : vector<8x128xf32>
    %774 = arith.divf %772, %773 : vector<8x128xf32>
    %c1_491 = arith.constant 1 : index
    %c0_492 = arith.constant 0 : index
    %c0_493 = arith.constant 0 : index
    %775 = vector.load %arg9[%c1_491, %c0_492, %c0_493] : memref<4x1x128xf32, #tpu.memory_space<vmem>>, vector<1x1x128xf32>
    %776 = vector.shape_cast %775 : vector<1x1x128xf32> to vector<1x128xf32>
    %c1_494 = arith.constant 1 : index
    %c0_495 = arith.constant 0 : index
    %c0_496 = arith.constant 0 : index
    %777 = vector.load %arg5[%c1_494, %c0_495, %c0_496] : memref<4x128x128xbf16, #tpu.memory_space<vmem>>, vector<1x128x128xbf16>
    %778 = vector.shape_cast %777 : vector<1x128x128xbf16> to vector<128x128xbf16>
    %cst_497 = arith.constant dense<0.000000e+00> : vector<8x128xf32>
    %779 = tpu.matmul %757, %778, %cst_497 {dimension_numbers = #tpu.dot_dimension_numbers<[1], [0], [0], [1], [0, 0, 1, 1], [], []>} : vector<8x128xbf16>, vector<128x128xbf16>, vector<8x128xf32> -> vector<8x128xf32>
    %780 = vector.broadcast %776 : vector<1x128xf32> to vector<8x128xf32>
    %781 = arith.addf %780, %779 : vector<8x128xf32>
    %c1_498 = arith.constant 1 : index
    %c0_499 = arith.constant 0 : index
    %c0_500 = arith.constant 0 : index
    %782 = vector.load %arg7[%c1_498, %c0_499, %c0_500] : memref<4x128x128xbf16, #tpu.memory_space<vmem>>, vector<1x128x128xbf16>
    %783 = vector.shape_cast %782 : vector<1x128x128xbf16> to vector<128x128xbf16>
    %cst_501 = arith.constant dense<0.000000e+00> : vector<8x128xf32>
    %784 = tpu.matmul %758, %783, %cst_501 {dimension_numbers = #tpu.dot_dimension_numbers<[1], [0], [0], [1], [0, 0, 1, 1], [], []>} : vector<8x128xbf16>, vector<128x128xbf16>, vector<8x128xf32> -> vector<8x128xf32>
    %785 = arith.addf %781, %784 : vector<8x128xf32>
    %786 = arith.negf %785 : vector<8x128xf32>
    %787 = math.exp %786 : vector<8x128xf32>
    %cst_502 = arith.constant 1.000000e+00 : f32
    %788 = vector.broadcast %cst_502 : f32 to vector<8x128xf32>
    %789 = arith.addf %788, %787 : vector<8x128xf32>
    %790 = arith.divf %788, %789 : vector<8x128xf32>
    %c2_503 = arith.constant 2 : index
    %c0_504 = arith.constant 0 : index
    %c0_505 = arith.constant 0 : index
    %791 = vector.load %arg9[%c2_503, %c0_504, %c0_505] : memref<4x1x128xf32, #tpu.memory_space<vmem>>, vector<1x1x128xf32>
    %792 = vector.shape_cast %791 : vector<1x1x128xf32> to vector<1x128xf32>
    %c2_506 = arith.constant 2 : index
    %c0_507 = arith.constant 0 : index
    %c0_508 = arith.constant 0 : index
    %793 = vector.load %arg5[%c2_506, %c0_507, %c0_508] : memref<4x128x128xbf16, #tpu.memory_space<vmem>>, vector<1x128x128xbf16>
    %794 = vector.shape_cast %793 : vector<1x128x128xbf16> to vector<128x128xbf16>
    %cst_509 = arith.constant dense<0.000000e+00> : vector<8x128xf32>
    %795 = tpu.matmul %757, %794, %cst_509 {dimension_numbers = #tpu.dot_dimension_numbers<[1], [0], [0], [1], [0, 0, 1, 1], [], []>} : vector<8x128xbf16>, vector<128x128xbf16>, vector<8x128xf32> -> vector<8x128xf32>
    %796 = vector.broadcast %792 : vector<1x128xf32> to vector<8x128xf32>
    %797 = arith.addf %796, %795 : vector<8x128xf32>
    %c2_510 = arith.constant 2 : index
    %c0_511 = arith.constant 0 : index
    %c0_512 = arith.constant 0 : index
    %798 = vector.load %arg7[%c2_510, %c0_511, %c0_512] : memref<4x128x128xbf16, #tpu.memory_space<vmem>>, vector<1x128x128xbf16>
    %799 = vector.shape_cast %798 : vector<1x128x128xbf16> to vector<128x128xbf16>
    %cst_513 = arith.constant dense<0.000000e+00> : vector<8x128xf32>
    %800 = tpu.matmul %758, %799, %cst_513 {dimension_numbers = #tpu.dot_dimension_numbers<[1], [0], [0], [1], [0, 0, 1, 1], [], []>} : vector<8x128xbf16>, vector<128x128xbf16>, vector<8x128xf32> -> vector<8x128xf32>
    %801 = arith.addf %797, %800 : vector<8x128xf32>
    %802 = math.tanh %801 : vector<8x128xf32>
    %c3_514 = arith.constant 3 : index
    %c0_515 = arith.constant 0 : index
    %c0_516 = arith.constant 0 : index
    %803 = vector.load %arg9[%c3_514, %c0_515, %c0_516] : memref<4x1x128xf32, #tpu.memory_space<vmem>>, vector<1x1x128xf32>
    %804 = vector.shape_cast %803 : vector<1x1x128xf32> to vector<1x128xf32>
    %c3_517 = arith.constant 3 : index
    %c0_518 = arith.constant 0 : index
    %c0_519 = arith.constant 0 : index
    %805 = vector.load %arg5[%c3_517, %c0_518, %c0_519] : memref<4x128x128xbf16, #tpu.memory_space<vmem>>, vector<1x128x128xbf16>
    %806 = vector.shape_cast %805 : vector<1x128x128xbf16> to vector<128x128xbf16>
    %cst_520 = arith.constant dense<0.000000e+00> : vector<8x128xf32>
    %807 = tpu.matmul %757, %806, %cst_520 {dimension_numbers = #tpu.dot_dimension_numbers<[1], [0], [0], [1], [0, 0, 1, 1], [], []>} : vector<8x128xbf16>, vector<128x128xbf16>, vector<8x128xf32> -> vector<8x128xf32>
    %808 = vector.broadcast %804 : vector<1x128xf32> to vector<8x128xf32>
    %809 = arith.addf %808, %807 : vector<8x128xf32>
    %c3_521 = arith.constant 3 : index
    %c0_522 = arith.constant 0 : index
    %c0_523 = arith.constant 0 : index
    %810 = vector.load %arg7[%c3_521, %c0_522, %c0_523] : memref<4x128x128xbf16, #tpu.memory_space<vmem>>, vector<1x128x128xbf16>
    %811 = vector.shape_cast %810 : vector<1x128x128xbf16> to vector<128x128xbf16>
    %cst_524 = arith.constant dense<0.000000e+00> : vector<8x128xf32>
    %812 = tpu.matmul %758, %811, %cst_524 {dimension_numbers = #tpu.dot_dimension_numbers<[1], [0], [0], [1], [0, 0, 1, 1], [], []>} : vector<8x128xbf16>, vector<128x128xbf16>, vector<8x128xf32> -> vector<8x128xf32>
    %813 = arith.addf %809, %812 : vector<8x128xf32>
    %814 = arith.negf %813 : vector<8x128xf32>
    %815 = math.exp %814 : vector<8x128xf32>
    %cst_525 = arith.constant 1.000000e+00 : f32
    %816 = vector.broadcast %cst_525 : f32 to vector<8x128xf32>
    %817 = arith.addf %816, %815 : vector<8x128xf32>
    %818 = arith.divf %816, %817 : vector<8x128xf32>
    %819 = arith.mulf %790, %670 : vector<8x128xf32>
    %820 = arith.mulf %774, %802 : vector<8x128xf32>
    %821 = arith.addf %819, %820 : vector<8x128xf32>
    %822 = math.tanh %821 : vector<8x128xf32>
    %823 = arith.mulf %818, %822 : vector<8x128xf32>
    %824 = vector.broadcast %755 : i32 to vector<8x1xi32>
    %825 = arith.cmpi sgt, %3, %824 : vector<8x1xi32>
    %cst_526 = arith.constant -3.000000e+38 : f32
    %826 = vector.shape_cast %825 : vector<8x1xi1> to vector<8x1xi1>
    %827 = vector.broadcast %826 : vector<8x1xi1> to vector<8x128xi1>
    %828 = vector.broadcast %cst_526 : f32 to vector<8x128xf32>
    %829 = arith.select %827, %823, %828 : vector<8x128xi1>, vector<8x128xf32>
    %830 = vector.shape_cast %825 : vector<8x1xi1> to vector<8x1xi1>
    %831 = vector.broadcast %830 : vector<8x1xi1> to vector<8x128xi1>
    %832 = arith.select %831, %823, %667 : vector<8x128xi1>, vector<8x128xf32>
    %833 = vector.shape_cast %825 : vector<8x1xi1> to vector<8x1xi1>
    %834 = vector.broadcast %833 : vector<8x1xi1> to vector<8x128xi1>
    %835 = arith.select %834, %821, %670 : vector<8x128xi1>, vector<8x128xf32>
    %836 = arith.maximumf %671, %829 : vector<8x128xf32>
    %c8_i32_527 = arith.constant 8 : i32
    %837 = arith.muli %arg1, %c8_i32_527 : i32
    %c5_i32 = arith.constant 5 : i32
    %838 = arith.addi %837, %c5_i32 : i32
    %c5_528 = arith.constant 5 : index
    %c0_529 = arith.constant 0 : index
    %c0_530 = arith.constant 0 : index
    %839 = vector.load %arg2[%c5_528, %c0_529, %c0_530] : memref<8x8x128xbf16, #tpu.memory_space<vmem>>, vector<1x8x128xbf16>
    %840 = vector.shape_cast %839 : vector<1x8x128xbf16> to vector<8x128xbf16>
    %841 = arith.truncf %750 : vector<8x128xf32> to vector<8x128xbf16>
    %c0_531 = arith.constant 0 : index
    %c0_532 = arith.constant 0 : index
    %c0_533 = arith.constant 0 : index
    %842 = vector.load %arg8[%c0_531, %c0_532, %c0_533] : memref<4x1x128xf32, #tpu.memory_space<vmem>>, vector<1x1x128xf32>
    %843 = vector.shape_cast %842 : vector<1x1x128xf32> to vector<1x128xf32>
    %c0_534 = arith.constant 0 : index
    %c0_535 = arith.constant 0 : index
    %c0_536 = arith.constant 0 : index
    %844 = vector.load %arg4[%c0_534, %c0_535, %c0_536] : memref<4x128x128xbf16, #tpu.memory_space<vmem>>, vector<1x128x128xbf16>
    %845 = vector.shape_cast %844 : vector<1x128x128xbf16> to vector<128x128xbf16>
    %cst_537 = arith.constant dense<0.000000e+00> : vector<8x128xf32>
    %846 = tpu.matmul %840, %845, %cst_537 {dimension_numbers = #tpu.dot_dimension_numbers<[1], [0], [0], [1], [0, 0, 1, 1], [], []>} : vector<8x128xbf16>, vector<128x128xbf16>, vector<8x128xf32> -> vector<8x128xf32>
    %847 = vector.broadcast %843 : vector<1x128xf32> to vector<8x128xf32>
    %848 = arith.addf %847, %846 : vector<8x128xf32>
    %c0_538 = arith.constant 0 : index
    %c0_539 = arith.constant 0 : index
    %c0_540 = arith.constant 0 : index
    %849 = vector.load %arg6[%c0_538, %c0_539, %c0_540] : memref<4x128x128xbf16, #tpu.memory_space<vmem>>, vector<1x128x128xbf16>
    %850 = vector.shape_cast %849 : vector<1x128x128xbf16> to vector<128x128xbf16>
    %cst_541 = arith.constant dense<0.000000e+00> : vector<8x128xf32>
    %851 = tpu.matmul %841, %850, %cst_541 {dimension_numbers = #tpu.dot_dimension_numbers<[1], [0], [0], [1], [0, 0, 1, 1], [], []>} : vector<8x128xbf16>, vector<128x128xbf16>, vector<8x128xf32> -> vector<8x128xf32>
    %852 = arith.addf %848, %851 : vector<8x128xf32>
    %853 = arith.negf %852 : vector<8x128xf32>
    %854 = math.exp %853 : vector<8x128xf32>
    %cst_542 = arith.constant 1.000000e+00 : f32
    %855 = vector.broadcast %cst_542 : f32 to vector<8x128xf32>
    %856 = arith.addf %855, %854 : vector<8x128xf32>
    %857 = arith.divf %855, %856 : vector<8x128xf32>
    %c1_543 = arith.constant 1 : index
    %c0_544 = arith.constant 0 : index
    %c0_545 = arith.constant 0 : index
    %858 = vector.load %arg8[%c1_543, %c0_544, %c0_545] : memref<4x1x128xf32, #tpu.memory_space<vmem>>, vector<1x1x128xf32>
    %859 = vector.shape_cast %858 : vector<1x1x128xf32> to vector<1x128xf32>
    %c1_546 = arith.constant 1 : index
    %c0_547 = arith.constant 0 : index
    %c0_548 = arith.constant 0 : index
    %860 = vector.load %arg4[%c1_546, %c0_547, %c0_548] : memref<4x128x128xbf16, #tpu.memory_space<vmem>>, vector<1x128x128xbf16>
    %861 = vector.shape_cast %860 : vector<1x128x128xbf16> to vector<128x128xbf16>
    %cst_549 = arith.constant dense<0.000000e+00> : vector<8x128xf32>
    %862 = tpu.matmul %840, %861, %cst_549 {dimension_numbers = #tpu.dot_dimension_numbers<[1], [0], [0], [1], [0, 0, 1, 1], [], []>} : vector<8x128xbf16>, vector<128x128xbf16>, vector<8x128xf32> -> vector<8x128xf32>
    %863 = vector.broadcast %859 : vector<1x128xf32> to vector<8x128xf32>
    %864 = arith.addf %863, %862 : vector<8x128xf32>
    %c1_550 = arith.constant 1 : index
    %c0_551 = arith.constant 0 : index
    %c0_552 = arith.constant 0 : index
    %865 = vector.load %arg6[%c1_550, %c0_551, %c0_552] : memref<4x128x128xbf16, #tpu.memory_space<vmem>>, vector<1x128x128xbf16>
    %866 = vector.shape_cast %865 : vector<1x128x128xbf16> to vector<128x128xbf16>
    %cst_553 = arith.constant dense<0.000000e+00> : vector<8x128xf32>
    %867 = tpu.matmul %841, %866, %cst_553 {dimension_numbers = #tpu.dot_dimension_numbers<[1], [0], [0], [1], [0, 0, 1, 1], [], []>} : vector<8x128xbf16>, vector<128x128xbf16>, vector<8x128xf32> -> vector<8x128xf32>
    %868 = arith.addf %864, %867 : vector<8x128xf32>
    %869 = arith.negf %868 : vector<8x128xf32>
    %870 = math.exp %869 : vector<8x128xf32>
    %cst_554 = arith.constant 1.000000e+00 : f32
    %871 = vector.broadcast %cst_554 : f32 to vector<8x128xf32>
    %872 = arith.addf %871, %870 : vector<8x128xf32>
    %873 = arith.divf %871, %872 : vector<8x128xf32>
    %c2_555 = arith.constant 2 : index
    %c0_556 = arith.constant 0 : index
    %c0_557 = arith.constant 0 : index
    %874 = vector.load %arg8[%c2_555, %c0_556, %c0_557] : memref<4x1x128xf32, #tpu.memory_space<vmem>>, vector<1x1x128xf32>
    %875 = vector.shape_cast %874 : vector<1x1x128xf32> to vector<1x128xf32>
    %c2_558 = arith.constant 2 : index
    %c0_559 = arith.constant 0 : index
    %c0_560 = arith.constant 0 : index
    %876 = vector.load %arg4[%c2_558, %c0_559, %c0_560] : memref<4x128x128xbf16, #tpu.memory_space<vmem>>, vector<1x128x128xbf16>
    %877 = vector.shape_cast %876 : vector<1x128x128xbf16> to vector<128x128xbf16>
    %cst_561 = arith.constant dense<0.000000e+00> : vector<8x128xf32>
    %878 = tpu.matmul %840, %877, %cst_561 {dimension_numbers = #tpu.dot_dimension_numbers<[1], [0], [0], [1], [0, 0, 1, 1], [], []>} : vector<8x128xbf16>, vector<128x128xbf16>, vector<8x128xf32> -> vector<8x128xf32>
    %879 = vector.broadcast %875 : vector<1x128xf32> to vector<8x128xf32>
    %880 = arith.addf %879, %878 : vector<8x128xf32>
    %c2_562 = arith.constant 2 : index
    %c0_563 = arith.constant 0 : index
    %c0_564 = arith.constant 0 : index
    %881 = vector.load %arg6[%c2_562, %c0_563, %c0_564] : memref<4x128x128xbf16, #tpu.memory_space<vmem>>, vector<1x128x128xbf16>
    %882 = vector.shape_cast %881 : vector<1x128x128xbf16> to vector<128x128xbf16>
    %cst_565 = arith.constant dense<0.000000e+00> : vector<8x128xf32>
    %883 = tpu.matmul %841, %882, %cst_565 {dimension_numbers = #tpu.dot_dimension_numbers<[1], [0], [0], [1], [0, 0, 1, 1], [], []>} : vector<8x128xbf16>, vector<128x128xbf16>, vector<8x128xf32> -> vector<8x128xf32>
    %884 = arith.addf %880, %883 : vector<8x128xf32>
    %885 = math.tanh %884 : vector<8x128xf32>
    %c3_566 = arith.constant 3 : index
    %c0_567 = arith.constant 0 : index
    %c0_568 = arith.constant 0 : index
    %886 = vector.load %arg8[%c3_566, %c0_567, %c0_568] : memref<4x1x128xf32, #tpu.memory_space<vmem>>, vector<1x1x128xf32>
    %887 = vector.shape_cast %886 : vector<1x1x128xf32> to vector<1x128xf32>
    %c3_569 = arith.constant 3 : index
    %c0_570 = arith.constant 0 : index
    %c0_571 = arith.constant 0 : index
    %888 = vector.load %arg4[%c3_569, %c0_570, %c0_571] : memref<4x128x128xbf16, #tpu.memory_space<vmem>>, vector<1x128x128xbf16>
    %889 = vector.shape_cast %888 : vector<1x128x128xbf16> to vector<128x128xbf16>
    %cst_572 = arith.constant dense<0.000000e+00> : vector<8x128xf32>
    %890 = tpu.matmul %840, %889, %cst_572 {dimension_numbers = #tpu.dot_dimension_numbers<[1], [0], [0], [1], [0, 0, 1, 1], [], []>} : vector<8x128xbf16>, vector<128x128xbf16>, vector<8x128xf32> -> vector<8x128xf32>
    %891 = vector.broadcast %887 : vector<1x128xf32> to vector<8x128xf32>
    %892 = arith.addf %891, %890 : vector<8x128xf32>
    %c3_573 = arith.constant 3 : index
    %c0_574 = arith.constant 0 : index
    %c0_575 = arith.constant 0 : index
    %893 = vector.load %arg6[%c3_573, %c0_574, %c0_575] : memref<4x128x128xbf16, #tpu.memory_space<vmem>>, vector<1x128x128xbf16>
    %894 = vector.shape_cast %893 : vector<1x128x128xbf16> to vector<128x128xbf16>
    %cst_576 = arith.constant dense<0.000000e+00> : vector<8x128xf32>
    %895 = tpu.matmul %841, %894, %cst_576 {dimension_numbers = #tpu.dot_dimension_numbers<[1], [0], [0], [1], [0, 0, 1, 1], [], []>} : vector<8x128xbf16>, vector<128x128xbf16>, vector<8x128xf32> -> vector<8x128xf32>
    %896 = arith.addf %892, %895 : vector<8x128xf32>
    %897 = arith.negf %896 : vector<8x128xf32>
    %898 = math.exp %897 : vector<8x128xf32>
    %cst_577 = arith.constant 1.000000e+00 : f32
    %899 = vector.broadcast %cst_577 : f32 to vector<8x128xf32>
    %900 = arith.addf %899, %898 : vector<8x128xf32>
    %901 = arith.divf %899, %900 : vector<8x128xf32>
    %902 = arith.mulf %873, %753 : vector<8x128xf32>
    %903 = arith.mulf %857, %885 : vector<8x128xf32>
    %904 = arith.addf %902, %903 : vector<8x128xf32>
    %905 = math.tanh %904 : vector<8x128xf32>
    %906 = arith.mulf %901, %905 : vector<8x128xf32>
    %907 = vector.broadcast %838 : i32 to vector<8x1xi32>
    %908 = arith.cmpi sgt, %3, %907 : vector<8x1xi32>
    %cst_578 = arith.constant -3.000000e+38 : f32
    %909 = vector.shape_cast %908 : vector<8x1xi1> to vector<8x1xi1>
    %910 = vector.broadcast %909 : vector<8x1xi1> to vector<8x128xi1>
    %911 = vector.broadcast %cst_578 : f32 to vector<8x128xf32>
    %912 = arith.select %910, %906, %911 : vector<8x128xi1>, vector<8x128xf32>
    %913 = vector.shape_cast %908 : vector<8x1xi1> to vector<8x1xi1>
    %914 = vector.broadcast %913 : vector<8x1xi1> to vector<8x128xi1>
    %915 = arith.select %914, %906, %750 : vector<8x128xi1>, vector<8x128xf32>
    %916 = vector.shape_cast %908 : vector<8x1xi1> to vector<8x1xi1>
    %917 = vector.broadcast %916 : vector<8x1xi1> to vector<8x128xi1>
    %918 = arith.select %917, %904, %753 : vector<8x128xi1>, vector<8x128xf32>
    %919 = arith.maximumf %754, %912 : vector<8x128xf32>
    %c7_i32_579 = arith.constant 7 : i32
    %920 = arith.subi %c7_i32_579, %838 : i32
    %c2_580 = arith.constant 2 : index
    %c0_581 = arith.constant 0 : index
    %c0_582 = arith.constant 0 : index
    %921 = vector.load %arg3[%c2_580, %c0_581, %c0_582] : memref<8x8x128xbf16, #tpu.memory_space<vmem>>, vector<1x8x128xbf16>
    %922 = vector.shape_cast %921 : vector<1x8x128xbf16> to vector<8x128xbf16>
    %923 = arith.truncf %832 : vector<8x128xf32> to vector<8x128xbf16>
    %c0_583 = arith.constant 0 : index
    %c0_584 = arith.constant 0 : index
    %c0_585 = arith.constant 0 : index
    %924 = vector.load %arg9[%c0_583, %c0_584, %c0_585] : memref<4x1x128xf32, #tpu.memory_space<vmem>>, vector<1x1x128xf32>
    %925 = vector.shape_cast %924 : vector<1x1x128xf32> to vector<1x128xf32>
    %c0_586 = arith.constant 0 : index
    %c0_587 = arith.constant 0 : index
    %c0_588 = arith.constant 0 : index
    %926 = vector.load %arg5[%c0_586, %c0_587, %c0_588] : memref<4x128x128xbf16, #tpu.memory_space<vmem>>, vector<1x128x128xbf16>
    %927 = vector.shape_cast %926 : vector<1x128x128xbf16> to vector<128x128xbf16>
    %cst_589 = arith.constant dense<0.000000e+00> : vector<8x128xf32>
    %928 = tpu.matmul %922, %927, %cst_589 {dimension_numbers = #tpu.dot_dimension_numbers<[1], [0], [0], [1], [0, 0, 1, 1], [], []>} : vector<8x128xbf16>, vector<128x128xbf16>, vector<8x128xf32> -> vector<8x128xf32>
    %929 = vector.broadcast %925 : vector<1x128xf32> to vector<8x128xf32>
    %930 = arith.addf %929, %928 : vector<8x128xf32>
    %c0_590 = arith.constant 0 : index
    %c0_591 = arith.constant 0 : index
    %c0_592 = arith.constant 0 : index
    %931 = vector.load %arg7[%c0_590, %c0_591, %c0_592] : memref<4x128x128xbf16, #tpu.memory_space<vmem>>, vector<1x128x128xbf16>
    %932 = vector.shape_cast %931 : vector<1x128x128xbf16> to vector<128x128xbf16>
    %cst_593 = arith.constant dense<0.000000e+00> : vector<8x128xf32>
    %933 = tpu.matmul %923, %932, %cst_593 {dimension_numbers = #tpu.dot_dimension_numbers<[1], [0], [0], [1], [0, 0, 1, 1], [], []>} : vector<8x128xbf16>, vector<128x128xbf16>, vector<8x128xf32> -> vector<8x128xf32>
    %934 = arith.addf %930, %933 : vector<8x128xf32>
    %935 = arith.negf %934 : vector<8x128xf32>
    %936 = math.exp %935 : vector<8x128xf32>
    %cst_594 = arith.constant 1.000000e+00 : f32
    %937 = vector.broadcast %cst_594 : f32 to vector<8x128xf32>
    %938 = arith.addf %937, %936 : vector<8x128xf32>
    %939 = arith.divf %937, %938 : vector<8x128xf32>
    %c1_595 = arith.constant 1 : index
    %c0_596 = arith.constant 0 : index
    %c0_597 = arith.constant 0 : index
    %940 = vector.load %arg9[%c1_595, %c0_596, %c0_597] : memref<4x1x128xf32, #tpu.memory_space<vmem>>, vector<1x1x128xf32>
    %941 = vector.shape_cast %940 : vector<1x1x128xf32> to vector<1x128xf32>
    %c1_598 = arith.constant 1 : index
    %c0_599 = arith.constant 0 : index
    %c0_600 = arith.constant 0 : index
    %942 = vector.load %arg5[%c1_598, %c0_599, %c0_600] : memref<4x128x128xbf16, #tpu.memory_space<vmem>>, vector<1x128x128xbf16>
    %943 = vector.shape_cast %942 : vector<1x128x128xbf16> to vector<128x128xbf16>
    %cst_601 = arith.constant dense<0.000000e+00> : vector<8x128xf32>
    %944 = tpu.matmul %922, %943, %cst_601 {dimension_numbers = #tpu.dot_dimension_numbers<[1], [0], [0], [1], [0, 0, 1, 1], [], []>} : vector<8x128xbf16>, vector<128x128xbf16>, vector<8x128xf32> -> vector<8x128xf32>
    %945 = vector.broadcast %941 : vector<1x128xf32> to vector<8x128xf32>
    %946 = arith.addf %945, %944 : vector<8x128xf32>
    %c1_602 = arith.constant 1 : index
    %c0_603 = arith.constant 0 : index
    %c0_604 = arith.constant 0 : index
    %947 = vector.load %arg7[%c1_602, %c0_603, %c0_604] : memref<4x128x128xbf16, #tpu.memory_space<vmem>>, vector<1x128x128xbf16>
    %948 = vector.shape_cast %947 : vector<1x128x128xbf16> to vector<128x128xbf16>
    %cst_605 = arith.constant dense<0.000000e+00> : vector<8x128xf32>
    %949 = tpu.matmul %923, %948, %cst_605 {dimension_numbers = #tpu.dot_dimension_numbers<[1], [0], [0], [1], [0, 0, 1, 1], [], []>} : vector<8x128xbf16>, vector<128x128xbf16>, vector<8x128xf32> -> vector<8x128xf32>
    %950 = arith.addf %946, %949 : vector<8x128xf32>
    %951 = arith.negf %950 : vector<8x128xf32>
    %952 = math.exp %951 : vector<8x128xf32>
    %cst_606 = arith.constant 1.000000e+00 : f32
    %953 = vector.broadcast %cst_606 : f32 to vector<8x128xf32>
    %954 = arith.addf %953, %952 : vector<8x128xf32>
    %955 = arith.divf %953, %954 : vector<8x128xf32>
    %c2_607 = arith.constant 2 : index
    %c0_608 = arith.constant 0 : index
    %c0_609 = arith.constant 0 : index
    %956 = vector.load %arg9[%c2_607, %c0_608, %c0_609] : memref<4x1x128xf32, #tpu.memory_space<vmem>>, vector<1x1x128xf32>
    %957 = vector.shape_cast %956 : vector<1x1x128xf32> to vector<1x128xf32>
    %c2_610 = arith.constant 2 : index
    %c0_611 = arith.constant 0 : index
    %c0_612 = arith.constant 0 : index
    %958 = vector.load %arg5[%c2_610, %c0_611, %c0_612] : memref<4x128x128xbf16, #tpu.memory_space<vmem>>, vector<1x128x128xbf16>
    %959 = vector.shape_cast %958 : vector<1x128x128xbf16> to vector<128x128xbf16>
    %cst_613 = arith.constant dense<0.000000e+00> : vector<8x128xf32>
    %960 = tpu.matmul %922, %959, %cst_613 {dimension_numbers = #tpu.dot_dimension_numbers<[1], [0], [0], [1], [0, 0, 1, 1], [], []>} : vector<8x128xbf16>, vector<128x128xbf16>, vector<8x128xf32> -> vector<8x128xf32>
    %961 = vector.broadcast %957 : vector<1x128xf32> to vector<8x128xf32>
    %962 = arith.addf %961, %960 : vector<8x128xf32>
    %c2_614 = arith.constant 2 : index
    %c0_615 = arith.constant 0 : index
    %c0_616 = arith.constant 0 : index
    %963 = vector.load %arg7[%c2_614, %c0_615, %c0_616] : memref<4x128x128xbf16, #tpu.memory_space<vmem>>, vector<1x128x128xbf16>
    %964 = vector.shape_cast %963 : vector<1x128x128xbf16> to vector<128x128xbf16>
    %cst_617 = arith.constant dense<0.000000e+00> : vector<8x128xf32>
    %965 = tpu.matmul %923, %964, %cst_617 {dimension_numbers = #tpu.dot_dimension_numbers<[1], [0], [0], [1], [0, 0, 1, 1], [], []>} : vector<8x128xbf16>, vector<128x128xbf16>, vector<8x128xf32> -> vector<8x128xf32>
    %966 = arith.addf %962, %965 : vector<8x128xf32>
    %967 = math.tanh %966 : vector<8x128xf32>
    %c3_618 = arith.constant 3 : index
    %c0_619 = arith.constant 0 : index
    %c0_620 = arith.constant 0 : index
    %968 = vector.load %arg9[%c3_618, %c0_619, %c0_620] : memref<4x1x128xf32, #tpu.memory_space<vmem>>, vector<1x1x128xf32>
    %969 = vector.shape_cast %968 : vector<1x1x128xf32> to vector<1x128xf32>
    %c3_621 = arith.constant 3 : index
    %c0_622 = arith.constant 0 : index
    %c0_623 = arith.constant 0 : index
    %970 = vector.load %arg5[%c3_621, %c0_622, %c0_623] : memref<4x128x128xbf16, #tpu.memory_space<vmem>>, vector<1x128x128xbf16>
    %971 = vector.shape_cast %970 : vector<1x128x128xbf16> to vector<128x128xbf16>
    %cst_624 = arith.constant dense<0.000000e+00> : vector<8x128xf32>
    %972 = tpu.matmul %922, %971, %cst_624 {dimension_numbers = #tpu.dot_dimension_numbers<[1], [0], [0], [1], [0, 0, 1, 1], [], []>} : vector<8x128xbf16>, vector<128x128xbf16>, vector<8x128xf32> -> vector<8x128xf32>
    %973 = vector.broadcast %969 : vector<1x128xf32> to vector<8x128xf32>
    %974 = arith.addf %973, %972 : vector<8x128xf32>
    %c3_625 = arith.constant 3 : index
    %c0_626 = arith.constant 0 : index
    %c0_627 = arith.constant 0 : index
    %975 = vector.load %arg7[%c3_625, %c0_626, %c0_627] : memref<4x128x128xbf16, #tpu.memory_space<vmem>>, vector<1x128x128xbf16>
    %976 = vector.shape_cast %975 : vector<1x128x128xbf16> to vector<128x128xbf16>
    %cst_628 = arith.constant dense<0.000000e+00> : vector<8x128xf32>
    %977 = tpu.matmul %923, %976, %cst_628 {dimension_numbers = #tpu.dot_dimension_numbers<[1], [0], [0], [1], [0, 0, 1, 1], [], []>} : vector<8x128xbf16>, vector<128x128xbf16>, vector<8x128xf32> -> vector<8x128xf32>
    %978 = arith.addf %974, %977 : vector<8x128xf32>
    %979 = arith.negf %978 : vector<8x128xf32>
    %980 = math.exp %979 : vector<8x128xf32>
    %cst_629 = arith.constant 1.000000e+00 : f32
    %981 = vector.broadcast %cst_629 : f32 to vector<8x128xf32>
    %982 = arith.addf %981, %980 : vector<8x128xf32>
    %983 = arith.divf %981, %982 : vector<8x128xf32>
    %984 = arith.mulf %955, %835 : vector<8x128xf32>
    %985 = arith.mulf %939, %967 : vector<8x128xf32>
    %986 = arith.addf %984, %985 : vector<8x128xf32>
    %987 = math.tanh %986 : vector<8x128xf32>
    %988 = arith.mulf %983, %987 : vector<8x128xf32>
    %989 = vector.broadcast %920 : i32 to vector<8x1xi32>
    %990 = arith.cmpi sgt, %3, %989 : vector<8x1xi32>
    %cst_630 = arith.constant -3.000000e+38 : f32
    %991 = vector.shape_cast %990 : vector<8x1xi1> to vector<8x1xi1>
    %992 = vector.broadcast %991 : vector<8x1xi1> to vector<8x128xi1>
    %993 = vector.broadcast %cst_630 : f32 to vector<8x128xf32>
    %994 = arith.select %992, %988, %993 : vector<8x128xi1>, vector<8x128xf32>
    %995 = vector.shape_cast %990 : vector<8x1xi1> to vector<8x1xi1>
    %996 = vector.broadcast %995 : vector<8x1xi1> to vector<8x128xi1>
    %997 = arith.select %996, %988, %832 : vector<8x128xi1>, vector<8x128xf32>
    %998 = vector.shape_cast %990 : vector<8x1xi1> to vector<8x1xi1>
    %999 = vector.broadcast %998 : vector<8x1xi1> to vector<8x128xi1>
    %1000 = arith.select %999, %986, %835 : vector<8x128xi1>, vector<8x128xf32>
    %1001 = arith.maximumf %836, %994 : vector<8x128xf32>
    %c8_i32_631 = arith.constant 8 : i32
    %1002 = arith.muli %arg1, %c8_i32_631 : i32
    %c6_i32 = arith.constant 6 : i32
    %1003 = arith.addi %1002, %c6_i32 : i32
    %c6_632 = arith.constant 6 : index
    %c0_633 = arith.constant 0 : index
    %c0_634 = arith.constant 0 : index
    %1004 = vector.load %arg2[%c6_632, %c0_633, %c0_634] : memref<8x8x128xbf16, #tpu.memory_space<vmem>>, vector<1x8x128xbf16>
    %1005 = vector.shape_cast %1004 : vector<1x8x128xbf16> to vector<8x128xbf16>
    %1006 = arith.truncf %915 : vector<8x128xf32> to vector<8x128xbf16>
    %c0_635 = arith.constant 0 : index
    %c0_636 = arith.constant 0 : index
    %c0_637 = arith.constant 0 : index
    %1007 = vector.load %arg8[%c0_635, %c0_636, %c0_637] : memref<4x1x128xf32, #tpu.memory_space<vmem>>, vector<1x1x128xf32>
    %1008 = vector.shape_cast %1007 : vector<1x1x128xf32> to vector<1x128xf32>
    %c0_638 = arith.constant 0 : index
    %c0_639 = arith.constant 0 : index
    %c0_640 = arith.constant 0 : index
    %1009 = vector.load %arg4[%c0_638, %c0_639, %c0_640] : memref<4x128x128xbf16, #tpu.memory_space<vmem>>, vector<1x128x128xbf16>
    %1010 = vector.shape_cast %1009 : vector<1x128x128xbf16> to vector<128x128xbf16>
    %cst_641 = arith.constant dense<0.000000e+00> : vector<8x128xf32>
    %1011 = tpu.matmul %1005, %1010, %cst_641 {dimension_numbers = #tpu.dot_dimension_numbers<[1], [0], [0], [1], [0, 0, 1, 1], [], []>} : vector<8x128xbf16>, vector<128x128xbf16>, vector<8x128xf32> -> vector<8x128xf32>
    %1012 = vector.broadcast %1008 : vector<1x128xf32> to vector<8x128xf32>
    %1013 = arith.addf %1012, %1011 : vector<8x128xf32>
    %c0_642 = arith.constant 0 : index
    %c0_643 = arith.constant 0 : index
    %c0_644 = arith.constant 0 : index
    %1014 = vector.load %arg6[%c0_642, %c0_643, %c0_644] : memref<4x128x128xbf16, #tpu.memory_space<vmem>>, vector<1x128x128xbf16>
    %1015 = vector.shape_cast %1014 : vector<1x128x128xbf16> to vector<128x128xbf16>
    %cst_645 = arith.constant dense<0.000000e+00> : vector<8x128xf32>
    %1016 = tpu.matmul %1006, %1015, %cst_645 {dimension_numbers = #tpu.dot_dimension_numbers<[1], [0], [0], [1], [0, 0, 1, 1], [], []>} : vector<8x128xbf16>, vector<128x128xbf16>, vector<8x128xf32> -> vector<8x128xf32>
    %1017 = arith.addf %1013, %1016 : vector<8x128xf32>
    %1018 = arith.negf %1017 : vector<8x128xf32>
    %1019 = math.exp %1018 : vector<8x128xf32>
    %cst_646 = arith.constant 1.000000e+00 : f32
    %1020 = vector.broadcast %cst_646 : f32 to vector<8x128xf32>
    %1021 = arith.addf %1020, %1019 : vector<8x128xf32>
    %1022 = arith.divf %1020, %1021 : vector<8x128xf32>
    %c1_647 = arith.constant 1 : index
    %c0_648 = arith.constant 0 : index
    %c0_649 = arith.constant 0 : index
    %1023 = vector.load %arg8[%c1_647, %c0_648, %c0_649] : memref<4x1x128xf32, #tpu.memory_space<vmem>>, vector<1x1x128xf32>
    %1024 = vector.shape_cast %1023 : vector<1x1x128xf32> to vector<1x128xf32>
    %c1_650 = arith.constant 1 : index
    %c0_651 = arith.constant 0 : index
    %c0_652 = arith.constant 0 : index
    %1025 = vector.load %arg4[%c1_650, %c0_651, %c0_652] : memref<4x128x128xbf16, #tpu.memory_space<vmem>>, vector<1x128x128xbf16>
    %1026 = vector.shape_cast %1025 : vector<1x128x128xbf16> to vector<128x128xbf16>
    %cst_653 = arith.constant dense<0.000000e+00> : vector<8x128xf32>
    %1027 = tpu.matmul %1005, %1026, %cst_653 {dimension_numbers = #tpu.dot_dimension_numbers<[1], [0], [0], [1], [0, 0, 1, 1], [], []>} : vector<8x128xbf16>, vector<128x128xbf16>, vector<8x128xf32> -> vector<8x128xf32>
    %1028 = vector.broadcast %1024 : vector<1x128xf32> to vector<8x128xf32>
    %1029 = arith.addf %1028, %1027 : vector<8x128xf32>
    %c1_654 = arith.constant 1 : index
    %c0_655 = arith.constant 0 : index
    %c0_656 = arith.constant 0 : index
    %1030 = vector.load %arg6[%c1_654, %c0_655, %c0_656] : memref<4x128x128xbf16, #tpu.memory_space<vmem>>, vector<1x128x128xbf16>
    %1031 = vector.shape_cast %1030 : vector<1x128x128xbf16> to vector<128x128xbf16>
    %cst_657 = arith.constant dense<0.000000e+00> : vector<8x128xf32>
    %1032 = tpu.matmul %1006, %1031, %cst_657 {dimension_numbers = #tpu.dot_dimension_numbers<[1], [0], [0], [1], [0, 0, 1, 1], [], []>} : vector<8x128xbf16>, vector<128x128xbf16>, vector<8x128xf32> -> vector<8x128xf32>
    %1033 = arith.addf %1029, %1032 : vector<8x128xf32>
    %1034 = arith.negf %1033 : vector<8x128xf32>
    %1035 = math.exp %1034 : vector<8x128xf32>
    %cst_658 = arith.constant 1.000000e+00 : f32
    %1036 = vector.broadcast %cst_658 : f32 to vector<8x128xf32>
    %1037 = arith.addf %1036, %1035 : vector<8x128xf32>
    %1038 = arith.divf %1036, %1037 : vector<8x128xf32>
    %c2_659 = arith.constant 2 : index
    %c0_660 = arith.constant 0 : index
    %c0_661 = arith.constant 0 : index
    %1039 = vector.load %arg8[%c2_659, %c0_660, %c0_661] : memref<4x1x128xf32, #tpu.memory_space<vmem>>, vector<1x1x128xf32>
    %1040 = vector.shape_cast %1039 : vector<1x1x128xf32> to vector<1x128xf32>
    %c2_662 = arith.constant 2 : index
    %c0_663 = arith.constant 0 : index
    %c0_664 = arith.constant 0 : index
    %1041 = vector.load %arg4[%c2_662, %c0_663, %c0_664] : memref<4x128x128xbf16, #tpu.memory_space<vmem>>, vector<1x128x128xbf16>
    %1042 = vector.shape_cast %1041 : vector<1x128x128xbf16> to vector<128x128xbf16>
    %cst_665 = arith.constant dense<0.000000e+00> : vector<8x128xf32>
    %1043 = tpu.matmul %1005, %1042, %cst_665 {dimension_numbers = #tpu.dot_dimension_numbers<[1], [0], [0], [1], [0, 0, 1, 1], [], []>} : vector<8x128xbf16>, vector<128x128xbf16>, vector<8x128xf32> -> vector<8x128xf32>
    %1044 = vector.broadcast %1040 : vector<1x128xf32> to vector<8x128xf32>
    %1045 = arith.addf %1044, %1043 : vector<8x128xf32>
    %c2_666 = arith.constant 2 : index
    %c0_667 = arith.constant 0 : index
    %c0_668 = arith.constant 0 : index
    %1046 = vector.load %arg6[%c2_666, %c0_667, %c0_668] : memref<4x128x128xbf16, #tpu.memory_space<vmem>>, vector<1x128x128xbf16>
    %1047 = vector.shape_cast %1046 : vector<1x128x128xbf16> to vector<128x128xbf16>
    %cst_669 = arith.constant dense<0.000000e+00> : vector<8x128xf32>
    %1048 = tpu.matmul %1006, %1047, %cst_669 {dimension_numbers = #tpu.dot_dimension_numbers<[1], [0], [0], [1], [0, 0, 1, 1], [], []>} : vector<8x128xbf16>, vector<128x128xbf16>, vector<8x128xf32> -> vector<8x128xf32>
    %1049 = arith.addf %1045, %1048 : vector<8x128xf32>
    %1050 = math.tanh %1049 : vector<8x128xf32>
    %c3_670 = arith.constant 3 : index
    %c0_671 = arith.constant 0 : index
    %c0_672 = arith.constant 0 : index
    %1051 = vector.load %arg8[%c3_670, %c0_671, %c0_672] : memref<4x1x128xf32, #tpu.memory_space<vmem>>, vector<1x1x128xf32>
    %1052 = vector.shape_cast %1051 : vector<1x1x128xf32> to vector<1x128xf32>
    %c3_673 = arith.constant 3 : index
    %c0_674 = arith.constant 0 : index
    %c0_675 = arith.constant 0 : index
    %1053 = vector.load %arg4[%c3_673, %c0_674, %c0_675] : memref<4x128x128xbf16, #tpu.memory_space<vmem>>, vector<1x128x128xbf16>
    %1054 = vector.shape_cast %1053 : vector<1x128x128xbf16> to vector<128x128xbf16>
    %cst_676 = arith.constant dense<0.000000e+00> : vector<8x128xf32>
    %1055 = tpu.matmul %1005, %1054, %cst_676 {dimension_numbers = #tpu.dot_dimension_numbers<[1], [0], [0], [1], [0, 0, 1, 1], [], []>} : vector<8x128xbf16>, vector<128x128xbf16>, vector<8x128xf32> -> vector<8x128xf32>
    %1056 = vector.broadcast %1052 : vector<1x128xf32> to vector<8x128xf32>
    %1057 = arith.addf %1056, %1055 : vector<8x128xf32>
    %c3_677 = arith.constant 3 : index
    %c0_678 = arith.constant 0 : index
    %c0_679 = arith.constant 0 : index
    %1058 = vector.load %arg6[%c3_677, %c0_678, %c0_679] : memref<4x128x128xbf16, #tpu.memory_space<vmem>>, vector<1x128x128xbf16>
    %1059 = vector.shape_cast %1058 : vector<1x128x128xbf16> to vector<128x128xbf16>
    %cst_680 = arith.constant dense<0.000000e+00> : vector<8x128xf32>
    %1060 = tpu.matmul %1006, %1059, %cst_680 {dimension_numbers = #tpu.dot_dimension_numbers<[1], [0], [0], [1], [0, 0, 1, 1], [], []>} : vector<8x128xbf16>, vector<128x128xbf16>, vector<8x128xf32> -> vector<8x128xf32>
    %1061 = arith.addf %1057, %1060 : vector<8x128xf32>
    %1062 = arith.negf %1061 : vector<8x128xf32>
    %1063 = math.exp %1062 : vector<8x128xf32>
    %cst_681 = arith.constant 1.000000e+00 : f32
    %1064 = vector.broadcast %cst_681 : f32 to vector<8x128xf32>
    %1065 = arith.addf %1064, %1063 : vector<8x128xf32>
    %1066 = arith.divf %1064, %1065 : vector<8x128xf32>
    %1067 = arith.mulf %1038, %918 : vector<8x128xf32>
    %1068 = arith.mulf %1022, %1050 : vector<8x128xf32>
    %1069 = arith.addf %1067, %1068 : vector<8x128xf32>
    %1070 = math.tanh %1069 : vector<8x128xf32>
    %1071 = arith.mulf %1066, %1070 : vector<8x128xf32>
    %1072 = vector.broadcast %1003 : i32 to vector<8x1xi32>
    %1073 = arith.cmpi sgt, %3, %1072 : vector<8x1xi32>
    %cst_682 = arith.constant -3.000000e+38 : f32
    %1074 = vector.shape_cast %1073 : vector<8x1xi1> to vector<8x1xi1>
    %1075 = vector.broadcast %1074 : vector<8x1xi1> to vector<8x128xi1>
    %1076 = vector.broadcast %cst_682 : f32 to vector<8x128xf32>
    %1077 = arith.select %1075, %1071, %1076 : vector<8x128xi1>, vector<8x128xf32>
    %1078 = vector.shape_cast %1073 : vector<8x1xi1> to vector<8x1xi1>
    %1079 = vector.broadcast %1078 : vector<8x1xi1> to vector<8x128xi1>
    %1080 = arith.select %1079, %1071, %915 : vector<8x128xi1>, vector<8x128xf32>
    %1081 = vector.shape_cast %1073 : vector<8x1xi1> to vector<8x1xi1>
    %1082 = vector.broadcast %1081 : vector<8x1xi1> to vector<8x128xi1>
    %1083 = arith.select %1082, %1069, %918 : vector<8x128xi1>, vector<8x128xf32>
    %1084 = arith.maximumf %919, %1077 : vector<8x128xf32>
    %c7_i32_683 = arith.constant 7 : i32
    %1085 = arith.subi %c7_i32_683, %1003 : i32
    %c1_684 = arith.constant 1 : index
    %c0_685 = arith.constant 0 : index
    %c0_686 = arith.constant 0 : index
    %1086 = vector.load %arg3[%c1_684, %c0_685, %c0_686] : memref<8x8x128xbf16, #tpu.memory_space<vmem>>, vector<1x8x128xbf16>
    %1087 = vector.shape_cast %1086 : vector<1x8x128xbf16> to vector<8x128xbf16>
    %1088 = arith.truncf %997 : vector<8x128xf32> to vector<8x128xbf16>
    %c0_687 = arith.constant 0 : index
    %c0_688 = arith.constant 0 : index
    %c0_689 = arith.constant 0 : index
    %1089 = vector.load %arg9[%c0_687, %c0_688, %c0_689] : memref<4x1x128xf32, #tpu.memory_space<vmem>>, vector<1x1x128xf32>
    %1090 = vector.shape_cast %1089 : vector<1x1x128xf32> to vector<1x128xf32>
    %c0_690 = arith.constant 0 : index
    %c0_691 = arith.constant 0 : index
    %c0_692 = arith.constant 0 : index
    %1091 = vector.load %arg5[%c0_690, %c0_691, %c0_692] : memref<4x128x128xbf16, #tpu.memory_space<vmem>>, vector<1x128x128xbf16>
    %1092 = vector.shape_cast %1091 : vector<1x128x128xbf16> to vector<128x128xbf16>
    %cst_693 = arith.constant dense<0.000000e+00> : vector<8x128xf32>
    %1093 = tpu.matmul %1087, %1092, %cst_693 {dimension_numbers = #tpu.dot_dimension_numbers<[1], [0], [0], [1], [0, 0, 1, 1], [], []>} : vector<8x128xbf16>, vector<128x128xbf16>, vector<8x128xf32> -> vector<8x128xf32>
    %1094 = vector.broadcast %1090 : vector<1x128xf32> to vector<8x128xf32>
    %1095 = arith.addf %1094, %1093 : vector<8x128xf32>
    %c0_694 = arith.constant 0 : index
    %c0_695 = arith.constant 0 : index
    %c0_696 = arith.constant 0 : index
    %1096 = vector.load %arg7[%c0_694, %c0_695, %c0_696] : memref<4x128x128xbf16, #tpu.memory_space<vmem>>, vector<1x128x128xbf16>
    %1097 = vector.shape_cast %1096 : vector<1x128x128xbf16> to vector<128x128xbf16>
    %cst_697 = arith.constant dense<0.000000e+00> : vector<8x128xf32>
    %1098 = tpu.matmul %1088, %1097, %cst_697 {dimension_numbers = #tpu.dot_dimension_numbers<[1], [0], [0], [1], [0, 0, 1, 1], [], []>} : vector<8x128xbf16>, vector<128x128xbf16>, vector<8x128xf32> -> vector<8x128xf32>
    %1099 = arith.addf %1095, %1098 : vector<8x128xf32>
    %1100 = arith.negf %1099 : vector<8x128xf32>
    %1101 = math.exp %1100 : vector<8x128xf32>
    %cst_698 = arith.constant 1.000000e+00 : f32
    %1102 = vector.broadcast %cst_698 : f32 to vector<8x128xf32>
    %1103 = arith.addf %1102, %1101 : vector<8x128xf32>
    %1104 = arith.divf %1102, %1103 : vector<8x128xf32>
    %c1_699 = arith.constant 1 : index
    %c0_700 = arith.constant 0 : index
    %c0_701 = arith.constant 0 : index
    %1105 = vector.load %arg9[%c1_699, %c0_700, %c0_701] : memref<4x1x128xf32, #tpu.memory_space<vmem>>, vector<1x1x128xf32>
    %1106 = vector.shape_cast %1105 : vector<1x1x128xf32> to vector<1x128xf32>
    %c1_702 = arith.constant 1 : index
    %c0_703 = arith.constant 0 : index
    %c0_704 = arith.constant 0 : index
    %1107 = vector.load %arg5[%c1_702, %c0_703, %c0_704] : memref<4x128x128xbf16, #tpu.memory_space<vmem>>, vector<1x128x128xbf16>
    %1108 = vector.shape_cast %1107 : vector<1x128x128xbf16> to vector<128x128xbf16>
    %cst_705 = arith.constant dense<0.000000e+00> : vector<8x128xf32>
    %1109 = tpu.matmul %1087, %1108, %cst_705 {dimension_numbers = #tpu.dot_dimension_numbers<[1], [0], [0], [1], [0, 0, 1, 1], [], []>} : vector<8x128xbf16>, vector<128x128xbf16>, vector<8x128xf32> -> vector<8x128xf32>
    %1110 = vector.broadcast %1106 : vector<1x128xf32> to vector<8x128xf32>
    %1111 = arith.addf %1110, %1109 : vector<8x128xf32>
    %c1_706 = arith.constant 1 : index
    %c0_707 = arith.constant 0 : index
    %c0_708 = arith.constant 0 : index
    %1112 = vector.load %arg7[%c1_706, %c0_707, %c0_708] : memref<4x128x128xbf16, #tpu.memory_space<vmem>>, vector<1x128x128xbf16>
    %1113 = vector.shape_cast %1112 : vector<1x128x128xbf16> to vector<128x128xbf16>
    %cst_709 = arith.constant dense<0.000000e+00> : vector<8x128xf32>
    %1114 = tpu.matmul %1088, %1113, %cst_709 {dimension_numbers = #tpu.dot_dimension_numbers<[1], [0], [0], [1], [0, 0, 1, 1], [], []>} : vector<8x128xbf16>, vector<128x128xbf16>, vector<8x128xf32> -> vector<8x128xf32>
    %1115 = arith.addf %1111, %1114 : vector<8x128xf32>
    %1116 = arith.negf %1115 : vector<8x128xf32>
    %1117 = math.exp %1116 : vector<8x128xf32>
    %cst_710 = arith.constant 1.000000e+00 : f32
    %1118 = vector.broadcast %cst_710 : f32 to vector<8x128xf32>
    %1119 = arith.addf %1118, %1117 : vector<8x128xf32>
    %1120 = arith.divf %1118, %1119 : vector<8x128xf32>
    %c2_711 = arith.constant 2 : index
    %c0_712 = arith.constant 0 : index
    %c0_713 = arith.constant 0 : index
    %1121 = vector.load %arg9[%c2_711, %c0_712, %c0_713] : memref<4x1x128xf32, #tpu.memory_space<vmem>>, vector<1x1x128xf32>
    %1122 = vector.shape_cast %1121 : vector<1x1x128xf32> to vector<1x128xf32>
    %c2_714 = arith.constant 2 : index
    %c0_715 = arith.constant 0 : index
    %c0_716 = arith.constant 0 : index
    %1123 = vector.load %arg5[%c2_714, %c0_715, %c0_716] : memref<4x128x128xbf16, #tpu.memory_space<vmem>>, vector<1x128x128xbf16>
    %1124 = vector.shape_cast %1123 : vector<1x128x128xbf16> to vector<128x128xbf16>
    %cst_717 = arith.constant dense<0.000000e+00> : vector<8x128xf32>
    %1125 = tpu.matmul %1087, %1124, %cst_717 {dimension_numbers = #tpu.dot_dimension_numbers<[1], [0], [0], [1], [0, 0, 1, 1], [], []>} : vector<8x128xbf16>, vector<128x128xbf16>, vector<8x128xf32> -> vector<8x128xf32>
    %1126 = vector.broadcast %1122 : vector<1x128xf32> to vector<8x128xf32>
    %1127 = arith.addf %1126, %1125 : vector<8x128xf32>
    %c2_718 = arith.constant 2 : index
    %c0_719 = arith.constant 0 : index
    %c0_720 = arith.constant 0 : index
    %1128 = vector.load %arg7[%c2_718, %c0_719, %c0_720] : memref<4x128x128xbf16, #tpu.memory_space<vmem>>, vector<1x128x128xbf16>
    %1129 = vector.shape_cast %1128 : vector<1x128x128xbf16> to vector<128x128xbf16>
    %cst_721 = arith.constant dense<0.000000e+00> : vector<8x128xf32>
    %1130 = tpu.matmul %1088, %1129, %cst_721 {dimension_numbers = #tpu.dot_dimension_numbers<[1], [0], [0], [1], [0, 0, 1, 1], [], []>} : vector<8x128xbf16>, vector<128x128xbf16>, vector<8x128xf32> -> vector<8x128xf32>
    %1131 = arith.addf %1127, %1130 : vector<8x128xf32>
    %1132 = math.tanh %1131 : vector<8x128xf32>
    %c3_722 = arith.constant 3 : index
    %c0_723 = arith.constant 0 : index
    %c0_724 = arith.constant 0 : index
    %1133 = vector.load %arg9[%c3_722, %c0_723, %c0_724] : memref<4x1x128xf32, #tpu.memory_space<vmem>>, vector<1x1x128xf32>
    %1134 = vector.shape_cast %1133 : vector<1x1x128xf32> to vector<1x128xf32>
    %c3_725 = arith.constant 3 : index
    %c0_726 = arith.constant 0 : index
    %c0_727 = arith.constant 0 : index
    %1135 = vector.load %arg5[%c3_725, %c0_726, %c0_727] : memref<4x128x128xbf16, #tpu.memory_space<vmem>>, vector<1x128x128xbf16>
    %1136 = vector.shape_cast %1135 : vector<1x128x128xbf16> to vector<128x128xbf16>
    %cst_728 = arith.constant dense<0.000000e+00> : vector<8x128xf32>
    %1137 = tpu.matmul %1087, %1136, %cst_728 {dimension_numbers = #tpu.dot_dimension_numbers<[1], [0], [0], [1], [0, 0, 1, 1], [], []>} : vector<8x128xbf16>, vector<128x128xbf16>, vector<8x128xf32> -> vector<8x128xf32>
    %1138 = vector.broadcast %1134 : vector<1x128xf32> to vector<8x128xf32>
    %1139 = arith.addf %1138, %1137 : vector<8x128xf32>
    %c3_729 = arith.constant 3 : index
    %c0_730 = arith.constant 0 : index
    %c0_731 = arith.constant 0 : index
    %1140 = vector.load %arg7[%c3_729, %c0_730, %c0_731] : memref<4x128x128xbf16, #tpu.memory_space<vmem>>, vector<1x128x128xbf16>
    %1141 = vector.shape_cast %1140 : vector<1x128x128xbf16> to vector<128x128xbf16>
    %cst_732 = arith.constant dense<0.000000e+00> : vector<8x128xf32>
    %1142 = tpu.matmul %1088, %1141, %cst_732 {dimension_numbers = #tpu.dot_dimension_numbers<[1], [0], [0], [1], [0, 0, 1, 1], [], []>} : vector<8x128xbf16>, vector<128x128xbf16>, vector<8x128xf32> -> vector<8x128xf32>
    %1143 = arith.addf %1139, %1142 : vector<8x128xf32>
    %1144 = arith.negf %1143 : vector<8x128xf32>
    %1145 = math.exp %1144 : vector<8x128xf32>
    %cst_733 = arith.constant 1.000000e+00 : f32
    %1146 = vector.broadcast %cst_733 : f32 to vector<8x128xf32>
    %1147 = arith.addf %1146, %1145 : vector<8x128xf32>
    %1148 = arith.divf %1146, %1147 : vector<8x128xf32>
    %1149 = arith.mulf %1120, %1000 : vector<8x128xf32>
    %1150 = arith.mulf %1104, %1132 : vector<8x128xf32>
    %1151 = arith.addf %1149, %1150 : vector<8x128xf32>
    %1152 = math.tanh %1151 : vector<8x128xf32>
    %1153 = arith.mulf %1148, %1152 : vector<8x128xf32>
    %1154 = vector.broadcast %1085 : i32 to vector<8x1xi32>
    %1155 = arith.cmpi sgt, %3, %1154 : vector<8x1xi32>
    %cst_734 = arith.constant -3.000000e+38 : f32
    %1156 = vector.shape_cast %1155 : vector<8x1xi1> to vector<8x1xi1>
    %1157 = vector.broadcast %1156 : vector<8x1xi1> to vector<8x128xi1>
    %1158 = vector.broadcast %cst_734 : f32 to vector<8x128xf32>
    %1159 = arith.select %1157, %1153, %1158 : vector<8x128xi1>, vector<8x128xf32>
    %1160 = vector.shape_cast %1155 : vector<8x1xi1> to vector<8x1xi1>
    %1161 = vector.broadcast %1160 : vector<8x1xi1> to vector<8x128xi1>
    %1162 = arith.select %1161, %1153, %997 : vector<8x128xi1>, vector<8x128xf32>
    %1163 = vector.shape_cast %1155 : vector<8x1xi1> to vector<8x1xi1>
    %1164 = vector.broadcast %1163 : vector<8x1xi1> to vector<8x128xi1>
    %1165 = arith.select %1164, %1151, %1000 : vector<8x128xi1>, vector<8x128xf32>
    %1166 = arith.maximumf %1001, %1159 : vector<8x128xf32>
    %c8_i32_735 = arith.constant 8 : i32
    %1167 = arith.muli %arg1, %c8_i32_735 : i32
    %c7_i32_736 = arith.constant 7 : i32
    %1168 = arith.addi %1167, %c7_i32_736 : i32
    %c7_737 = arith.constant 7 : index
    %c0_738 = arith.constant 0 : index
    %c0_739 = arith.constant 0 : index
    %1169 = vector.load %arg2[%c7_737, %c0_738, %c0_739] : memref<8x8x128xbf16, #tpu.memory_space<vmem>>, vector<1x8x128xbf16>
    %1170 = vector.shape_cast %1169 : vector<1x8x128xbf16> to vector<8x128xbf16>
    %1171 = arith.truncf %1080 : vector<8x128xf32> to vector<8x128xbf16>
    %c0_740 = arith.constant 0 : index
    %c0_741 = arith.constant 0 : index
    %c0_742 = arith.constant 0 : index
    %1172 = vector.load %arg8[%c0_740, %c0_741, %c0_742] : memref<4x1x128xf32, #tpu.memory_space<vmem>>, vector<1x1x128xf32>
    %1173 = vector.shape_cast %1172 : vector<1x1x128xf32> to vector<1x128xf32>
    %c0_743 = arith.constant 0 : index
    %c0_744 = arith.constant 0 : index
    %c0_745 = arith.constant 0 : index
    %1174 = vector.load %arg4[%c0_743, %c0_744, %c0_745] : memref<4x128x128xbf16, #tpu.memory_space<vmem>>, vector<1x128x128xbf16>
    %1175 = vector.shape_cast %1174 : vector<1x128x128xbf16> to vector<128x128xbf16>
    %cst_746 = arith.constant dense<0.000000e+00> : vector<8x128xf32>
    %1176 = tpu.matmul %1170, %1175, %cst_746 {dimension_numbers = #tpu.dot_dimension_numbers<[1], [0], [0], [1], [0, 0, 1, 1], [], []>} : vector<8x128xbf16>, vector<128x128xbf16>, vector<8x128xf32> -> vector<8x128xf32>
    %1177 = vector.broadcast %1173 : vector<1x128xf32> to vector<8x128xf32>
    %1178 = arith.addf %1177, %1176 : vector<8x128xf32>
    %c0_747 = arith.constant 0 : index
    %c0_748 = arith.constant 0 : index
    %c0_749 = arith.constant 0 : index
    %1179 = vector.load %arg6[%c0_747, %c0_748, %c0_749] : memref<4x128x128xbf16, #tpu.memory_space<vmem>>, vector<1x128x128xbf16>
    %1180 = vector.shape_cast %1179 : vector<1x128x128xbf16> to vector<128x128xbf16>
    %cst_750 = arith.constant dense<0.000000e+00> : vector<8x128xf32>
    %1181 = tpu.matmul %1171, %1180, %cst_750 {dimension_numbers = #tpu.dot_dimension_numbers<[1], [0], [0], [1], [0, 0, 1, 1], [], []>} : vector<8x128xbf16>, vector<128x128xbf16>, vector<8x128xf32> -> vector<8x128xf32>
    %1182 = arith.addf %1178, %1181 : vector<8x128xf32>
    %1183 = arith.negf %1182 : vector<8x128xf32>
    %1184 = math.exp %1183 : vector<8x128xf32>
    %cst_751 = arith.constant 1.000000e+00 : f32
    %1185 = vector.broadcast %cst_751 : f32 to vector<8x128xf32>
    %1186 = arith.addf %1185, %1184 : vector<8x128xf32>
    %1187 = arith.divf %1185, %1186 : vector<8x128xf32>
    %c1_752 = arith.constant 1 : index
    %c0_753 = arith.constant 0 : index
    %c0_754 = arith.constant 0 : index
    %1188 = vector.load %arg8[%c1_752, %c0_753, %c0_754] : memref<4x1x128xf32, #tpu.memory_space<vmem>>, vector<1x1x128xf32>
    %1189 = vector.shape_cast %1188 : vector<1x1x128xf32> to vector<1x128xf32>
    %c1_755 = arith.constant 1 : index
    %c0_756 = arith.constant 0 : index
    %c0_757 = arith.constant 0 : index
    %1190 = vector.load %arg4[%c1_755, %c0_756, %c0_757] : memref<4x128x128xbf16, #tpu.memory_space<vmem>>, vector<1x128x128xbf16>
    %1191 = vector.shape_cast %1190 : vector<1x128x128xbf16> to vector<128x128xbf16>
    %cst_758 = arith.constant dense<0.000000e+00> : vector<8x128xf32>
    %1192 = tpu.matmul %1170, %1191, %cst_758 {dimension_numbers = #tpu.dot_dimension_numbers<[1], [0], [0], [1], [0, 0, 1, 1], [], []>} : vector<8x128xbf16>, vector<128x128xbf16>, vector<8x128xf32> -> vector<8x128xf32>
    %1193 = vector.broadcast %1189 : vector<1x128xf32> to vector<8x128xf32>
    %1194 = arith.addf %1193, %1192 : vector<8x128xf32>
    %c1_759 = arith.constant 1 : index
    %c0_760 = arith.constant 0 : index
    %c0_761 = arith.constant 0 : index
    %1195 = vector.load %arg6[%c1_759, %c0_760, %c0_761] : memref<4x128x128xbf16, #tpu.memory_space<vmem>>, vector<1x128x128xbf16>
    %1196 = vector.shape_cast %1195 : vector<1x128x128xbf16> to vector<128x128xbf16>
    %cst_762 = arith.constant dense<0.000000e+00> : vector<8x128xf32>
    %1197 = tpu.matmul %1171, %1196, %cst_762 {dimension_numbers = #tpu.dot_dimension_numbers<[1], [0], [0], [1], [0, 0, 1, 1], [], []>} : vector<8x128xbf16>, vector<128x128xbf16>, vector<8x128xf32> -> vector<8x128xf32>
    %1198 = arith.addf %1194, %1197 : vector<8x128xf32>
    %1199 = arith.negf %1198 : vector<8x128xf32>
    %1200 = math.exp %1199 : vector<8x128xf32>
    %cst_763 = arith.constant 1.000000e+00 : f32
    %1201 = vector.broadcast %cst_763 : f32 to vector<8x128xf32>
    %1202 = arith.addf %1201, %1200 : vector<8x128xf32>
    %1203 = arith.divf %1201, %1202 : vector<8x128xf32>
    %c2_764 = arith.constant 2 : index
    %c0_765 = arith.constant 0 : index
    %c0_766 = arith.constant 0 : index
    %1204 = vector.load %arg8[%c2_764, %c0_765, %c0_766] : memref<4x1x128xf32, #tpu.memory_space<vmem>>, vector<1x1x128xf32>
    %1205 = vector.shape_cast %1204 : vector<1x1x128xf32> to vector<1x128xf32>
    %c2_767 = arith.constant 2 : index
    %c0_768 = arith.constant 0 : index
    %c0_769 = arith.constant 0 : index
    %1206 = vector.load %arg4[%c2_767, %c0_768, %c0_769] : memref<4x128x128xbf16, #tpu.memory_space<vmem>>, vector<1x128x128xbf16>
    %1207 = vector.shape_cast %1206 : vector<1x128x128xbf16> to vector<128x128xbf16>
    %cst_770 = arith.constant dense<0.000000e+00> : vector<8x128xf32>
    %1208 = tpu.matmul %1170, %1207, %cst_770 {dimension_numbers = #tpu.dot_dimension_numbers<[1], [0], [0], [1], [0, 0, 1, 1], [], []>} : vector<8x128xbf16>, vector<128x128xbf16>, vector<8x128xf32> -> vector<8x128xf32>
    %1209 = vector.broadcast %1205 : vector<1x128xf32> to vector<8x128xf32>
    %1210 = arith.addf %1209, %1208 : vector<8x128xf32>
    %c2_771 = arith.constant 2 : index
    %c0_772 = arith.constant 0 : index
    %c0_773 = arith.constant 0 : index
    %1211 = vector.load %arg6[%c2_771, %c0_772, %c0_773] : memref<4x128x128xbf16, #tpu.memory_space<vmem>>, vector<1x128x128xbf16>
    %1212 = vector.shape_cast %1211 : vector<1x128x128xbf16> to vector<128x128xbf16>
    %cst_774 = arith.constant dense<0.000000e+00> : vector<8x128xf32>
    %1213 = tpu.matmul %1171, %1212, %cst_774 {dimension_numbers = #tpu.dot_dimension_numbers<[1], [0], [0], [1], [0, 0, 1, 1], [], []>} : vector<8x128xbf16>, vector<128x128xbf16>, vector<8x128xf32> -> vector<8x128xf32>
    %1214 = arith.addf %1210, %1213 : vector<8x128xf32>
    %1215 = math.tanh %1214 : vector<8x128xf32>
    %c3_775 = arith.constant 3 : index
    %c0_776 = arith.constant 0 : index
    %c0_777 = arith.constant 0 : index
    %1216 = vector.load %arg8[%c3_775, %c0_776, %c0_777] : memref<4x1x128xf32, #tpu.memory_space<vmem>>, vector<1x1x128xf32>
    %1217 = vector.shape_cast %1216 : vector<1x1x128xf32> to vector<1x128xf32>
    %c3_778 = arith.constant 3 : index
    %c0_779 = arith.constant 0 : index
    %c0_780 = arith.constant 0 : index
    %1218 = vector.load %arg4[%c3_778, %c0_779, %c0_780] : memref<4x128x128xbf16, #tpu.memory_space<vmem>>, vector<1x128x128xbf16>
    %1219 = vector.shape_cast %1218 : vector<1x128x128xbf16> to vector<128x128xbf16>
    %cst_781 = arith.constant dense<0.000000e+00> : vector<8x128xf32>
    %1220 = tpu.matmul %1170, %1219, %cst_781 {dimension_numbers = #tpu.dot_dimension_numbers<[1], [0], [0], [1], [0, 0, 1, 1], [], []>} : vector<8x128xbf16>, vector<128x128xbf16>, vector<8x128xf32> -> vector<8x128xf32>
    %1221 = vector.broadcast %1217 : vector<1x128xf32> to vector<8x128xf32>
    %1222 = arith.addf %1221, %1220 : vector<8x128xf32>
    %c3_782 = arith.constant 3 : index
    %c0_783 = arith.constant 0 : index
    %c0_784 = arith.constant 0 : index
    %1223 = vector.load %arg6[%c3_782, %c0_783, %c0_784] : memref<4x128x128xbf16, #tpu.memory_space<vmem>>, vector<1x128x128xbf16>
    %1224 = vector.shape_cast %1223 : vector<1x128x128xbf16> to vector<128x128xbf16>
    %cst_785 = arith.constant dense<0.000000e+00> : vector<8x128xf32>
    %1225 = tpu.matmul %1171, %1224, %cst_785 {dimension_numbers = #tpu.dot_dimension_numbers<[1], [0], [0], [1], [0, 0, 1, 1], [], []>} : vector<8x128xbf16>, vector<128x128xbf16>, vector<8x128xf32> -> vector<8x128xf32>
    %1226 = arith.addf %1222, %1225 : vector<8x128xf32>
    %1227 = arith.negf %1226 : vector<8x128xf32>
    %1228 = math.exp %1227 : vector<8x128xf32>
    %cst_786 = arith.constant 1.000000e+00 : f32
    %1229 = vector.broadcast %cst_786 : f32 to vector<8x128xf32>
    %1230 = arith.addf %1229, %1228 : vector<8x128xf32>
    %1231 = arith.divf %1229, %1230 : vector<8x128xf32>
    %1232 = arith.mulf %1203, %1083 : vector<8x128xf32>
    %1233 = arith.mulf %1187, %1215 : vector<8x128xf32>
    %1234 = arith.addf %1232, %1233 : vector<8x128xf32>
    %1235 = math.tanh %1234 : vector<8x128xf32>
    %1236 = arith.mulf %1231, %1235 : vector<8x128xf32>
    %1237 = vector.broadcast %1168 : i32 to vector<8x1xi32>
    %1238 = arith.cmpi sgt, %3, %1237 : vector<8x1xi32>
    %cst_787 = arith.constant -3.000000e+38 : f32
    %1239 = vector.shape_cast %1238 : vector<8x1xi1> to vector<8x1xi1>
    %1240 = vector.broadcast %1239 : vector<8x1xi1> to vector<8x128xi1>
    %1241 = vector.broadcast %cst_787 : f32 to vector<8x128xf32>
    %1242 = arith.select %1240, %1236, %1241 : vector<8x128xi1>, vector<8x128xf32>
    %1243 = vector.shape_cast %1238 : vector<8x1xi1> to vector<8x1xi1>
    %1244 = vector.broadcast %1243 : vector<8x1xi1> to vector<8x128xi1>
    %1245 = arith.select %1244, %1236, %1080 : vector<8x128xi1>, vector<8x128xf32>
    %1246 = vector.shape_cast %1238 : vector<8x1xi1> to vector<8x1xi1>
    %1247 = vector.broadcast %1246 : vector<8x1xi1> to vector<8x128xi1>
    %1248 = arith.select %1247, %1234, %1083 : vector<8x128xi1>, vector<8x128xf32>
    %1249 = arith.maximumf %1084, %1242 : vector<8x128xf32>
    %c7_i32_788 = arith.constant 7 : i32
    %1250 = arith.subi %c7_i32_788, %1168 : i32
    %c0_789 = arith.constant 0 : index
    %c0_790 = arith.constant 0 : index
    %c0_791 = arith.constant 0 : index
    %1251 = vector.load %arg3[%c0_789, %c0_790, %c0_791] : memref<8x8x128xbf16, #tpu.memory_space<vmem>>, vector<1x8x128xbf16>
    %1252 = vector.shape_cast %1251 : vector<1x8x128xbf16> to vector<8x128xbf16>
    %1253 = arith.truncf %1162 : vector<8x128xf32> to vector<8x128xbf16>
    %c0_792 = arith.constant 0 : index
    %c0_793 = arith.constant 0 : index
    %c0_794 = arith.constant 0 : index
    %1254 = vector.load %arg9[%c0_792, %c0_793, %c0_794] : memref<4x1x128xf32, #tpu.memory_space<vmem>>, vector<1x1x128xf32>
    %1255 = vector.shape_cast %1254 : vector<1x1x128xf32> to vector<1x128xf32>
    %c0_795 = arith.constant 0 : index
    %c0_796 = arith.constant 0 : index
    %c0_797 = arith.constant 0 : index
    %1256 = vector.load %arg5[%c0_795, %c0_796, %c0_797] : memref<4x128x128xbf16, #tpu.memory_space<vmem>>, vector<1x128x128xbf16>
    %1257 = vector.shape_cast %1256 : vector<1x128x128xbf16> to vector<128x128xbf16>
    %cst_798 = arith.constant dense<0.000000e+00> : vector<8x128xf32>
    %1258 = tpu.matmul %1252, %1257, %cst_798 {dimension_numbers = #tpu.dot_dimension_numbers<[1], [0], [0], [1], [0, 0, 1, 1], [], []>} : vector<8x128xbf16>, vector<128x128xbf16>, vector<8x128xf32> -> vector<8x128xf32>
    %1259 = vector.broadcast %1255 : vector<1x128xf32> to vector<8x128xf32>
    %1260 = arith.addf %1259, %1258 : vector<8x128xf32>
    %c0_799 = arith.constant 0 : index
    %c0_800 = arith.constant 0 : index
    %c0_801 = arith.constant 0 : index
    %1261 = vector.load %arg7[%c0_799, %c0_800, %c0_801] : memref<4x128x128xbf16, #tpu.memory_space<vmem>>, vector<1x128x128xbf16>
    %1262 = vector.shape_cast %1261 : vector<1x128x128xbf16> to vector<128x128xbf16>
    %cst_802 = arith.constant dense<0.000000e+00> : vector<8x128xf32>
    %1263 = tpu.matmul %1253, %1262, %cst_802 {dimension_numbers = #tpu.dot_dimension_numbers<[1], [0], [0], [1], [0, 0, 1, 1], [], []>} : vector<8x128xbf16>, vector<128x128xbf16>, vector<8x128xf32> -> vector<8x128xf32>
    %1264 = arith.addf %1260, %1263 : vector<8x128xf32>
    %1265 = arith.negf %1264 : vector<8x128xf32>
    %1266 = math.exp %1265 : vector<8x128xf32>
    %cst_803 = arith.constant 1.000000e+00 : f32
    %1267 = vector.broadcast %cst_803 : f32 to vector<8x128xf32>
    %1268 = arith.addf %1267, %1266 : vector<8x128xf32>
    %1269 = arith.divf %1267, %1268 : vector<8x128xf32>
    %c1_804 = arith.constant 1 : index
    %c0_805 = arith.constant 0 : index
    %c0_806 = arith.constant 0 : index
    %1270 = vector.load %arg9[%c1_804, %c0_805, %c0_806] : memref<4x1x128xf32, #tpu.memory_space<vmem>>, vector<1x1x128xf32>
    %1271 = vector.shape_cast %1270 : vector<1x1x128xf32> to vector<1x128xf32>
    %c1_807 = arith.constant 1 : index
    %c0_808 = arith.constant 0 : index
    %c0_809 = arith.constant 0 : index
    %1272 = vector.load %arg5[%c1_807, %c0_808, %c0_809] : memref<4x128x128xbf16, #tpu.memory_space<vmem>>, vector<1x128x128xbf16>
    %1273 = vector.shape_cast %1272 : vector<1x128x128xbf16> to vector<128x128xbf16>
    %cst_810 = arith.constant dense<0.000000e+00> : vector<8x128xf32>
    %1274 = tpu.matmul %1252, %1273, %cst_810 {dimension_numbers = #tpu.dot_dimension_numbers<[1], [0], [0], [1], [0, 0, 1, 1], [], []>} : vector<8x128xbf16>, vector<128x128xbf16>, vector<8x128xf32> -> vector<8x128xf32>
    %1275 = vector.broadcast %1271 : vector<1x128xf32> to vector<8x128xf32>
    %1276 = arith.addf %1275, %1274 : vector<8x128xf32>
    %c1_811 = arith.constant 1 : index
    %c0_812 = arith.constant 0 : index
    %c0_813 = arith.constant 0 : index
    %1277 = vector.load %arg7[%c1_811, %c0_812, %c0_813] : memref<4x128x128xbf16, #tpu.memory_space<vmem>>, vector<1x128x128xbf16>
    %1278 = vector.shape_cast %1277 : vector<1x128x128xbf16> to vector<128x128xbf16>
    %cst_814 = arith.constant dense<0.000000e+00> : vector<8x128xf32>
    %1279 = tpu.matmul %1253, %1278, %cst_814 {dimension_numbers = #tpu.dot_dimension_numbers<[1], [0], [0], [1], [0, 0, 1, 1], [], []>} : vector<8x128xbf16>, vector<128x128xbf16>, vector<8x128xf32> -> vector<8x128xf32>
    %1280 = arith.addf %1276, %1279 : vector<8x128xf32>
    %1281 = arith.negf %1280 : vector<8x128xf32>
    %1282 = math.exp %1281 : vector<8x128xf32>
    %cst_815 = arith.constant 1.000000e+00 : f32
    %1283 = vector.broadcast %cst_815 : f32 to vector<8x128xf32>
    %1284 = arith.addf %1283, %1282 : vector<8x128xf32>
    %1285 = arith.divf %1283, %1284 : vector<8x128xf32>
    %c2_816 = arith.constant 2 : index
    %c0_817 = arith.constant 0 : index
    %c0_818 = arith.constant 0 : index
    %1286 = vector.load %arg9[%c2_816, %c0_817, %c0_818] : memref<4x1x128xf32, #tpu.memory_space<vmem>>, vector<1x1x128xf32>
    %1287 = vector.shape_cast %1286 : vector<1x1x128xf32> to vector<1x128xf32>
    %c2_819 = arith.constant 2 : index
    %c0_820 = arith.constant 0 : index
    %c0_821 = arith.constant 0 : index
    %1288 = vector.load %arg5[%c2_819, %c0_820, %c0_821] : memref<4x128x128xbf16, #tpu.memory_space<vmem>>, vector<1x128x128xbf16>
    %1289 = vector.shape_cast %1288 : vector<1x128x128xbf16> to vector<128x128xbf16>
    %cst_822 = arith.constant dense<0.000000e+00> : vector<8x128xf32>
    %1290 = tpu.matmul %1252, %1289, %cst_822 {dimension_numbers = #tpu.dot_dimension_numbers<[1], [0], [0], [1], [0, 0, 1, 1], [], []>} : vector<8x128xbf16>, vector<128x128xbf16>, vector<8x128xf32> -> vector<8x128xf32>
    %1291 = vector.broadcast %1287 : vector<1x128xf32> to vector<8x128xf32>
    %1292 = arith.addf %1291, %1290 : vector<8x128xf32>
    %c2_823 = arith.constant 2 : index
    %c0_824 = arith.constant 0 : index
    %c0_825 = arith.constant 0 : index
    %1293 = vector.load %arg7[%c2_823, %c0_824, %c0_825] : memref<4x128x128xbf16, #tpu.memory_space<vmem>>, vector<1x128x128xbf16>
    %1294 = vector.shape_cast %1293 : vector<1x128x128xbf16> to vector<128x128xbf16>
    %cst_826 = arith.constant dense<0.000000e+00> : vector<8x128xf32>
    %1295 = tpu.matmul %1253, %1294, %cst_826 {dimension_numbers = #tpu.dot_dimension_numbers<[1], [0], [0], [1], [0, 0, 1, 1], [], []>} : vector<8x128xbf16>, vector<128x128xbf16>, vector<8x128xf32> -> vector<8x128xf32>
    %1296 = arith.addf %1292, %1295 : vector<8x128xf32>
    %1297 = math.tanh %1296 : vector<8x128xf32>
    %c3_827 = arith.constant 3 : index
    %c0_828 = arith.constant 0 : index
    %c0_829 = arith.constant 0 : index
    %1298 = vector.load %arg9[%c3_827, %c0_828, %c0_829] : memref<4x1x128xf32, #tpu.memory_space<vmem>>, vector<1x1x128xf32>
    %1299 = vector.shape_cast %1298 : vector<1x1x128xf32> to vector<1x128xf32>
    %c3_830 = arith.constant 3 : index
    %c0_831 = arith.constant 0 : index
    %c0_832 = arith.constant 0 : index
    %1300 = vector.load %arg5[%c3_830, %c0_831, %c0_832] : memref<4x128x128xbf16, #tpu.memory_space<vmem>>, vector<1x128x128xbf16>
    %1301 = vector.shape_cast %1300 : vector<1x128x128xbf16> to vector<128x128xbf16>
    %cst_833 = arith.constant dense<0.000000e+00> : vector<8x128xf32>
    %1302 = tpu.matmul %1252, %1301, %cst_833 {dimension_numbers = #tpu.dot_dimension_numbers<[1], [0], [0], [1], [0, 0, 1, 1], [], []>} : vector<8x128xbf16>, vector<128x128xbf16>, vector<8x128xf32> -> vector<8x128xf32>
    %1303 = vector.broadcast %1299 : vector<1x128xf32> to vector<8x128xf32>
    %1304 = arith.addf %1303, %1302 : vector<8x128xf32>
    %c3_834 = arith.constant 3 : index
    %c0_835 = arith.constant 0 : index
    %c0_836 = arith.constant 0 : index
    %1305 = vector.load %arg7[%c3_834, %c0_835, %c0_836] : memref<4x128x128xbf16, #tpu.memory_space<vmem>>, vector<1x128x128xbf16>
    %1306 = vector.shape_cast %1305 : vector<1x128x128xbf16> to vector<128x128xbf16>
    %cst_837 = arith.constant dense<0.000000e+00> : vector<8x128xf32>
    %1307 = tpu.matmul %1253, %1306, %cst_837 {dimension_numbers = #tpu.dot_dimension_numbers<[1], [0], [0], [1], [0, 0, 1, 1], [], []>} : vector<8x128xbf16>, vector<128x128xbf16>, vector<8x128xf32> -> vector<8x128xf32>
    %1308 = arith.addf %1304, %1307 : vector<8x128xf32>
    %1309 = arith.negf %1308 : vector<8x128xf32>
    %1310 = math.exp %1309 : vector<8x128xf32>
    %cst_838 = arith.constant 1.000000e+00 : f32
    %1311 = vector.broadcast %cst_838 : f32 to vector<8x128xf32>
    %1312 = arith.addf %1311, %1310 : vector<8x128xf32>
    %1313 = arith.divf %1311, %1312 : vector<8x128xf32>
    %1314 = arith.mulf %1285, %1165 : vector<8x128xf32>
    %1315 = arith.mulf %1269, %1297 : vector<8x128xf32>
    %1316 = arith.addf %1314, %1315 : vector<8x128xf32>
    %1317 = math.tanh %1316 : vector<8x128xf32>
    %1318 = arith.mulf %1313, %1317 : vector<8x128xf32>
    %1319 = vector.broadcast %1250 : i32 to vector<8x1xi32>
    %1320 = arith.cmpi sgt, %3, %1319 : vector<8x1xi32>
    %cst_839 = arith.constant -3.000000e+38 : f32
    %1321 = vector.shape_cast %1320 : vector<8x1xi1> to vector<8x1xi1>
    %1322 = vector.broadcast %1321 : vector<8x1xi1> to vector<8x128xi1>
    %1323 = vector.broadcast %cst_839 : f32 to vector<8x128xf32>
    %1324 = arith.select %1322, %1318, %1323 : vector<8x128xi1>, vector<8x128xf32>
    %1325 = vector.shape_cast %1320 : vector<8x1xi1> to vector<8x1xi1>
    %1326 = vector.broadcast %1325 : vector<8x1xi1> to vector<8x128xi1>
    %1327 = arith.select %1326, %1318, %1162 : vector<8x128xi1>, vector<8x128xf32>
    %1328 = vector.shape_cast %1320 : vector<8x1xi1> to vector<8x1xi1>
    %1329 = vector.broadcast %1328 : vector<8x1xi1> to vector<8x128xi1>
    %1330 = arith.select %1329, %1316, %1165 : vector<8x128xi1>, vector<8x128xf32>
    %1331 = arith.maximumf %1166, %1324 : vector<8x128xf32>
    %c0_840 = arith.constant 0 : index
    %c0_841 = arith.constant 0 : index
    %1332 = vector.load %arg12[%c0_840, %c0_841] : memref<8x128xf32, #tpu.memory_space<vmem>>, vector<8x128xf32>
    tpu.vector_store %arg12[%c0_840, %c0_841], %1245 {strides = array<i32>} : memref<8x128xf32, #tpu.memory_space<vmem>>, vector<8x128xf32>,
    %c0_842 = arith.constant 0 : index
    %c0_843 = arith.constant 0 : index
    %1333 = vector.load %arg13[%c0_842, %c0_843] : memref<8x128xf32, #tpu.memory_space<vmem>>, vector<8x128xf32>
    tpu.vector_store %arg13[%c0_842, %c0_843], %1248 {strides = array<i32>} : memref<8x128xf32, #tpu.memory_space<vmem>>, vector<8x128xf32>,
    %c0_844 = arith.constant 0 : index
    %c0_845 = arith.constant 0 : index
    %1334 = vector.load %arg14[%c0_844, %c0_845] : memref<8x128xf32, #tpu.memory_space<vmem>>, vector<8x128xf32>
    tpu.vector_store %arg14[%c0_844, %c0_845], %1327 {strides = array<i32>} : memref<8x128xf32, #tpu.memory_space<vmem>>, vector<8x128xf32>,
    %c0_846 = arith.constant 0 : index
    %c0_847 = arith.constant 0 : index
    %1335 = vector.load %arg15[%c0_846, %c0_847] : memref<8x128xf32, #tpu.memory_space<vmem>>, vector<8x128xf32>
    tpu.vector_store %arg15[%c0_846, %c0_847], %1330 {strides = array<i32>} : memref<8x128xf32, #tpu.memory_space<vmem>>, vector<8x128xf32>,
    %c0_848 = arith.constant 0 : index
    %c0_849 = arith.constant 0 : index
    %c0_850 = arith.constant 0 : index
    %1336 = vector.load %arg11[%c0_848, %c0_849, %c0_850] : memref<2x8x128xf32, #tpu.memory_space<vmem>>, vector<1x8x128xf32>
    %1337 = vector.shape_cast %1336 : vector<1x8x128xf32> to vector<8x128xf32>
    %1338 = vector.shape_cast %1249 : vector<8x128xf32> to vector<1x8x128xf32>
    tpu.vector_store %arg11[%c0_848, %c0_849, %c0_850], %1338 {strides = array<i32>} : memref<2x8x128xf32, #tpu.memory_space<vmem>>, vector<1x8x128xf32>,
    %c1_851 = arith.constant 1 : index
    %c0_852 = arith.constant 0 : index
    %c0_853 = arith.constant 0 : index
    %1339 = vector.load %arg11[%c1_851, %c0_852, %c0_853] : memref<2x8x128xf32, #tpu.memory_space<vmem>>, vector<1x8x128xf32>
    %1340 = vector.shape_cast %1339 : vector<1x8x128xf32> to vector<8x128xf32>
    %1341 = vector.shape_cast %1331 : vector<8x128xf32> to vector<1x8x128xf32>
    tpu.vector_store %arg11[%c1_851, %c0_852, %c0_853], %1341 {strides = array<i32>} : memref<2x8x128xf32, #tpu.memory_space<vmem>>, vector<1x8x128xf32>,
    return
  }
  func.func @transform_0(%arg0: i32, %arg1: i32) -> (i32, i32, i32) {
    %c0_i32 = arith.constant 0 : i32
    %c0_i32_0 = arith.constant 0 : i32
    return %arg1, %arg0, %c0_i32 : i32, i32, i32
  }
  func.func @transform_1(%arg0: i32, %arg1: i32) -> (i32, i32, i32) {
    %c0_i32 = arith.constant 0 : i32
    %0 = arith.subi %c0_i32, %arg1 : i32
    %c0_i32_0 = arith.constant 0 : i32
    %c0_i32_1 = arith.constant 0 : i32
    return %0, %arg0, %c0_i32_0 : i32, i32, i32
  }
  func.func @transform_2(%arg0: i32, %arg1: i32) -> (i32, i32, i32) {
    %c0_i32 = arith.constant 0 : i32
    %c0_i32_0 = arith.constant 0 : i32
    %c0_i32_1 = arith.constant 0 : i32
    %c0_i32_2 = arith.constant 0 : i32
    return %c0_i32, %c0_i32_0, %c0_i32_1 : i32, i32, i32
  }
  func.func @transform_3(%arg0: i32, %arg1: i32) -> (i32, i32, i32) {
    %c0_i32 = arith.constant 0 : i32
    %c0_i32_0 = arith.constant 0 : i32
    %c0_i32_1 = arith.constant 0 : i32
    %c0_i32_2 = arith.constant 0 : i32
    return %c0_i32, %c0_i32_0, %c0_i32_1 : i32, i32, i32
  }
  func.func @transform_4(%arg0: i32, %arg1: i32) -> (i32, i32, i32) {
    %c0_i32 = arith.constant 0 : i32
    %c0_i32_0 = arith.constant 0 : i32
    %c0_i32_1 = arith.constant 0 : i32
    %c0_i32_2 = arith.constant 0 : i32
    return %c0_i32, %c0_i32_0, %c0_i32_1 : i32, i32, i32
  }
  func.func @transform_5(%arg0: i32, %arg1: i32) -> (i32, i32, i32) {
    %c0_i32 = arith.constant 0 : i32
    %c0_i32_0 = arith.constant 0 : i32
    %c0_i32_1 = arith.constant 0 : i32
    %c0_i32_2 = arith.constant 0 : i32
    return %c0_i32, %c0_i32_0, %c0_i32_1 : i32, i32, i32
  }
  func.func @transform_6(%arg0: i32, %arg1: i32) -> (i32, i32, i32) {
    %c0_i32 = arith.constant 0 : i32
    %c0_i32_0 = arith.constant 0 : i32
    %c0_i32_1 = arith.constant 0 : i32
    %c0_i32_2 = arith.constant 0 : i32
    return %c0_i32, %c0_i32_0, %c0_i32_1 : i32, i32, i32
  }
  func.func @transform_7(%arg0: i32, %arg1: i32) -> (i32, i32, i32) {
    %c0_i32 = arith.constant 0 : i32
    %c0_i32_0 = arith.constant 0 : i32
    %c0_i32_1 = arith.constant 0 : i32
    %c0_i32_2 = arith.constant 0 : i32
    return %c0_i32, %c0_i32_0, %c0_i32_1 : i32, i32, i32
  }
  func.func @transform_8(%arg0: i32, %arg1: i32) -> (i32, i32) {
    %c0_i32 = arith.constant 0 : i32
    %c0_i32_0 = arith.constant 0 : i32
    return %arg0, %c0_i32 : i32, i32
  }
  func.func @transform_9(%arg0: i32, %arg1: i32) -> (i32, i32, i32) {
    %c0_i32 = arith.constant 0 : i32
    %c0_i32_0 = arith.constant 0 : i32
    %c0_i32_1 = arith.constant 0 : i32
    return %c0_i32, %arg0, %c0_i32_0 : i32, i32, i32
  }
}

</mosaic_0001>

<llo_original>
// kernel: fast_maxout_forward.3
$region0: #{fast_maxout_forward.3}
  #allocation0 [shape = 'u32[]', space=smem, size = 0x4, offset = 0x4, fixed_abs, tag = 'smem constant byte address 0x4 - core index']
  #allocation1 [shape = 'u32[72,128]{1,0:T(1,128)}', space=vmem, size = 0x9000, scoped, tag = 'internal scratch']
  %s0 = inlined_call_operand.vmem [shape: f32[2,64], index: 0, kind: input, shape index: {}]
  %s1 = inlined_call_operand.vmem [shape: f32[2,64], index: 1, kind: input, shape index: {}]
  %s2 = inlined_call_operand.vmem [shape: f32[4,64,64], index: 2, kind: input, shape index: {}]
  %s3 = inlined_call_operand.vmem [shape: f32[1,64], index: 3, kind: input, shape index: {}]
  %s4 = inlined_call_operand.vmem [shape: f32[64,3], index: 4, kind: input, shape index: {}]
  %s5 = inlined_call_operand.vmem [shape: f32[1,3], index: 5, kind: input, shape index: {}]
  %s6 = inlined_call_operand.hbm [shape: f32[2,3], index: 6, kind: output, shape index: {}]
  %s7 = sld [smem:[#allocation0]]
  $region34: #{fast_maxout_forward.3} parent=0
    _
  %s9 = ssub.s32 1, %s7
  %s10 = scalar_select 0, %s9, %s7
  $region1: #{fast_maxout_forward.3} parent=0
    #allocation2 [shape = 'u8[1024]{0}', space=vmem, size = 0x400, scoped, tag = 'output window, operand 0, single buffered']
    #allocation3 [shape = 's32[1]{0}', space=sflag, size = 0x4, scoped, tag = 'scoped memory for fast_maxout_forward.3']
    %11 = vsyncpa [#allocation3], 0
    // Predicated region
    $region2: #{fast_maxout_forward.3} parent=1 // pred_check
      _
    $region3: #{fast_maxout_forward.3} parent=1 // pred_check_branch
      %13 = sbr.rel (0) target = $region5
    $region4: #{fast_maxout_forward.3} parent=1 // pred_region
      _
    $region5: #{fast_maxout_forward.3} parent=1 // pred_fallthru
      _
    // Predicated region
    $region6: #{fast_maxout_forward.3} parent=1 // pred_check
      _
    $region7: #{fast_maxout_forward.3} parent=1 // pred_check_branch
      %15 = sbr.rel (0) target = $region9
    $region8: #{fast_maxout_forward.3} parent=1 // pred_region
      _
    $region9: #{fast_maxout_forward.3} parent=1 // pred_fallthru
      _
    // Predicated region
    $region10: #{fast_maxout_forward.3} parent=1 // pred_check
      _
    $region11: #{fast_maxout_forward.3} parent=1 // pred_check_branch
      %17 = sbr.rel (0) target = $region13
    $region12: #{fast_maxout_forward.3} parent=1 // pred_region
      _
    $region13: #{fast_maxout_forward.3} parent=1 // pred_fallthru
      _
    // Predicated region
    $region14: #{fast_maxout_forward.3} parent=1 // pred_check
      _
    $region15: #{fast_maxout_forward.3} parent=1 // pred_check_branch
      %19 = sbr.rel (0) target = $region17
    $region16: #{fast_maxout_forward.3} parent=1 // pred_region
      _
    $region17: #{fast_maxout_forward.3} parent=1 // pred_fallthru
      _
    // Predicated region
    $region18: #{fast_maxout_forward.3} parent=1 // pred_check
      _
    $region19: #{fast_maxout_forward.3} parent=1 // pred_check_branch
      %21 = sbr.rel (0) target = $region21
    $region20: #{fast_maxout_forward.3} parent=1 // pred_region
      _
    $region21: #{fast_maxout_forward.3} parent=1 // pred_fallthru
      _
    // Predicated region
    $region22: #{fast_maxout_forward.3} parent=1 // pred_check
      _
    $region23: #{fast_maxout_forward.3} parent=1 // pred_check_branch
      %23 = sbr.rel (0) target = $region25
    $region24: #{fast_maxout_forward.3} parent=1 // pred_region
      _
    $region25: #{fast_maxout_forward.3} parent=1 // pred_fallthru
      _
    %v24 = vld [vmem:[%s0] sm:$0x3]
    %v25 = vld [vmem:[%s1] sm:$0x3]
    %v26 = vld [vmem:[%s2] sm:$0xff]
    %v27 = vld [vmem:[%s2 + $0x8] sm:$0xff]
    %v28 = vld [vmem:[%s2 + $0x10] sm:$0xff]
    %v29 = vld [vmem:[%s2 + $0x18] sm:$0xff]
    %v30 = vld [vmem:[%s2 + $0x20] sm:$0xff]
    %v31 = vld [vmem:[%s2 + $0x28] sm:$0xff]
    %v32 = vld [vmem:[%s2 + $0x30] sm:$0xff]
    %v33 = vld [vmem:[%s2 + $0x38] sm:$0xff]
    %s34 = scalar_lea.vmem %s2, 64
    %v35 = vld [vmem:[%s34] sm:$0xff]
    %v36 = vld [vmem:[%s34 + $0x8] sm:$0xff]
    %v37 = vld [vmem:[%s34 + $0x10] sm:$0xff]
    %v38 = vld [vmem:[%s34 + $0x18] sm:$0xff]
    %v39 = vld [vmem:[%s34 + $0x20] sm:$0xff]
    %v40 = vld [vmem:[%s34 + $0x28] sm:$0xff]
    %v41 = vld [vmem:[%s34 + $0x30] sm:$0xff]
    %v42 = vld [vmem:[%s34 + $0x38] sm:$0xff]
    %vm43 = vcmask 523264
    %v45 = vsel %vm43, %v25, 0
    %47 = vmatpush.msra.mxu0 0.0
    %48 = vmatpush.msra.mxu0 0.0
    %49 = vmatpush.msra.mxu0 0.0
    %50 = vmatpush.msra.mxu0 0.0
    %51 = vmatpush.msra.mxu0 0.0
    %52 = vmatpush.msra.mxu0 0.0
    %53 = vmatpush.msra.mxu0 0.0
    %54 = vmatpush.msra.mxu0 0.0
    %55 = vmatpush.msra.mxu0 %v42
    %56 = vmatpush.msra.mxu0 %v41
    %57 = vmatpush.msra.mxu0 %v40
    %58 = vmatpush.msra.mxu0 %v39
    %59 = vmatpush.msra.mxu0 %v38
    %60 = vmatpush.msra.mxu0 %v37
    %61 = vmatpush.msra.mxu0 %v36
    %62 = vmatpush.msra.mxu0 %v35
    %63 = vmatmul.f32.gmra.mxu0 %v45
    %v64 = vpop.f32.mrf.mxu0
    %v65 = vadd.f32 0.0, %v64
    %66 = vdwg.mxu0
    %v68 = vsel %vm43, %v24, 0
    %70 = vmatpush.msra.mxu0 0.0
    %71 = vmatpush.msra.mxu0 0.0
    %72 = vmatpush.msra.mxu0 0.0
    %73 = vmatpush.msra.mxu0 0.0
    %74 = vmatpush.msra.mxu0 0.0
    %75 = vmatpush.msra.mxu0 0.0
    %76 = vmatpush.msra.mxu0 0.0
    %77 = vmatpush.msra.mxu0 0.0
    %78 = vmatpush.msra.mxu0 %v33
    %79 = vmatpush.msra.mxu0 %v32
    %80 = vmatpush.msra.mxu0 %v31
    %81 = vmatpush.msra.mxu0 %v30
    %82 = vmatpush.msra.mxu0 %v29
    %83 = vmatpush.msra.mxu0 %v28
    %84 = vmatpush.msra.mxu0 %v27
    %85 = vmatpush.msra.mxu0 %v26
    %86 = vmatmul.f32.gmra.mxu0 %v68
    %v87 = vpop.f32.mrf.mxu0
    %v88 = vadd.f32 %v65, %v87
    %89 = vdwg.mxu0
    %v90 = vsub.f32 %v24, %v25
    %v91 = vand.u32 2147483647, %v90
    %s92 = scalar_lea.vmem %s2, 128
    %v93 = vld [vmem:[%s92] sm:$0xff]
    %v94 = vld [vmem:[%s92 + $0x8] sm:$0xff]
    %v95 = vld [vmem:[%s92 + $0x10] sm:$0xff]
    %v96 = vld [vmem:[%s92 + $0x18] sm:$0xff]
    %v97 = vld [vmem:[%s92 + $0x20] sm:$0xff]
    %v98 = vld [vmem:[%s92 + $0x28] sm:$0xff]
    %v99 = vld [vmem:[%s92 + $0x30] sm:$0xff]
    %v100 = vld [vmem:[%s92 + $0x38] sm:$0xff]
    %v102 = vsel %vm43, %v91, 0
    %104 = vmatpush.msra.mxu0 0.0
    %105 = vmatpush.msra.mxu0 0.0
    %106 = vmatpush.msra.mxu0 0.0
    %107 = vmatpush.msra.mxu0 0.0
    %108 = vmatpush.msra.mxu0 0.0
    %109 = vmatpush.msra.mxu0 0.0
    %110 = vmatpush.msra.mxu0 0.0
    %111 = vmatpush.msra.mxu0 0.0
    %112 = vmatpush.msra.mxu0 %v100
    %113 = vmatpush.msra.mxu0 %v99
    %114 = vmatpush.msra.mxu0 %v98
    %115 = vmatpush.msra.mxu0 %v97
    %116 = vmatpush.msra.mxu0 %v96
    %117 = vmatpush.msra.mxu0 %v95
    %118 = vmatpush.msra.mxu0 %v94
    %119 = vmatpush.msra.mxu0 %v93
    %120 = vmatmul.f32.gmra.mxu0 %v102
    %v121 = vpop.f32.mrf.mxu0
    %v122 = vadd.f32 0.0, %v121
    %123 = vdwg.mxu0
    %v124 = vadd.f32 %v88, %v122
    %v125 = vmul.f32 %v24, %v25
    %s126 = scalar_lea.vmem %s2, 192
    %v127 = vld [vmem:[%s126] sm:$0xff]
    %v128 = vld [vmem:[%s126 + $0x8] sm:$0xff]
    %v129 = vld [vmem:[%s126 + $0x10] sm:$0xff]
    %v130 = vld [vmem:[%s126 + $0x18] sm:$0xff]
    %v131 = vld [vmem:[%s126 + $0x20] sm:$0xff]
    %v132 = vld [vmem:[%s126 + $0x28] sm:$0xff]
    %v133 = vld [vmem:[%s126 + $0x30] sm:$0xff]
    %v134 = vld [vmem:[%s126 + $0x38] sm:$0xff]
    %v136 = vsel %vm43, %v125, 0
    %138 = vmatpush.msra.mxu0 0.0
    %139 = vmatpush.msra.mxu0 0.0
    %140 = vmatpush.msra.mxu0 0.0
    %141 = vmatpush.msra.mxu0 0.0
    %142 = vmatpush.msra.mxu0 0.0
    %143 = vmatpush.msra.mxu0 0.0
    %144 = vmatpush.msra.mxu0 0.0
    %145 = vmatpush.msra.mxu0 0.0
    %146 = vmatpush.msra.mxu0 %v134
    %147 = vmatpush.msra.mxu0 %v133
    %148 = vmatpush.msra.mxu0 %v132
    %149 = vmatpush.msra.mxu0 %v131
    %150 = vmatpush.msra.mxu0 %v130
    %151 = vmatpush.msra.mxu0 %v129
    %152 = vmatpush.msra.mxu0 %v128
    %153 = vmatpush.msra.mxu0 %v127
    %154 = vmatmul.f32.gmra.mxu0 %v136
    %v155 = vpop.f32.mrf.mxu0
    %v156 = vadd.f32 0.0, %v155
    %157 = vdwg.mxu0
    %v158 = vadd.f32 %v124, %v156
    %v159 = vld [vmem:[%s3] sm:$0x1]
    %v161 = vperm.slane %v159, 0
    %v163 = vadd.f32 %v158, %v161
    %v164 = vmax.f32 %v163, 0.0
    %v165 = vld [vmem:[%s4] sm:$0xff]
    %v166 = vld [vmem:[%s4 + $0x8] sm:$0xff]
    %v167 = vld [vmem:[%s4 + $0x10] sm:$0xff]
    %v168 = vld [vmem:[%s4 + $0x18] sm:$0xff]
    %v169 = vld [vmem:[%s4 + $0x20] sm:$0xff]
    %v170 = vld [vmem:[%s4 + $0x28] sm:$0xff]
    %v171 = vld [vmem:[%s4 + $0x30] sm:$0xff]
    %v172 = vld [vmem:[%s4 + $0x38] sm:$0xff]
    %v173 = vld [vmem:[%s5] sm:$0x1]
    %v175 = vperm.slane %v173, 0
    %v178 = vsel %vm43, %v164, 0
    %180 = vmatpush.msra.mxu0 0.0
    %181 = vmatpush.msra.mxu0 0.0
    %182 = vmatpush.msra.mxu0 0.0
    %183 = vmatpush.msra.mxu0 0.0
    %184 = vmatpush.msra.mxu0 0.0
    %185 = vmatpush.msra.mxu0 0.0
    %186 = vmatpush.msra.mxu0 0.0
    %187 = vmatpush.msra.mxu0 0.0
    %188 = vmatpush.msra.mxu0 %v172
    %189 = vmatpush.msra.mxu0 %v171
    %190 = vmatpush.msra.mxu0 %v170
    %191 = vmatpush.msra.mxu0 %v169
    %192 = vmatpush.msra.mxu0 %v168
    %193 = vmatpush.msra.mxu0 %v167
    %194 = vmatpush.msra.mxu0 %v166
    %195 = vmatpush.msra.mxu0 %v165
    %196 = vmatmul.f32.gmra.mxu0 %v178
    %v197 = vpop.f32.mrf.mxu0
    %v198 = vadd.f32 %v175, %v197
    %199 = vdwg.mxu0
    %vm200 = vcmask 17408
    %201 = vst.msk [vmem:[#allocation2] sm:$0x3] %vm200, %v198
    // Predicated region
    $region26: #{fast_maxout_forward.3} parent=1 // pred_check
      _
    $region27: #{fast_maxout_forward.3} parent=1 // pred_check_branch
      %203 = sbr.rel (0) target = $region29
    $region28: #{fast_maxout_forward.3} parent=1 // pred_region
      %205 = vsyncadd [#allocation3], 0
      %s207 = sshll.u32 [#allocation2], 4
      %s208 = int_to_ptr.vmem [resolvable:$true] %s207
      %s209 = sshll.u32 %s6, 4
      %s210 = int_to_ptr.hbm [resolvable:$true] %s209
      %212 = dma.vmem_to_hbm [thread:$0]  %s208, 32, %s210, [#allocation3]
    $region29: #{fast_maxout_forward.3} parent=1 // pred_fallthru
      _
    // Predicated region
    $region30: #{fast_maxout_forward.3} parent=1 // pred_check
      _
    $region31: #{fast_maxout_forward.3} parent=1 // pred_check_branch
      %214 = sbr.rel (0) target = $region33
    $region32: #{fast_maxout_forward.3} parent=1 // pred_region
      %216 = dma.done [#allocation3], 32
    $region33: #{fast_maxout_forward.3} parent=1 // pred_fallthru
      _
    %217 = vsyncpa [#allocation3], 1

// kernel: fast_maxout_forward.2
$region0: #{fast_maxout_forward.2}
  #allocation0 [shape = 'u32[]', space=smem, size = 0x4, offset = 0x4, fixed_abs, tag = 'smem constant byte address 0x4 - core index']
  #allocation1 [shape = 'u32[72,128]{1,0:T(1,128)}', space=vmem, size = 0x9000, scoped, tag = 'internal scratch']
  #allocation2 [shape = 'f32[8,128]{1,0:T(8,128)}', space=vmem, size = 0x1000, scoped, tag = 'scratch operand']
  #allocation3 [shape = 'f32[8,128]{1,0:T(8,128)}', space=vmem, size = 0x1000, scoped, tag = 'scratch operand']
  #allocation4 [shape = 'f32[8,128]{1,0:T(8,128)}', space=vmem, size = 0x1000, scoped, tag = 'scratch operand']
  #allocation5 [shape = 'f32[8,128]{1,0:T(8,128)}', space=vmem, size = 0x1000, scoped, tag = 'scratch operand']
  %s0 = inlined_call_operand.vmem [shape: bf16[8,8,128], index: 0, kind: input, shape index: {}, may-alias: {0,1}]
  %s1 = inlined_call_operand.vmem [shape: bf16[8,8,128], index: 1, kind: input, shape index: {}, may-alias: {0,1}]
  %s2 = inlined_call_operand.vmem [shape: bf16[4,128,128], index: 2, kind: input, shape index: {}]
  %s3 = inlined_call_operand.vmem [shape: bf16[4,128,128], index: 3, kind: input, shape index: {}]
  %s4 = inlined_call_operand.vmem [shape: bf16[4,128,128], index: 4, kind: input, shape index: {}]
  %s5 = inlined_call_operand.vmem [shape: bf16[4,128,128], index: 5, kind: input, shape index: {}]
  %s6 = inlined_call_operand.vmem [shape: f32[4,1,128], index: 6, kind: input, shape index: {}]
  %s7 = inlined_call_operand.vmem [shape: f32[4,1,128], index: 7, kind: input, shape index: {}]
  %s8 = inlined_call_operand.vmem [shape: s32[8,1], index: 8, kind: input, shape index: {}]
  %s9 = inlined_call_operand.vmem [shape: f32[2,8,128], index: 9, kind: output, shape index: {}]
  %s10 = sld [smem:[#allocation0]]
  $region50: #{fast_maxout_forward.2} parent=0
    _
  %s12 = ssub.s32 1, %s10
  %s13 = scalar_select 0, %s12, %s10
  // Predicated region
  $region2: #{fast_maxout_forward.2} parent=0 // pred_check
    _
  $region3: #{fast_maxout_forward.2} parent=0 // pred_check_branch
    %15 = sbr.rel (0) target = $region5
  $region4: #{fast_maxout_forward.2} parent=0 // pred_region
    _
  $region5: #{fast_maxout_forward.2} parent=0 // pred_fallthru
    _
  // Predicated region
  $region6: #{fast_maxout_forward.2} parent=0 // pred_check
    _
  $region7: #{fast_maxout_forward.2} parent=0 // pred_check_branch
    %17 = sbr.rel (0) target = $region9
  $region8: #{fast_maxout_forward.2} parent=0 // pred_region
    %s18 = ssub.s32 0, 0
    %s19 = smul.u32 8, %s18
    %p20 = scmp.lt.s32.totalorder %s19, 7
    %s21 = scalar_select %p20, %s19, 7
    %s22 = smul.addr %s21, 4
    %s23 = scalar_lea.vmem %s1, %s22
    %s24 = ssub.s32 0, 0
    %s25 = smul.u32 8, %s24
  $region9: #{fast_maxout_forward.2} parent=0 // pred_fallthru
    _
  // Predicated region
  $region10: #{fast_maxout_forward.2} parent=0 // pred_check
    _
  $region11: #{fast_maxout_forward.2} parent=0 // pred_check_branch
    %27 = sbr.rel (0) target = $region13
  $region12: #{fast_maxout_forward.2} parent=0 // pred_region
    _
  $region13: #{fast_maxout_forward.2} parent=0 // pred_fallthru
    _
  // Predicated region
  $region14: #{fast_maxout_forward.2} parent=0 // pred_check
    _
  $region15: #{fast_maxout_forward.2} parent=0 // pred_check_branch
    %29 = sbr.rel (0) target = $region17
  $region16: #{fast_maxout_forward.2} parent=0 // pred_region
    _
  $region17: #{fast_maxout_forward.2} parent=0 // pred_fallthru
    _
  // Predicated region
  $region18: #{fast_maxout_forward.2} parent=0 // pred_check
    _
  $region19: #{fast_maxout_forward.2} parent=0 // pred_check_branch
    %31 = sbr.rel (0) target = $region21
  $region20: #{fast_maxout_forward.2} parent=0 // pred_region
    _
  $region21: #{fast_maxout_forward.2} parent=0 // pred_fallthru
    _
  // Predicated region
  $region22: #{fast_maxout_forward.2} parent=0 // pred_check
    _
  $region23: #{fast_maxout_forward.2} parent=0 // pred_check_branch
    %33 = sbr.rel (0) target = $region25
  $region24: #{fast_maxout_forward.2} parent=0 // pred_region
    _
  $region25: #{fast_maxout_forward.2} parent=0 // pred_fallthru
    _
  // Predicated region
  $region26: #{fast_maxout_forward.2} parent=0 // pred_check
    _
  $region27: #{fast_maxout_forward.2} parent=0 // pred_check_branch
    %35 = sbr.rel (0) target = $region29
  $region28: #{fast_maxout_forward.2} parent=0 // pred_region
    _
  $region29: #{fast_maxout_forward.2} parent=0 // pred_fallthru
    _
  // Predicated region
  $region30: #{fast_maxout_forward.2} parent=0 // pred_check
    _
  $region31: #{fast_maxout_forward.2} parent=0 // pred_check_branch
    %37 = sbr.rel (0) target = $region33
  $region32: #{fast_maxout_forward.2} parent=0 // pred_region
    _
  $region33: #{fast_maxout_forward.2} parent=0 // pred_fallthru
    _
  // Predicated region
  $region34: #{fast_maxout_forward.2} parent=0 // pred_check
    _
  $region35: #{fast_maxout_forward.2} parent=0 // pred_check_branch
    %39 = sbr.rel (0) target = $region37
  $region36: #{fast_maxout_forward.2} parent=0 // pred_region
    _
  $region37: #{fast_maxout_forward.2} parent=0 // pred_fallthru
    _
  %s40 = ssub.s32 0, 0
  %s41 = smul.u32 8, %s40
  %p42 = scmp.lt.s32.totalorder %s41, 7
  %s43 = scalar_select %p42, %s41, 7
  %s44 = smul.addr %s43, 4
  %s45 = scalar_lea.vmem %s1, %s44
  %s46 = ssub.s32 0, 0
  %s47 = smul.u32 8, %s46
  %p48 = scmp.lt.s32.totalorder %s47, 7
  %s49 = scalar_select %p48, %s47, 7
  %s50 = smul.addr %s49, 4
  %s51 = scalar_lea.vmem %s1, %s50
  %s52 = ssub.s32 0, 0
  %s53 = smul.u32 8, %s52
  %p54 = scmp.eq.s32.totalorder 0, 0
  // Predicated region
  $region38: #{fast_maxout_forward.2} parent=0 // pred_check
    %p55 = pneg %p54
  $region39: #{fast_maxout_forward.2} parent=0 // pred_check_branch
    %57 = sbr.rel (%p55) target = $region41
  $region40: #{fast_maxout_forward.2} parent=0 // pred_region
    %58 = vst [vmem:[#allocation2] sm:$0xff] 0.0
    %59 = vst [vmem:[#allocation3] sm:$0xff] 0.0
    %60 = vst [vmem:[#allocation4] sm:$0xff] 0.0
    %61 = vst [vmem:[#allocation5] sm:$0xff] 0.0
    %62 = vst [vmem:[%s9] sm:$0xff] -3e+38
    %63 = vst [vmem:[%s9 + $0x8] sm:$0xff] -3e+38
  $region41: #{fast_maxout_forward.2} parent=0 // pred_fallthru
    _
  %v64 = vld [vmem:[%s8] sm:$0xff]
  %v65 = vld [vmem:[#allocation2] sm:$0xff]
  %v66 = vld [vmem:[#allocation3] sm:$0xff]
  %v67 = vld [vmem:[#allocation4] sm:$0xff]
  %v68 = vld [vmem:[#allocation5] sm:$0xff]
  %v69 = vld [vmem:[%s9] sm:$0xff]
  %s70 = scalar_lea.vmem %s9, 8
  %v71 = vld [vmem:[%s70] sm:$0xff]
  %s72 = smul.u32 0, 8
  %v73 = vld [vmem:[%s0] sm:$0xf]
  %v74 = vpack.c.bf16 %v65, %v65
  %v75 = vld [vmem:[%s6] sm:$0x1]
  %v76 = vld [vmem:[%s2] sm:$0xf]
  %v77 = vld [vmem:[%s2 + $0x4] sm:$0xf]
  %v78 = vld [vmem:[%s2 + $0x8] sm:$0xf]
  %v79 = vld [vmem:[%s2 + $0xc] sm:$0xf]
  %v80 = vld [vmem:[%s2 + $0x10] sm:$0xf]
  %v81 = vld [vmem:[%s2 + $0x14] sm:$0xf]
  %v82 = vld [vmem:[%s2 + $0x18] sm:$0xf]
  %v83 = vld [vmem:[%s2 + $0x1c] sm:$0xf]
  %v84 = vld [vmem:[%s2 + $0x20] sm:$0xf]
  %v85 = vld [vmem:[%s2 + $0x24] sm:$0xf]
  %v86 = vld [vmem:[%s2 + $0x28] sm:$0xf]
  %v87 = vld [vmem:[%s2 + $0x2c] sm:$0xf]
  %v88 = vld [vmem:[%s2 + $0x30] sm:$0xf]
  %v89 = vld [vmem:[%s2 + $0x34] sm:$0xf]
  %v90 = vld [vmem:[%s2 + $0x38] sm:$0xf]
  %v91 = vld [vmem:[%s2 + $0x3c] sm:$0xf]
  %v108 = vunpack.c.l.b16 %v76
  %v109 = vunpack.c.l.b16 %v77
  %v110 = vunpack.c.l.b16 %v78
  %v111 = vunpack.c.l.b16 %v79
  %v112 = vunpack.c.l.b16 %v80
  %v113 = vunpack.c.l.b16 %v81
  %v114 = vunpack.c.l.b16 %v82
  %v115 = vunpack.c.l.b16 %v83
  %v116 = vunpack.c.l.b16 %v84
  %v117 = vunpack.c.l.b16 %v85
  %v118 = vunpack.c.l.b16 %v86
  %v119 = vunpack.c.l.b16 %v87
  %v120 = vunpack.c.l.b16 %v88
  %v121 = vunpack.c.l.b16 %v89
  %v122 = vunpack.c.l.b16 %v90
  %v123 = vunpack.c.l.b16 %v91
  %v124 = vpack.c.b16 %v109, %v108
  %v125 = vpack.c.b16 %v111, %v110
  %v126 = vpack.c.b16 %v113, %v112
  %v127 = vpack.c.b16 %v115, %v114
  %v128 = vpack.c.b16 %v117, %v116
  %v129 = vpack.c.b16 %v119, %v118
  %v130 = vpack.c.b16 %v121, %v120
  %v131 = vpack.c.b16 %v123, %v122
  %140 = vmatpush.bf16.msra.mxu0 %v131
  %141 = vmatpush.bf16.msra.mxu0 %v130
  %142 = vmatpush.bf16.msra.mxu0 %v129
  %143 = vmatpush.bf16.msra.mxu0 %v128
  %144 = vmatpush.bf16.msra.mxu0 %v127
  %145 = vmatpush.bf16.msra.mxu0 %v126
  %146 = vmatpush.bf16.msra.mxu0 %v125
  %147 = vmatpush.bf16.msra.mxu0 %v124
  %148 = vmatmul.bf16.gmra.mxu0 %v73
  %v149 = vpop.f32.mrf.mxu0
  %v150 = vadd.f32 0.0, %v149
  %v151 = vpop.f32.mrf.mxu0
  %152 = vdwg.mxu0
  %v154 = vperm.slane %v75, 0
  %v156 = vadd.f32 %v154, %v150
  %v157 = vld [vmem:[%s4] sm:$0xf]
  %v158 = vld [vmem:[%s4 + $0x4] sm:$0xf]
  %v159 = vld [vmem:[%s4 + $0x8] sm:$0xf]
  %v160 = vld [vmem:[%s4 + $0xc] sm:$0xf]
  %v161 = vld [vmem:[%s4 + $0x10] sm:$0xf]
  %v162 = vld [vmem:[%s4 + $0x14] sm:$0xf]
  %v163 = vld [vmem:[%s4 + $0x18] sm:$0xf]
  %v164 = vld [vmem:[%s4 + $0x1c] sm:$0xf]
  %v165 = vld [vmem:[%s4 + $0x20] sm:$0xf]
  %v166 = vld [vmem:[%s4 + $0x24] sm:$0xf]
  %v167 = vld [vmem:[%s4 + $0x28] sm:$0xf]
  %v168 = vld [vmem:[%s4 + $0x2c] sm:$0xf]
  %v169 = vld [vmem:[%s4 + $0x30] sm:$0xf]
  %v170 = vld [vmem:[%s4 + $0x34] sm:$0xf]
  %v171 = vld [vmem:[%s4 + $0x38] sm:$0xf]
  %v172 = vld [vmem:[%s4 + $0x3c] sm:$0xf]
  %v189 = vunpack.c.l.b16 %v157
  %v190 = vunpack.c.l.b16 %v158
  %v191 = vunpack.c.l.b16 %v159
  %v192 = vunpack.c.l.b16 %v160
  %v193 = vunpack.c.l.b16 %v161
  %v194 = vunpack.c.l.b16 %v162
  %v195 = vunpack.c.l.b16 %v163
  %v196 = vunpack.c.l.b16 %v164
  %v197 = vunpack.c.l.b16 %v165
  %v198 = vunpack.c.l.b16 %v166
  %v199 = vunpack.c.l.b16 %v167
  %v200 = vunpack.c.l.b16 %v168
  %v201 = vunpack.c.l.b16 %v169
  %v202 = vunpack.c.l.b16 %v170
  %v203 = vunpack.c.l.b16 %v171
  %v204 = vunpack.c.l.b16 %v172
  %v205 = vpack.c.b16 %v190, %v189
  %v206 = vpack.c.b16 %v192, %v191
  %v207 = vpack.c.b16 %v194, %v193
  %v208 = vpack.c.b16 %v196, %v195
  %v209 = vpack.c.b16 %v198, %v197
  %v210 = vpack.c.b16 %v200, %v199
  %v211 = vpack.c.b16 %v202, %v201
  %v212 = vpack.c.b16 %v204, %v203
  %221 = vmatpush.bf16.msra.mxu0 %v212
  %222 = vmatpush.bf16.msra.mxu0 %v211
  %223 = vmatpush.bf16.msra.mxu0 %v210
  %224 = vmatpush.bf16.msra.mxu0 %v209
  %225 = vmatpush.bf16.msra.mxu0 %v208
  %226 = vmatpush.bf16.msra.mxu0 %v207
  %227 = vmatpush.bf16.msra.mxu0 %v206
  %228 = vmatpush.bf16.msra.mxu0 %v205
  %229 = vmatmul.bf16.gmra.mxu0 %v74
  %v230 = vpop.f32.mrf.mxu0
  %v231 = vadd.f32 0.0, %v230
  %v232 = vpop.f32.mrf.mxu0
  %233 = vdwg.mxu0
  %v234 = vadd.f32 %v156, %v231
  %v235 = vxor.u32 %v234, 2147483648
  %v236 = vmul.f32 %v235, 1.442695
  %v237 = vpow.pop %v236
  %v238 = vadd.f32 %v237, 1.0
  %v239 = vrcp.pop %v238
  %v240 = vmul.f32 %v238, %v239
  %v241 = vsub.f32 1.0, %v240
  %v242 = vmul.f32 %v239, %v241
  %v243 = vadd.f32 %v239, %v242
  %vm244 = vweird.f32 %v238
  %vm245 = vweird.f32 %v239
  %vm246 = vmor %vm244, %vm245
  %v247 = vsel %vm246, %v239, %v243
  %v248 = vand.u32 2147483647, %v238
  %vm249 = vcmp.eq.f32.partialorder %v248, 8.507059e+37
  %v250 = vand.u32 %v238, 2147483648
  %v251 = vor.u32 1.1754944e-38, %v250
  %v252 = vsel %vm249, %v251, %v247
  %v253 = vmul.f32 1.0, %v252
  %s254 = scalar_lea.vmem %s6, 1
  %v255 = vld [vmem:[%s254] sm:$0x1]
  %s256 = scalar_lea.vmem %s2, 64
  %v257 = vld [vmem:[%s256] sm:$0xf]
  %v258 = vld [vmem:[%s256 + $0x4] sm:$0xf]
  %v259 = vld [vmem:[%s256 + $0x8] sm:$0xf]
  %v260 = vld [vmem:[%s256 + $0xc] sm:$0xf]
  %v261 = vld [vmem:[%s256 + $0x10] sm:$0xf]
  %v262 = vld [vmem:[%s256 + $0x14] sm:$0xf]
  %v263 = vld [vmem:[%s256 + $0x18] sm:$0xf]
  %v264 = vld [vmem:[%s256 + $0x1c] sm:$0xf]
  %v265 = vld [vmem:[%s256 + $0x20] sm:$0xf]
  %v266 = vld [vmem:[%s256 + $0x24] sm:$0xf]
  %v267 = vld [vmem:[%s256 + $0x28] sm:$0xf]
  %v268 = vld [vmem:[%s256 + $0x2c] sm:$0xf]
  %v269 = vld [vmem:[%s256 + $0x30] sm:$0xf]
  %v270 = vld [vmem:[%s256 + $0x34] sm:$0xf]
  %v271 = vld [vmem:[%s256 + $0x38] sm:$0xf]
  %v272 = vld [vmem:[%s256 + $0x3c] sm:$0xf]
  %v289 = vunpack.c.l.b16 %v257
  %v290 = vunpack.c.l.b16 %v258
  %v291 = vunpack.c.l.b16 %v259
  %v292 = vunpack.c.l.b16 %v260
  %v293 = vunpack.c.l.b16 %v261
  %v294 = vunpack.c.l.b16 %v262
  %v295 = vunpack.c.l.b16 %v263
  %v296 = vunpack.c.l.b16 %v264
  %v297 = vunpack.c.l.b16 %v265
  %v298 = vunpack.c.l.b16 %v266
  %v299 = vunpack.c.l.b16 %v267
  %v300 = vunpack.c.l.b16 %v268
  %v301 = vunpack.c.l.b16 %v269
  %v302 = vunpack.c.l.b16 %v270
  %v303 = vunpack.c.l.b16 %v271
  %v304 = vunpack.c.l.b16 %v272
  %v305 = vpack.c.b16 %v290, %v289
  %v306 = vpack.c.b16 %v292, %v291
  %v307 = vpack.c.b16 %v294, %v293
  %v308 = vpack.c.b16 %v296, %v295
  %v309 = vpack.c.b16 %v298, %v297
  %v310 = vpack.c.b16 %v300, %v299
  %v311 = vpack.c.b16 %v302, %v301
  %v312 = vpack.c.b16 %v304, %v303
  %321 = vmatpush.bf16.msra.mxu0 %v312
  %322 = vmatpush.bf16.msra.mxu0 %v311
  %323 = vmatpush.bf16.msra.mxu0 %v310
  %324 = vmatpush.bf16.msra.mxu0 %v309
  %325 = vmatpush.bf16.msra.mxu0 %v308
  %326 = vmatpush.bf16.msra.mxu0 %v307
  %327 = vmatpush.bf16.msra.mxu0 %v306
  %328 = vmatpush.bf16.msra.mxu0 %v305
  %329 = vmatmul.bf16.gmra.mxu0 %v73
  %v330 = vpop.f32.mrf.mxu0
  %v331 = vadd.f32 0.0, %v330
  %v332 = vpop.f32.mrf.mxu0
  %333 = vdwg.mxu0
  %v335 = vperm.slane %v255, 0
  %v337 = vadd.f32 %v335, %v331
  %s338 = scalar_lea.vmem %s4, 64
  %v339 = vld [vmem:[%s338] sm:$0xf]
  %v340 = vld [vmem:[%s338 + $0x4] sm:$0xf]
  %v341 = vld [vmem:[%s338 + $0x8] sm:$0xf]
  %v342 = vld [vmem:[%s338 + $0xc] sm:$0xf]
  %v343 = vld [vmem:[%s338 + $0x10] sm:$0xf]
  %v344 = vld [vmem:[%s338 + $0x14] sm:$0xf]
  %v345 = vld [vmem:[%s338 + $0x18] sm:$0xf]
  %v346 = vld [vmem:[%s338 + $0x1c] sm:$0xf]
  %v347 = vld [vmem:[%s338 + $0x20] sm:$0xf]
  %v348 = vld [vmem:[%s338 + $0x24] sm:$0xf]
  %v349 = vld [vmem:[%s338 + $0x28] sm:$0xf]
  %v350 = vld [vmem:[%s338 + $0x2c] sm:$0xf]
  %v351 = vld [vmem:[%s338 + $0x30] sm:$0xf]
  %v352 = vld [vmem:[%s338 + $0x34] sm:$0xf]
  %v353 = vld [vmem:[%s338 + $0x38] sm:$0xf]
  %v354 = vld [vmem:[%s338 + $0x3c] sm:$0xf]
  %v371 = vunpack.c.l.b16 %v339
  %v372 = vunpack.c.l.b16 %v340
  %v373 = vunpack.c.l.b16 %v341
  %v374 = vunpack.c.l.b16 %v342
  %v375 = vunpack.c.l.b16 %v343
  %v376 = vunpack.c.l.b16 %v344
  %v377 = vunpack.c.l.b16 %v345
  %v378 = vunpack.c.l.b16 %v346
  %v379 = vunpack.c.l.b16 %v347
  %v380 = vunpack.c.l.b16 %v348
  %v381 = vunpack.c.l.b16 %v349
  %v382 = vunpack.c.l.b16 %v350
  %v383 = vunpack.c.l.b16 %v351
  %v384 = vunpack.c.l.b16 %v352
  %v385 = vunpack.c.l.b16 %v353
  %v386 = vunpack.c.l.b16 %v354
  %v387 = vpack.c.b16 %v372, %v371
  %v388 = vpack.c.b16 %v374, %v373
  %v389 = vpack.c.b16 %v376, %v375
  %v390 = vpack.c.b16 %v378, %v377
  %v391 = vpack.c.b16 %v380, %v379
  %v392 = vpack.c.b16 %v382, %v381
  %v393 = vpack.c.b16 %v384, %v383
  %v394 = vpack.c.b16 %v386, %v385
  %403 = vmatpush.bf16.msra.mxu0 %v394
  %404 = vmatpush.bf16.msra.mxu0 %v393
  %405 = vmatpush.bf16.msra.mxu0 %v392
  %406 = vmatpush.bf16.msra.mxu0 %v391
  %407 = vmatpush.bf16.msra.mxu0 %v390
  %408 = vmatpush.bf16.msra.mxu0 %v389
  %409 = vmatpush.bf16.msra.mxu0 %v388
  %410 = vmatpush.bf16.msra.mxu0 %v387
  %411 = vmatmul.bf16.gmra.mxu0 %v74
  %v412 = vpop.f32.mrf.mxu0
  %v413 = vadd.f32 0.0, %v412
  %v414 = vpop.f32.mrf.mxu0
  %415 = vdwg.mxu0
  %v416 = vadd.f32 %v337, %v413
  %v417 = vxor.u32 %v416, 2147483648
  %v418 = vmul.f32 %v417, 1.442695
  %v419 = vpow.pop %v418
  %v420 = vadd.f32 %v419, 1.0
  %v421 = vrcp.pop %v420
  %v422 = vmul.f32 %v420, %v421
  %v423 = vsub.f32 1.0, %v422
  %v424 = vmul.f32 %v421, %v423
  %v425 = vadd.f32 %v421, %v424
  %vm426 = vweird.f32 %v420
  %vm427 = vweird.f32 %v421
  %vm428 = vmor %vm426, %vm427
  %v429 = vsel %vm428, %v421, %v425
  %v430 = vand.u32 2147483647, %v420
  %vm431 = vcmp.eq.f32.partialorder %v430, 8.507059e+37
  %v432 = vand.u32 %v420, 2147483648
  %v433 = vor.u32 1.1754944e-38, %v432
  %v434 = vsel %vm431, %v433, %v429
  %v435 = vmul.f32 1.0, %v434
  %s436 = scalar_lea.vmem %s6, 2
  %v437 = vld [vmem:[%s436] sm:$0x1]
  %s438 = scalar_lea.vmem %s2, 128
  %v439 = vld [vmem:[%s438] sm:$0xf]
  %v440 = vld [vmem:[%s438 + $0x4] sm:$0xf]
  %v441 = vld [vmem:[%s438 + $0x8] sm:$0xf]
  %v442 = vld [vmem:[%s438 + $0xc] sm:$0xf]
  %v443 = vld [vmem:[%s438 + $0x10] sm:$0xf]
  %v444 = vld [vmem:[%s438 + $0x14] sm:$0xf]
  %v445 = vld [vmem:[%s438 + $0x18] sm:$0xf]
  %v446 = vld [vmem:[%s438 + $0x1c] sm:$0xf]
  %v447 = vld [vmem:[%s438 + $0x20] sm:$0xf]
  %v448 = vld [vmem:[%s438 + $0x24] sm:$0xf]
  %v449 = vld [vmem:[%s438 + $0x28] sm:$0xf]
  %v450 = vld [vmem:[%s438 + $0x2c] sm:$0xf]
  %v451 = vld [vmem:[%s438 + $0x30] sm:$0xf]
  %v452 = vld [vmem:[%s438 + $0x34] sm:$0xf]
  %v453 = vld [vmem:[%s438 + $0x38] sm:$0xf]
  %v454 = vld [vmem:[%s438 + $0x3c] sm:$0xf]
  %v471 = vunpack.c.l.b16 %v439
  %v472 = vunpack.c.l.b16 %v440
  %v473 = vunpack.c.l.b16 %v441
  %v474 = vunpack.c.l.b16 %v442
  %v475 = vunpack.c.l.b16 %v443
  %v476 = vunpack.c.l.b16 %v444
  %v477 = vunpack.c.l.b16 %v445
  %v478 = vunpack.c.l.b16 %v446
  %v479 = vunpack.c.l.b16 %v447
  %v480 = vunpack.c.l.b16 %v448
  %v481 = vunpack.c.l.b16 %v449
  %v482 = vunpack.c.l.b16 %v450
  %v483 = vunpack.c.l.b16 %v451
  %v484 = vunpack.c.l.b16 %v452
  %v485 = vunpack.c.l.b16 %v453
  %v486 = vunpack.c.l.b16 %v454
  %v487 = vpack.c.b16 %v472, %v471
  %v488 = vpack.c.b16 %v474, %v473
  %v489 = vpack.c.b16 %v476, %v475
  %v490 = vpack.c.b16 %v478, %v477
  %v491 = vpack.c.b16 %v480, %v479
  %v492 = vpack.c.b16 %v482, %v481
  %v493 = vpack.c.b16 %v484, %v483
  %v494 = vpack.c.b16 %v486, %v485
  %503 = vmatpush.bf16.msra.mxu0 %v494
  %504 = vmatpush.bf16.msra.mxu0 %v493
  %505 = vmatpush.bf16.msra.mxu0 %v492
  %506 = vmatpush.bf16.msra.mxu0 %v491
  %507 = vmatpush.bf16.msra.mxu0 %v490
  %508 = vmatpush.bf16.msra.mxu0 %v489
  %509 = vmatpush.bf16.msra.mxu0 %v488
  %510 = vmatpush.bf16.msra.mxu0 %v487
  %511 = vmatmul.bf16.gmra.mxu0 %v73
  %v512 = vpop.f32.mrf.mxu0
  %v513 = vadd.f32 0.0, %v512
  %v514 = vpop.f32.mrf.mxu0
  %515 = vdwg.mxu0
  %v517 = vperm.slane %v437, 0
  %v519 = vadd.f32 %v517, %v513
  %s520 = scalar_lea.vmem %s4, 128
  %v521 = vld [vmem:[%s520] sm:$0xf]
  %v522 = vld [vmem:[%s520 + $0x4] sm:$0xf]
  %v523 = vld [vmem:[%s520 + $0x8] sm:$0xf]
  %v524 = vld [vmem:[%s520 + $0xc] sm:$0xf]
  %v525 = vld [vmem:[%s520 + $0x10] sm:$0xf]
  %v526 = vld [vmem:[%s520 + $0x14] sm:$0xf]
  %v527 = vld [vmem:[%s520 + $0x18] sm:$0xf]
  %v528 = vld [vmem:[%s520 + $0x1c] sm:$0xf]
  %v529 = vld [vmem:[%s520 + $0x20] sm:$0xf]
  %v530 = vld [vmem:[%s520 + $0x24] sm:$0xf]
  %v531 = vld [vmem:[%s520 + $0x28] sm:$0xf]
  %v532 = vld [vmem:[%s520 + $0x2c] sm:$0xf]
  %v533 = vld [vmem:[%s520 + $0x30] sm:$0xf]
  %v534 = vld [vmem:[%s520 + $0x34] sm:$0xf]
  %v535 = vld [vmem:[%s520 + $0x38] sm:$0xf]
  %v536 = vld [vmem:[%s520 + $0x3c] sm:$0xf]
  %v553 = vunpack.c.l.b16 %v521
  %v554 = vunpack.c.l.b16 %v522
  %v555 = vunpack.c.l.b16 %v523
  %v556 = vunpack.c.l.b16 %v524
  %v557 = vunpack.c.l.b16 %v525
  %v558 = vunpack.c.l.b16 %v526
  %v559 = vunpack.c.l.b16 %v527
  %v560 = vunpack.c.l.b16 %v528
  %v561 = vunpack.c.l.b16 %v529
  %v562 = vunpack.c.l.b16 %v530
  %v563 = vunpack.c.l.b16 %v531
  %v564 = vunpack.c.l.b16 %v532
  %v565 = vunpack.c.l.b16 %v533
  %v566 = vunpack.c.l.b16 %v534
  %v567 = vunpack.c.l.b16 %v535
  %v568 = vunpack.c.l.b16 %v536
  %v569 = vpack.c.b16 %v554, %v553
  %v570 = vpack.c.b16 %v556, %v555
  %v571 = vpack.c.b16 %v558, %v557
  %v572 = vpack.c.b16 %v560, %v559
  %v573 = vpack.c.b16 %v562, %v561
  %v574 = vpack.c.b16 %v564, %v563
  %v575 = vpack.c.b16 %v566, %v565
  %v576 = vpack.c.b16 %v568, %v567
  %585 = vmatpush.bf16.msra.mxu0 %v576
  %586 = vmatpush.bf16.msra.mxu0 %v575
  %587 = vmatpush.bf16.msra.mxu0 %v574
  %588 = vmatpush.bf16.msra.mxu0 %v573
  %589 = vmatpush.bf16.msra.mxu0 %v572
  %590 = vmatpush.bf16.msra.mxu0 %v571
  %591 = vmatpush.bf16.msra.mxu0 %v570
  %592 = vmatpush.bf16.msra.mxu0 %v569
  %593 = vmatmul.bf16.gmra.mxu0 %v74
  %v594 = vpop.f32.mrf.mxu0
  %v595 = vadd.f32 0.0, %v594
  %v596 = vpop.f32.mrf.mxu0
  %597 = vdwg.mxu0
  %v598 = vadd.f32 %v519, %v595
  %v599 = vtanh.pop %v598
  %s600 = scalar_lea.vmem %s6, 3
  %v601 = vld [vmem:[%s600] sm:$0x1]
  %s602 = scalar_lea.vmem %s2, 192
  %v603 = vld [vmem:[%s602] sm:$0xf]
  %v604 = vld [vmem:[%s602 + $0x4] sm:$0xf]
  %v605 = vld [vmem:[%s602 + $0x8] sm:$0xf]
  %v606 = vld [vmem:[%s602 + $0xc] sm:$0xf]
  %v607 = vld [vmem:[%s602 + $0x10] sm:$0xf]
  %v608 = vld [vmem:[%s602 + $0x14] sm:$0xf]
  %v609 = vld [vmem:[%s602 + $0x18] sm:$0xf]
  %v610 = vld [vmem:[%s602 + $0x1c] sm:$0xf]
  %v611 = vld [vmem:[%s602 + $0x20] sm:$0xf]
  %v612 = vld [vmem:[%s602 + $0x24] sm:$0xf]
  %v613 = vld [vmem:[%s602 + $0x28] sm:$0xf]
  %v614 = vld [vmem:[%s602 + $0x2c] sm:$0xf]
  %v615 = vld [vmem:[%s602 + $0x30] sm:$0xf]
  %v616 = vld [vmem:[%s602 + $0x34] sm:$0xf]
  %v617 = vld [vmem:[%s602 + $0x38] sm:$0xf]
  %v618 = vld [vmem:[%s602 + $0x3c] sm:$0xf]
  %v635 = vunpack.c.l.b16 %v603
  %v636 = vunpack.c.l.b16 %v604
  %v637 = vunpack.c.l.b16 %v605
  %v638 = vunpack.c.l.b16 %v606
  %v639 = vunpack.c.l.b16 %v607
  %v640 = vunpack.c.l.b16 %v608
  %v641 = vunpack.c.l.b16 %v609
  %v642 = vunpack.c.l.b16 %v610
  %v643 = vunpack.c.l.b16 %v611
  %v644 = vunpack.c.l.b16 %v612
  %v645 = vunpack.c.l.b16 %v613
  %v646 = vunpack.c.l.b16 %v614
  %v647 = vunpack.c.l.b16 %v615
  %v648 = vunpack.c.l.b16 %v616
  %v649 = vunpack.c.l.b16 %v617
  %v650 = vunpack.c.l.b16 %v618
  %v651 = vpack.c.b16 %v636, %v635
  %v652 = vpack.c.b16 %v638, %v637
  %v653 = vpack.c.b16 %v640, %v639
  %v654 = vpack.c.b16 %v642, %v641
  %v655 = vpack.c.b16 %v644, %v643
  %v656 = vpack.c.b16 %v646, %v645
  %v657 = vpack.c.b16 %v648, %v647
  %v658 = vpack.c.b16 %v650, %v649
  %667 = vmatpush.bf16.msra.mxu0 %v658
  %668 = vmatpush.bf16.msra.mxu0 %v657
  %669 = vmatpush.bf16.msra.mxu0 %v656
  %670 = vmatpush.bf16.msra.mxu0 %v655
  %671 = vmatpush.bf16.msra.mxu0 %v654
  %672 = vmatpush.bf16.msra.mxu0 %v653
  %673 = vmatpush.bf16.msra.mxu0 %v652
  %674 = vmatpush.bf16.msra.mxu0 %v651
  %675 = vmatmul.bf16.gmra.mxu0 %v73
  %v676 = vpop.f32.mrf.mxu0
  %v677 = vadd.f32 0.0, %v676
  %v678 = vpop.f32.mrf.mxu0
  %679 = vdwg.mxu0
  %v681 = vperm.slane %v601, 0
  %v683 = vadd.f32 %v681, %v677
  %s684 = scalar_lea.vmem %s4, 192
  %v685 = vld [vmem:[%s684] sm:$0xf]
  %v686 = vld [vmem:[%s684 + $0x4] sm:$0xf]
  %v687 = vld [vmem:[%s684 + $0x8] sm:$0xf]
  %v688 = vld [vmem:[%s684 + $0xc] sm:$0xf]
  %v689 = vld [vmem:[%s684 + $0x10] sm:$0xf]
  %v690 = vld [vmem:[%s684 + $0x14] sm:$0xf]
  %v691 = vld [vmem:[%s684 + $0x18] sm:$0xf]
  %v692 = vld [vmem:[%s684 + $0x1c] sm:$0xf]
  %v693 = vld [vmem:[%s684 + $0x20] sm:$0xf]
  %v694 = vld [vmem:[%s684 + $0x24] sm:$0xf]
  %v695 = vld [vmem:[%s684 + $0x28] sm:$0xf]
  %v696 = vld [vmem:[%s684 + $0x2c] sm:$0xf]
  %v697 = vld [vmem:[%s684 + $0x30] sm:$0xf]
  %v698 = vld [vmem:[%s684 + $0x34] sm:$0xf]
  %v699 = vld [vmem:[%s684 + $0x38] sm:$0xf]
  %v700 = vld [vmem:[%s684 + $0x3c] sm:$0xf]
  %v717 = vunpack.c.l.b16 %v685
  %v718 = vunpack.c.l.b16 %v686
  %v719 = vunpack.c.l.b16 %v687
  %v720 = vunpack.c.l.b16 %v688
  %v721 = vunpack.c.l.b16 %v689
  %v722 = vunpack.c.l.b16 %v690
  %v723 = vunpack.c.l.b16 %v691
  %v724 = vunpack.c.l.b16 %v692
  %v725 = vunpack.c.l.b16 %v693
  %v726 = vunpack.c.l.b16 %v694
  %v727 = vunpack.c.l.b16 %v695
  %v728 = vunpack.c.l.b16 %v696
  %v729 = vunpack.c.l.b16 %v697
  %v730 = vunpack.c.l.b16 %v698
  %v731 = vunpack.c.l.b16 %v699
  %v732 = vunpack.c.l.b16 %v700
  %v733 = vpack.c.b16 %v718, %v717
  %v734 = vpack.c.b16 %v720, %v719
  %v735 = vpack.c.b16 %v722, %v721
  %v736 = vpack.c.b16 %v724, %v723
  %v737 = vpack.c.b16 %v726, %v725
  %v738 = vpack.c.b16 %v728, %v727
  %v739 = vpack.c.b16 %v730, %v729
  %v740 = vpack.c.b16 %v732, %v731
  %749 = vmatpush.bf16.msra.mxu0 %v740
  %750 = vmatpush.bf16.msra.mxu0 %v739
  %751 = vmatpush.bf16.msra.mxu0 %v738
  %752 = vmatpush.bf16.msra.mxu0 %v737
  %753 = vmatpush.bf16.msra.mxu0 %v736
  %754 = vmatpush.bf16.msra.mxu0 %v735
  %755 = vmatpush.bf16.msra.mxu0 %v734
  %756 = vmatpush.bf16.msra.mxu0 %v733
  %757 = vmatmul.bf16.gmra.mxu0 %v74
  %v758 = vpop.f32.mrf.mxu0
  %v759 = vadd.f32 0.0, %v758
  %v760 = vpop.f32.mrf.mxu0
  %761 = vdwg.mxu0
  %v762 = vadd.f32 %v683, %v759
  %v763 = vxor.u32 %v762, 2147483648
  %v764 = vmul.f32 %v763, 1.442695
  %v765 = vpow.pop %v764
  %v766 = vadd.f32 %v765, 1.0
  %v767 = vrcp.pop %v766
  %v768 = vmul.f32 %v766, %v767
  %v769 = vsub.f32 1.0, %v768
  %v770 = vmul.f32 %v767, %v769
  %v771 = vadd.f32 %v767, %v770
  %vm772 = vweird.f32 %v766
  %vm773 = vweird.f32 %v767
  %vm774 = vmor %vm772, %vm773
  %v775 = vsel %vm774, %v767, %v771
  %v776 = vand.u32 2147483647, %v766
  %vm777 = vcmp.eq.f32.partialorder %v776, 8.507059e+37
  %v778 = vand.u32 %v766, 2147483648
  %v779 = vor.u32 1.1754944e-38, %v778
  %v780 = vsel %vm777, %v779, %v775
  %v781 = vmul.f32 1.0, %v780
  %v782 = vmul.f32 %v435, %v66
  %v783 = vmul.f32 %v253, %v599
  %v784 = vadd.f32 %v782, %v783
  %v785 = vtanh.pop %v784
  %v786 = vmul.f32 %v781, %v785
  %v787 = vstv %s72
  %vm788 = vcmp.gt.s32.totalorder %v64, %v787
  %v789 = vsel %vm788, 1, 0
  %790 = vset.pattern.permute.xlu0 0
  %791 = vperm.xlu0 %790, %v789
  %v792 = vpop.permute.xlu0 %791
  %vm793 = vcmp.eq.s32.totalorder %v792, 1
  %v794 = vsel %vm793, %v786, -3e+38
  %v795 = vsel %vm793, %v786, %v65
  %v796 = vsel %vm793, %v784, %v66
  %v797 = vmax.f32 %v69, %v794
  %s798 = ssub.s32 7, %s72
  %s799 = scalar_lea.vmem %s51, 28
  %v800 = vld [vmem:[%s799] sm:$0xf]
  %v801 = vpack.c.bf16 %v67, %v67
  %v802 = vld [vmem:[%s7] sm:$0x1]
  %v803 = vld [vmem:[%s3] sm:$0xf]
  %v804 = vld [vmem:[%s3 + $0x4] sm:$0xf]
  %v805 = vld [vmem:[%s3 + $0x8] sm:$0xf]
  %v806 = vld [vmem:[%s3 + $0xc] sm:$0xf]
  %v807 = vld [vmem:[%s3 + $0x10] sm:$0xf]
  %v808 = vld [vmem:[%s3 + $0x14] sm:$0xf]
  %v809 = vld [vmem:[%s3 + $0x18] sm:$0xf]
  %v810 = vld [vmem:[%s3 + $0x1c] sm:$0xf]
  %v811 = vld [vmem:[%s3 + $0x20] sm:$0xf]
  %v812 = vld [vmem:[%s3 + $0x24] sm:$0xf]
  %v813 = vld [vmem:[%s3 + $0x28] sm:$0xf]
  %v814 = vld [vmem:[%s3 + $0x2c] sm:$0xf]
  %v815 = vld [vmem:[%s3 + $0x30] sm:$0xf]
  %v816 = vld [vmem:[%s3 + $0x34] sm:$0xf]
  %v817 = vld [vmem:[%s3 + $0x38] sm:$0xf]
  %v818 = vld [vmem:[%s3 + $0x3c] sm:$0xf]
  %v835 = vunpack.c.l.b16 %v803
  %v836 = vunpack.c.l.b16 %v804
  %v837 = vunpack.c.l.b16 %v805
  %v838 = vunpack.c.l.b16 %v806
  %v839 = vunpack.c.l.b16 %v807
  %v840 = vunpack.c.l.b16 %v808
  %v841 = vunpack.c.l.b16 %v809
  %v842 = vunpack.c.l.b16 %v810
  %v843 = vunpack.c.l.b16 %v811
  %v844 = vunpack.c.l.b16 %v812
  %v845 = vunpack.c.l.b16 %v813
  %v846 = vunpack.c.l.b16 %v814
  %v847 = vunpack.c.l.b16 %v815
  %v848 = vunpack.c.l.b16 %v816
  %v849 = vunpack.c.l.b16 %v817
  %v850 = vunpack.c.l.b16 %v818
  %v851 = vpack.c.b16 %v836, %v835
  %v852 = vpack.c.b16 %v838, %v837
  %v853 = vpack.c.b16 %v840, %v839
  %v854 = vpack.c.b16 %v842, %v841
  %v855 = vpack.c.b16 %v844, %v843
  %v856 = vpack.c.b16 %v846, %v845
  %v857 = vpack.c.b16 %v848, %v847
  %v858 = vpack.c.b16 %v850, %v849
  %867 = vmatpush.bf16.msra.mxu0 %v858
  %868 = vmatpush.bf16.msra.mxu0 %v857
  %869 = vmatpush.bf16.msra.mxu0 %v856
  %870 = vmatpush.bf16.msra.mxu0 %v855
  %871 = vmatpush.bf16.msra.mxu0 %v854
  %872 = vmatpush.bf16.msra.mxu0 %v853
  %873 = vmatpush.bf16.msra.mxu0 %v852
  %874 = vmatpush.bf16.msra.mxu0 %v851
  %875 = vmatmul.bf16.gmra.mxu0 %v800
  %v876 = vpop.f32.mrf.mxu0
  %v877 = vadd.f32 0.0, %v876
  %v878 = vpop.f32.mrf.mxu0
  %879 = vdwg.mxu0
  %v881 = vperm.slane %v802, 0
  %v883 = vadd.f32 %v881, %v877
  %v884 = vld [vmem:[%s5] sm:$0xf]
  %v885 = vld [vmem:[%s5 + $0x4] sm:$0xf]
  %v886 = vld [vmem:[%s5 + $0x8] sm:$0xf]
  %v887 = vld [vmem:[%s5 + $0xc] sm:$0xf]
  %v888 = vld [vmem:[%s5 + $0x10] sm:$0xf]
  %v889 = vld [vmem:[%s5 + $0x14] sm:$0xf]
  %v890 = vld [vmem:[%s5 + $0x18] sm:$0xf]
  %v891 = vld [vmem:[%s5 + $0x1c] sm:$0xf]
  %v892 = vld [vmem:[%s5 + $0x20] sm:$0xf]
  %v893 = vld [vmem:[%s5 + $0x24] sm:$0xf]
  %v894 = vld [vmem:[%s5 + $0x28] sm:$0xf]
  %v895 = vld [vmem:[%s5 + $0x2c] sm:$0xf]
  %v896 = vld [vmem:[%s5 + $0x30] sm:$0xf]
  %v897 = vld [vmem:[%s5 + $0x34] sm:$0xf]
  %v898 = vld [vmem:[%s5 + $0x38] sm:$0xf]
  %v899 = vld [vmem:[%s5 + $0x3c] sm:$0xf]
  %v916 = vunpack.c.l.b16 %v884
  %v917 = vunpack.c.l.b16 %v885
  %v918 = vunpack.c.l.b16 %v886
  %v919 = vunpack.c.l.b16 %v887
  %v920 = vunpack.c.l.b16 %v888
  %v921 = vunpack.c.l.b16 %v889
  %v922 = vunpack.c.l.b16 %v890
  %v923 = vunpack.c.l.b16 %v891
  %v924 = vunpack.c.l.b16 %v892
  %v925 = vunpack.c.l.b16 %v893
  %v926 = vunpack.c.l.b16 %v894
  %v927 = vunpack.c.l.b16 %v895
  %v928 = vunpack.c.l.b16 %v896
  %v929 = vunpack.c.l.b16 %v897
  %v930 = vunpack.c.l.b16 %v898
  %v931 = vunpack.c.l.b16 %v899
  %v932 = vpack.c.b16 %v917, %v916
  %v933 = vpack.c.b16 %v919, %v918
  %v934 = vpack.c.b16 %v921, %v920
  %v935 = vpack.c.b16 %v923, %v922
  %v936 = vpack.c.b16 %v925, %v924
  %v937 = vpack.c.b16 %v927, %v926
  %v938 = vpack.c.b16 %v929, %v928
  %v939 = vpack.c.b16 %v931, %v930
  %948 = vmatpush.bf16.msra.mxu0 %v939
  %949 = vmatpush.bf16.msra.mxu0 %v938
  %950 = vmatpush.bf16.msra.mxu0 %v937
  %951 = vmatpush.bf16.msra.mxu0 %v936
  %952 = vmatpush.bf16.msra.mxu0 %v935
  %953 = vmatpush.bf16.msra.mxu0 %v934
  %954 = vmatpush.bf16.msra.mxu0 %v933
  %955 = vmatpush.bf16.msra.mxu0 %v932
  %956 = vmatmul.bf16.gmra.mxu0 %v801
  %v957 = vpop.f32.mrf.mxu0
  %v958 = vadd.f32 0.0, %v957
  %v959 = vpop.f32.mrf.mxu0
  %960 = vdwg.mxu0
  %v961 = vadd.f32 %v883, %v958
  %v962 = vxor.u32 %v961, 2147483648
  %v963 = vmul.f32 %v962, 1.442695
  %v964 = vpow.pop %v963
  %v965 = vadd.f32 %v964, 1.0
  %v966 = vrcp.pop %v965
  %v967 = vmul.f32 %v965, %v966
  %v968 = vsub.f32 1.0, %v967
  %v969 = vmul.f32 %v966, %v968
  %v970 = vadd.f32 %v966, %v969
  %vm971 = vweird.f32 %v965
  %vm972 = vweird.f32 %v966
  %vm973 = vmor %vm971, %vm972
  %v974 = vsel %vm973, %v966, %v970
  %v975 = vand.u32 2147483647, %v965
  %vm976 = vcmp.eq.f32.partialorder %v975, 8.507059e+37
  %v977 = vand.u32 %v965, 2147483648
  %v978 = vor.u32 1.1754944e-38, %v977
  %v979 = vsel %vm976, %v978, %v974
  %v980 = vmul.f32 1.0, %v979
  %s981 = scalar_lea.vmem %s7, 1
  %v982 = vld [vmem:[%s981] sm:$0x1]
  %s983 = scalar_lea.vmem %s3, 64
  %v984 = vld [vmem:[%s983] sm:$0xf]
  %v985 = vld [vmem:[%s983 + $0x4] sm:$0xf]
  %v986 = vld [vmem:[%s983 + $0x8] sm:$0xf]
  %v987 = vld [vmem:[%s983 + $0xc] sm:$0xf]
  %v988 = vld [vmem:[%s983 + $0x10] sm:$0xf]
  %v989 = vld [vmem:[%s983 + $0x14] sm:$0xf]
  %v990 = vld [vmem:[%s983 + $0x18] sm:$0xf]
  %v991 = vld [vmem:[%s983 + $0x1c] sm:$0xf]
  %v992 = vld [vmem:[%s983 + $0x20] sm:$0xf]
  %v993 = vld [vmem:[%s983 + $0x24] sm:$0xf]
  %v994 = vld [vmem:[%s983 + $0x28] sm:$0xf]
  %v995 = vld [vmem:[%s983 + $0x2c] sm:$0xf]
  %v996 = vld [vmem:[%s983 + $0x30] sm:$0xf]
  %v997 = vld [vmem:[%s983 + $0x34] sm:$0xf]
  %v998 = vld [vmem:[%s983 + $0x38] sm:$0xf]
  %v999 = vld [vmem:[%s983 + $0x3c] sm:$0xf]
  %v1016 = vunpack.c.l.b16 %v984
  %v1017 = vunpack.c.l.b16 %v985
  %v1018 = vunpack.c.l.b16 %v986
  %v1019 = vunpack.c.l.b16 %v987
  %v1020 = vunpack.c.l.b16 %v988
  %v1021 = vunpack.c.l.b16 %v989
  %v1022 = vunpack.c.l.b16 %v990
  %v1023 = vunpack.c.l.b16 %v991
  %v1024 = vunpack.c.l.b16 %v992
  %v1025 = vunpack.c.l.b16 %v993
  %v1026 = vunpack.c.l.b16 %v994
  %v1027 = vunpack.c.l.b16 %v995
  %v1028 = vunpack.c.l.b16 %v996
  %v1029 = vunpack.c.l.b16 %v997
  %v1030 = vunpack.c.l.b16 %v998
  %v1031 = vunpack.c.l.b16 %v999
  %v1032 = vpack.c.b16 %v1017, %v1016
  %v1033 = vpack.c.b16 %v1019, %v1018
  %v1034 = vpack.c.b16 %v1021, %v1020
  %v1035 = vpack.c.b16 %v1023, %v1022
  %v1036 = vpack.c.b16 %v1025, %v1024
  %v1037 = vpack.c.b16 %v1027, %v1026
  %v1038 = vpack.c.b16 %v1029, %v1028
  %v1039 = vpack.c.b16 %v1031, %v1030
  %1048 = vmatpush.bf16.msra.mxu0 %v1039
  %1049 = vmatpush.bf16.msra.mxu0 %v1038
  %1050 = vmatpush.bf16.msra.mxu0 %v1037
  %1051 = vmatpush.bf16.msra.mxu0 %v1036
  %1052 = vmatpush.bf16.msra.mxu0 %v1035
  %1053 = vmatpush.bf16.msra.mxu0 %v1034
  %1054 = vmatpush.bf16.msra.mxu0 %v1033
  %1055 = vmatpush.bf16.msra.mxu0 %v1032
  %1056 = vmatmul.bf16.gmra.mxu0 %v800
  %v1057 = vpop.f32.mrf.mxu0
  %v1058 = vadd.f32 0.0, %v1057
  %v1059 = vpop.f32.mrf.mxu0
  %1060 = vdwg.mxu0
  %v1062 = vperm.slane %v982, 0
  %v1064 = vadd.f32 %v1062, %v1058
  %s1065 = scalar_lea.vmem %s5, 64
  %v1066 = vld [vmem:[%s1065] sm:$0xf]
  %v1067 = vld [vmem:[%s1065 + $0x4] sm:$0xf]
  %v1068 = vld [vmem:[%s1065 + $0x8] sm:$0xf]
  %v1069 = vld [vmem:[%s1065 + $0xc] sm:$0xf]
  %v1070 = vld [vmem:[%s1065 + $0x10] sm:$0xf]
  %v1071 = vld [vmem:[%s1065 + $0x14] sm:$0xf]
  %v1072 = vld [vmem:[%s1065 + $0x18] sm:$0xf]
  %v1073 = vld [vmem:[%s1065 + $0x1c] sm:$0xf]
  %v1074 = vld [vmem:[%s1065 + $0x20] sm:$0xf]
  %v1075 = vld [vmem:[%s1065 + $0x24] sm:$0xf]
  %v1076 = vld [vmem:[%s1065 + $0x28] sm:$0xf]
  %v1077 = vld [vmem:[%s1065 + $0x2c] sm:$0xf]
  %v1078 = vld [vmem:[%s1065 + $0x30] sm:$0xf]
  %v1079 = vld [vmem:[%s1065 + $0x34] sm:$0xf]
  %v1080 = vld [vmem:[%s1065 + $0x38] sm:$0xf]
  %v1081 = vld [vmem:[%s1065 + $0x3c] sm:$0xf]
  %v1098 = vunpack.c.l.b16 %v1066
  %v1099 = vunpack.c.l.b16 %v1067
  %v1100 = vunpack.c.l.b16 %v1068
  %v1101 = vunpack.c.l.b16 %v1069
  %v1102 = vunpack.c.l.b16 %v1070
  %v1103 = vunpack.c.l.b16 %v1071
  %v1104 = vunpack.c.l.b16 %v1072
  %v1105 = vunpack.c.l.b16 %v1073
  %v1106 = vunpack.c.l.b16 %v1074
  %v1107 = vunpack.c.l.b16 %v1075
  %v1108 = vunpack.c.l.b16 %v1076
  %v1109 = vunpack.c.l.b16 %v1077
  %v1110 = vunpack.c.l.b16 %v1078
  %v1111 = vunpack.c.l.b16 %v1079
  %v1112 = vunpack.c.l.b16 %v1080
  %v1113 = vunpack.c.l.b16 %v1081
  %v1114 = vpack.c.b16 %v1099, %v1098
  %v1115 = vpack.c.b16 %v1101, %v1100
  %v1116 = vpack.c.b16 %v1103, %v1102
  %v1117 = vpack.c.b16 %v1105, %v1104
  %v1118 = vpack.c.b16 %v1107, %v1106
  %v1119 = vpack.c.b16 %v1109, %v1108
  %v1120 = vpack.c.b16 %v1111, %v1110
  %v1121 = vpack.c.b16 %v1113, %v1112
  %1130 = vmatpush.bf16.msra.mxu0 %v1121
  %1131 = vmatpush.bf16.msra.mxu0 %v1120
  %1132 = vmatpush.bf16.msra.mxu0 %v1119
  %1133 = vmatpush.bf16.msra.mxu0 %v1118
  %1134 = vmatpush.bf16.msra.mxu0 %v1117
  %1135 = vmatpush.bf16.msra.mxu0 %v1116
  %1136 = vmatpush.bf16.msra.mxu0 %v1115
  %1137 = vmatpush.bf16.msra.mxu0 %v1114
  %1138 = vmatmul.bf16.gmra.mxu0 %v801
  %v1139 = vpop.f32.mrf.mxu0
  %v1140 = vadd.f32 0.0, %v1139
  %v1141 = vpop.f32.mrf.mxu0
  %1142 = vdwg.mxu0
  %v1143 = vadd.f32 %v1064, %v1140
  %v1144 = vxor.u32 %v1143, 2147483648
  %v1145 = vmul.f32 %v1144, 1.442695
  %v1146 = vpow.pop %v1145
  %v1147 = vadd.f32 %v1146, 1.0
  %v1148 = vrcp.pop %v1147
  %v1149 = vmul.f32 %v1147, %v1148
  %v1150 = vsub.f32 1.0, %v1149
  %v1151 = vmul.f32 %v1148, %v1150
  %v1152 = vadd.f32 %v1148, %v1151
  %vm1153 = vweird.f32 %v1147
  %vm1154 = vweird.f32 %v1148
  %vm1155 = vmor %vm1153, %vm1154
  %v1156 = vsel %vm1155, %v1148, %v1152
  %v1157 = vand.u32 2147483647, %v1147
  %vm1158 = vcmp.eq.f32.partialorder %v1157, 8.507059e+37
  %v1159 = vand.u32 %v1147, 2147483648
  %v1160 = vor.u32 1.1754944e-38, %v1159
  %v1161 = vsel %vm1158, %v1160, %v1156
  %v1162 = vmul.f32 1.0, %v1161
  %s1163 = scalar_lea.vmem %s7, 2
  %v1164 = vld [vmem:[%s1163] sm:$0x1]
  %s1165 = scalar_lea.vmem %s3, 128
  %v1166 = vld [vmem:[%s1165] sm:$0xf]
  %v1167 = vld [vmem:[%s1165 + $0x4] sm:$0xf]
  %v1168 = vld [vmem:[%s1165 + $0x8] sm:$0xf]
  %v1169 = vld [vmem:[%s1165 + $0xc] sm:$0xf]
  %v1170 = vld [vmem:[%s1165 + $0x10] sm:$0xf]
  %v1171 = vld [vmem:[%s1165 + $0x14] sm:$0xf]
  %v1172 = vld [vmem:[%s1165 + $0x18] sm:$0xf]
  %v1173 = vld [vmem:[%s1165 + $0x1c] sm:$0xf]
  %v1174 = vld [vmem:[%s1165 + $0x20] sm:$0xf]
  %v1175 = vld [vmem:[%s1165 + $0x24] sm:$0xf]
  %v1176 = vld [vmem:[%s1165 + $0x28] sm:$0xf]
  %v1177 = vld [vmem:[%s1165 + $0x2c] sm:$0xf]
  %v1178 = vld [vmem:[%s1165 + $0x30] sm:$0xf]
  %v1179 = vld [vmem:[%s1165 + $0x34] sm:$0xf]
  %v1180 = vld [vmem:[%s1165 + $0x38] sm:$0xf]
  %v1181 = vld [vmem:[%s1165 + $0x3c] sm:$0xf]
  %v1198 = vunpack.c.l.b16 %v1166
  %v1199 = vunpack.c.l.b16 %v1167
  %v1200 = vunpack.c.l.b16 %v1168
  %v1201 = vunpack.c.l.b16 %v1169
  %v1202 = vunpack.c.l.b16 %v1170
  %v1203 = vunpack.c.l.b16 %v1171
  %v1204 = vunpack.c.l.b16 %v1172
  %v1205 = vunpack.c.l.b16 %v1173
  %v1206 = vunpack.c.l.b16 %v1174
  %v1207 = vunpack.c.l.b16 %v1175
  %v1208 = vunpack.c.l.b16 %v1176
  %v1209 = vunpack.c.l.b16 %v1177
  %v1210 = vunpack.c.l.b16 %v1178
  %v1211 = vunpack.c.l.b16 %v1179
  %v1212 = vunpack.c.l.b16 %v1180
  %v1213 = vunpack.c.l.b16 %v1181
  %v1214 = vpack.c.b16 %v1199, %v1198
  %v1215 = vpack.c.b16 %v1201, %v1200
  %v1216 = vpack.c.b16 %v1203, %v1202
  %v1217 = vpack.c.b16 %v1205, %v1204
  %v1218 = vpack.c.b16 %v1207, %v1206
  %v1219 = vpack.c.b16 %v1209, %v1208
  %v1220 = vpack.c.b16 %v1211, %v1210
  %v1221 = vpack.c.b16 %v1213, %v1212
  %1230 = vmatpush.bf16.msra.mxu0 %v1221
  %1231 = vmatpush.bf16.msra.mxu0 %v1220
  %1232 = vmatpush.bf16.msra.mxu0 %v1219
  %1233 = vmatpush.bf16.msra.mxu0 %v1218
  %1234 = vmatpush.bf16.msra.mxu0 %v1217
  %1235 = vmatpush.bf16.msra.mxu0 %v1216
  %1236 = vmatpush.bf16.msra.mxu0 %v1215
  %1237 = vmatpush.bf16.msra.mxu0 %v1214
  %1238 = vmatmul.bf16.gmra.mxu0 %v800
  %v1239 = vpop.f32.mrf.mxu0
  %v1240 = vadd.f32 0.0, %v1239
  %v1241 = vpop.f32.mrf.mxu0
  %1242 = vdwg.mxu0
  %v1244 = vperm.slane %v1164, 0
  %v1246 = vadd.f32 %v1244, %v1240
  %s1247 = scalar_lea.vmem %s5, 128
  %v1248 = vld [vmem:[%s1247] sm:$0xf]
  %v1249 = vld [vmem:[%s1247 + $0x4] sm:$0xf]
  %v1250 = vld [vmem:[%s1247 + $0x8] sm:$0xf]
  %v1251 = vld [vmem:[%s1247 + $0xc] sm:$0xf]
  %v1252 = vld [vmem:[%s1247 + $0x10] sm:$0xf]
  %v1253 = vld [vmem:[%s1247 + $0x14] sm:$0xf]
  %v1254 = vld [vmem:[%s1247 + $0x18] sm:$0xf]
  %v1255 = vld [vmem:[%s1247 + $0x1c] sm:$0xf]
  %v1256 = vld [vmem:[%s1247 + $0x20] sm:$0xf]
  %v1257 = vld [vmem:[%s1247 + $0x24] sm:$0xf]
  %v1258 = vld [vmem:[%s1247 + $0x28] sm:$0xf]
  %v1259 = vld [vmem:[%s1247 + $0x2c] sm:$0xf]
  %v1260 = vld [vmem:[%s1247 + $0x30] sm:$0xf]
  %v1261 = vld [vmem:[%s1247 + $0x34] sm:$0xf]
  %v1262 = vld [vmem:[%s1247 + $0x38] sm:$0xf]
  %v1263 = vld [vmem:[%s1247 + $0x3c] sm:$0xf]
  %v1280 = vunpack.c.l.b16 %v1248
  %v1281 = vunpack.c.l.b16 %v1249
  %v1282 = vunpack.c.l.b16 %v1250
  %v1283 = vunpack.c.l.b16 %v1251
  %v1284 = vunpack.c.l.b16 %v1252
  %v1285 = vunpack.c.l.b16 %v1253
  %v1286 = vunpack.c.l.b16 %v1254
  %v1287 = vunpack.c.l.b16 %v1255
  %v1288 = vunpack.c.l.b16 %v1256
  %v1289 = vunpack.c.l.b16 %v1257
  %v1290 = vunpack.c.l.b16 %v1258
  %v1291 = vunpack.c.l.b16 %v1259
  %v1292 = vunpack.c.l.b16 %v1260
  %v1293 = vunpack.c.l.b16 %v1261
  %v1294 = vunpack.c.l.b16 %v1262
  %v1295 = vunpack.c.l.b16 %v1263
  %v1296 = vpack.c.b16 %v1281, %v1280
  %v1297 = vpack.c.b16 %v1283, %v1282
  %v1298 = vpack.c.b16 %v1285, %v1284
  %v1299 = vpack.c.b16 %v1287, %v1286
  %v1300 = vpack.c.b16 %v1289, %v1288
  %v1301 = vpack.c.b16 %v1291, %v1290
  %v1302 = vpack.c.b16 %v1293, %v1292
  %v1303 = vpack.c.b16 %v1295, %v1294
  %1312 = vmatpush.bf16.msra.mxu0 %v1303
  %1313 = vmatpush.bf16.msra.mxu0 %v1302
  %1314 = vmatpush.bf16.msra.mxu0 %v1301
  %1315 = vmatpush.bf16.msra.mxu0 %v1300
  %1316 = vmatpush.bf16.msra.mxu0 %v1299
  %1317 = vmatpush.bf16.msra.mxu0 %v1298
  %1318 = vmatpush.bf16.msra.mxu0 %v1297
  %1319 = vmatpush.bf16.msra.mxu0 %v1296
  %1320 = vmatmul.bf16.gmra.mxu0 %v801
  %v1321 = vpop.f32.mrf.mxu0
  %v1322 = vadd.f32 0.0, %v1321
  %v1323 = vpop.f32.mrf.mxu0
  %1324 = vdwg.mxu0
  %v1325 = vadd.f32 %v1246, %v1322
  %v1326 = vtanh.pop %v1325
  %s1327 = scalar_lea.vmem %s7, 3
  %v1328 = vld [vmem:[%s1327] sm:$0x1]
  %s1329 = scalar_lea.vmem %s3, 192
  %v1330 = vld [vmem:[%s1329] sm:$0xf]
  %v1331 = vld [vmem:[%s1329 + $0x4] sm:$0xf]
  %v1332 = vld [vmem:[%s1329 + $0x8] sm:$0xf]
  %v1333 = vld [vmem:[%s1329 + $0xc] sm:$0xf]
  %v1334 = vld [vmem:[%s1329 + $0x10] sm:$0xf]
  %v1335 = vld [vmem:[%s1329 + $0x14] sm:$0xf]
  %v1336 = vld [vmem:[%s1329 + $0x18] sm:$0xf]
  %v1337 = vld [vmem:[%s1329 + $0x1c] sm:$0xf]
  %v1338 = vld [vmem:[%s1329 + $0x20] sm:$0xf]
  %v1339 = vld [vmem:[%s1329 + $0x24] sm:$0xf]
  %v1340 = vld [vmem:[%s1329 + $0x28] sm:$0xf]
  %v1341 = vld [vmem:[%s1329 + $0x2c] sm:$0xf]
  %v1342 = vld [vmem:[%s1329 + $0x30] sm:$0xf]
  %v1343 = vld [vmem:[%s1329 + $0x34] sm:$0xf]
  %v1344 = vld [vmem:[%s1329 + $0x38] sm:$0xf]
  %v1345 = vld [vmem:[%s1329 + $0x3c] sm:$0xf]
  %v1362 = vunpack.c.l.b16 %v1330
  %v1363 = vunpack.c.l.b16 %v1331
  %v1364 = vunpack.c.l.b16 %v1332
  %v1365 = vunpack.c.l.b16 %v1333
  %v1366 = vunpack.c.l.b16 %v1334
  %v1367 = vunpack.c.l.b16 %v1335
  %v1368 = vunpack.c.l.b16 %v1336
  %v1369 = vunpack.c.l.b16 %v1337
  %v1370 = vunpack.c.l.b16 %v1338
  %v1371 = vunpack.c.l.b16 %v1339
  %v1372 = vunpack.c.l.b16 %v1340
  %v1373 = vunpack.c.l.b16 %v1341
  %v1374 = vunpack.c.l.b16 %v1342
  %v1375 = vunpack.c.l.b16 %v1343
  %v1376 = vunpack.c.l.b16 %v1344
  %v1377 = vunpack.c.l.b16 %v1345
  %v1378 = vpack.c.b16 %v1363, %v1362
  %v1379 = vpack.c.b16 %v1365, %v1364
  %v1380 = vpack.c.b16 %v1367, %v1366
  %v1381 = vpack.c.b16 %v1369, %v1368
  %v1382 = vpack.c.b16 %v1371, %v1370
  %v1383 = vpack.c.b16 %v1373, %v1372
  %v1384 = vpack.c.b16 %v1375, %v1374
  %v1385 = vpack.c.b16 %v1377, %v1376
  %1394 = vmatpush.bf16.msra.mxu0 %v1385
  %1395 = vmatpush.bf16.msra.mxu0 %v1384
  %1396 = vmatpush.bf16.msra.mxu0 %v1383
  %1397 = vmatpush.bf16.msra.mxu0 %v1382
  %1398 = vmatpush.bf16.msra.mxu0 %v1381
  %1399 = vmatpush.bf16.msra.mxu0 %v1380
  %1400 = vmatpush.bf16.msra.mxu0 %v1379
  %1401 = vmatpush.bf16.msra.mxu0 %v1378
  %1402 = vmatmul.bf16.gmra.mxu0 %v800
  %v1403 = vpop.f32.mrf.mxu0
  %v1404 = vadd.f32 0.0, %v1403
  %v1405 = vpop.f32.mrf.mxu0
  %1406 = vdwg.mxu0
  %v1408 = vperm.slane %v1328, 0
  %v1410 = vadd.f32 %v1408, %v1404
  %s1411 = scalar_lea.vmem %s5, 192
  %v1412 = vld [vmem:[%s1411] sm:$0xf]
  %v1413 = vld [vmem:[%s1411 + $0x4] sm:$0xf]
  %v1414 = vld [vmem:[%s1411 + $0x8] sm:$0xf]
  %v1415 = vld [vmem:[%s1411 + $0xc] sm:$0xf]
  %v1416 = vld [vmem:[%s1411 + $0x10] sm:$0xf]
  %v1417 = vld [vmem:[%s1411 + $0x14] sm:$0xf]
  %v1418 = vld [vmem:[%s1411 + $0x18] sm:$0xf]
  %v1419 = vld [vmem:[%s1411 + $0x1c] sm:$0xf]
  %v1420 = vld [vmem:[%s1411 + $0x20] sm:$0xf]
  %v1421 = vld [vmem:[%s1411 + $0x24] sm:$0xf]
  %v1422 = vld [vmem:[%s1411 + $0x28] sm:$0xf]
  %v1423 = vld [vmem:[%s1411 + $0x2c] sm:$0xf]
  %v1424 = vld [vmem:[%s1411 + $0x30] sm:$0xf]
  %v1425 = vld [vmem:[%s1411 + $0x34] sm:$0xf]
  %v1426 = vld [vmem:[%s1411 + $0x38] sm:$0xf]
  %v1427 = vld [vmem:[%s1411 + $0x3c] sm:$0xf]
  %v1444 = vunpack.c.l.b16 %v1412
  %v1445 = vunpack.c.l.b16 %v1413
  %v1446 = vunpack.c.l.b16 %v1414
  %v1447 = vunpack.c.l.b16 %v1415
  %v1448 = vunpack.c.l.b16 %v1416
  %v1449 = vunpack.c.l.b16 %v1417
  %v1450 = vunpack.c.l.b16 %v1418
  %v1451 = vunpack.c.l.b16 %v1419
  %v1452 = vunpack.c.l.b16 %v1420
  %v1453 = vunpack.c.l.b16 %v1421
  %v1454 = vunpack.c.l.b16 %v1422
  %v1455 = vunpack.c.l.b16 %v1423
  %v1456 = vunpack.c.l.b16 %v1424
  %v1457 = vunpack.c.l.b16 %v1425
  %v1458 = vunpack.c.l.b16 %v1426
  %v1459 = vunpack.c.l.b16 %v1427
  %v1460 = vpack.c.b16 %v1445, %v1444
  %v1461 = vpack.c.b16 %v1447, %v1446
  %v1462 = vpack.c.b16 %v1449, %v1448
  %v1463 = vpack.c.b16 %v1451, %v1450
  %v1464 = vpack.c.b16 %v1453, %v1452
  %v1465 = vpack.c.b16 %v1455, %v1454
  %v1466 = vpack.c.b16 %v1457, %v1456
  %v1467 = vpack.c.b16 %v1459, %v1458
  %1476 = vmatpush.bf16.msra.mxu0 %v1467
  %1477 = vmatpush.bf16.msra.mxu0 %v1466
  %1478 = vmatpush.bf16.msra.mxu0 %v1465
  %1479 = vmatpush.bf16.msra.mxu0 %v1464
  %1480 = vmatpush.bf16.msra.mxu0 %v1463
  %1481 = vmatpush.bf16.msra.mxu0 %v1462
  %1482 = vmatpush.bf16.msra.mxu0 %v1461
  %1483 = vmatpush.bf16.msra.mxu0 %v1460
  %1484 = vmatmul.bf16.gmra.mxu0 %v801
  %v1485 = vpop.f32.mrf.mxu0
  %v1486 = vadd.f32 0.0, %v1485
  %v1487 = vpop.f32.mrf.mxu0
  %1488 = vdwg.mxu0
  %v1489 = vadd.f32 %v1410, %v1486
  %v1490 = vxor.u32 %v1489, 2147483648
  %v1491 = vmul.f32 %v1490, 1.442695
  %v1492 = vpow.pop %v1491
  %v1493 = vadd.f32 %v1492, 1.0
  %v1494 = vrcp.pop %v1493
  %v1495 = vmul.f32 %v1493, %v1494
  %v1496 = vsub.f32 1.0, %v1495
  %v1497 = vmul.f32 %v1494, %v1496
  %v1498 = vadd.f32 %v1494, %v1497
  %vm1499 = vweird.f32 %v1493
  %vm1500 = vweird.f32 %v1494
  %vm1501 = vmor %vm1499, %vm1500
  %v1502 = vsel %vm1501, %v1494, %v1498
  %v1503 = vand.u32 2147483647, %v1493
  %vm1504 = vcmp.eq.f32.partialorder %v1503, 8.507059e+37
  %v1505 = vand.u32 %v1493, 2147483648
  %v1506 = vor.u32 1.1754944e-38, %v1505
  %v1507 = vsel %vm1504, %v1506, %v1502
  %v1508 = vmul.f32 1.0, %v1507
  %v1509 = vmul.f32 %v1162, %v68
  %v1510 = vmul.f32 %v980, %v1326
  %v1511 = vadd.f32 %v1509, %v1510
  %v1512 = vtanh.pop %v1511
  %v1513 = vmul.f32 %v1508, %v1512
  %v1514 = vstv %s798
  %vm1515 = vcmp.gt.s32.totalorder %v64, %v1514
  %v1516 = vsel %vm1515, 1, 0
  %1517 = vset.pattern.permute.xlu0 0
  %1518 = vperm.xlu0 %1517, %v1516
  %v1519 = vpop.permute.xlu0 %1518
  %vm1520 = vcmp.eq.s32.totalorder %v1519, 1
  %v1521 = vsel %vm1520, %v1513, -3e+38
  %v1522 = vsel %vm1520, %v1513, %v67
  %v1523 = vsel %vm1520, %v1511, %v68
  %v1524 = vmax.f32 %v71, %v1521
  %s1525 = sadd.s32 %s72, 1
  %s1526 = scalar_lea.vmem %s0, 4
  %v1527 = vld [vmem:[%s1526] sm:$0xf]
  %v1528 = vpack.c.bf16 %v795, %v795
  %1529 = vmatpush.bf16.msra.mxu0 %v131
  %1530 = vmatpush.bf16.msra.mxu0 %v130
  %1531 = vmatpush.bf16.msra.mxu0 %v129
  %1532 = vmatpush.bf16.msra.mxu0 %v128
  %1533 = vmatpush.bf16.msra.mxu0 %v127
  %1534 = vmatpush.bf16.msra.mxu0 %v126
  %1535 = vmatpush.bf16.msra.mxu0 %v125
  %1536 = vmatpush.bf16.msra.mxu0 %v124
  %1537 = vmatmul.bf16.gmra.mxu0 %v1527
  %v1538 = vpop.f32.mrf.mxu0
  %v1539 = vadd.f32 0.0, %v1538
  %v1540 = vpop.f32.mrf.mxu0
  %1541 = vdwg.mxu0
  %v1542 = vadd.f32 %v154, %v1539
  %1543 = vmatpush.bf16.msra.mxu0 %v212
  %1544 = vmatpush.bf16.msra.mxu0 %v211
  %1545 = vmatpush.bf16.msra.mxu0 %v210
  %1546 = vmatpush.bf16.msra.mxu0 %v209
  %1547 = vmatpush.bf16.msra.mxu0 %v208
  %1548 = vmatpush.bf16.msra.mxu0 %v207
  %1549 = vmatpush.bf16.msra.mxu0 %v206
  %1550 = vmatpush.bf16.msra.mxu0 %v205
  %1551 = vmatmul.bf16.gmra.mxu0 %v1528
  %v1552 = vpop.f32.mrf.mxu0
  %v1553 = vadd.f32 0.0, %v1552
  %v1554 = vpop.f32.mrf.mxu0
  %1555 = vdwg.mxu0
  %v1556 = vadd.f32 %v1542, %v1553
  %v1557 = vxor.u32 %v1556, 2147483648
  %v1558 = vmul.f32 %v1557, 1.442695
  %v1559 = vpow.pop %v1558
  %v1560 = vadd.f32 %v1559, 1.0
  %v1561 = vrcp.pop %v1560
  %v1562 = vmul.f32 %v1560, %v1561
  %v1563 = vsub.f32 1.0, %v1562
  %v1564 = vmul.f32 %v1561, %v1563
  %v1565 = vadd.f32 %v1561, %v1564
  %vm1566 = vweird.f32 %v1560
  %vm1567 = vweird.f32 %v1561
  %vm1568 = vmor %vm1566, %vm1567
  %v1569 = vsel %vm1568, %v1561, %v1565
  %v1570 = vand.u32 2147483647, %v1560
  %vm1571 = vcmp.eq.f32.partialorder %v1570, 8.507059e+37
  %v1572 = vand.u32 %v1560, 2147483648
  %v1573 = vor.u32 1.1754944e-38, %v1572
  %v1574 = vsel %vm1571, %v1573, %v1569
  %v1575 = vmul.f32 1.0, %v1574
  %1576 = vmatpush.bf16.msra.mxu0 %v312
  %1577 = vmatpush.bf16.msra.mxu0 %v311
  %1578 = vmatpush.bf16.msra.mxu0 %v310
  %1579 = vmatpush.bf16.msra.mxu0 %v309
  %1580 = vmatpush.bf16.msra.mxu0 %v308
  %1581 = vmatpush.bf16.msra.mxu0 %v307
  %1582 = vmatpush.bf16.msra.mxu0 %v306
  %1583 = vmatpush.bf16.msra.mxu0 %v305
  %1584 = vmatmul.bf16.gmra.mxu0 %v1527
  %v1585 = vpop.f32.mrf.mxu0
  %v1586 = vadd.f32 0.0, %v1585
  %v1587 = vpop.f32.mrf.mxu0
  %1588 = vdwg.mxu0
  %v1589 = vadd.f32 %v335, %v1586
  %1590 = vmatpush.bf16.msra.mxu0 %v394
  %1591 = vmatpush.bf16.msra.mxu0 %v393
  %1592 = vmatpush.bf16.msra.mxu0 %v392
  %1593 = vmatpush.bf16.msra.mxu0 %v391
  %1594 = vmatpush.bf16.msra.mxu0 %v390
  %1595 = vmatpush.bf16.msra.mxu0 %v389
  %1596 = vmatpush.bf16.msra.mxu0 %v388
  %1597 = vmatpush.bf16.msra.mxu0 %v387
  %1598 = vmatmul.bf16.gmra.mxu0 %v1528
  %v1599 = vpop.f32.mrf.mxu0
  %v1600 = vadd.f32 0.0, %v1599
  %v1601 = vpop.f32.mrf.mxu0
  %1602 = vdwg.mxu0
  %v1603 = vadd.f32 %v1589, %v1600
  %v1604 = vxor.u32 %v1603, 2147483648
  %v1605 = vmul.f32 %v1604, 1.442695
  %v1606 = vpow.pop %v1605
  %v1607 = vadd.f32 %v1606, 1.0
  %v1608 = vrcp.pop %v1607
  %v1609 = vmul.f32 %v1607, %v1608
  %v1610 = vsub.f32 1.0, %v1609
  %v1611 = vmul.f32 %v1608, %v1610
  %v1612 = vadd.f32 %v1608, %v1611
  %vm1613 = vweird.f32 %v1607
  %vm1614 = vweird.f32 %v1608
  %vm1615 = vmor %vm1613, %vm1614
  %v1616 = vsel %vm1615, %v1608, %v1612
  %v1617 = vand.u32 2147483647, %v1607
  %vm1618 = vcmp.eq.f32.partialorder %v1617, 8.507059e+37
  %v1619 = vand.u32 %v1607, 2147483648
  %v1620 = vor.u32 1.1754944e-38, %v1619
  %v1621 = vsel %vm1618, %v1620, %v1616
  %v1622 = vmul.f32 1.0, %v1621
  %1623 = vmatpush.bf16.msra.mxu0 %v494
  %1624 = vmatpush.bf16.msra.mxu0 %v493
  %1625 = vmatpush.bf16.msra.mxu0 %v492
  %1626 = vmatpush.bf16.msra.mxu0 %v491
  %1627 = vmatpush.bf16.msra.mxu0 %v490
  %1628 = vmatpush.bf16.msra.mxu0 %v489
  %1629 = vmatpush.bf16.msra.mxu0 %v488
  %1630 = vmatpush.bf16.msra.mxu0 %v487
  %1631 = vmatmul.bf16.gmra.mxu0 %v1527
  %v1632 = vpop.f32.mrf.mxu0
  %v1633 = vadd.f32 0.0, %v1632
  %v1634 = vpop.f32.mrf.mxu0
  %1635 = vdwg.mxu0
  %v1636 = vadd.f32 %v517, %v1633
  %1637 = vmatpush.bf16.msra.mxu0 %v576
  %1638 = vmatpush.bf16.msra.mxu0 %v575
  %1639 = vmatpush.bf16.msra.mxu0 %v574
  %1640 = vmatpush.bf16.msra.mxu0 %v573
  %1641 = vmatpush.bf16.msra.mxu0 %v572
  %1642 = vmatpush.bf16.msra.mxu0 %v571
  %1643 = vmatpush.bf16.msra.mxu0 %v570
  %1644 = vmatpush.bf16.msra.mxu0 %v569
  %1645 = vmatmul.bf16.gmra.mxu0 %v1528
  %v1646 = vpop.f32.mrf.mxu0
  %v1647 = vadd.f32 0.0, %v1646
  %v1648 = vpop.f32.mrf.mxu0
  %1649 = vdwg.mxu0
  %v1650 = vadd.f32 %v1636, %v1647
  %v1651 = vtanh.pop %v1650
  %1652 = vmatpush.bf16.msra.mxu0 %v658
  %1653 = vmatpush.bf16.msra.mxu0 %v657
  %1654 = vmatpush.bf16.msra.mxu0 %v656
  %1655 = vmatpush.bf16.msra.mxu0 %v655
  %1656 = vmatpush.bf16.msra.mxu0 %v654
  %1657 = vmatpush.bf16.msra.mxu0 %v653
  %1658 = vmatpush.bf16.msra.mxu0 %v652
  %1659 = vmatpush.bf16.msra.mxu0 %v651
  %1660 = vmatmul.bf16.gmra.mxu0 %v1527
  %v1661 = vpop.f32.mrf.mxu0
  %v1662 = vadd.f32 0.0, %v1661
  %v1663 = vpop.f32.mrf.mxu0
  %1664 = vdwg.mxu0
  %v1665 = vadd.f32 %v681, %v1662
  %1666 = vmatpush.bf16.msra.mxu0 %v740
  %1667 = vmatpush.bf16.msra.mxu0 %v739
  %1668 = vmatpush.bf16.msra.mxu0 %v738
  %1669 = vmatpush.bf16.msra.mxu0 %v737
  %1670 = vmatpush.bf16.msra.mxu0 %v736
  %1671 = vmatpush.bf16.msra.mxu0 %v735
  %1672 = vmatpush.bf16.msra.mxu0 %v734
  %1673 = vmatpush.bf16.msra.mxu0 %v733
  %1674 = vmatmul.bf16.gmra.mxu0 %v1528
  %v1675 = vpop.f32.mrf.mxu0
  %v1676 = vadd.f32 0.0, %v1675
  %v1677 = vpop.f32.mrf.mxu0
  %1678 = vdwg.mxu0
  %v1679 = vadd.f32 %v1665, %v1676
  %v1680 = vxor.u32 %v1679, 2147483648
  %v1681 = vmul.f32 %v1680, 1.442695
  %v1682 = vpow.pop %v1681
  %v1683 = vadd.f32 %v1682, 1.0
  %v1684 = vrcp.pop %v1683
  %v1685 = vmul.f32 %v1683, %v1684
  %v1686 = vsub.f32 1.0, %v1685
  %v1687 = vmul.f32 %v1684, %v1686
  %v1688 = vadd.f32 %v1684, %v1687
  %vm1689 = vweird.f32 %v1683
  %vm1690 = vweird.f32 %v1684
  %vm1691 = vmor %vm1689, %vm1690
  %v1692 = vsel %vm1691, %v1684, %v1688
  %v1693 = vand.u32 2147483647, %v1683
  %vm1694 = vcmp.eq.f32.partialorder %v1693, 8.507059e+37
  %v1695 = vand.u32 %v1683, 2147483648
  %v1696 = vor.u32 1.1754944e-38, %v1695
  %v1697 = vsel %vm1694, %v1696, %v1692
  %v1698 = vmul.f32 1.0, %v1697
  %v1699 = vmul.f32 %v1622, %v796
  %v1700 = vmul.f32 %v1575, %v1651
  %v1701 = vadd.f32 %v1699, %v1700
  %v1702 = vtanh.pop %v1701
  %v1703 = vmul.f32 %v1698, %v1702
  %v1704 = vstv %s1525
  %vm1705 = vcmp.gt.s32.totalorder %v64, %v1704
  %v1706 = vsel %vm1705, 1, 0
  %1707 = vset.pattern.permute.xlu0 0
  %1708 = vperm.xlu0 %1707, %v1706
  %v1709 = vpop.permute.xlu0 %1708
  %vm1710 = vcmp.eq.s32.totalorder %v1709, 1
  %v1711 = vsel %vm1710, %v1703, -3e+38
  %v1712 = vsel %vm1710, %v1703, %v795
  %v1713 = vsel %vm1710, %v1701, %v796
  %v1714 = vmax.f32 %v797, %v1711
  %s1715 = ssub.s32 6, %s72
  %s1716 = scalar_lea.vmem %s51, 24
  %v1717 = vld [vmem:[%s1716] sm:$0xf]
  %v1718 = vpack.c.bf16 %v1522, %v1522
  %1719 = vmatpush.bf16.msra.mxu0 %v858
  %1720 = vmatpush.bf16.msra.mxu0 %v857
  %1721 = vmatpush.bf16.msra.mxu0 %v856
  %1722 = vmatpush.bf16.msra.mxu0 %v855
  %1723 = vmatpush.bf16.msra.mxu0 %v854
  %1724 = vmatpush.bf16.msra.mxu0 %v853
  %1725 = vmatpush.bf16.msra.mxu0 %v852
  %1726 = vmatpush.bf16.msra.mxu0 %v851
  %1727 = vmatmul.bf16.gmra.mxu0 %v1717
  %v1728 = vpop.f32.mrf.mxu0
  %v1729 = vadd.f32 0.0, %v1728
  %v1730 = vpop.f32.mrf.mxu0
  %1731 = vdwg.mxu0
  %v1732 = vadd.f32 %v881, %v1729
  %1733 = vmatpush.bf16.msra.mxu0 %v939
  %1734 = vmatpush.bf16.msra.mxu0 %v938
  %1735 = vmatpush.bf16.msra.mxu0 %v937
  %1736 = vmatpush.bf16.msra.mxu0 %v936
  %1737 = vmatpush.bf16.msra.mxu0 %v935
  %1738 = vmatpush.bf16.msra.mxu0 %v934
  %1739 = vmatpush.bf16.msra.mxu0 %v933
  %1740 = vmatpush.bf16.msra.mxu0 %v932
  %1741 = vmatmul.bf16.gmra.mxu0 %v1718
  %v1742 = vpop.f32.mrf.mxu0
  %v1743 = vadd.f32 0.0, %v1742
  %v1744 = vpop.f32.mrf.mxu0
  %1745 = vdwg.mxu0
  %v1746 = vadd.f32 %v1732, %v1743
  %v1747 = vxor.u32 %v1746, 2147483648
  %v1748 = vmul.f32 %v1747, 1.442695
  %v1749 = vpow.pop %v1748
  %v1750 = vadd.f32 %v1749, 1.0
  %v1751 = vrcp.pop %v1750
  %v1752 = vmul.f32 %v1750, %v1751
  %v1753 = vsub.f32 1.0, %v1752
  %v1754 = vmul.f32 %v1751, %v1753
  %v1755 = vadd.f32 %v1751, %v1754
  %vm1756 = vweird.f32 %v1750
  %vm1757 = vweird.f32 %v1751
  %vm1758 = vmor %vm1756, %vm1757
  %v1759 = vsel %vm1758, %v1751, %v1755
  %v1760 = vand.u32 2147483647, %v1750
  %vm1761 = vcmp.eq.f32.partialorder %v1760, 8.507059e+37
  %v1762 = vand.u32 %v1750, 2147483648
  %v1763 = vor.u32 1.1754944e-38, %v1762
  %v1764 = vsel %vm1761, %v1763, %v1759
  %v1765 = vmul.f32 1.0, %v1764
  %1766 = vmatpush.bf16.msra.mxu0 %v1039
  %1767 = vmatpush.bf16.msra.mxu0 %v1038
  %1768 = vmatpush.bf16.msra.mxu0 %v1037
  %1769 = vmatpush.bf16.msra.mxu0 %v1036
  %1770 = vmatpush.bf16.msra.mxu0 %v1035
  %1771 = vmatpush.bf16.msra.mxu0 %v1034
  %1772 = vmatpush.bf16.msra.mxu0 %v1033
  %1773 = vmatpush.bf16.msra.mxu0 %v1032
  %1774 = vmatmul.bf16.gmra.mxu0 %v1717
  %v1775 = vpop.f32.mrf.mxu0
  %v1776 = vadd.f32 0.0, %v1775
  %v1777 = vpop.f32.mrf.mxu0
  %1778 = vdwg.mxu0
  %v1779 = vadd.f32 %v1062, %v1776
  %1780 = vmatpush.bf16.msra.mxu0 %v1121
  %1781 = vmatpush.bf16.msra.mxu0 %v1120
  %1782 = vmatpush.bf16.msra.mxu0 %v1119
  %1783 = vmatpush.bf16.msra.mxu0 %v1118
  %1784 = vmatpush.bf16.msra.mxu0 %v1117
  %1785 = vmatpush.bf16.msra.mxu0 %v1116
  %1786 = vmatpush.bf16.msra.mxu0 %v1115
  %1787 = vmatpush.bf16.msra.mxu0 %v1114
  %1788 = vmatmul.bf16.gmra.mxu0 %v1718
  %v1789 = vpop.f32.mrf.mxu0
  %v1790 = vadd.f32 0.0, %v1789
  %v1791 = vpop.f32.mrf.mxu0
  %1792 = vdwg.mxu0
  %v1793 = vadd.f32 %v1779, %v1790
  %v1794 = vxor.u32 %v1793, 2147483648
  %v1795 = vmul.f32 %v1794, 1.442695
  %v1796 = vpow.pop %v1795
  %v1797 = vadd.f32 %v1796, 1.0
  %v1798 = vrcp.pop %v1797
  %v1799 = vmul.f32 %v1797, %v1798
  %v1800 = vsub.f32 1.0, %v1799
  %v1801 = vmul.f32 %v1798, %v1800
  %v1802 = vadd.f32 %v1798, %v1801
  %vm1803 = vweird.f32 %v1797
  %vm1804 = vweird.f32 %v1798
  %vm1805 = vmor %vm1803, %vm1804
  %v1806 = vsel %vm1805, %v1798, %v1802
  %v1807 = vand.u32 2147483647, %v1797
  %vm1808 = vcmp.eq.f32.partialorder %v1807, 8.507059e+37
  %v1809 = vand.u32 %v1797, 2147483648
  %v1810 = vor.u32 1.1754944e-38, %v1809
  %v1811 = vsel %vm1808, %v1810, %v1806
  %v1812 = vmul.f32 1.0, %v1811
  %1813 = vmatpush.bf16.msra.mxu0 %v1221
  %1814 = vmatpush.bf16.msra.mxu0 %v1220
  %1815 = vmatpush.bf16.msra.mxu0 %v1219
  %1816 = vmatpush.bf16.msra.mxu0 %v1218
  %1817 = vmatpush.bf16.msra.mxu0 %v1217
  %1818 = vmatpush.bf16.msra.mxu0 %v1216
  %1819 = vmatpush.bf16.msra.mxu0 %v1215
  %1820 = vmatpush.bf16.msra.mxu0 %v1214
  %1821 = vmatmul.bf16.gmra.mxu0 %v1717
  %v1822 = vpop.f32.mrf.mxu0
  %v1823 = vadd.f32 0.0, %v1822
  %v1824 = vpop.f32.mrf.mxu0
  %1825 = vdwg.mxu0
  %v1826 = vadd.f32 %v1244, %v1823
  %1827 = vmatpush.bf16.msra.mxu0 %v1303
  %1828 = vmatpush.bf16.msra.mxu0 %v1302
  %1829 = vmatpush.bf16.msra.mxu0 %v1301
  %1830 = vmatpush.bf16.msra.mxu0 %v1300
  %1831 = vmatpush.bf16.msra.mxu0 %v1299
  %1832 = vmatpush.bf16.msra.mxu0 %v1298
  %1833 = vmatpush.bf16.msra.mxu0 %v1297
  %1834 = vmatpush.bf16.msra.mxu0 %v1296
  %1835 = vmatmul.bf16.gmra.mxu0 %v1718
  %v1836 = vpop.f32.mrf.mxu0
  %v1837 = vadd.f32 0.0, %v1836
  %v1838 = vpop.f32.mrf.mxu0
  %1839 = vdwg.mxu0
  %v1840 = vadd.f32 %v1826, %v1837
  %v1841 = vtanh.pop %v1840
  %1842 = vmatpush.bf16.msra.mxu0 %v1385
  %1843 = vmatpush.bf16.msra.mxu0 %v1384
  %1844 = vmatpush.bf16.msra.mxu0 %v1383
  %1845 = vmatpush.bf16.msra.mxu0 %v1382
  %1846 = vmatpush.bf16.msra.mxu0 %v1381
  %1847 = vmatpush.bf16.msra.mxu0 %v1380
  %1848 = vmatpush.bf16.msra.mxu0 %v1379
  %1849 = vmatpush.bf16.msra.mxu0 %v1378
  %1850 = vmatmul.bf16.gmra.mxu0 %v1717
  %v1851 = vpop.f32.mrf.mxu0
  %v1852 = vadd.f32 0.0, %v1851
  %v1853 = vpop.f32.mrf.mxu0
  %1854 = vdwg.mxu0
  %v1855 = vadd.f32 %v1408, %v1852
  %1856 = vmatpush.bf16.msra.mxu0 %v1467
  %1857 = vmatpush.bf16.msra.mxu0 %v1466
  %1858 = vmatpush.bf16.msra.mxu0 %v1465
  %1859 = vmatpush.bf16.msra.mxu0 %v1464
  %1860 = vmatpush.bf16.msra.mxu0 %v1463
  %1861 = vmatpush.bf16.msra.mxu0 %v1462
  %1862 = vmatpush.bf16.msra.mxu0 %v1461
  %1863 = vmatpush.bf16.msra.mxu0 %v1460
  %1864 = vmatmul.bf16.gmra.mxu0 %v1718
  %v1865 = vpop.f32.mrf.mxu0
  %v1866 = vadd.f32 0.0, %v1865
  %v1867 = vpop.f32.mrf.mxu0
  %1868 = vdwg.mxu0
  %v1869 = vadd.f32 %v1855, %v1866
  %v1870 = vxor.u32 %v1869, 2147483648
  %v1871 = vmul.f32 %v1870, 1.442695
  %v1872 = vpow.pop %v1871
  %v1873 = vadd.f32 %v1872, 1.0
  %v1874 = vrcp.pop %v1873
  %v1875 = vmul.f32 %v1873, %v1874
  %v1876 = vsub.f32 1.0, %v1875
  %v1877 = vmul.f32 %v1874, %v1876
  %v1878 = vadd.f32 %v1874, %v1877
  %vm1879 = vweird.f32 %v1873
  %vm1880 = vweird.f32 %v1874
  %vm1881 = vmor %vm1879, %vm1880
  %v1882 = vsel %vm1881, %v1874, %v1878
  %v1883 = vand.u32 2147483647, %v1873
  %vm1884 = vcmp.eq.f32.partialorder %v1883, 8.507059e+37
  %v1885 = vand.u32 %v1873, 2147483648
  %v1886 = vor.u32 1.1754944e-38, %v1885
  %v1887 = vsel %vm1884, %v1886, %v1882
  %v1888 = vmul.f32 1.0, %v1887
  %v1889 = vmul.f32 %v1812, %v1523
  %v1890 = vmul.f32 %v1765, %v1841
  %v1891 = vadd.f32 %v1889, %v1890
  %v1892 = vtanh.pop %v1891
  %v1893 = vmul.f32 %v1888, %v1892
  %v1894 = vstv %s1715
  %vm1895 = vcmp.gt.s32.totalorder %v64, %v1894
  %v1896 = vsel %vm1895, 1, 0
  %1897 = vset.pattern.permute.xlu0 0
  %1898 = vperm.xlu0 %1897, %v1896
  %v1899 = vpop.permute.xlu0 %1898
  %vm1900 = vcmp.eq.s32.totalorder %v1899, 1
  %v1901 = vsel %vm1900, %v1893, -3e+38
  %v1902 = vsel %vm1900, %v1893, %v1522
  %v1903 = vsel %vm1900, %v1891, %v1523
  %v1904 = vmax.f32 %v1524, %v1901
  %s1905 = sadd.s32 %s72, 2
  %s1906 = scalar_lea.vmem %s0, 8
  %v1907 = vld [vmem:[%s1906] sm:$0xf]
  %v1908 = vpack.c.bf16 %v1712, %v1712
  %1909 = vmatpush.bf16.msra.mxu0 %v131
  %1910 = vmatpush.bf16.msra.mxu0 %v130
  %1911 = vmatpush.bf16.msra.mxu0 %v129
  %1912 = vmatpush.bf16.msra.mxu0 %v128
  %1913 = vmatpush.bf16.msra.mxu0 %v127
  %1914 = vmatpush.bf16.msra.mxu0 %v126
  %1915 = vmatpush.bf16.msra.mxu0 %v125
  %1916 = vmatpush.bf16.msra.mxu0 %v124
  %1917 = vmatmul.bf16.gmra.mxu0 %v1907
  %v1918 = vpop.f32.mrf.mxu0
  %v1919 = vadd.f32 0.0, %v1918
  %v1920 = vpop.f32.mrf.mxu0
  %1921 = vdwg.mxu0
  %v1922 = vadd.f32 %v154, %v1919
  %1923 = vmatpush.bf16.msra.mxu0 %v212
  %1924 = vmatpush.bf16.msra.mxu0 %v211
  %1925 = vmatpush.bf16.msra.mxu0 %v210
  %1926 = vmatpush.bf16.msra.mxu0 %v209
  %1927 = vmatpush.bf16.msra.mxu0 %v208
  %1928 = vmatpush.bf16.msra.mxu0 %v207
  %1929 = vmatpush.bf16.msra.mxu0 %v206
  %1930 = vmatpush.bf16.msra.mxu0 %v205
  %1931 = vmatmul.bf16.gmra.mxu0 %v1908
  %v1932 = vpop.f32.mrf.mxu0
  %v1933 = vadd.f32 0.0, %v1932
  %v1934 = vpop.f32.mrf.mxu0
  %1935 = vdwg.mxu0
  %v1936 = vadd.f32 %v1922, %v1933
  %v1937 = vxor.u32 %v1936, 2147483648
  %v1938 = vmul.f32 %v1937, 1.442695
  %v1939 = vpow.pop %v1938
  %v1940 = vadd.f32 %v1939, 1.0
  %v1941 = vrcp.pop %v1940
  %v1942 = vmul.f32 %v1940, %v1941
  %v1943 = vsub.f32 1.0, %v1942
  %v1944 = vmul.f32 %v1941, %v1943
  %v1945 = vadd.f32 %v1941, %v1944
  %vm1946 = vweird.f32 %v1940
  %vm1947 = vweird.f32 %v1941
  %vm1948 = vmor %vm1946, %vm1947
  %v1949 = vsel %vm1948, %v1941, %v1945
  %v1950 = vand.u32 2147483647, %v1940
  %vm1951 = vcmp.eq.f32.partialorder %v1950, 8.507059e+37
  %v1952 = vand.u32 %v1940, 2147483648
  %v1953 = vor.u32 1.1754944e-38, %v1952
  %v1954 = vsel %vm1951, %v1953, %v1949
  %v1955 = vmul.f32 1.0, %v1954
  %1956 = vmatpush.bf16.msra.mxu0 %v312
  %1957 = vmatpush.bf16.msra.mxu0 %v311
  %1958 = vmatpush.bf16.msra.mxu0 %v310
  %1959 = vmatpush.bf16.msra.mxu0 %v309
  %1960 = vmatpush.bf16.msra.mxu0 %v308
  %1961 = vmatpush.bf16.msra.mxu0 %v307
  %1962 = vmatpush.bf16.msra.mxu0 %v306
  %1963 = vmatpush.bf16.msra.mxu0 %v305
  %1964 = vmatmul.bf16.gmra.mxu0 %v1907
  %v1965 = vpop.f32.mrf.mxu0
  %v1966 = vadd.f32 0.0, %v1965
  %v1967 = vpop.f32.mrf.mxu0
  %1968 = vdwg.mxu0
  %v1969 = vadd.f32 %v335, %v1966
  %1970 = vmatpush.bf16.msra.mxu0 %v394
  %1971 = vmatpush.bf16.msra.mxu0 %v393
  %1972 = vmatpush.bf16.msra.mxu0 %v392
  %1973 = vmatpush.bf16.msra.mxu0 %v391
  %1974 = vmatpush.bf16.msra.mxu0 %v390
  %1975 = vmatpush.bf16.msra.mxu0 %v389
  %1976 = vmatpush.bf16.msra.mxu0 %v388
  %1977 = vmatpush.bf16.msra.mxu0 %v387
  %1978 = vmatmul.bf16.gmra.mxu0 %v1908
  %v1979 = vpop.f32.mrf.mxu0
  %v1980 = vadd.f32 0.0, %v1979
  %v1981 = vpop.f32.mrf.mxu0
  %1982 = vdwg.mxu0
  %v1983 = vadd.f32 %v1969, %v1980
  %v1984 = vxor.u32 %v1983, 2147483648
  %v1985 = vmul.f32 %v1984, 1.442695
  %v1986 = vpow.pop %v1985
  %v1987 = vadd.f32 %v1986, 1.0
  %v1988 = vrcp.pop %v1987
  %v1989 = vmul.f32 %v1987, %v1988
  %v1990 = vsub.f32 1.0, %v1989
  %v1991 = vmul.f32 %v1988, %v1990
  %v1992 = vadd.f32 %v1988, %v1991
  %vm1993 = vweird.f32 %v1987
  %vm1994 = vweird.f32 %v1988
  %vm1995 = vmor %vm1993, %vm1994
  %v1996 = vsel %vm1995, %v1988, %v1992
  %v1997 = vand.u32 2147483647, %v1987
  %vm1998 = vcmp.eq.f32.partialorder %v1997, 8.507059e+37
  %v1999 = vand.u32 %v1987, 2147483648
  %v2000 = vor.u32 1.1754944e-38, %v1999
  %v2001 = vsel %vm1998, %v2000, %v1996
  %v2002 = vmul.f32 1.0, %v2001
  %2003 = vmatpush.bf16.msra.mxu0 %v494
  %2004 = vmatpush.bf16.msra.mxu0 %v493
  %2005 = vmatpush.bf16.msra.mxu0 %v492
  %2006 = vmatpush.bf16.msra.mxu0 %v491
  %2007 = vmatpush.bf16.msra.mxu0 %v490
  %2008 = vmatpush.bf16.msra.mxu0 %v489
  %2009 = vmatpush.bf16.msra.mxu0 %v488
  %2010 = vmatpush.bf16.msra.mxu0 %v487
  %2011 = vmatmul.bf16.gmra.mxu0 %v1907
  %v2012 = vpop.f32.mrf.mxu0
  %v2013 = vadd.f32 0.0, %v2012
  %v2014 = vpop.f32.mrf.mxu0
  %2015 = vdwg.mxu0
  %v2016 = vadd.f32 %v517, %v2013
  %2017 = vmatpush.bf16.msra.mxu0 %v576
  %2018 = vmatpush.bf16.msra.mxu0 %v575
  %2019 = vmatpush.bf16.msra.mxu0 %v574
  %2020 = vmatpush.bf16.msra.mxu0 %v573
  %2021 = vmatpush.bf16.msra.mxu0 %v572
  %2022 = vmatpush.bf16.msra.mxu0 %v571
  %2023 = vmatpush.bf16.msra.mxu0 %v570
  %2024 = vmatpush.bf16.msra.mxu0 %v569
  %2025 = vmatmul.bf16.gmra.mxu0 %v1908
  %v2026 = vpop.f32.mrf.mxu0
  %v2027 = vadd.f32 0.0, %v2026
  %v2028 = vpop.f32.mrf.mxu0
  %2029 = vdwg.mxu0
  %v2030 = vadd.f32 %v2016, %v2027
  %v2031 = vtanh.pop %v2030
  %2032 = vmatpush.bf16.msra.mxu0 %v658
  %2033 = vmatpush.bf16.msra.mxu0 %v657
  %2034 = vmatpush.bf16.msra.mxu0 %v656
  %2035 = vmatpush.bf16.msra.mxu0 %v655
  %2036 = vmatpush.bf16.msra.mxu0 %v654
  %2037 = vmatpush.bf16.msra.mxu0 %v653
  %2038 = vmatpush.bf16.msra.mxu0 %v652
  %2039 = vmatpush.bf16.msra.mxu0 %v651
  %2040 = vmatmul.bf16.gmra.mxu0 %v1907
  %v2041 = vpop.f32.mrf.mxu0
  %v2042 = vadd.f32 0.0, %v2041
  %v2043 = vpop.f32.mrf.mxu0
  %2044 = vdwg.mxu0
  %v2045 = vadd.f32 %v681, %v2042
  %2046 = vmatpush.bf16.msra.mxu0 %v740
  %2047 = vmatpush.bf16.msra.mxu0 %v739
  %2048 = vmatpush.bf16.msra.mxu0 %v738
  %2049 = vmatpush.bf16.msra.mxu0 %v737
  %2050 = vmatpush.bf16.msra.mxu0 %v736
  %2051 = vmatpush.bf16.msra.mxu0 %v735
  %2052 = vmatpush.bf16.msra.mxu0 %v734
  %2053 = vmatpush.bf16.msra.mxu0 %v733
  %2054 = vmatmul.bf16.gmra.mxu0 %v1908
  %v2055 = vpop.f32.mrf.mxu0
  %v2056 = vadd.f32 0.0, %v2055
  %v2057 = vpop.f32.mrf.mxu0
  %2058 = vdwg.mxu0
  %v2059 = vadd.f32 %v2045, %v2056
  %v2060 = vxor.u32 %v2059, 2147483648
  %v2061 = vmul.f32 %v2060, 1.442695
  %v2062 = vpow.pop %v2061
  %v2063 = vadd.f32 %v2062, 1.0
  %v2064 = vrcp.pop %v2063
  %v2065 = vmul.f32 %v2063, %v2064
  %v2066 = vsub.f32 1.0, %v2065
  %v2067 = vmul.f32 %v2064, %v2066
  %v2068 = vadd.f32 %v2064, %v2067
  %vm2069 = vweird.f32 %v2063
  %vm2070 = vweird.f32 %v2064
  %vm2071 = vmor %vm2069, %vm2070
  %v2072 = vsel %vm2071, %v2064, %v2068
  %v2073 = vand.u32 2147483647, %v2063
  %vm2074 = vcmp.eq.f32.partialorder %v2073, 8.507059e+37
  %v2075 = vand.u32 %v2063, 2147483648
  %v2076 = vor.u32 1.1754944e-38, %v2075
  %v2077 = vsel %vm2074, %v2076, %v2072
  %v2078 = vmul.f32 1.0, %v2077
  %v2079 = vmul.f32 %v2002, %v1713
  %v2080 = vmul.f32 %v1955, %v2031
  %v2081 = vadd.f32 %v2079, %v2080
  %v2082 = vtanh.pop %v2081
  %v2083 = vmul.f32 %v2078, %v2082
  %v2084 = vstv %s1905
  %vm2085 = vcmp.gt.s32.totalorder %v64, %v2084
  %v2086 = vsel %vm2085, 1, 0
  %2087 = vset.pattern.permute.xlu0 0
  %2088 = vperm.xlu0 %2087, %v2086
  %v2089 = vpop.permute.xlu0 %2088
  %vm2090 = vcmp.eq.s32.totalorder %v2089, 1
  %v2091 = vsel %vm2090, %v2083, -3e+38
  %v2092 = vsel %vm2090, %v2083, %v1712
  %v2093 = vsel %vm2090, %v2081, %v1713
  %v2094 = vmax.f32 %v1714, %v2091
  %s2095 = ssub.s32 5, %s72
  %s2096 = scalar_lea.vmem %s51, 20
  %v2097 = vld [vmem:[%s2096] sm:$0xf]
  %v2098 = vpack.c.bf16 %v1902, %v1902
  %2099 = vmatpush.bf16.msra.mxu0 %v858
  %2100 = vmatpush.bf16.msra.mxu0 %v857
  %2101 = vmatpush.bf16.msra.mxu0 %v856
  %2102 = vmatpush.bf16.msra.mxu0 %v855
  %2103 = vmatpush.bf16.msra.mxu0 %v854
  %2104 = vmatpush.bf16.msra.mxu0 %v853
  %2105 = vmatpush.bf16.msra.mxu0 %v852
  %2106 = vmatpush.bf16.msra.mxu0 %v851
  %2107 = vmatmul.bf16.gmra.mxu0 %v2097
  %v2108 = vpop.f32.mrf.mxu0
  %v2109 = vadd.f32 0.0, %v2108
  %v2110 = vpop.f32.mrf.mxu0
  %2111 = vdwg.mxu0
  %v2112 = vadd.f32 %v881, %v2109
  %2113 = vmatpush.bf16.msra.mxu0 %v939
  %2114 = vmatpush.bf16.msra.mxu0 %v938
  %2115 = vmatpush.bf16.msra.mxu0 %v937
  %2116 = vmatpush.bf16.msra.mxu0 %v936
  %2117 = vmatpush.bf16.msra.mxu0 %v935
  %2118 = vmatpush.bf16.msra.mxu0 %v934
  %2119 = vmatpush.bf16.msra.mxu0 %v933
  %2120 = vmatpush.bf16.msra.mxu0 %v932
  %2121 = vmatmul.bf16.gmra.mxu0 %v2098
  %v2122 = vpop.f32.mrf.mxu0
  %v2123 = vadd.f32 0.0, %v2122
  %v2124 = vpop.f32.mrf.mxu0
  %2125 = vdwg.mxu0
  %v2126 = vadd.f32 %v2112, %v2123
  %v2127 = vxor.u32 %v2126, 2147483648
  %v2128 = vmul.f32 %v2127, 1.442695
  %v2129 = vpow.pop %v2128
  %v2130 = vadd.f32 %v2129, 1.0
  %v2131 = vrcp.pop %v2130
  %v2132 = vmul.f32 %v2130, %v2131
  %v2133 = vsub.f32 1.0, %v2132
  %v2134 = vmul.f32 %v2131, %v2133
  %v2135 = vadd.f32 %v2131, %v2134
  %vm2136 = vweird.f32 %v2130
  %vm2137 = vweird.f32 %v2131
  %vm2138 = vmor %vm2136, %vm2137
  %v2139 = vsel %vm2138, %v2131, %v2135
  %v2140 = vand.u32 2147483647, %v2130
  %vm2141 = vcmp.eq.f32.partialorder %v2140, 8.507059e+37
  %v2142 = vand.u32 %v2130, 2147483648
  %v2143 = vor.u32 1.1754944e-38, %v2142
  %v2144 = vsel %vm2141, %v2143, %v2139
  %v2145 = vmul.f32 1.0, %v2144
  %2146 = vmatpush.bf16.msra.mxu0 %v1039
  %2147 = vmatpush.bf16.msra.mxu0 %v1038
  %2148 = vmatpush.bf16.msra.mxu0 %v1037
  %2149 = vmatpush.bf16.msra.mxu0 %v1036
  %2150 = vmatpush.bf16.msra.mxu0 %v1035
  %2151 = vmatpush.bf16.msra.mxu0 %v1034
  %2152 = vmatpush.bf16.msra.mxu0 %v1033
  %2153 = vmatpush.bf16.msra.mxu0 %v1032
  %2154 = vmatmul.bf16.gmra.mxu0 %v2097
  %v2155 = vpop.f32.mrf.mxu0
  %v2156 = vadd.f32 0.0, %v2155
  %v2157 = vpop.f32.mrf.mxu0
  %2158 = vdwg.mxu0
  %v2159 = vadd.f32 %v1062, %v2156
  %2160 = vmatpush.bf16.msra.mxu0 %v1121
  %2161 = vmatpush.bf16.msra.mxu0 %v1120
  %2162 = vmatpush.bf16.msra.mxu0 %v1119
  %2163 = vmatpush.bf16.msra.mxu0 %v1118
  %2164 = vmatpush.bf16.msra.mxu0 %v1117
  %2165 = vmatpush.bf16.msra.mxu0 %v1116
  %2166 = vmatpush.bf16.msra.mxu0 %v1115
  %2167 = vmatpush.bf16.msra.mxu0 %v1114
  %2168 = vmatmul.bf16.gmra.mxu0 %v2098
  %v2169 = vpop.f32.mrf.mxu0
  %v2170 = vadd.f32 0.0, %v2169
  %v2171 = vpop.f32.mrf.mxu0
  %2172 = vdwg.mxu0
  %v2173 = vadd.f32 %v2159, %v2170
  %v2174 = vxor.u32 %v2173, 2147483648
  %v2175 = vmul.f32 %v2174, 1.442695
  %v2176 = vpow.pop %v2175
  %v2177 = vadd.f32 %v2176, 1.0
  %v2178 = vrcp.pop %v2177
  %v2179 = vmul.f32 %v2177, %v2178
  %v2180 = vsub.f32 1.0, %v2179
  %v2181 = vmul.f32 %v2178, %v2180
  %v2182 = vadd.f32 %v2178, %v2181
  %vm2183 = vweird.f32 %v2177
  %vm2184 = vweird.f32 %v2178
  %vm2185 = vmor %vm2183, %vm2184
  %v2186 = vsel %vm2185, %v2178, %v2182
  %v2187 = vand.u32 2147483647, %v2177
  %vm2188 = vcmp.eq.f32.partialorder %v2187, 8.507059e+37
  %v2189 = vand.u32 %v2177, 2147483648
  %v2190 = vor.u32 1.1754944e-38, %v2189
  %v2191 = vsel %vm2188, %v2190, %v2186
  %v2192 = vmul.f32 1.0, %v2191
  %2193 = vmatpush.bf16.msra.mxu0 %v1221
  %2194 = vmatpush.bf16.msra.mxu0 %v1220
  %2195 = vmatpush.bf16.msra.mxu0 %v1219
  %2196 = vmatpush.bf16.msra.mxu0 %v1218
  %2197 = vmatpush.bf16.msra.mxu0 %v1217
  %2198 = vmatpush.bf16.msra.mxu0 %v1216
  %2199 = vmatpush.bf16.msra.mxu0 %v1215
  %2200 = vmatpush.bf16.msra.mxu0 %v1214
  %2201 = vmatmul.bf16.gmra.mxu0 %v2097
  %v2202 = vpop.f32.mrf.mxu0
  %v2203 = vadd.f32 0.0, %v2202
  %v2204 = vpop.f32.mrf.mxu0
  %2205 = vdwg.mxu0
  %v2206 = vadd.f32 %v1244, %v2203
  %2207 = vmatpush.bf16.msra.mxu0 %v1303
  %2208 = vmatpush.bf16.msra.mxu0 %v1302
  %2209 = vmatpush.bf16.msra.mxu0 %v1301
  %2210 = vmatpush.bf16.msra.mxu0 %v1300
  %2211 = vmatpush.bf16.msra.mxu0 %v1299
  %2212 = vmatpush.bf16.msra.mxu0 %v1298
  %2213 = vmatpush.bf16.msra.mxu0 %v1297
  %2214 = vmatpush.bf16.msra.mxu0 %v1296
  %2215 = vmatmul.bf16.gmra.mxu0 %v2098
  %v2216 = vpop.f32.mrf.mxu0
  %v2217 = vadd.f32 0.0, %v2216
  %v2218 = vpop.f32.mrf.mxu0
  %2219 = vdwg.mxu0
  %v2220 = vadd.f32 %v2206, %v2217
  %v2221 = vtanh.pop %v2220
  %2222 = vmatpush.bf16.msra.mxu0 %v1385
  %2223 = vmatpush.bf16.msra.mxu0 %v1384
  %2224 = vmatpush.bf16.msra.mxu0 %v1383
  %2225 = vmatpush.bf16.msra.mxu0 %v1382
  %2226 = vmatpush.bf16.msra.mxu0 %v1381
  %2227 = vmatpush.bf16.msra.mxu0 %v1380
  %2228 = vmatpush.bf16.msra.mxu0 %v1379
  %2229 = vmatpush.bf16.msra.mxu0 %v1378
  %2230 = vmatmul.bf16.gmra.mxu0 %v2097
  %v2231 = vpop.f32.mrf.mxu0
  %v2232 = vadd.f32 0.0, %v2231
  %v2233 = vpop.f32.mrf.mxu0
  %2234 = vdwg.mxu0
  %v2235 = vadd.f32 %v1408, %v2232
  %2236 = vmatpush.bf16.msra.mxu0 %v1467
  %2237 = vmatpush.bf16.msra.mxu0 %v1466
  %2238 = vmatpush.bf16.msra.mxu0 %v1465
  %2239 = vmatpush.bf16.msra.mxu0 %v1464
  %2240 = vmatpush.bf16.msra.mxu0 %v1463
  %2241 = vmatpush.bf16.msra.mxu0 %v1462
  %2242 = vmatpush.bf16.msra.mxu0 %v1461
  %2243 = vmatpush.bf16.msra.mxu0 %v1460
  %2244 = vmatmul.bf16.gmra.mxu0 %v2098
  %v2245 = vpop.f32.mrf.mxu0
  %v2246 = vadd.f32 0.0, %v2245
  %v2247 = vpop.f32.mrf.mxu0
  %2248 = vdwg.mxu0
  %v2249 = vadd.f32 %v2235, %v2246
  %v2250 = vxor.u32 %v2249, 2147483648
  %v2251 = vmul.f32 %v2250, 1.442695
  %v2252 = vpow.pop %v2251
  %v2253 = vadd.f32 %v2252, 1.0
  %v2254 = vrcp.pop %v2253
  %v2255 = vmul.f32 %v2253, %v2254
  %v2256 = vsub.f32 1.0, %v2255
  %v2257 = vmul.f32 %v2254, %v2256
  %v2258 = vadd.f32 %v2254, %v2257
  %vm2259 = vweird.f32 %v2253
  %vm2260 = vweird.f32 %v2254
  %vm2261 = vmor %vm2259, %vm2260
  %v2262 = vsel %vm2261, %v2254, %v2258
  %v2263 = vand.u32 2147483647, %v2253
  %vm2264 = vcmp.eq.f32.partialorder %v2263, 8.507059e+37
  %v2265 = vand.u32 %v2253, 2147483648
  %v2266 = vor.u32 1.1754944e-38, %v2265
  %v2267 = vsel %vm2264, %v2266, %v2262
  %v2268 = vmul.f32 1.0, %v2267
  %v2269 = vmul.f32 %v2192, %v1903
  %v2270 = vmul.f32 %v2145, %v2221
  %v2271 = vadd.f32 %v2269, %v2270
  %v2272 = vtanh.pop %v2271
  %v2273 = vmul.f32 %v2268, %v2272
  %v2274 = vstv %s2095
  %vm2275 = vcmp.gt.s32.totalorder %v64, %v2274
  %v2276 = vsel %vm2275, 1, 0
  %2277 = vset.pattern.permute.xlu0 0
  %2278 = vperm.xlu0 %2277, %v2276
  %v2279 = vpop.permute.xlu0 %2278
  %vm2280 = vcmp.eq.s32.totalorder %v2279, 1
  %v2281 = vsel %vm2280, %v2273, -3e+38
  %v2282 = vsel %vm2280, %v2273, %v1902
  %v2283 = vsel %vm2280, %v2271, %v1903
  %v2284 = vmax.f32 %v1904, %v2281
  %s2285 = sadd.s32 %s72, 3
  %s2286 = scalar_lea.vmem %s0, 12
  %v2287 = vld [vmem:[%s2286] sm:$0xf]
  %v2288 = vpack.c.bf16 %v2092, %v2092
  %2289 = vmatpush.bf16.msra.mxu0 %v131
  %2290 = vmatpush.bf16.msra.mxu0 %v130
  %2291 = vmatpush.bf16.msra.mxu0 %v129
  %2292 = vmatpush.bf16.msra.mxu0 %v128
  %2293 = vmatpush.bf16.msra.mxu0 %v127
  %2294 = vmatpush.bf16.msra.mxu0 %v126
  %2295 = vmatpush.bf16.msra.mxu0 %v125
  %2296 = vmatpush.bf16.msra.mxu0 %v124
  %2297 = vmatmul.bf16.gmra.mxu0 %v2287
  %v2298 = vpop.f32.mrf.mxu0
  %v2299 = vadd.f32 0.0, %v2298
  %v2300 = vpop.f32.mrf.mxu0
  %2301 = vdwg.mxu0
  %v2302 = vadd.f32 %v154, %v2299
  %2303 = vmatpush.bf16.msra.mxu0 %v212
  %2304 = vmatpush.bf16.msra.mxu0 %v211
  %2305 = vmatpush.bf16.msra.mxu0 %v210
  %2306 = vmatpush.bf16.msra.mxu0 %v209
  %2307 = vmatpush.bf16.msra.mxu0 %v208
  %2308 = vmatpush.bf16.msra.mxu0 %v207
  %2309 = vmatpush.bf16.msra.mxu0 %v206
  %2310 = vmatpush.bf16.msra.mxu0 %v205
  %2311 = vmatmul.bf16.gmra.mxu0 %v2288
  %v2312 = vpop.f32.mrf.mxu0
  %v2313 = vadd.f32 0.0, %v2312
  %v2314 = vpop.f32.mrf.mxu0
  %2315 = vdwg.mxu0
  %v2316 = vadd.f32 %v2302, %v2313
  %v2317 = vxor.u32 %v2316, 2147483648
  %v2318 = vmul.f32 %v2317, 1.442695
  %v2319 = vpow.pop %v2318
  %v2320 = vadd.f32 %v2319, 1.0
  %v2321 = vrcp.pop %v2320
  %v2322 = vmul.f32 %v2320, %v2321
  %v2323 = vsub.f32 1.0, %v2322
  %v2324 = vmul.f32 %v2321, %v2323
  %v2325 = vadd.f32 %v2321, %v2324
  %vm2326 = vweird.f32 %v2320
  %vm2327 = vweird.f32 %v2321
  %vm2328 = vmor %vm2326, %vm2327
  %v2329 = vsel %vm2328, %v2321, %v2325
  %v2330 = vand.u32 2147483647, %v2320
  %vm2331 = vcmp.eq.f32.partialorder %v2330, 8.507059e+37
  %v2332 = vand.u32 %v2320, 2147483648
  %v2333 = vor.u32 1.1754944e-38, %v2332
  %v2334 = vsel %vm2331, %v2333, %v2329
  %v2335 = vmul.f32 1.0, %v2334
  %2336 = vmatpush.bf16.msra.mxu0 %v312
  %2337 = vmatpush.bf16.msra.mxu0 %v311
  %2338 = vmatpush.bf16.msra.mxu0 %v310
  %2339 = vmatpush.bf16.msra.mxu0 %v309
  %2340 = vmatpush.bf16.msra.mxu0 %v308
  %2341 = vmatpush.bf16.msra.mxu0 %v307
  %2342 = vmatpush.bf16.msra.mxu0 %v306
  %2343 = vmatpush.bf16.msra.mxu0 %v305
  %2344 = vmatmul.bf16.gmra.mxu0 %v2287
  %v2345 = vpop.f32.mrf.mxu0
  %v2346 = vadd.f32 0.0, %v2345
  %v2347 = vpop.f32.mrf.mxu0
  %2348 = vdwg.mxu0
  %v2349 = vadd.f32 %v335, %v2346
  %2350 = vmatpush.bf16.msra.mxu0 %v394
  %2351 = vmatpush.bf16.msra.mxu0 %v393
  %2352 = vmatpush.bf16.msra.mxu0 %v392
  %2353 = vmatpush.bf16.msra.mxu0 %v391
  %2354 = vmatpush.bf16.msra.mxu0 %v390
  %2355 = vmatpush.bf16.msra.mxu0 %v389
  %2356 = vmatpush.bf16.msra.mxu0 %v388
  %2357 = vmatpush.bf16.msra.mxu0 %v387
  %2358 = vmatmul.bf16.gmra.mxu0 %v2288
  %v2359 = vpop.f32.mrf.mxu0
  %v2360 = vadd.f32 0.0, %v2359
  %v2361 = vpop.f32.mrf.mxu0
  %2362 = vdwg.mxu0
  %v2363 = vadd.f32 %v2349, %v2360
  %v2364 = vxor.u32 %v2363, 2147483648
  %v2365 = vmul.f32 %v2364, 1.442695
  %v2366 = vpow.pop %v2365
  %v2367 = vadd.f32 %v2366, 1.0
  %v2368 = vrcp.pop %v2367
  %v2369 = vmul.f32 %v2367, %v2368
  %v2370 = vsub.f32 1.0, %v2369
  %v2371 = vmul.f32 %v2368, %v2370
  %v2372 = vadd.f32 %v2368, %v2371
  %vm2373 = vweird.f32 %v2367
  %vm2374 = vweird.f32 %v2368
  %vm2375 = vmor %vm2373, %vm2374
  %v2376 = vsel %vm2375, %v2368, %v2372
  %v2377 = vand.u32 2147483647, %v2367
  %vm2378 = vcmp.eq.f32.partialorder %v2377, 8.507059e+37
  %v2379 = vand.u32 %v2367, 2147483648
  %v2380 = vor.u32 1.1754944e-38, %v2379
  %v2381 = vsel %vm2378, %v2380, %v2376
  %v2382 = vmul.f32 1.0, %v2381
  %2383 = vmatpush.bf16.msra.mxu0 %v494
  %2384 = vmatpush.bf16.msra.mxu0 %v493
  %2385 = vmatpush.bf16.msra.mxu0 %v492
  %2386 = vmatpush.bf16.msra.mxu0 %v491
  %2387 = vmatpush.bf16.msra.mxu0 %v490
  %2388 = vmatpush.bf16.msra.mxu0 %v489
  %2389 = vmatpush.bf16.msra.mxu0 %v488
  %2390 = vmatpush.bf16.msra.mxu0 %v487
  %2391 = vmatmul.bf16.gmra.mxu0 %v2287
  %v2392 = vpop.f32.mrf.mxu0
  %v2393 = vadd.f32 0.0, %v2392
  %v2394 = vpop.f32.mrf.mxu0
  %2395 = vdwg.mxu0
  %v2396 = vadd.f32 %v517, %v2393
  %2397 = vmatpush.bf16.msra.mxu0 %v576
  %2398 = vmatpush.bf16.msra.mxu0 %v575
  %2399 = vmatpush.bf16.msra.mxu0 %v574
  %2400 = vmatpush.bf16.msra.mxu0 %v573
  %2401 = vmatpush.bf16.msra.mxu0 %v572
  %2402 = vmatpush.bf16.msra.mxu0 %v571
  %2403 = vmatpush.bf16.msra.mxu0 %v570
  %2404 = vmatpush.bf16.msra.mxu0 %v569
  %2405 = vmatmul.bf16.gmra.mxu0 %v2288
  %v2406 = vpop.f32.mrf.mxu0
  %v2407 = vadd.f32 0.0, %v2406
  %v2408 = vpop.f32.mrf.mxu0
  %2409 = vdwg.mxu0
  %v2410 = vadd.f32 %v2396, %v2407
  %v2411 = vtanh.pop %v2410
  %2412 = vmatpush.bf16.msra.mxu0 %v658
  %2413 = vmatpush.bf16.msra.mxu0 %v657
  %2414 = vmatpush.bf16.msra.mxu0 %v656
  %2415 = vmatpush.bf16.msra.mxu0 %v655
  %2416 = vmatpush.bf16.msra.mxu0 %v654
  %2417 = vmatpush.bf16.msra.mxu0 %v653
  %2418 = vmatpush.bf16.msra.mxu0 %v652
  %2419 = vmatpush.bf16.msra.mxu0 %v651
  %2420 = vmatmul.bf16.gmra.mxu0 %v2287
  %v2421 = vpop.f32.mrf.mxu0
  %v2422 = vadd.f32 0.0, %v2421
  %v2423 = vpop.f32.mrf.mxu0
  %2424 = vdwg.mxu0
  %v2425 = vadd.f32 %v681, %v2422
  %2426 = vmatpush.bf16.msra.mxu0 %v740
  %2427 = vmatpush.bf16.msra.mxu0 %v739
  %2428 = vmatpush.bf16.msra.mxu0 %v738
  %2429 = vmatpush.bf16.msra.mxu0 %v737
  %2430 = vmatpush.bf16.msra.mxu0 %v736
  %2431 = vmatpush.bf16.msra.mxu0 %v735
  %2432 = vmatpush.bf16.msra.mxu0 %v734
  %2433 = vmatpush.bf16.msra.mxu0 %v733
  %2434 = vmatmul.bf16.gmra.mxu0 %v2288
  %v2435 = vpop.f32.mrf.mxu0
  %v2436 = vadd.f32 0.0, %v2435
  %v2437 = vpop.f32.mrf.mxu0
  %2438 = vdwg.mxu0
  %v2439 = vadd.f32 %v2425, %v2436
  %v2440 = vxor.u32 %v2439, 2147483648
  %v2441 = vmul.f32 %v2440, 1.442695
  %v2442 = vpow.pop %v2441
  %v2443 = vadd.f32 %v2442, 1.0
  %v2444 = vrcp.pop %v2443
  %v2445 = vmul.f32 %v2443, %v2444
  %v2446 = vsub.f32 1.0, %v2445
  %v2447 = vmul.f32 %v2444, %v2446
  %v2448 = vadd.f32 %v2444, %v2447
  %vm2449 = vweird.f32 %v2443
  %vm2450 = vweird.f32 %v2444
  %vm2451 = vmor %vm2449, %vm2450
  %v2452 = vsel %vm2451, %v2444, %v2448
  %v2453 = vand.u32 2147483647, %v2443
  %vm2454 = vcmp.eq.f32.partialorder %v2453, 8.507059e+37
  %v2455 = vand.u32 %v2443, 2147483648
  %v2456 = vor.u32 1.1754944e-38, %v2455
  %v2457 = vsel %vm2454, %v2456, %v2452
  %v2458 = vmul.f32 1.0, %v2457
  %v2459 = vmul.f32 %v2382, %v2093
  %v2460 = vmul.f32 %v2335, %v2411
  %v2461 = vadd.f32 %v2459, %v2460
  %v2462 = vtanh.pop %v2461
  %v2463 = vmul.f32 %v2458, %v2462
  %v2464 = vstv %s2285
  %vm2465 = vcmp.gt.s32.totalorder %v64, %v2464
  %v2466 = vsel %vm2465, 1, 0
  %2467 = vset.pattern.permute.xlu0 0
  %2468 = vperm.xlu0 %2467, %v2466
  %v2469 = vpop.permute.xlu0 %2468
  %vm2470 = vcmp.eq.s32.totalorder %v2469, 1
  %v2471 = vsel %vm2470, %v2463, -3e+38
  %v2472 = vsel %vm2470, %v2463, %v2092
  %v2473 = vsel %vm2470, %v2461, %v2093
  %v2474 = vmax.f32 %v2094, %v2471
  %s2475 = ssub.s32 4, %s72
  %s2476 = scalar_lea.vmem %s51, 16
  %v2477 = vld [vmem:[%s2476] sm:$0xf]
  %v2478 = vpack.c.bf16 %v2282, %v2282
  %2479 = vmatpush.bf16.msra.mxu0 %v858
  %2480 = vmatpush.bf16.msra.mxu0 %v857
  %2481 = vmatpush.bf16.msra.mxu0 %v856
  %2482 = vmatpush.bf16.msra.mxu0 %v855
  %2483 = vmatpush.bf16.msra.mxu0 %v854
  %2484 = vmatpush.bf16.msra.mxu0 %v853
  %2485 = vmatpush.bf16.msra.mxu0 %v852
  %2486 = vmatpush.bf16.msra.mxu0 %v851
  %2487 = vmatmul.bf16.gmra.mxu0 %v2477
  %v2488 = vpop.f32.mrf.mxu0
  %v2489 = vadd.f32 0.0, %v2488
  %v2490 = vpop.f32.mrf.mxu0
  %2491 = vdwg.mxu0
  %v2492 = vadd.f32 %v881, %v2489
  %2493 = vmatpush.bf16.msra.mxu0 %v939
  %2494 = vmatpush.bf16.msra.mxu0 %v938
  %2495 = vmatpush.bf16.msra.mxu0 %v937
  %2496 = vmatpush.bf16.msra.mxu0 %v936
  %2497 = vmatpush.bf16.msra.mxu0 %v935
  %2498 = vmatpush.bf16.msra.mxu0 %v934
  %2499 = vmatpush.bf16.msra.mxu0 %v933
  %2500 = vmatpush.bf16.msra.mxu0 %v932
  %2501 = vmatmul.bf16.gmra.mxu0 %v2478
  %v2502 = vpop.f32.mrf.mxu0
  %v2503 = vadd.f32 0.0, %v2502
  %v2504 = vpop.f32.mrf.mxu0
  %2505 = vdwg.mxu0
  %v2506 = vadd.f32 %v2492, %v2503
  %v2507 = vxor.u32 %v2506, 2147483648
  %v2508 = vmul.f32 %v2507, 1.442695
  %v2509 = vpow.pop %v2508
  %v2510 = vadd.f32 %v2509, 1.0
  %v2511 = vrcp.pop %v2510
  %v2512 = vmul.f32 %v2510, %v2511
  %v2513 = vsub.f32 1.0, %v2512
  %v2514 = vmul.f32 %v2511, %v2513
  %v2515 = vadd.f32 %v2511, %v2514
  %vm2516 = vweird.f32 %v2510
  %vm2517 = vweird.f32 %v2511
  %vm2518 = vmor %vm2516, %vm2517
  %v2519 = vsel %vm2518, %v2511, %v2515
  %v2520 = vand.u32 2147483647, %v2510
  %vm2521 = vcmp.eq.f32.partialorder %v2520, 8.507059e+37
  %v2522 = vand.u32 %v2510, 2147483648
  %v2523 = vor.u32 1.1754944e-38, %v2522
  %v2524 = vsel %vm2521, %v2523, %v2519
  %v2525 = vmul.f32 1.0, %v2524
  %2526 = vmatpush.bf16.msra.mxu0 %v1039
  %2527 = vmatpush.bf16.msra.mxu0 %v1038
  %2528 = vmatpush.bf16.msra.mxu0 %v1037
  %2529 = vmatpush.bf16.msra.mxu0 %v1036
  %2530 = vmatpush.bf16.msra.mxu0 %v1035
  %2531 = vmatpush.bf16.msra.mxu0 %v1034
  %2532 = vmatpush.bf16.msra.mxu0 %v1033
  %2533 = vmatpush.bf16.msra.mxu0 %v1032
  %2534 = vmatmul.bf16.gmra.mxu0 %v2477
  %v2535 = vpop.f32.mrf.mxu0
  %v2536 = vadd.f32 0.0, %v2535
  %v2537 = vpop.f32.mrf.mxu0
  %2538 = vdwg.mxu0
  %v2539 = vadd.f32 %v1062, %v2536
  %2540 = vmatpush.bf16.msra.mxu0 %v1121
  %2541 = vmatpush.bf16.msra.mxu0 %v1120
  %2542 = vmatpush.bf16.msra.mxu0 %v1119
  %2543 = vmatpush.bf16.msra.mxu0 %v1118
  %2544 = vmatpush.bf16.msra.mxu0 %v1117
  %2545 = vmatpush.bf16.msra.mxu0 %v1116
  %2546 = vmatpush.bf16.msra.mxu0 %v1115
  %2547 = vmatpush.bf16.msra.mxu0 %v1114
  %2548 = vmatmul.bf16.gmra.mxu0 %v2478
  %v2549 = vpop.f32.mrf.mxu0
  %v2550 = vadd.f32 0.0, %v2549
  %v2551 = vpop.f32.mrf.mxu0
  %2552 = vdwg.mxu0
  %v2553 = vadd.f32 %v2539, %v2550
  %v2554 = vxor.u32 %v2553, 2147483648
  %v2555 = vmul.f32 %v2554, 1.442695
  %v2556 = vpow.pop %v2555
  %v2557 = vadd.f32 %v2556, 1.0
  %v2558 = vrcp.pop %v2557
  %v2559 = vmul.f32 %v2557, %v2558
  %v2560 = vsub.f32 1.0, %v2559
  %v2561 = vmul.f32 %v2558, %v2560
  %v2562 = vadd.f32 %v2558, %v2561
  %vm2563 = vweird.f32 %v2557
  %vm2564 = vweird.f32 %v2558
  %vm2565 = vmor %vm2563, %vm2564
  %v2566 = vsel %vm2565, %v2558, %v2562
  %v2567 = vand.u32 2147483647, %v2557
  %vm2568 = vcmp.eq.f32.partialorder %v2567, 8.507059e+37
  %v2569 = vand.u32 %v2557, 2147483648
  %v2570 = vor.u32 1.1754944e-38, %v2569
  %v2571 = vsel %vm2568, %v2570, %v2566
  %v2572 = vmul.f32 1.0, %v2571
  %2573 = vmatpush.bf16.msra.mxu0 %v1221
  %2574 = vmatpush.bf16.msra.mxu0 %v1220
  %2575 = vmatpush.bf16.msra.mxu0 %v1219
  %2576 = vmatpush.bf16.msra.mxu0 %v1218
  %2577 = vmatpush.bf16.msra.mxu0 %v1217
  %2578 = vmatpush.bf16.msra.mxu0 %v1216
  %2579 = vmatpush.bf16.msra.mxu0 %v1215
  %2580 = vmatpush.bf16.msra.mxu0 %v1214
  %2581 = vmatmul.bf16.gmra.mxu0 %v2477
  %v2582 = vpop.f32.mrf.mxu0
  %v2583 = vadd.f32 0.0, %v2582
  %v2584 = vpop.f32.mrf.mxu0
  %2585 = vdwg.mxu0
  %v2586 = vadd.f32 %v1244, %v2583
  %2587 = vmatpush.bf16.msra.mxu0 %v1303
  %2588 = vmatpush.bf16.msra.mxu0 %v1302
  %2589 = vmatpush.bf16.msra.mxu0 %v1301
  %2590 = vmatpush.bf16.msra.mxu0 %v1300
  %2591 = vmatpush.bf16.msra.mxu0 %v1299
  %2592 = vmatpush.bf16.msra.mxu0 %v1298
  %2593 = vmatpush.bf16.msra.mxu0 %v1297
  %2594 = vmatpush.bf16.msra.mxu0 %v1296
  %2595 = vmatmul.bf16.gmra.mxu0 %v2478
  %v2596 = vpop.f32.mrf.mxu0
  %v2597 = vadd.f32 0.0, %v2596
  %v2598 = vpop.f32.mrf.mxu0
  %2599 = vdwg.mxu0
  %v2600 = vadd.f32 %v2586, %v2597
  %v2601 = vtanh.pop %v2600
  %2602 = vmatpush.bf16.msra.mxu0 %v1385
  %2603 = vmatpush.bf16.msra.mxu0 %v1384
  %2604 = vmatpush.bf16.msra.mxu0 %v1383
  %2605 = vmatpush.bf16.msra.mxu0 %v1382
  %2606 = vmatpush.bf16.msra.mxu0 %v1381
  %2607 = vmatpush.bf16.msra.mxu0 %v1380
  %2608 = vmatpush.bf16.msra.mxu0 %v1379
  %2609 = vmatpush.bf16.msra.mxu0 %v1378
  %2610 = vmatmul.bf16.gmra.mxu0 %v2477
  %v2611 = vpop.f32.mrf.mxu0
  %v2612 = vadd.f32 0.0, %v2611
  %v2613 = vpop.f32.mrf.mxu0
  %2614 = vdwg.mxu0
  %v2615 = vadd.f32 %v1408, %v2612
  %2616 = vmatpush.bf16.msra.mxu0 %v1467
  %2617 = vmatpush.bf16.msra.mxu0 %v1466
  %2618 = vmatpush.bf16.msra.mxu0 %v1465
  %2619 = vmatpush.bf16.msra.mxu0 %v1464
  %2620 = vmatpush.bf16.msra.mxu0 %v1463
  %2621 = vmatpush.bf16.msra.mxu0 %v1462
  %2622 = vmatpush.bf16.msra.mxu0 %v1461
  %2623 = vmatpush.bf16.msra.mxu0 %v1460
  %2624 = vmatmul.bf16.gmra.mxu0 %v2478
  %v2625 = vpop.f32.mrf.mxu0
  %v2626 = vadd.f32 0.0, %v2625
  %v2627 = vpop.f32.mrf.mxu0
  %2628 = vdwg.mxu0
  %v2629 = vadd.f32 %v2615, %v2626
  %v2630 = vxor.u32 %v2629, 2147483648
  %v2631 = vmul.f32 %v2630, 1.442695
  %v2632 = vpow.pop %v2631
  %v2633 = vadd.f32 %v2632, 1.0
  %v2634 = vrcp.pop %v2633
  %v2635 = vmul.f32 %v2633, %v2634
  %v2636 = vsub.f32 1.0, %v2635
  %v2637 = vmul.f32 %v2634, %v2636
  %v2638 = vadd.f32 %v2634, %v2637
  %vm2639 = vweird.f32 %v2633
  %vm2640 = vweird.f32 %v2634
  %vm2641 = vmor %vm2639, %vm2640
  %v2642 = vsel %vm2641, %v2634, %v2638
  %v2643 = vand.u32 2147483647, %v2633
  %vm2644 = vcmp.eq.f32.partialorder %v2643, 8.507059e+37
  %v2645 = vand.u32 %v2633, 2147483648
  %v2646 = vor.u32 1.1754944e-38, %v2645
  %v2647 = vsel %vm2644, %v2646, %v2642
  %v2648 = vmul.f32 1.0, %v2647
  %v2649 = vmul.f32 %v2572, %v2283
  %v2650 = vmul.f32 %v2525, %v2601
  %v2651 = vadd.f32 %v2649, %v2650
  %v2652 = vtanh.pop %v2651
  %v2653 = vmul.f32 %v2648, %v2652
  %v2654 = vstv %s2475
  %vm2655 = vcmp.gt.s32.totalorder %v64, %v2654
  %v2656 = vsel %vm2655, 1, 0
  %2657 = vset.pattern.permute.xlu0 0
  %2658 = vperm.xlu0 %2657, %v2656
  %v2659 = vpop.permute.xlu0 %2658
  %vm2660 = vcmp.eq.s32.totalorder %v2659, 1
  %v2661 = vsel %vm2660, %v2653, -3e+38
  %v2662 = vsel %vm2660, %v2653, %v2282
  %v2663 = vsel %vm2660, %v2651, %v2283
  %v2664 = vmax.f32 %v2284, %v2661
  %s2665 = sadd.s32 %s72, 4
  %s2666 = scalar_lea.vmem %s0, 16
  %v2667 = vld [vmem:[%s2666] sm:$0xf]
  %v2668 = vpack.c.bf16 %v2472, %v2472
  %2669 = vmatpush.bf16.msra.mxu0 %v131
  %2670 = vmatpush.bf16.msra.mxu0 %v130
  %2671 = vmatpush.bf16.msra.mxu0 %v129
  %2672 = vmatpush.bf16.msra.mxu0 %v128
  %2673 = vmatpush.bf16.msra.mxu0 %v127
  %2674 = vmatpush.bf16.msra.mxu0 %v126
  %2675 = vmatpush.bf16.msra.mxu0 %v125
  %2676 = vmatpush.bf16.msra.mxu0 %v124
  %2677 = vmatmul.bf16.gmra.mxu0 %v2667
  %v2678 = vpop.f32.mrf.mxu0
  %v2679 = vadd.f32 0.0, %v2678
  %v2680 = vpop.f32.mrf.mxu0
  %2681 = vdwg.mxu0
  %v2682 = vadd.f32 %v154, %v2679
  %2683 = vmatpush.bf16.msra.mxu0 %v212
  %2684 = vmatpush.bf16.msra.mxu0 %v211
  %2685 = vmatpush.bf16.msra.mxu0 %v210
  %2686 = vmatpush.bf16.msra.mxu0 %v209
  %2687 = vmatpush.bf16.msra.mxu0 %v208
  %2688 = vmatpush.bf16.msra.mxu0 %v207
  %2689 = vmatpush.bf16.msra.mxu0 %v206
  %2690 = vmatpush.bf16.msra.mxu0 %v205
  %2691 = vmatmul.bf16.gmra.mxu0 %v2668
  %v2692 = vpop.f32.mrf.mxu0
  %v2693 = vadd.f32 0.0, %v2692
  %v2694 = vpop.f32.mrf.mxu0
  %2695 = vdwg.mxu0
  %v2696 = vadd.f32 %v2682, %v2693
  %v2697 = vxor.u32 %v2696, 2147483648
  %v2698 = vmul.f32 %v2697, 1.442695
  %v2699 = vpow.pop %v2698
  %v2700 = vadd.f32 %v2699, 1.0
  %v2701 = vrcp.pop %v2700
  %v2702 = vmul.f32 %v2700, %v2701
  %v2703 = vsub.f32 1.0, %v2702
  %v2704 = vmul.f32 %v2701, %v2703
  %v2705 = vadd.f32 %v2701, %v2704
  %vm2706 = vweird.f32 %v2700
  %vm2707 = vweird.f32 %v2701
  %vm2708 = vmor %vm2706, %vm2707
  %v2709 = vsel %vm2708, %v2701, %v2705
  %v2710 = vand.u32 2147483647, %v2700
  %vm2711 = vcmp.eq.f32.partialorder %v2710, 8.507059e+37
  %v2712 = vand.u32 %v2700, 2147483648
  %v2713 = vor.u32 1.1754944e-38, %v2712
  %v2714 = vsel %vm2711, %v2713, %v2709
  %v2715 = vmul.f32 1.0, %v2714
  %2716 = vmatpush.bf16.msra.mxu0 %v312
  %2717 = vmatpush.bf16.msra.mxu0 %v311
  %2718 = vmatpush.bf16.msra.mxu0 %v310
  %2719 = vmatpush.bf16.msra.mxu0 %v309
  %2720 = vmatpush.bf16.msra.mxu0 %v308
  %2721 = vmatpush.bf16.msra.mxu0 %v307
  %2722 = vmatpush.bf16.msra.mxu0 %v306
  %2723 = vmatpush.bf16.msra.mxu0 %v305
  %2724 = vmatmul.bf16.gmra.mxu0 %v2667
  %v2725 = vpop.f32.mrf.mxu0
  %v2726 = vadd.f32 0.0, %v2725
  %v2727 = vpop.f32.mrf.mxu0
  %2728 = vdwg.mxu0
  %v2729 = vadd.f32 %v335, %v2726
  %2730 = vmatpush.bf16.msra.mxu0 %v394
  %2731 = vmatpush.bf16.msra.mxu0 %v393
  %2732 = vmatpush.bf16.msra.mxu0 %v392
  %2733 = vmatpush.bf16.msra.mxu0 %v391
  %2734 = vmatpush.bf16.msra.mxu0 %v390
  %2735 = vmatpush.bf16.msra.mxu0 %v389
  %2736 = vmatpush.bf16.msra.mxu0 %v388
  %2737 = vmatpush.bf16.msra.mxu0 %v387
  %2738 = vmatmul.bf16.gmra.mxu0 %v2668
  %v2739 = vpop.f32.mrf.mxu0
  %v2740 = vadd.f32 0.0, %v2739
  %v2741 = vpop.f32.mrf.mxu0
  %2742 = vdwg.mxu0
  %v2743 = vadd.f32 %v2729, %v2740
  %v2744 = vxor.u32 %v2743, 2147483648
  %v2745 = vmul.f32 %v2744, 1.442695
  %v2746 = vpow.pop %v2745
  %v2747 = vadd.f32 %v2746, 1.0
  %v2748 = vrcp.pop %v2747
  %v2749 = vmul.f32 %v2747, %v2748
  %v2750 = vsub.f32 1.0, %v2749
  %v2751 = vmul.f32 %v2748, %v2750
  %v2752 = vadd.f32 %v2748, %v2751
  %vm2753 = vweird.f32 %v2747
  %vm2754 = vweird.f32 %v2748
  %vm2755 = vmor %vm2753, %vm2754
  %v2756 = vsel %vm2755, %v2748, %v2752
  %v2757 = vand.u32 2147483647, %v2747
  %vm2758 = vcmp.eq.f32.partialorder %v2757, 8.507059e+37
  %v2759 = vand.u32 %v2747, 2147483648
  %v2760 = vor.u32 1.1754944e-38, %v2759
  %v2761 = vsel %vm2758, %v2760, %v2756
  %v2762 = vmul.f32 1.0, %v2761
  %2763 = vmatpush.bf16.msra.mxu0 %v494
  %2764 = vmatpush.bf16.msra.mxu0 %v493
  %2765 = vmatpush.bf16.msra.mxu0 %v492
  %2766 = vmatpush.bf16.msra.mxu0 %v491
  %2767 = vmatpush.bf16.msra.mxu0 %v490
  %2768 = vmatpush.bf16.msra.mxu0 %v489
  %2769 = vmatpush.bf16.msra.mxu0 %v488
  %2770 = vmatpush.bf16.msra.mxu0 %v487
  %2771 = vmatmul.bf16.gmra.mxu0 %v2667
  %v2772 = vpop.f32.mrf.mxu0
  %v2773 = vadd.f32 0.0, %v2772
  %v2774 = vpop.f32.mrf.mxu0
  %2775 = vdwg.mxu0
  %v2776 = vadd.f32 %v517, %v2773
  %2777 = vmatpush.bf16.msra.mxu0 %v576
  %2778 = vmatpush.bf16.msra.mxu0 %v575
  %2779 = vmatpush.bf16.msra.mxu0 %v574
  %2780 = vmatpush.bf16.msra.mxu0 %v573
  %2781 = vmatpush.bf16.msra.mxu0 %v572
  %2782 = vmatpush.bf16.msra.mxu0 %v571
  %2783 = vmatpush.bf16.msra.mxu0 %v570
  %2784 = vmatpush.bf16.msra.mxu0 %v569
  %2785 = vmatmul.bf16.gmra.mxu0 %v2668
  %v2786 = vpop.f32.mrf.mxu0
  %v2787 = vadd.f32 0.0, %v2786
  %v2788 = vpop.f32.mrf.mxu0
  %2789 = vdwg.mxu0
  %v2790 = vadd.f32 %v2776, %v2787
  %v2791 = vtanh.pop %v2790
  %2792 = vmatpush.bf16.msra.mxu0 %v658
  %2793 = vmatpush.bf16.msra.mxu0 %v657
  %2794 = vmatpush.bf16.msra.mxu0 %v656
  %2795 = vmatpush.bf16.msra.mxu0 %v655
  %2796 = vmatpush.bf16.msra.mxu0 %v654
  %2797 = vmatpush.bf16.msra.mxu0 %v653
  %2798 = vmatpush.bf16.msra.mxu0 %v652
  %2799 = vmatpush.bf16.msra.mxu0 %v651
  %2800 = vmatmul.bf16.gmra.mxu0 %v2667
  %v2801 = vpop.f32.mrf.mxu0
  %v2802 = vadd.f32 0.0, %v2801
  %v2803 = vpop.f32.mrf.mxu0
  %2804 = vdwg.mxu0
  %v2805 = vadd.f32 %v681, %v2802
  %2806 = vmatpush.bf16.msra.mxu0 %v740
  %2807 = vmatpush.bf16.msra.mxu0 %v739
  %2808 = vmatpush.bf16.msra.mxu0 %v738
  %2809 = vmatpush.bf16.msra.mxu0 %v737
  %2810 = vmatpush.bf16.msra.mxu0 %v736
  %2811 = vmatpush.bf16.msra.mxu0 %v735
  %2812 = vmatpush.bf16.msra.mxu0 %v734
  %2813 = vmatpush.bf16.msra.mxu0 %v733
  %2814 = vmatmul.bf16.gmra.mxu0 %v2668
  %v2815 = vpop.f32.mrf.mxu0
  %v2816 = vadd.f32 0.0, %v2815
  %v2817 = vpop.f32.mrf.mxu0
  %2818 = vdwg.mxu0
  %v2819 = vadd.f32 %v2805, %v2816
  %v2820 = vxor.u32 %v2819, 2147483648
  %v2821 = vmul.f32 %v2820, 1.442695
  %v2822 = vpow.pop %v2821
  %v2823 = vadd.f32 %v2822, 1.0
  %v2824 = vrcp.pop %v2823
  %v2825 = vmul.f32 %v2823, %v2824
  %v2826 = vsub.f32 1.0, %v2825
  %v2827 = vmul.f32 %v2824, %v2826
  %v2828 = vadd.f32 %v2824, %v2827
  %vm2829 = vweird.f32 %v2823
  %vm2830 = vweird.f32 %v2824
  %vm2831 = vmor %vm2829, %vm2830
  %v2832 = vsel %vm2831, %v2824, %v2828
  %v2833 = vand.u32 2147483647, %v2823
  %vm2834 = vcmp.eq.f32.partialorder %v2833, 8.507059e+37
  %v2835 = vand.u32 %v2823, 2147483648
  %v2836 = vor.u32 1.1754944e-38, %v2835
  %v2837 = vsel %vm2834, %v2836, %v2832
  %v2838 = vmul.f32 1.0, %v2837
  %v2839 = vmul.f32 %v2762, %v2473
  %v2840 = vmul.f32 %v2715, %v2791
  %v2841 = vadd.f32 %v2839, %v2840
  %v2842 = vtanh.pop %v2841
  %v2843 = vmul.f32 %v2838, %v2842
  %v2844 = vstv %s2665
  %vm2845 = vcmp.gt.s32.totalorder %v64, %v2844
  %v2846 = vsel %vm2845, 1, 0
  %2847 = vset.pattern.permute.xlu0 0
  %2848 = vperm.xlu0 %2847, %v2846
  %v2849 = vpop.permute.xlu0 %2848
  %vm2850 = vcmp.eq.s32.totalorder %v2849, 1
  %v2851 = vsel %vm2850, %v2843, -3e+38
  %v2852 = vsel %vm2850, %v2843, %v2472
  %v2853 = vsel %vm2850, %v2841, %v2473
  %v2854 = vmax.f32 %v2474, %v2851
  %s2855 = ssub.s32 3, %s72
  %s2856 = scalar_lea.vmem %s51, 12
  %v2857 = vld [vmem:[%s2856] sm:$0xf]
  %v2858 = vpack.c.bf16 %v2662, %v2662
  %2859 = vmatpush.bf16.msra.mxu0 %v858
  %2860 = vmatpush.bf16.msra.mxu0 %v857
  %2861 = vmatpush.bf16.msra.mxu0 %v856
  %2862 = vmatpush.bf16.msra.mxu0 %v855
  %2863 = vmatpush.bf16.msra.mxu0 %v854
  %2864 = vmatpush.bf16.msra.mxu0 %v853
  %2865 = vmatpush.bf16.msra.mxu0 %v852
  %2866 = vmatpush.bf16.msra.mxu0 %v851
  %2867 = vmatmul.bf16.gmra.mxu0 %v2857
  %v2868 = vpop.f32.mrf.mxu0
  %v2869 = vadd.f32 0.0, %v2868
  %v2870 = vpop.f32.mrf.mxu0
  %2871 = vdwg.mxu0
  %v2872 = vadd.f32 %v881, %v2869
  %2873 = vmatpush.bf16.msra.mxu0 %v939
  %2874 = vmatpush.bf16.msra.mxu0 %v938
  %2875 = vmatpush.bf16.msra.mxu0 %v937
  %2876 = vmatpush.bf16.msra.mxu0 %v936
  %2877 = vmatpush.bf16.msra.mxu0 %v935
  %2878 = vmatpush.bf16.msra.mxu0 %v934
  %2879 = vmatpush.bf16.msra.mxu0 %v933
  %2880 = vmatpush.bf16.msra.mxu0 %v932
  %2881 = vmatmul.bf16.gmra.mxu0 %v2858
  %v2882 = vpop.f32.mrf.mxu0
  %v2883 = vadd.f32 0.0, %v2882
  %v2884 = vpop.f32.mrf.mxu0
  %2885 = vdwg.mxu0
  %v2886 = vadd.f32 %v2872, %v2883
  %v2887 = vxor.u32 %v2886, 2147483648
  %v2888 = vmul.f32 %v2887, 1.442695
  %v2889 = vpow.pop %v2888
  %v2890 = vadd.f32 %v2889, 1.0
  %v2891 = vrcp.pop %v2890
  %v2892 = vmul.f32 %v2890, %v2891
  %v2893 = vsub.f32 1.0, %v2892
  %v2894 = vmul.f32 %v2891, %v2893
  %v2895 = vadd.f32 %v2891, %v2894
  %vm2896 = vweird.f32 %v2890
  %vm2897 = vweird.f32 %v2891
  %vm2898 = vmor %vm2896, %vm2897
  %v2899 = vsel %vm2898, %v2891, %v2895
  %v2900 = vand.u32 2147483647, %v2890
  %vm2901 = vcmp.eq.f32.partialorder %v2900, 8.507059e+37
  %v2902 = vand.u32 %v2890, 2147483648
  %v2903 = vor.u32 1.1754944e-38, %v2902
  %v2904 = vsel %vm2901, %v2903, %v2899
  %v2905 = vmul.f32 1.0, %v2904
  %2906 = vmatpush.bf16.msra.mxu0 %v1039
  %2907 = vmatpush.bf16.msra.mxu0 %v1038
  %2908 = vmatpush.bf16.msra.mxu0 %v1037
  %2909 = vmatpush.bf16.msra.mxu0 %v1036
  %2910 = vmatpush.bf16.msra.mxu0 %v1035
  %2911 = vmatpush.bf16.msra.mxu0 %v1034
  %2912 = vmatpush.bf16.msra.mxu0 %v1033
  %2913 = vmatpush.bf16.msra.mxu0 %v1032
  %2914 = vmatmul.bf16.gmra.mxu0 %v2857
  %v2915 = vpop.f32.mrf.mxu0
  %v2916 = vadd.f32 0.0, %v2915
  %v2917 = vpop.f32.mrf.mxu0
  %2918 = vdwg.mxu0
  %v2919 = vadd.f32 %v1062, %v2916
  %2920 = vmatpush.bf16.msra.mxu0 %v1121
  %2921 = vmatpush.bf16.msra.mxu0 %v1120
  %2922 = vmatpush.bf16.msra.mxu0 %v1119
  %2923 = vmatpush.bf16.msra.mxu0 %v1118
  %2924 = vmatpush.bf16.msra.mxu0 %v1117
  %2925 = vmatpush.bf16.msra.mxu0 %v1116
  %2926 = vmatpush.bf16.msra.mxu0 %v1115
  %2927 = vmatpush.bf16.msra.mxu0 %v1114
  %2928 = vmatmul.bf16.gmra.mxu0 %v2858
  %v2929 = vpop.f32.mrf.mxu0
  %v2930 = vadd.f32 0.0, %v2929
  %v2931 = vpop.f32.mrf.mxu0
  %2932 = vdwg.mxu0
  %v2933 = vadd.f32 %v2919, %v2930
  %v2934 = vxor.u32 %v2933, 2147483648
  %v2935 = vmul.f32 %v2934, 1.442695
  %v2936 = vpow.pop %v2935
  %v2937 = vadd.f32 %v2936, 1.0
  %v2938 = vrcp.pop %v2937
  %v2939 = vmul.f32 %v2937, %v2938
  %v2940 = vsub.f32 1.0, %v2939
  %v2941 = vmul.f32 %v2938, %v2940
  %v2942 = vadd.f32 %v2938, %v2941
  %vm2943 = vweird.f32 %v2937
  %vm2944 = vweird.f32 %v2938
  %vm2945 = vmor %vm2943, %vm2944
  %v2946 = vsel %vm2945, %v2938, %v2942
  %v2947 = vand.u32 2147483647, %v2937
  %vm2948 = vcmp.eq.f32.partialorder %v2947, 8.507059e+37
  %v2949 = vand.u32 %v2937, 2147483648
  %v2950 = vor.u32 1.1754944e-38, %v2949
  %v2951 = vsel %vm2948, %v2950, %v2946
  %v2952 = vmul.f32 1.0, %v2951
  %2953 = vmatpush.bf16.msra.mxu0 %v1221
  %2954 = vmatpush.bf16.msra.mxu0 %v1220
  %2955 = vmatpush.bf16.msra.mxu0 %v1219
  %2956 = vmatpush.bf16.msra.mxu0 %v1218
  %2957 = vmatpush.bf16.msra.mxu0 %v1217
  %2958 = vmatpush.bf16.msra.mxu0 %v1216
  %2959 = vmatpush.bf16.msra.mxu0 %v1215
  %2960 = vmatpush.bf16.msra.mxu0 %v1214
  %2961 = vmatmul.bf16.gmra.mxu0 %v2857
  %v2962 = vpop.f32.mrf.mxu0
  %v2963 = vadd.f32 0.0, %v2962
  %v2964 = vpop.f32.mrf.mxu0
  %2965 = vdwg.mxu0
  %v2966 = vadd.f32 %v1244, %v2963
  %2967 = vmatpush.bf16.msra.mxu0 %v1303
  %2968 = vmatpush.bf16.msra.mxu0 %v1302
  %2969 = vmatpush.bf16.msra.mxu0 %v1301
  %2970 = vmatpush.bf16.msra.mxu0 %v1300
  %2971 = vmatpush.bf16.msra.mxu0 %v1299
  %2972 = vmatpush.bf16.msra.mxu0 %v1298
  %2973 = vmatpush.bf16.msra.mxu0 %v1297
  %2974 = vmatpush.bf16.msra.mxu0 %v1296
  %2975 = vmatmul.bf16.gmra.mxu0 %v2858
  %v2976 = vpop.f32.mrf.mxu0
  %v2977 = vadd.f32 0.0, %v2976
  %v2978 = vpop.f32.mrf.mxu0
  %2979 = vdwg.mxu0
  %v2980 = vadd.f32 %v2966, %v2977
  %v2981 = vtanh.pop %v2980
  %2982 = vmatpush.bf16.msra.mxu0 %v1385
  %2983 = vmatpush.bf16.msra.mxu0 %v1384
  %2984 = vmatpush.bf16.msra.mxu0 %v1383
  %2985 = vmatpush.bf16.msra.mxu0 %v1382
  %2986 = vmatpush.bf16.msra.mxu0 %v1381
  %2987 = vmatpush.bf16.msra.mxu0 %v1380
  %2988 = vmatpush.bf16.msra.mxu0 %v1379
  %2989 = vmatpush.bf16.msra.mxu0 %v1378
  %2990 = vmatmul.bf16.gmra.mxu0 %v2857
  %v2991 = vpop.f32.mrf.mxu0
  %v2992 = vadd.f32 0.0, %v2991
  %v2993 = vpop.f32.mrf.mxu0
  %2994 = vdwg.mxu0
  %v2995 = vadd.f32 %v1408, %v2992
  %2996 = vmatpush.bf16.msra.mxu0 %v1467
  %2997 = vmatpush.bf16.msra.mxu0 %v1466
  %2998 = vmatpush.bf16.msra.mxu0 %v1465
  %2999 = vmatpush.bf16.msra.mxu0 %v1464
  %3000 = vmatpush.bf16.msra.mxu0 %v1463
  %3001 = vmatpush.bf16.msra.mxu0 %v1462
  %3002 = vmatpush.bf16.msra.mxu0 %v1461
  %3003 = vmatpush.bf16.msra.mxu0 %v1460
  %3004 = vmatmul.bf16.gmra.mxu0 %v2858
  %v3005 = vpop.f32.mrf.mxu0
  %v3006 = vadd.f32 0.0, %v3005
  %v3007 = vpop.f32.mrf.mxu0
  %3008 = vdwg.mxu0
  %v3009 = vadd.f32 %v2995, %v3006
  %v3010 = vxor.u32 %v3009, 2147483648
  %v3011 = vmul.f32 %v3010, 1.442695
  %v3012 = vpow.pop %v3011
  %v3013 = vadd.f32 %v3012, 1.0
  %v3014 = vrcp.pop %v3013
  %v3015 = vmul.f32 %v3013, %v3014
  %v3016 = vsub.f32 1.0, %v3015
  %v3017 = vmul.f32 %v3014, %v3016
  %v3018 = vadd.f32 %v3014, %v3017
  %vm3019 = vweird.f32 %v3013
  %vm3020 = vweird.f32 %v3014
  %vm3021 = vmor %vm3019, %vm3020
  %v3022 = vsel %vm3021, %v3014, %v3018
  %v3023 = vand.u32 2147483647, %v3013
  %vm3024 = vcmp.eq.f32.partialorder %v3023, 8.507059e+37
  %v3025 = vand.u32 %v3013, 2147483648
  %v3026 = vor.u32 1.1754944e-38, %v3025
  %v3027 = vsel %vm3024, %v3026, %v3022
  %v3028 = vmul.f32 1.0, %v3027
  %v3029 = vmul.f32 %v2952, %v2663
  %v3030 = vmul.f32 %v2905, %v2981
  %v3031 = vadd.f32 %v3029, %v3030
  %v3032 = vtanh.pop %v3031
  %v3033 = vmul.f32 %v3028, %v3032
  %v3034 = vstv %s2855
  %vm3035 = vcmp.gt.s32.totalorder %v64, %v3034
  %v3036 = vsel %vm3035, 1, 0
  %3037 = vset.pattern.permute.xlu0 0
  %3038 = vperm.xlu0 %3037, %v3036
  %v3039 = vpop.permute.xlu0 %3038
  %vm3040 = vcmp.eq.s32.totalorder %v3039, 1
  %v3041 = vsel %vm3040, %v3033, -3e+38
  %v3042 = vsel %vm3040, %v3033, %v2662
  %v3043 = vsel %vm3040, %v3031, %v2663
  %v3044 = vmax.f32 %v2664, %v3041
  %s3045 = sadd.s32 %s72, 5
  %s3046 = scalar_lea.vmem %s0, 20
  %v3047 = vld [vmem:[%s3046] sm:$0xf]
  %v3048 = vpack.c.bf16 %v2852, %v2852
  %3049 = vmatpush.bf16.msra.mxu0 %v131
  %3050 = vmatpush.bf16.msra.mxu0 %v130
  %3051 = vmatpush.bf16.msra.mxu0 %v129
  %3052 = vmatpush.bf16.msra.mxu0 %v128
  %3053 = vmatpush.bf16.msra.mxu0 %v127
  %3054 = vmatpush.bf16.msra.mxu0 %v126
  %3055 = vmatpush.bf16.msra.mxu0 %v125
  %3056 = vmatpush.bf16.msra.mxu0 %v124
  %3057 = vmatmul.bf16.gmra.mxu0 %v3047
  %v3058 = vpop.f32.mrf.mxu0
  %v3059 = vadd.f32 0.0, %v3058
  %v3060 = vpop.f32.mrf.mxu0
  %3061 = vdwg.mxu0
  %v3062 = vadd.f32 %v154, %v3059
  %3063 = vmatpush.bf16.msra.mxu0 %v212
  %3064 = vmatpush.bf16.msra.mxu0 %v211
  %3065 = vmatpush.bf16.msra.mxu0 %v210
  %3066 = vmatpush.bf16.msra.mxu0 %v209
  %3067 = vmatpush.bf16.msra.mxu0 %v208
  %3068 = vmatpush.bf16.msra.mxu0 %v207
  %3069 = vmatpush.bf16.msra.mxu0 %v206
  %3070 = vmatpush.bf16.msra.mxu0 %v205
  %3071 = vmatmul.bf16.gmra.mxu0 %v3048
  %v3072 = vpop.f32.mrf.mxu0
  %v3073 = vadd.f32 0.0, %v3072
  %v3074 = vpop.f32.mrf.mxu0
  %3075 = vdwg.mxu0
  %v3076 = vadd.f32 %v3062, %v3073
  %v3077 = vxor.u32 %v3076, 2147483648
  %v3078 = vmul.f32 %v3077, 1.442695
  %v3079 = vpow.pop %v3078
  %v3080 = vadd.f32 %v3079, 1.0
  %v3081 = vrcp.pop %v3080
  %v3082 = vmul.f32 %v3080, %v3081
  %v3083 = vsub.f32 1.0, %v3082
  %v3084 = vmul.f32 %v3081, %v3083
  %v3085 = vadd.f32 %v3081, %v3084
  %vm3086 = vweird.f32 %v3080
  %vm3087 = vweird.f32 %v3081
  %vm3088 = vmor %vm3086, %vm3087
  %v3089 = vsel %vm3088, %v3081, %v3085
  %v3090 = vand.u32 2147483647, %v3080
  %vm3091 = vcmp.eq.f32.partialorder %v3090, 8.507059e+37
  %v3092 = vand.u32 %v3080, 2147483648
  %v3093 = vor.u32 1.1754944e-38, %v3092
  %v3094 = vsel %vm3091, %v3093, %v3089
  %v3095 = vmul.f32 1.0, %v3094
  %3096 = vmatpush.bf16.msra.mxu0 %v312
  %3097 = vmatpush.bf16.msra.mxu0 %v311
  %3098 = vmatpush.bf16.msra.mxu0 %v310
  %3099 = vmatpush.bf16.msra.mxu0 %v309
  %3100 = vmatpush.bf16.msra.mxu0 %v308
  %3101 = vmatpush.bf16.msra.mxu0 %v307
  %3102 = vmatpush.bf16.msra.mxu0 %v306
  %3103 = vmatpush.bf16.msra.mxu0 %v305
  %3104 = vmatmul.bf16.gmra.mxu0 %v3047
  %v3105 = vpop.f32.mrf.mxu0
  %v3106 = vadd.f32 0.0, %v3105
  %v3107 = vpop.f32.mrf.mxu0
  %3108 = vdwg.mxu0
  %v3109 = vadd.f32 %v335, %v3106
  %3110 = vmatpush.bf16.msra.mxu0 %v394
  %3111 = vmatpush.bf16.msra.mxu0 %v393
  %3112 = vmatpush.bf16.msra.mxu0 %v392
  %3113 = vmatpush.bf16.msra.mxu0 %v391
  %3114 = vmatpush.bf16.msra.mxu0 %v390
  %3115 = vmatpush.bf16.msra.mxu0 %v389
  %3116 = vmatpush.bf16.msra.mxu0 %v388
  %3117 = vmatpush.bf16.msra.mxu0 %v387
  %3118 = vmatmul.bf16.gmra.mxu0 %v3048
  %v3119 = vpop.f32.mrf.mxu0
  %v3120 = vadd.f32 0.0, %v3119
  %v3121 = vpop.f32.mrf.mxu0
  %3122 = vdwg.mxu0
  %v3123 = vadd.f32 %v3109, %v3120
  %v3124 = vxor.u32 %v3123, 2147483648
  %v3125 = vmul.f32 %v3124, 1.442695
  %v3126 = vpow.pop %v3125
  %v3127 = vadd.f32 %v3126, 1.0
  %v3128 = vrcp.pop %v3127
  %v3129 = vmul.f32 %v3127, %v3128
  %v3130 = vsub.f32 1.0, %v3129
  %v3131 = vmul.f32 %v3128, %v3130
  %v3132 = vadd.f32 %v3128, %v3131
  %vm3133 = vweird.f32 %v3127
  %vm3134 = vweird.f32 %v3128
  %vm3135 = vmor %vm3133, %vm3134
  %v3136 = vsel %vm3135, %v3128, %v3132
  %v3137 = vand.u32 2147483647, %v3127
  %vm3138 = vcmp.eq.f32.partialorder %v3137, 8.507059e+37
  %v3139 = vand.u32 %v3127, 2147483648
  %v3140 = vor.u32 1.1754944e-38, %v3139
  %v3141 = vsel %vm3138, %v3140, %v3136
  %v3142 = vmul.f32 1.0, %v3141
  %3143 = vmatpush.bf16.msra.mxu0 %v494
  %3144 = vmatpush.bf16.msra.mxu0 %v493
  %3145 = vmatpush.bf16.msra.mxu0 %v492
  %3146 = vmatpush.bf16.msra.mxu0 %v491
  %3147 = vmatpush.bf16.msra.mxu0 %v490
  %3148 = vmatpush.bf16.msra.mxu0 %v489
  %3149 = vmatpush.bf16.msra.mxu0 %v488
  %3150 = vmatpush.bf16.msra.mxu0 %v487
  %3151 = vmatmul.bf16.gmra.mxu0 %v3047
  %v3152 = vpop.f32.mrf.mxu0
  %v3153 = vadd.f32 0.0, %v3152
  %v3154 = vpop.f32.mrf.mxu0
  %3155 = vdwg.mxu0
  %v3156 = vadd.f32 %v517, %v3153
  %3157 = vmatpush.bf16.msra.mxu0 %v576
  %3158 = vmatpush.bf16.msra.mxu0 %v575
  %3159 = vmatpush.bf16.msra.mxu0 %v574
  %3160 = vmatpush.bf16.msra.mxu0 %v573
  %3161 = vmatpush.bf16.msra.mxu0 %v572
  %3162 = vmatpush.bf16.msra.mxu0 %v571
  %3163 = vmatpush.bf16.msra.mxu0 %v570
  %3164 = vmatpush.bf16.msra.mxu0 %v569
  %3165 = vmatmul.bf16.gmra.mxu0 %v3048
  %v3166 = vpop.f32.mrf.mxu0
  %v3167 = vadd.f32 0.0, %v3166
  %v3168 = vpop.f32.mrf.mxu0
  %3169 = vdwg.mxu0
  %v3170 = vadd.f32 %v3156, %v3167
  %v3171 = vtanh.pop %v3170
  %3172 = vmatpush.bf16.msra.mxu0 %v658
  %3173 = vmatpush.bf16.msra.mxu0 %v657
  %3174 = vmatpush.bf16.msra.mxu0 %v656
  %3175 = vmatpush.bf16.msra.mxu0 %v655
  %3176 = vmatpush.bf16.msra.mxu0 %v654
  %3177 = vmatpush.bf16.msra.mxu0 %v653
  %3178 = vmatpush.bf16.msra.mxu0 %v652
  %3179 = vmatpush.bf16.msra.mxu0 %v651
  %3180 = vmatmul.bf16.gmra.mxu0 %v3047
  %v3181 = vpop.f32.mrf.mxu0
  %v3182 = vadd.f32 0.0, %v3181
  %v3183 = vpop.f32.mrf.mxu0
  %3184 = vdwg.mxu0
  %v3185 = vadd.f32 %v681, %v3182
  %3186 = vmatpush.bf16.msra.mxu0 %v740
  %3187 = vmatpush.bf16.msra.mxu0 %v739
  %3188 = vmatpush.bf16.msra.mxu0 %v738
  %3189 = vmatpush.bf16.msra.mxu0 %v737
  %3190 = vmatpush.bf16.msra.mxu0 %v736
  %3191 = vmatpush.bf16.msra.mxu0 %v735
  %3192 = vmatpush.bf16.msra.mxu0 %v734
  %3193 = vmatpush.bf16.msra.mxu0 %v733
  %3194 = vmatmul.bf16.gmra.mxu0 %v3048
  %v3195 = vpop.f32.mrf.mxu0
  %v3196 = vadd.f32 0.0, %v3195
  %v3197 = vpop.f32.mrf.mxu0
  %3198 = vdwg.mxu0
  %v3199 = vadd.f32 %v3185, %v3196
  %v3200 = vxor.u32 %v3199, 2147483648
  %v3201 = vmul.f32 %v3200, 1.442695
  %v3202 = vpow.pop %v3201
  %v3203 = vadd.f32 %v3202, 1.0
  %v3204 = vrcp.pop %v3203
  %v3205 = vmul.f32 %v3203, %v3204
  %v3206 = vsub.f32 1.0, %v3205
  %v3207 = vmul.f32 %v3204, %v3206
  %v3208 = vadd.f32 %v3204, %v3207
  %vm3209 = vweird.f32 %v3203
  %vm3210 = vweird.f32 %v3204
  %vm3211 = vmor %vm3209, %vm3210
  %v3212 = vsel %vm3211, %v3204, %v3208
  %v3213 = vand.u32 2147483647, %v3203
  %vm3214 = vcmp.eq.f32.partialorder %v3213, 8.507059e+37
  %v3215 = vand.u32 %v3203, 2147483648
  %v3216 = vor.u32 1.1754944e-38, %v3215
  %v3217 = vsel %vm3214, %v3216, %v3212
  %v3218 = vmul.f32 1.0, %v3217
  %v3219 = vmul.f32 %v3142, %v2853
  %v3220 = vmul.f32 %v3095, %v3171
  %v3221 = vadd.f32 %v3219, %v3220
  %v3222 = vtanh.pop %v3221
  %v3223 = vmul.f32 %v3218, %v3222
  %v3224 = vstv %s3045
  %vm3225 = vcmp.gt.s32.totalorder %v64, %v3224
  %v3226 = vsel %vm3225, 1, 0
  %3227 = vset.pattern.permute.xlu0 0
  %3228 = vperm.xlu0 %3227, %v3226
  %v3229 = vpop.permute.xlu0 %3228
  %vm3230 = vcmp.eq.s32.totalorder %v3229, 1
  %v3231 = vsel %vm3230, %v3223, -3e+38
  %v3232 = vsel %vm3230, %v3223, %v2852
  %v3233 = vsel %vm3230, %v3221, %v2853
  %v3234 = vmax.f32 %v2854, %v3231
  %s3235 = ssub.s32 2, %s72
  %s3236 = scalar_lea.vmem %s51, 8
  %v3237 = vld [vmem:[%s3236] sm:$0xf]
  %v3238 = vpack.c.bf16 %v3042, %v3042
  %3239 = vmatpush.bf16.msra.mxu0 %v858
  %3240 = vmatpush.bf16.msra.mxu0 %v857
  %3241 = vmatpush.bf16.msra.mxu0 %v856
  %3242 = vmatpush.bf16.msra.mxu0 %v855
  %3243 = vmatpush.bf16.msra.mxu0 %v854
  %3244 = vmatpush.bf16.msra.mxu0 %v853
  %3245 = vmatpush.bf16.msra.mxu0 %v852
  %3246 = vmatpush.bf16.msra.mxu0 %v851
  %3247 = vmatmul.bf16.gmra.mxu0 %v3237
  %v3248 = vpop.f32.mrf.mxu0
  %v3249 = vadd.f32 0.0, %v3248
  %v3250 = vpop.f32.mrf.mxu0
  %3251 = vdwg.mxu0
  %v3252 = vadd.f32 %v881, %v3249
  %3253 = vmatpush.bf16.msra.mxu0 %v939
  %3254 = vmatpush.bf16.msra.mxu0 %v938
  %3255 = vmatpush.bf16.msra.mxu0 %v937
  %3256 = vmatpush.bf16.msra.mxu0 %v936
  %3257 = vmatpush.bf16.msra.mxu0 %v935
  %3258 = vmatpush.bf16.msra.mxu0 %v934
  %3259 = vmatpush.bf16.msra.mxu0 %v933
  %3260 = vmatpush.bf16.msra.mxu0 %v932
  %3261 = vmatmul.bf16.gmra.mxu0 %v3238
  %v3262 = vpop.f32.mrf.mxu0
  %v3263 = vadd.f32 0.0, %v3262
  %v3264 = vpop.f32.mrf.mxu0
  %3265 = vdwg.mxu0
  %v3266 = vadd.f32 %v3252, %v3263
  %v3267 = vxor.u32 %v3266, 2147483648
  %v3268 = vmul.f32 %v3267, 1.442695
  %v3269 = vpow.pop %v3268
  %v3270 = vadd.f32 %v3269, 1.0
  %v3271 = vrcp.pop %v3270
  %v3272 = vmul.f32 %v3270, %v3271
  %v3273 = vsub.f32 1.0, %v3272
  %v3274 = vmul.f32 %v3271, %v3273
  %v3275 = vadd.f32 %v3271, %v3274
  %vm3276 = vweird.f32 %v3270
  %vm3277 = vweird.f32 %v3271
  %vm3278 = vmor %vm3276, %vm3277
  %v3279 = vsel %vm3278, %v3271, %v3275
  %v3280 = vand.u32 2147483647, %v3270
  %vm3281 = vcmp.eq.f32.partialorder %v3280, 8.507059e+37
  %v3282 = vand.u32 %v3270, 2147483648
  %v3283 = vor.u32 1.1754944e-38, %v3282
  %v3284 = vsel %vm3281, %v3283, %v3279
  %v3285 = vmul.f32 1.0, %v3284
  %3286 = vmatpush.bf16.msra.mxu0 %v1039
  %3287 = vmatpush.bf16.msra.mxu0 %v1038
  %3288 = vmatpush.bf16.msra.mxu0 %v1037
  %3289 = vmatpush.bf16.msra.mxu0 %v1036
  %3290 = vmatpush.bf16.msra.mxu0 %v1035
  %3291 = vmatpush.bf16.msra.mxu0 %v1034
  %3292 = vmatpush.bf16.msra.mxu0 %v1033
  %3293 = vmatpush.bf16.msra.mxu0 %v1032
  %3294 = vmatmul.bf16.gmra.mxu0 %v3237
  %v3295 = vpop.f32.mrf.mxu0
  %v3296 = vadd.f32 0.0, %v3295
  %v3297 = vpop.f32.mrf.mxu0
  %3298 = vdwg.mxu0
  %v3299 = vadd.f32 %v1062, %v3296
  %3300 = vmatpush.bf16.msra.mxu0 %v1121
  %3301 = vmatpush.bf16.msra.mxu0 %v1120
  %3302 = vmatpush.bf16.msra.mxu0 %v1119
  %3303 = vmatpush.bf16.msra.mxu0 %v1118
  %3304 = vmatpush.bf16.msra.mxu0 %v1117
  %3305 = vmatpush.bf16.msra.mxu0 %v1116
  %3306 = vmatpush.bf16.msra.mxu0 %v1115
  %3307 = vmatpush.bf16.msra.mxu0 %v1114
  %3308 = vmatmul.bf16.gmra.mxu0 %v3238
  %v3309 = vpop.f32.mrf.mxu0
  %v3310 = vadd.f32 0.0, %v3309
  %v3311 = vpop.f32.mrf.mxu0
  %3312 = vdwg.mxu0
  %v3313 = vadd.f32 %v3299, %v3310
  %v3314 = vxor.u32 %v3313, 2147483648
  %v3315 = vmul.f32 %v3314, 1.442695
  %v3316 = vpow.pop %v3315
  %v3317 = vadd.f32 %v3316, 1.0
  %v3318 = vrcp.pop %v3317
  %v3319 = vmul.f32 %v3317, %v3318
  %v3320 = vsub.f32 1.0, %v3319
  %v3321 = vmul.f32 %v3318, %v3320
  %v3322 = vadd.f32 %v3318, %v3321
  %vm3323 = vweird.f32 %v3317
  %vm3324 = vweird.f32 %v3318
  %vm3325 = vmor %vm3323, %vm3324
  %v3326 = vsel %vm3325, %v3318, %v3322
  %v3327 = vand.u32 2147483647, %v3317
  %vm3328 = vcmp.eq.f32.partialorder %v3327, 8.507059e+37
  %v3329 = vand.u32 %v3317, 2147483648
  %v3330 = vor.u32 1.1754944e-38, %v3329
  %v3331 = vsel %vm3328, %v3330, %v3326
  %v3332 = vmul.f32 1.0, %v3331
  %3333 = vmatpush.bf16.msra.mxu0 %v1221
  %3334 = vmatpush.bf16.msra.mxu0 %v1220
  %3335 = vmatpush.bf16.msra.mxu0 %v1219
  %3336 = vmatpush.bf16.msra.mxu0 %v1218
  %3337 = vmatpush.bf16.msra.mxu0 %v1217
  %3338 = vmatpush.bf16.msra.mxu0 %v1216
  %3339 = vmatpush.bf16.msra.mxu0 %v1215
  %3340 = vmatpush.bf16.msra.mxu0 %v1214
  %3341 = vmatmul.bf16.gmra.mxu0 %v3237
  %v3342 = vpop.f32.mrf.mxu0
  %v3343 = vadd.f32 0.0, %v3342
  %v3344 = vpop.f32.mrf.mxu0
  %3345 = vdwg.mxu0
  %v3346 = vadd.f32 %v1244, %v3343
  %3347 = vmatpush.bf16.msra.mxu0 %v1303
  %3348 = vmatpush.bf16.msra.mxu0 %v1302
  %3349 = vmatpush.bf16.msra.mxu0 %v1301
  %3350 = vmatpush.bf16.msra.mxu0 %v1300
  %3351 = vmatpush.bf16.msra.mxu0 %v1299
  %3352 = vmatpush.bf16.msra.mxu0 %v1298
  %3353 = vmatpush.bf16.msra.mxu0 %v1297
  %3354 = vmatpush.bf16.msra.mxu0 %v1296
  %3355 = vmatmul.bf16.gmra.mxu0 %v3238
  %v3356 = vpop.f32.mrf.mxu0
  %v3357 = vadd.f32 0.0, %v3356
  %v3358 = vpop.f32.mrf.mxu0
  %3359 = vdwg.mxu0
  %v3360 = vadd.f32 %v3346, %v3357
  %v3361 = vtanh.pop %v3360
  %3362 = vmatpush.bf16.msra.mxu0 %v1385
  %3363 = vmatpush.bf16.msra.mxu0 %v1384
  %3364 = vmatpush.bf16.msra.mxu0 %v1383
  %3365 = vmatpush.bf16.msra.mxu0 %v1382
  %3366 = vmatpush.bf16.msra.mxu0 %v1381
  %3367 = vmatpush.bf16.msra.mxu0 %v1380
  %3368 = vmatpush.bf16.msra.mxu0 %v1379
  %3369 = vmatpush.bf16.msra.mxu0 %v1378
  %3370 = vmatmul.bf16.gmra.mxu0 %v3237
  %v3371 = vpop.f32.mrf.mxu0
  %v3372 = vadd.f32 0.0, %v3371
  %v3373 = vpop.f32.mrf.mxu0
  %3374 = vdwg.mxu0
  %v3375 = vadd.f32 %v1408, %v3372
  %3376 = vmatpush.bf16.msra.mxu0 %v1467
  %3377 = vmatpush.bf16.msra.mxu0 %v1466
  %3378 = vmatpush.bf16.msra.mxu0 %v1465
  %3379 = vmatpush.bf16.msra.mxu0 %v1464
  %3380 = vmatpush.bf16.msra.mxu0 %v1463
  %3381 = vmatpush.bf16.msra.mxu0 %v1462
  %3382 = vmatpush.bf16.msra.mxu0 %v1461
  %3383 = vmatpush.bf16.msra.mxu0 %v1460
  %3384 = vmatmul.bf16.gmra.mxu0 %v3238
  %v3385 = vpop.f32.mrf.mxu0
  %v3386 = vadd.f32 0.0, %v3385
  %v3387 = vpop.f32.mrf.mxu0
  %3388 = vdwg.mxu0
  %v3389 = vadd.f32 %v3375, %v3386
  %v3390 = vxor.u32 %v3389, 2147483648
  %v3391 = vmul.f32 %v3390, 1.442695
  %v3392 = vpow.pop %v3391
  %v3393 = vadd.f32 %v3392, 1.0
  %v3394 = vrcp.pop %v3393
  %v3395 = vmul.f32 %v3393, %v3394
  %v3396 = vsub.f32 1.0, %v3395
  %v3397 = vmul.f32 %v3394, %v3396
  %v3398 = vadd.f32 %v3394, %v3397
  %vm3399 = vweird.f32 %v3393
  %vm3400 = vweird.f32 %v3394
  %vm3401 = vmor %vm3399, %vm3400
  %v3402 = vsel %vm3401, %v3394, %v3398
  %v3403 = vand.u32 2147483647, %v3393
  %vm3404 = vcmp.eq.f32.partialorder %v3403, 8.507059e+37
  %v3405 = vand.u32 %v3393, 2147483648
  %v3406 = vor.u32 1.1754944e-38, %v3405
  %v3407 = vsel %vm3404, %v3406, %v3402
  %v3408 = vmul.f32 1.0, %v3407
  %v3409 = vmul.f32 %v3332, %v3043
  %v3410 = vmul.f32 %v3285, %v3361
  %v3411 = vadd.f32 %v3409, %v3410
  %v3412 = vtanh.pop %v3411
  %v3413 = vmul.f32 %v3408, %v3412
  %v3414 = vstv %s3235
  %vm3415 = vcmp.gt.s32.totalorder %v64, %v3414
  %v3416 = vsel %vm3415, 1, 0
  %3417 = vset.pattern.permute.xlu0 0
  %3418 = vperm.xlu0 %3417, %v3416
  %v3419 = vpop.permute.xlu0 %3418
  %vm3420 = vcmp.eq.s32.totalorder %v3419, 1
  %v3421 = vsel %vm3420, %v3413, -3e+38
  %v3422 = vsel %vm3420, %v3413, %v3042
  %v3423 = vsel %vm3420, %v3411, %v3043
  %v3424 = vmax.f32 %v3044, %v3421
  %s3425 = sadd.s32 %s72, 6
  %s3426 = scalar_lea.vmem %s0, 24
  %v3427 = vld [vmem:[%s3426] sm:$0xf]
  %v3428 = vpack.c.bf16 %v3232, %v3232
  %3429 = vmatpush.bf16.msra.mxu0 %v131
  %3430 = vmatpush.bf16.msra.mxu0 %v130
  %3431 = vmatpush.bf16.msra.mxu0 %v129
  %3432 = vmatpush.bf16.msra.mxu0 %v128
  %3433 = vmatpush.bf16.msra.mxu0 %v127
  %3434 = vmatpush.bf16.msra.mxu0 %v126
  %3435 = vmatpush.bf16.msra.mxu0 %v125
  %3436 = vmatpush.bf16.msra.mxu0 %v124
  %3437 = vmatmul.bf16.gmra.mxu0 %v3427
  %v3438 = vpop.f32.mrf.mxu0
  %v3439 = vadd.f32 0.0, %v3438
  %v3440 = vpop.f32.mrf.mxu0
  %3441 = vdwg.mxu0
  %v3442 = vadd.f32 %v154, %v3439
  %3443 = vmatpush.bf16.msra.mxu0 %v212
  %3444 = vmatpush.bf16.msra.mxu0 %v211
  %3445 = vmatpush.bf16.msra.mxu0 %v210
  %3446 = vmatpush.bf16.msra.mxu0 %v209
  %3447 = vmatpush.bf16.msra.mxu0 %v208
  %3448 = vmatpush.bf16.msra.mxu0 %v207
  %3449 = vmatpush.bf16.msra.mxu0 %v206
  %3450 = vmatpush.bf16.msra.mxu0 %v205
  %3451 = vmatmul.bf16.gmra.mxu0 %v3428
  %v3452 = vpop.f32.mrf.mxu0
  %v3453 = vadd.f32 0.0, %v3452
  %v3454 = vpop.f32.mrf.mxu0
  %3455 = vdwg.mxu0
  %v3456 = vadd.f32 %v3442, %v3453
  %v3457 = vxor.u32 %v3456, 2147483648
  %v3458 = vmul.f32 %v3457, 1.442695
  %v3459 = vpow.pop %v3458
  %v3460 = vadd.f32 %v3459, 1.0
  %v3461 = vrcp.pop %v3460
  %v3462 = vmul.f32 %v3460, %v3461
  %v3463 = vsub.f32 1.0, %v3462
  %v3464 = vmul.f32 %v3461, %v3463
  %v3465 = vadd.f32 %v3461, %v3464
  %vm3466 = vweird.f32 %v3460
  %vm3467 = vweird.f32 %v3461
  %vm3468 = vmor %vm3466, %vm3467
  %v3469 = vsel %vm3468, %v3461, %v3465
  %v3470 = vand.u32 2147483647, %v3460
  %vm3471 = vcmp.eq.f32.partialorder %v3470, 8.507059e+37
  %v3472 = vand.u32 %v3460, 2147483648
  %v3473 = vor.u32 1.1754944e-38, %v3472
  %v3474 = vsel %vm3471, %v3473, %v3469
  %v3475 = vmul.f32 1.0, %v3474
  %3476 = vmatpush.bf16.msra.mxu0 %v312
  %3477 = vmatpush.bf16.msra.mxu0 %v311
  %3478 = vmatpush.bf16.msra.mxu0 %v310
  %3479 = vmatpush.bf16.msra.mxu0 %v309
  %3480 = vmatpush.bf16.msra.mxu0 %v308
  %3481 = vmatpush.bf16.msra.mxu0 %v307
  %3482 = vmatpush.bf16.msra.mxu0 %v306
  %3483 = vmatpush.bf16.msra.mxu0 %v305
  %3484 = vmatmul.bf16.gmra.mxu0 %v3427
  %v3485 = vpop.f32.mrf.mxu0
  %v3486 = vadd.f32 0.0, %v3485
  %v3487 = vpop.f32.mrf.mxu0
  %3488 = vdwg.mxu0
  %v3489 = vadd.f32 %v335, %v3486
  %3490 = vmatpush.bf16.msra.mxu0 %v394
  %3491 = vmatpush.bf16.msra.mxu0 %v393
  %3492 = vmatpush.bf16.msra.mxu0 %v392
  %3493 = vmatpush.bf16.msra.mxu0 %v391
  %3494 = vmatpush.bf16.msra.mxu0 %v390
  %3495 = vmatpush.bf16.msra.mxu0 %v389
  %3496 = vmatpush.bf16.msra.mxu0 %v388
  %3497 = vmatpush.bf16.msra.mxu0 %v387
  %3498 = vmatmul.bf16.gmra.mxu0 %v3428
  %v3499 = vpop.f32.mrf.mxu0
  %v3500 = vadd.f32 0.0, %v3499
  %v3501 = vpop.f32.mrf.mxu0
  %3502 = vdwg.mxu0
  %v3503 = vadd.f32 %v3489, %v3500
  %v3504 = vxor.u32 %v3503, 2147483648
  %v3505 = vmul.f32 %v3504, 1.442695
  %v3506 = vpow.pop %v3505
  %v3507 = vadd.f32 %v3506, 1.0
  %v3508 = vrcp.pop %v3507
  %v3509 = vmul.f32 %v3507, %v3508
  %v3510 = vsub.f32 1.0, %v3509
  %v3511 = vmul.f32 %v3508, %v3510
  %v3512 = vadd.f32 %v3508, %v3511
  %vm3513 = vweird.f32 %v3507
  %vm3514 = vweird.f32 %v3508
  %vm3515 = vmor %vm3513, %vm3514
  %v3516 = vsel %vm3515, %v3508, %v3512
  %v3517 = vand.u32 2147483647, %v3507
  %vm3518 = vcmp.eq.f32.partialorder %v3517, 8.507059e+37
  %v3519 = vand.u32 %v3507, 2147483648
  %v3520 = vor.u32 1.1754944e-38, %v3519
  %v3521 = vsel %vm3518, %v3520, %v3516
  %v3522 = vmul.f32 1.0, %v3521
  %3523 = vmatpush.bf16.msra.mxu0 %v494
  %3524 = vmatpush.bf16.msra.mxu0 %v493
  %3525 = vmatpush.bf16.msra.mxu0 %v492
  %3526 = vmatpush.bf16.msra.mxu0 %v491
  %3527 = vmatpush.bf16.msra.mxu0 %v490
  %3528 = vmatpush.bf16.msra.mxu0 %v489
  %3529 = vmatpush.bf16.msra.mxu0 %v488
  %3530 = vmatpush.bf16.msra.mxu0 %v487
  %3531 = vmatmul.bf16.gmra.mxu0 %v3427
  %v3532 = vpop.f32.mrf.mxu0
  %v3533 = vadd.f32 0.0, %v3532
  %v3534 = vpop.f32.mrf.mxu0
  %3535 = vdwg.mxu0
  %v3536 = vadd.f32 %v517, %v3533
  %3537 = vmatpush.bf16.msra.mxu0 %v576
  %3538 = vmatpush.bf16.msra.mxu0 %v575
  %3539 = vmatpush.bf16.msra.mxu0 %v574
  %3540 = vmatpush.bf16.msra.mxu0 %v573
  %3541 = vmatpush.bf16.msra.mxu0 %v572
  %3542 = vmatpush.bf16.msra.mxu0 %v571
  %3543 = vmatpush.bf16.msra.mxu0 %v570
  %3544 = vmatpush.bf16.msra.mxu0 %v569
  %3545 = vmatmul.bf16.gmra.mxu0 %v3428
  %v3546 = vpop.f32.mrf.mxu0
  %v3547 = vadd.f32 0.0, %v3546
  %v3548 = vpop.f32.mrf.mxu0
  %3549 = vdwg.mxu0
  %v3550 = vadd.f32 %v3536, %v3547
  %v3551 = vtanh.pop %v3550
  %3552 = vmatpush.bf16.msra.mxu0 %v658
  %3553 = vmatpush.bf16.msra.mxu0 %v657
  %3554 = vmatpush.bf16.msra.mxu0 %v656
  %3555 = vmatpush.bf16.msra.mxu0 %v655
  %3556 = vmatpush.bf16.msra.mxu0 %v654
  %3557 = vmatpush.bf16.msra.mxu0 %v653
  %3558 = vmatpush.bf16.msra.mxu0 %v652
  %3559 = vmatpush.bf16.msra.mxu0 %v651
  %3560 = vmatmul.bf16.gmra.mxu0 %v3427
  %v3561 = vpop.f32.mrf.mxu0
  %v3562 = vadd.f32 0.0, %v3561
  %v3563 = vpop.f32.mrf.mxu0
  %3564 = vdwg.mxu0
  %v3565 = vadd.f32 %v681, %v3562
  %3566 = vmatpush.bf16.msra.mxu0 %v740
  %3567 = vmatpush.bf16.msra.mxu0 %v739
  %3568 = vmatpush.bf16.msra.mxu0 %v738
  %3569 = vmatpush.bf16.msra.mxu0 %v737
  %3570 = vmatpush.bf16.msra.mxu0 %v736
  %3571 = vmatpush.bf16.msra.mxu0 %v735
  %3572 = vmatpush.bf16.msra.mxu0 %v734
  %3573 = vmatpush.bf16.msra.mxu0 %v733
  %3574 = vmatmul.bf16.gmra.mxu0 %v3428
  %v3575 = vpop.f32.mrf.mxu0
  %v3576 = vadd.f32 0.0, %v3575
  %v3577 = vpop.f32.mrf.mxu0
  %3578 = vdwg.mxu0
  %v3579 = vadd.f32 %v3565, %v3576
  %v3580 = vxor.u32 %v3579, 2147483648
  %v3581 = vmul.f32 %v3580, 1.442695
  %v3582 = vpow.pop %v3581
  %v3583 = vadd.f32 %v3582, 1.0
  %v3584 = vrcp.pop %v3583
  %v3585 = vmul.f32 %v3583, %v3584
  %v3586 = vsub.f32 1.0, %v3585
  %v3587 = vmul.f32 %v3584, %v3586
  %v3588 = vadd.f32 %v3584, %v3587
  %vm3589 = vweird.f32 %v3583
  %vm3590 = vweird.f32 %v3584
  %vm3591 = vmor %vm3589, %vm3590
  %v3592 = vsel %vm3591, %v3584, %v3588
  %v3593 = vand.u32 2147483647, %v3583
  %vm3594 = vcmp.eq.f32.partialorder %v3593, 8.507059e+37
  %v3595 = vand.u32 %v3583, 2147483648
  %v3596 = vor.u32 1.1754944e-38, %v3595
  %v3597 = vsel %vm3594, %v3596, %v3592
  %v3598 = vmul.f32 1.0, %v3597
  %v3599 = vmul.f32 %v3522, %v3233
  %v3600 = vmul.f32 %v3475, %v3551
  %v3601 = vadd.f32 %v3599, %v3600
  %v3602 = vtanh.pop %v3601
  %v3603 = vmul.f32 %v3598, %v3602
  %v3604 = vstv %s3425
  %vm3605 = vcmp.gt.s32.totalorder %v64, %v3604
  %v3606 = vsel %vm3605, 1, 0
  %3607 = vset.pattern.permute.xlu0 0
  %3608 = vperm.xlu0 %3607, %v3606
  %v3609 = vpop.permute.xlu0 %3608
  %vm3610 = vcmp.eq.s32.totalorder %v3609, 1
  %v3611 = vsel %vm3610, %v3603, -3e+38
  %v3612 = vsel %vm3610, %v3603, %v3232
  %v3613 = vsel %vm3610, %v3601, %v3233
  %v3614 = vmax.f32 %v3234, %v3611
  %s3615 = ssub.s32 1, %s72
  %s3616 = scalar_lea.vmem %s51, 4
  %v3617 = vld [vmem:[%s3616] sm:$0xf]
  %v3618 = vpack.c.bf16 %v3422, %v3422
  %3619 = vmatpush.bf16.msra.mxu0 %v858
  %3620 = vmatpush.bf16.msra.mxu0 %v857
  %3621 = vmatpush.bf16.msra.mxu0 %v856
  %3622 = vmatpush.bf16.msra.mxu0 %v855
  %3623 = vmatpush.bf16.msra.mxu0 %v854
  %3624 = vmatpush.bf16.msra.mxu0 %v853
  %3625 = vmatpush.bf16.msra.mxu0 %v852
  %3626 = vmatpush.bf16.msra.mxu0 %v851
  %3627 = vmatmul.bf16.gmra.mxu0 %v3617
  %v3628 = vpop.f32.mrf.mxu0
  %v3629 = vadd.f32 0.0, %v3628
  %v3630 = vpop.f32.mrf.mxu0
  %3631 = vdwg.mxu0
  %v3632 = vadd.f32 %v881, %v3629
  %3633 = vmatpush.bf16.msra.mxu0 %v939
  %3634 = vmatpush.bf16.msra.mxu0 %v938
  %3635 = vmatpush.bf16.msra.mxu0 %v937
  %3636 = vmatpush.bf16.msra.mxu0 %v936
  %3637 = vmatpush.bf16.msra.mxu0 %v935
  %3638 = vmatpush.bf16.msra.mxu0 %v934
  %3639 = vmatpush.bf16.msra.mxu0 %v933
  %3640 = vmatpush.bf16.msra.mxu0 %v932
  %3641 = vmatmul.bf16.gmra.mxu0 %v3618
  %v3642 = vpop.f32.mrf.mxu0
  %v3643 = vadd.f32 0.0, %v3642
  %v3644 = vpop.f32.mrf.mxu0
  %3645 = vdwg.mxu0
  %v3646 = vadd.f32 %v3632, %v3643
  %v3647 = vxor.u32 %v3646, 2147483648
  %v3648 = vmul.f32 %v3647, 1.442695
  %v3649 = vpow.pop %v3648
  %v3650 = vadd.f32 %v3649, 1.0
  %v3651 = vrcp.pop %v3650
  %v3652 = vmul.f32 %v3650, %v3651
  %v3653 = vsub.f32 1.0, %v3652
  %v3654 = vmul.f32 %v3651, %v3653
  %v3655 = vadd.f32 %v3651, %v3654
  %vm3656 = vweird.f32 %v3650
  %vm3657 = vweird.f32 %v3651
  %vm3658 = vmor %vm3656, %vm3657
  %v3659 = vsel %vm3658, %v3651, %v3655
  %v3660 = vand.u32 2147483647, %v3650
  %vm3661 = vcmp.eq.f32.partialorder %v3660, 8.507059e+37
  %v3662 = vand.u32 %v3650, 2147483648
  %v3663 = vor.u32 1.1754944e-38, %v3662
  %v3664 = vsel %vm3661, %v3663, %v3659
  %v3665 = vmul.f32 1.0, %v3664
  %3666 = vmatpush.bf16.msra.mxu0 %v1039
  %3667 = vmatpush.bf16.msra.mxu0 %v1038
  %3668 = vmatpush.bf16.msra.mxu0 %v1037
  %3669 = vmatpush.bf16.msra.mxu0 %v1036
  %3670 = vmatpush.bf16.msra.mxu0 %v1035
  %3671 = vmatpush.bf16.msra.mxu0 %v1034
  %3672 = vmatpush.bf16.msra.mxu0 %v1033
  %3673 = vmatpush.bf16.msra.mxu0 %v1032
  %3674 = vmatmul.bf16.gmra.mxu0 %v3617
  %v3675 = vpop.f32.mrf.mxu0
  %v3676 = vadd.f32 0.0, %v3675
  %v3677 = vpop.f32.mrf.mxu0
  %3678 = vdwg.mxu0
  %v3679 = vadd.f32 %v1062, %v3676
  %3680 = vmatpush.bf16.msra.mxu0 %v1121
  %3681 = vmatpush.bf16.msra.mxu0 %v1120
  %3682 = vmatpush.bf16.msra.mxu0 %v1119
  %3683 = vmatpush.bf16.msra.mxu0 %v1118
  %3684 = vmatpush.bf16.msra.mxu0 %v1117
  %3685 = vmatpush.bf16.msra.mxu0 %v1116
  %3686 = vmatpush.bf16.msra.mxu0 %v1115
  %3687 = vmatpush.bf16.msra.mxu0 %v1114
  %3688 = vmatmul.bf16.gmra.mxu0 %v3618
  %v3689 = vpop.f32.mrf.mxu0
  %v3690 = vadd.f32 0.0, %v3689
  %v3691 = vpop.f32.mrf.mxu0
  %3692 = vdwg.mxu0
  %v3693 = vadd.f32 %v3679, %v3690
  %v3694 = vxor.u32 %v3693, 2147483648
  %v3695 = vmul.f32 %v3694, 1.442695
  %v3696 = vpow.pop %v3695
  %v3697 = vadd.f32 %v3696, 1.0
  %v3698 = vrcp.pop %v3697
  %v3699 = vmul.f32 %v3697, %v3698
  %v3700 = vsub.f32 1.0, %v3699
  %v3701 = vmul.f32 %v3698, %v3700
  %v3702 = vadd.f32 %v3698, %v3701
  %vm3703 = vweird.f32 %v3697
  %vm3704 = vweird.f32 %v3698
  %vm3705 = vmor %vm3703, %vm3704
  %v3706 = vsel %vm3705, %v3698, %v3702
  %v3707 = vand.u32 2147483647, %v3697
  %vm3708 = vcmp.eq.f32.partialorder %v3707, 8.507059e+37
  %v3709 = vand.u32 %v3697, 2147483648
  %v3710 = vor.u32 1.1754944e-38, %v3709
  %v3711 = vsel %vm3708, %v3710, %v3706
  %v3712 = vmul.f32 1.0, %v3711
  %3713 = vmatpush.bf16.msra.mxu0 %v1221
  %3714 = vmatpush.bf16.msra.mxu0 %v1220
  %3715 = vmatpush.bf16.msra.mxu0 %v1219
  %3716 = vmatpush.bf16.msra.mxu0 %v1218
  %3717 = vmatpush.bf16.msra.mxu0 %v1217
  %3718 = vmatpush.bf16.msra.mxu0 %v1216
  %3719 = vmatpush.bf16.msra.mxu0 %v1215
  %3720 = vmatpush.bf16.msra.mxu0 %v1214
  %3721 = vmatmul.bf16.gmra.mxu0 %v3617
  %v3722 = vpop.f32.mrf.mxu0
  %v3723 = vadd.f32 0.0, %v3722
  %v3724 = vpop.f32.mrf.mxu0
  %3725 = vdwg.mxu0
  %v3726 = vadd.f32 %v1244, %v3723
  %3727 = vmatpush.bf16.msra.mxu0 %v1303
  %3728 = vmatpush.bf16.msra.mxu0 %v1302
  %3729 = vmatpush.bf16.msra.mxu0 %v1301
  %3730 = vmatpush.bf16.msra.mxu0 %v1300
  %3731 = vmatpush.bf16.msra.mxu0 %v1299
  %3732 = vmatpush.bf16.msra.mxu0 %v1298
  %3733 = vmatpush.bf16.msra.mxu0 %v1297
  %3734 = vmatpush.bf16.msra.mxu0 %v1296
  %3735 = vmatmul.bf16.gmra.mxu0 %v3618
  %v3736 = vpop.f32.mrf.mxu0
  %v3737 = vadd.f32 0.0, %v3736
  %v3738 = vpop.f32.mrf.mxu0
  %3739 = vdwg.mxu0
  %v3740 = vadd.f32 %v3726, %v3737
  %v3741 = vtanh.pop %v3740
  %3742 = vmatpush.bf16.msra.mxu0 %v1385
  %3743 = vmatpush.bf16.msra.mxu0 %v1384
  %3744 = vmatpush.bf16.msra.mxu0 %v1383
  %3745 = vmatpush.bf16.msra.mxu0 %v1382
  %3746 = vmatpush.bf16.msra.mxu0 %v1381
  %3747 = vmatpush.bf16.msra.mxu0 %v1380
  %3748 = vmatpush.bf16.msra.mxu0 %v1379
  %3749 = vmatpush.bf16.msra.mxu0 %v1378
  %3750 = vmatmul.bf16.gmra.mxu0 %v3617
  %v3751 = vpop.f32.mrf.mxu0
  %v3752 = vadd.f32 0.0, %v3751
  %v3753 = vpop.f32.mrf.mxu0
  %3754 = vdwg.mxu0
  %v3755 = vadd.f32 %v1408, %v3752
  %3756 = vmatpush.bf16.msra.mxu0 %v1467
  %3757 = vmatpush.bf16.msra.mxu0 %v1466
  %3758 = vmatpush.bf16.msra.mxu0 %v1465
  %3759 = vmatpush.bf16.msra.mxu0 %v1464
  %3760 = vmatpush.bf16.msra.mxu0 %v1463
  %3761 = vmatpush.bf16.msra.mxu0 %v1462
  %3762 = vmatpush.bf16.msra.mxu0 %v1461
  %3763 = vmatpush.bf16.msra.mxu0 %v1460
  %3764 = vmatmul.bf16.gmra.mxu0 %v3618
  %v3765 = vpop.f32.mrf.mxu0
  %v3766 = vadd.f32 0.0, %v3765
  %v3767 = vpop.f32.mrf.mxu0
  %3768 = vdwg.mxu0
  %v3769 = vadd.f32 %v3755, %v3766
  %v3770 = vxor.u32 %v3769, 2147483648
  %v3771 = vmul.f32 %v3770, 1.442695
  %v3772 = vpow.pop %v3771
  %v3773 = vadd.f32 %v3772, 1.0
  %v3774 = vrcp.pop %v3773
  %v3775 = vmul.f32 %v3773, %v3774
  %v3776 = vsub.f32 1.0, %v3775
  %v3777 = vmul.f32 %v3774, %v3776
  %v3778 = vadd.f32 %v3774, %v3777
  %vm3779 = vweird.f32 %v3773
  %vm3780 = vweird.f32 %v3774
  %vm3781 = vmor %vm3779, %vm3780
  %v3782 = vsel %vm3781, %v3774, %v3778
  %v3783 = vand.u32 2147483647, %v3773
  %vm3784 = vcmp.eq.f32.partialorder %v3783, 8.507059e+37
  %v3785 = vand.u32 %v3773, 2147483648
  %v3786 = vor.u32 1.1754944e-38, %v3785
  %v3787 = vsel %vm3784, %v3786, %v3782
  %v3788 = vmul.f32 1.0, %v3787
  %v3789 = vmul.f32 %v3712, %v3423
  %v3790 = vmul.f32 %v3665, %v3741
  %v3791 = vadd.f32 %v3789, %v3790
  %v3792 = vtanh.pop %v3791
  %v3793 = vmul.f32 %v3788, %v3792
  %v3794 = vstv %s3615
  %vm3795 = vcmp.gt.s32.totalorder %v64, %v3794
  %v3796 = vsel %vm3795, 1, 0
  %3797 = vset.pattern.permute.xlu0 0
  %3798 = vperm.xlu0 %3797, %v3796
  %v3799 = vpop.permute.xlu0 %3798
  %vm3800 = vcmp.eq.s32.totalorder %v3799, 1
  %v3801 = vsel %vm3800, %v3793, -3e+38
  %v3802 = vsel %vm3800, %v3793, %v3422
  %v3803 = vsel %vm3800, %v3791, %v3423
  %v3804 = vmax.f32 %v3424, %v3801
  %s3805 = sadd.s32 %s72, 7
  %s3806 = scalar_lea.vmem %s0, 28
  %v3807 = vld [vmem:[%s3806] sm:$0xf]
  %v3808 = vpack.c.bf16 %v3612, %v3612
  %3809 = vmatpush.bf16.msra.mxu0 %v131
  %3810 = vmatpush.bf16.msra.mxu0 %v130
  %3811 = vmatpush.bf16.msra.mxu0 %v129
  %3812 = vmatpush.bf16.msra.mxu0 %v128
  %3813 = vmatpush.bf16.msra.mxu0 %v127
  %3814 = vmatpush.bf16.msra.mxu0 %v126
  %3815 = vmatpush.bf16.msra.mxu0 %v125
  %3816 = vmatpush.bf16.msra.mxu0 %v124
  %3817 = vmatmul.bf16.gmra.mxu0 %v3807
  %v3818 = vpop.f32.mrf.mxu0
  %v3819 = vadd.f32 0.0, %v3818
  %v3820 = vpop.f32.mrf.mxu0
  %3821 = vdwg.mxu0
  %v3822 = vadd.f32 %v154, %v3819
  %3823 = vmatpush.bf16.msra.mxu0 %v212
  %3824 = vmatpush.bf16.msra.mxu0 %v211
  %3825 = vmatpush.bf16.msra.mxu0 %v210
  %3826 = vmatpush.bf16.msra.mxu0 %v209
  %3827 = vmatpush.bf16.msra.mxu0 %v208
  %3828 = vmatpush.bf16.msra.mxu0 %v207
  %3829 = vmatpush.bf16.msra.mxu0 %v206
  %3830 = vmatpush.bf16.msra.mxu0 %v205
  %3831 = vmatmul.bf16.gmra.mxu0 %v3808
  %v3832 = vpop.f32.mrf.mxu0
  %v3833 = vadd.f32 0.0, %v3832
  %v3834 = vpop.f32.mrf.mxu0
  %3835 = vdwg.mxu0
  %v3836 = vadd.f32 %v3822, %v3833
  %v3837 = vxor.u32 %v3836, 2147483648
  %v3838 = vmul.f32 %v3837, 1.442695
  %v3839 = vpow.pop %v3838
  %v3840 = vadd.f32 %v3839, 1.0
  %v3841 = vrcp.pop %v3840
  %v3842 = vmul.f32 %v3840, %v3841
  %v3843 = vsub.f32 1.0, %v3842
  %v3844 = vmul.f32 %v3841, %v3843
  %v3845 = vadd.f32 %v3841, %v3844
  %vm3846 = vweird.f32 %v3840
  %vm3847 = vweird.f32 %v3841
  %vm3848 = vmor %vm3846, %vm3847
  %v3849 = vsel %vm3848, %v3841, %v3845
  %v3850 = vand.u32 2147483647, %v3840
  %vm3851 = vcmp.eq.f32.partialorder %v3850, 8.507059e+37
  %v3852 = vand.u32 %v3840, 2147483648
  %v3853 = vor.u32 1.1754944e-38, %v3852
  %v3854 = vsel %vm3851, %v3853, %v3849
  %v3855 = vmul.f32 1.0, %v3854
  %3856 = vmatpush.bf16.msra.mxu0 %v312
  %3857 = vmatpush.bf16.msra.mxu0 %v311
  %3858 = vmatpush.bf16.msra.mxu0 %v310
  %3859 = vmatpush.bf16.msra.mxu0 %v309
  %3860 = vmatpush.bf16.msra.mxu0 %v308
  %3861 = vmatpush.bf16.msra.mxu0 %v307
  %3862 = vmatpush.bf16.msra.mxu0 %v306
  %3863 = vmatpush.bf16.msra.mxu0 %v305
  %3864 = vmatmul.bf16.gmra.mxu0 %v3807
  %v3865 = vpop.f32.mrf.mxu0
  %v3866 = vadd.f32 0.0, %v3865
  %v3867 = vpop.f32.mrf.mxu0
  %3868 = vdwg.mxu0
  %v3869 = vadd.f32 %v335, %v3866
  %3870 = vmatpush.bf16.msra.mxu0 %v394
  %3871 = vmatpush.bf16.msra.mxu0 %v393
  %3872 = vmatpush.bf16.msra.mxu0 %v392
  %3873 = vmatpush.bf16.msra.mxu0 %v391
  %3874 = vmatpush.bf16.msra.mxu0 %v390
  %3875 = vmatpush.bf16.msra.mxu0 %v389
  %3876 = vmatpush.bf16.msra.mxu0 %v388
  %3877 = vmatpush.bf16.msra.mxu0 %v387
  %3878 = vmatmul.bf16.gmra.mxu0 %v3808
  %v3879 = vpop.f32.mrf.mxu0
  %v3880 = vadd.f32 0.0, %v3879
  %v3881 = vpop.f32.mrf.mxu0
  %3882 = vdwg.mxu0
  %v3883 = vadd.f32 %v3869, %v3880
  %v3884 = vxor.u32 %v3883, 2147483648
  %v3885 = vmul.f32 %v3884, 1.442695
  %v3886 = vpow.pop %v3885
  %v3887 = vadd.f32 %v3886, 1.0
  %v3888 = vrcp.pop %v3887
  %v3889 = vmul.f32 %v3887, %v3888
  %v3890 = vsub.f32 1.0, %v3889
  %v3891 = vmul.f32 %v3888, %v3890
  %v3892 = vadd.f32 %v3888, %v3891
  %vm3893 = vweird.f32 %v3887
  %vm3894 = vweird.f32 %v3888
  %vm3895 = vmor %vm3893, %vm3894
  %v3896 = vsel %vm3895, %v3888, %v3892
  %v3897 = vand.u32 2147483647, %v3887
  %vm3898 = vcmp.eq.f32.partialorder %v3897, 8.507059e+37
  %v3899 = vand.u32 %v3887, 2147483648
  %v3900 = vor.u32 1.1754944e-38, %v3899
  %v3901 = vsel %vm3898, %v3900, %v3896
  %v3902 = vmul.f32 1.0, %v3901
  %3903 = vmatpush.bf16.msra.mxu0 %v494
  %3904 = vmatpush.bf16.msra.mxu0 %v493
  %3905 = vmatpush.bf16.msra.mxu0 %v492
  %3906 = vmatpush.bf16.msra.mxu0 %v491
  %3907 = vmatpush.bf16.msra.mxu0 %v490
  %3908 = vmatpush.bf16.msra.mxu0 %v489
  %3909 = vmatpush.bf16.msra.mxu0 %v488
  %3910 = vmatpush.bf16.msra.mxu0 %v487
  %3911 = vmatmul.bf16.gmra.mxu0 %v3807
  %v3912 = vpop.f32.mrf.mxu0
  %v3913 = vadd.f32 0.0, %v3912
  %v3914 = vpop.f32.mrf.mxu0
  %3915 = vdwg.mxu0
  %v3916 = vadd.f32 %v517, %v3913
  %3917 = vmatpush.bf16.msra.mxu0 %v576
  %3918 = vmatpush.bf16.msra.mxu0 %v575
  %3919 = vmatpush.bf16.msra.mxu0 %v574
  %3920 = vmatpush.bf16.msra.mxu0 %v573
  %3921 = vmatpush.bf16.msra.mxu0 %v572
  %3922 = vmatpush.bf16.msra.mxu0 %v571
  %3923 = vmatpush.bf16.msra.mxu0 %v570
  %3924 = vmatpush.bf16.msra.mxu0 %v569
  %3925 = vmatmul.bf16.gmra.mxu0 %v3808
  %v3926 = vpop.f32.mrf.mxu0
  %v3927 = vadd.f32 0.0, %v3926
  %v3928 = vpop.f32.mrf.mxu0
  %3929 = vdwg.mxu0
  %v3930 = vadd.f32 %v3916, %v3927
  %v3931 = vtanh.pop %v3930
  %3932 = vmatpush.bf16.msra.mxu0 %v658
  %3933 = vmatpush.bf16.msra.mxu0 %v657
  %3934 = vmatpush.bf16.msra.mxu0 %v656
  %3935 = vmatpush.bf16.msra.mxu0 %v655
  %3936 = vmatpush.bf16.msra.mxu0 %v654
  %3937 = vmatpush.bf16.msra.mxu0 %v653
  %3938 = vmatpush.bf16.msra.mxu0 %v652
  %3939 = vmatpush.bf16.msra.mxu0 %v651
  %3940 = vmatmul.bf16.gmra.mxu0 %v3807
  %v3941 = vpop.f32.mrf.mxu0
  %v3942 = vadd.f32 0.0, %v3941
  %v3943 = vpop.f32.mrf.mxu0
  %3944 = vdwg.mxu0
  %v3945 = vadd.f32 %v681, %v3942
  %3946 = vmatpush.bf16.msra.mxu0 %v740
  %3947 = vmatpush.bf16.msra.mxu0 %v739
  %3948 = vmatpush.bf16.msra.mxu0 %v738
  %3949 = vmatpush.bf16.msra.mxu0 %v737
  %3950 = vmatpush.bf16.msra.mxu0 %v736
  %3951 = vmatpush.bf16.msra.mxu0 %v735
  %3952 = vmatpush.bf16.msra.mxu0 %v734
  %3953 = vmatpush.bf16.msra.mxu0 %v733
  %3954 = vmatmul.bf16.gmra.mxu0 %v3808
  %v3955 = vpop.f32.mrf.mxu0
  %v3956 = vadd.f32 0.0, %v3955
  %v3957 = vpop.f32.mrf.mxu0
  %3958 = vdwg.mxu0
  %v3959 = vadd.f32 %v3945, %v3956
  %v3960 = vxor.u32 %v3959, 2147483648
  %v3961 = vmul.f32 %v3960, 1.442695
  %v3962 = vpow.pop %v3961
  %v3963 = vadd.f32 %v3962, 1.0
  %v3964 = vrcp.pop %v3963
  %v3965 = vmul.f32 %v3963, %v3964
  %v3966 = vsub.f32 1.0, %v3965
  %v3967 = vmul.f32 %v3964, %v3966
  %v3968 = vadd.f32 %v3964, %v3967
  %vm3969 = vweird.f32 %v3963
  %vm3970 = vweird.f32 %v3964
  %vm3971 = vmor %vm3969, %vm3970
  %v3972 = vsel %vm3971, %v3964, %v3968
  %v3973 = vand.u32 2147483647, %v3963
  %vm3974 = vcmp.eq.f32.partialorder %v3973, 8.507059e+37
  %v3975 = vand.u32 %v3963, 2147483648
  %v3976 = vor.u32 1.1754944e-38, %v3975
  %v3977 = vsel %vm3974, %v3976, %v3972
  %v3978 = vmul.f32 1.0, %v3977
  %v3979 = vmul.f32 %v3902, %v3613
  %v3980 = vmul.f32 %v3855, %v3931
  %v3981 = vadd.f32 %v3979, %v3980
  %v3982 = vtanh.pop %v3981
  %v3983 = vmul.f32 %v3978, %v3982
  %v3984 = vstv %s3805
  %vm3985 = vcmp.gt.s32.totalorder %v64, %v3984
  %v3986 = vsel %vm3985, 1, 0
  %3987 = vset.pattern.permute.xlu0 0
  %3988 = vperm.xlu0 %3987, %v3986
  %v3989 = vpop.permute.xlu0 %3988
  %vm3990 = vcmp.eq.s32.totalorder %v3989, 1
  %v3991 = vsel %vm3990, %v3983, -3e+38
  %v3992 = vsel %vm3990, %v3983, %v3612
  %v3993 = vsel %vm3990, %v3981, %v3613
  %v3994 = vmax.f32 %v3614, %v3991
  %s3995 = ssub.s32 0, %s72
  %v3996 = vld [vmem:[%s51] sm:$0xf]
  %v3997 = vpack.c.bf16 %v3802, %v3802
  %3998 = vmatpush.bf16.msra.mxu0 %v858
  %3999 = vmatpush.bf16.msra.mxu0 %v857
  %4000 = vmatpush.bf16.msra.mxu0 %v856
  %4001 = vmatpush.bf16.msra.mxu0 %v855
  %4002 = vmatpush.bf16.msra.mxu0 %v854
  %4003 = vmatpush.bf16.msra.mxu0 %v853
  %4004 = vmatpush.bf16.msra.mxu0 %v852
  %4005 = vmatpush.bf16.msra.mxu0 %v851
  %4006 = vmatmul.bf16.gmra.mxu0 %v3996
  %v4007 = vpop.f32.mrf.mxu0
  %v4008 = vadd.f32 0.0, %v4007
  %v4009 = vpop.f32.mrf.mxu0
  %4010 = vdwg.mxu0
  %v4011 = vadd.f32 %v881, %v4008
  %4012 = vmatpush.bf16.msra.mxu0 %v939
  %4013 = vmatpush.bf16.msra.mxu0 %v938
  %4014 = vmatpush.bf16.msra.mxu0 %v937
  %4015 = vmatpush.bf16.msra.mxu0 %v936
  %4016 = vmatpush.bf16.msra.mxu0 %v935
  %4017 = vmatpush.bf16.msra.mxu0 %v934
  %4018 = vmatpush.bf16.msra.mxu0 %v933
  %4019 = vmatpush.bf16.msra.mxu0 %v932
  %4020 = vmatmul.bf16.gmra.mxu0 %v3997
  %v4021 = vpop.f32.mrf.mxu0
  %v4022 = vadd.f32 0.0, %v4021
  %v4023 = vpop.f32.mrf.mxu0
  %4024 = vdwg.mxu0
  %v4025 = vadd.f32 %v4011, %v4022
  %v4026 = vxor.u32 %v4025, 2147483648
  %v4027 = vmul.f32 %v4026, 1.442695
  %v4028 = vpow.pop %v4027
  %v4029 = vadd.f32 %v4028, 1.0
  %v4030 = vrcp.pop %v4029
  %v4031 = vmul.f32 %v4029, %v4030
  %v4032 = vsub.f32 1.0, %v4031
  %v4033 = vmul.f32 %v4030, %v4032
  %v4034 = vadd.f32 %v4030, %v4033
  %vm4035 = vweird.f32 %v4029
  %vm4036 = vweird.f32 %v4030
  %vm4037 = vmor %vm4035, %vm4036
  %v4038 = vsel %vm4037, %v4030, %v4034
  %v4039 = vand.u32 2147483647, %v4029
  %vm4040 = vcmp.eq.f32.partialorder %v4039, 8.507059e+37
  %v4041 = vand.u32 %v4029, 2147483648
  %v4042 = vor.u32 1.1754944e-38, %v4041
  %v4043 = vsel %vm4040, %v4042, %v4038
  %v4044 = vmul.f32 1.0, %v4043
  %4045 = vmatpush.bf16.msra.mxu0 %v1039
  %4046 = vmatpush.bf16.msra.mxu0 %v1038
  %4047 = vmatpush.bf16.msra.mxu0 %v1037
  %4048 = vmatpush.bf16.msra.mxu0 %v1036
  %4049 = vmatpush.bf16.msra.mxu0 %v1035
  %4050 = vmatpush.bf16.msra.mxu0 %v1034
  %4051 = vmatpush.bf16.msra.mxu0 %v1033
  %4052 = vmatpush.bf16.msra.mxu0 %v1032
  %4053 = vmatmul.bf16.gmra.mxu0 %v3996
  %v4054 = vpop.f32.mrf.mxu0
  %v4055 = vadd.f32 0.0, %v4054
  %v4056 = vpop.f32.mrf.mxu0
  %4057 = vdwg.mxu0
  %v4058 = vadd.f32 %v1062, %v4055
  %4059 = vmatpush.bf16.msra.mxu0 %v1121
  %4060 = vmatpush.bf16.msra.mxu0 %v1120
  %4061 = vmatpush.bf16.msra.mxu0 %v1119
  %4062 = vmatpush.bf16.msra.mxu0 %v1118
  %4063 = vmatpush.bf16.msra.mxu0 %v1117
  %4064 = vmatpush.bf16.msra.mxu0 %v1116
  %4065 = vmatpush.bf16.msra.mxu0 %v1115
  %4066 = vmatpush.bf16.msra.mxu0 %v1114
  %4067 = vmatmul.bf16.gmra.mxu0 %v3997
  %v4068 = vpop.f32.mrf.mxu0
  %v4069 = vadd.f32 0.0, %v4068
  %v4070 = vpop.f32.mrf.mxu0
  %4071 = vdwg.mxu0
  %v4072 = vadd.f32 %v4058, %v4069
  %v4073 = vxor.u32 %v4072, 2147483648
  %v4074 = vmul.f32 %v4073, 1.442695
  %v4075 = vpow.pop %v4074
  %v4076 = vadd.f32 %v4075, 1.0
  %v4077 = vrcp.pop %v4076
  %v4078 = vmul.f32 %v4076, %v4077
  %v4079 = vsub.f32 1.0, %v4078
  %v4080 = vmul.f32 %v4077, %v4079
  %v4081 = vadd.f32 %v4077, %v4080
  %vm4082 = vweird.f32 %v4076
  %vm4083 = vweird.f32 %v4077
  %vm4084 = vmor %vm4082, %vm4083
  %v4085 = vsel %vm4084, %v4077, %v4081
  %v4086 = vand.u32 2147483647, %v4076
  %vm4087 = vcmp.eq.f32.partialorder %v4086, 8.507059e+37
  %v4088 = vand.u32 %v4076, 2147483648
  %v4089 = vor.u32 1.1754944e-38, %v4088
  %v4090 = vsel %vm4087, %v4089, %v4085
  %v4091 = vmul.f32 1.0, %v4090
  %4092 = vmatpush.bf16.msra.mxu0 %v1221
  %4093 = vmatpush.bf16.msra.mxu0 %v1220
  %4094 = vmatpush.bf16.msra.mxu0 %v1219
  %4095 = vmatpush.bf16.msra.mxu0 %v1218
  %4096 = vmatpush.bf16.msra.mxu0 %v1217
  %4097 = vmatpush.bf16.msra.mxu0 %v1216
  %4098 = vmatpush.bf16.msra.mxu0 %v1215
  %4099 = vmatpush.bf16.msra.mxu0 %v1214
  %4100 = vmatmul.bf16.gmra.mxu0 %v3996
  %v4101 = vpop.f32.mrf.mxu0
  %v4102 = vadd.f32 0.0, %v4101
  %v4103 = vpop.f32.mrf.mxu0
  %4104 = vdwg.mxu0
  %v4105 = vadd.f32 %v1244, %v4102
  %4106 = vmatpush.bf16.msra.mxu0 %v1303
  %4107 = vmatpush.bf16.msra.mxu0 %v1302
  %4108 = vmatpush.bf16.msra.mxu0 %v1301
  %4109 = vmatpush.bf16.msra.mxu0 %v1300
  %4110 = vmatpush.bf16.msra.mxu0 %v1299
  %4111 = vmatpush.bf16.msra.mxu0 %v1298
  %4112 = vmatpush.bf16.msra.mxu0 %v1297
  %4113 = vmatpush.bf16.msra.mxu0 %v1296
  %4114 = vmatmul.bf16.gmra.mxu0 %v3997
  %v4115 = vpop.f32.mrf.mxu0
  %v4116 = vadd.f32 0.0, %v4115
  %v4117 = vpop.f32.mrf.mxu0
  %4118 = vdwg.mxu0
  %v4119 = vadd.f32 %v4105, %v4116
  %v4120 = vtanh.pop %v4119
  %4121 = vmatpush.bf16.msra.mxu0 %v1385
  %4122 = vmatpush.bf16.msra.mxu0 %v1384
  %4123 = vmatpush.bf16.msra.mxu0 %v1383
  %4124 = vmatpush.bf16.msra.mxu0 %v1382
  %4125 = vmatpush.bf16.msra.mxu0 %v1381
  %4126 = vmatpush.bf16.msra.mxu0 %v1380
  %4127 = vmatpush.bf16.msra.mxu0 %v1379
  %4128 = vmatpush.bf16.msra.mxu0 %v1378
  %4129 = vmatmul.bf16.gmra.mxu0 %v3996
  %v4130 = vpop.f32.mrf.mxu0
  %v4131 = vadd.f32 0.0, %v4130
  %v4132 = vpop.f32.mrf.mxu0
  %4133 = vdwg.mxu0
  %v4134 = vadd.f32 %v1408, %v4131
  %4135 = vmatpush.bf16.msra.mxu0 %v1467
  %4136 = vmatpush.bf16.msra.mxu0 %v1466
  %4137 = vmatpush.bf16.msra.mxu0 %v1465
  %4138 = vmatpush.bf16.msra.mxu0 %v1464
  %4139 = vmatpush.bf16.msra.mxu0 %v1463
  %4140 = vmatpush.bf16.msra.mxu0 %v1462
  %4141 = vmatpush.bf16.msra.mxu0 %v1461
  %4142 = vmatpush.bf16.msra.mxu0 %v1460
  %4143 = vmatmul.bf16.gmra.mxu0 %v3997
  %v4144 = vpop.f32.mrf.mxu0
  %v4145 = vadd.f32 0.0, %v4144
  %v4146 = vpop.f32.mrf.mxu0
  %4147 = vdwg.mxu0
  %v4148 = vadd.f32 %v4134, %v4145
  %v4149 = vxor.u32 %v4148, 2147483648
  %v4150 = vmul.f32 %v4149, 1.442695
  %v4151 = vpow.pop %v4150
  %v4152 = vadd.f32 %v4151, 1.0
  %v4153 = vrcp.pop %v4152
  %v4154 = vmul.f32 %v4152, %v4153
  %v4155 = vsub.f32 1.0, %v4154
  %v4156 = vmul.f32 %v4153, %v4155
  %v4157 = vadd.f32 %v4153, %v4156
  %vm4158 = vweird.f32 %v4152
  %vm4159 = vweird.f32 %v4153
  %vm4160 = vmor %vm4158, %vm4159
  %v4161 = vsel %vm4160, %v4153, %v4157
  %v4162 = vand.u32 2147483647, %v4152
  %vm4163 = vcmp.eq.f32.partialorder %v4162, 8.507059e+37
  %v4164 = vand.u32 %v4152, 2147483648
  %v4165 = vor.u32 1.1754944e-38, %v4164
  %v4166 = vsel %vm4163, %v4165, %v4161
  %v4167 = vmul.f32 1.0, %v4166
  %v4168 = vmul.f32 %v4091, %v3803
  %v4169 = vmul.f32 %v4044, %v4120
  %v4170 = vadd.f32 %v4168, %v4169
  %v4171 = vtanh.pop %v4170
  %v4172 = vmul.f32 %v4167, %v4171
  %v4173 = vstv %s3995
  %vm4174 = vcmp.gt.s32.totalorder %v64, %v4173
  %v4175 = vsel %vm4174, 1, 0
  %4176 = vset.pattern.permute.xlu0 0
  %4177 = vperm.xlu0 %4176, %v4175
  %v4178 = vpop.permute.xlu0 %4177
  %vm4179 = vcmp.eq.s32.totalorder %v4178, 1
  %v4180 = vsel %vm4179, %v4172, -3e+38
  %v4181 = vsel %vm4179, %v4172, %v3802
  %v4182 = vsel %vm4179, %v4170, %v3803
  %v4183 = vmax.f32 %v3804, %v4180
  %4184 = vst [vmem:[#allocation2] sm:$0xff] %v3992
  %4185 = vst [vmem:[#allocation3] sm:$0xff] %v3993
  %4186 = vst [vmem:[#allocation4] sm:$0xff] %v4181
  %4187 = vst [vmem:[#allocation5] sm:$0xff] %v4182
  %4188 = vst [vmem:[%s9] sm:$0xff] %v3994
  %4189 = vst [vmem:[%s70] sm:$0xff] %v4183
  // Predicated region
  $region42: #{fast_maxout_forward.2} parent=0 // pred_check
    _
  $region43: #{fast_maxout_forward.2} parent=0 // pred_check_branch
    %4191 = sbr.rel (0) target = $region45
  $region44: #{fast_maxout_forward.2} parent=0 // pred_region
    _
  $region45: #{fast_maxout_forward.2} parent=0 // pred_fallthru
    _
  // Predicated region
  $region46: #{fast_maxout_forward.2} parent=0 // pred_check
    _
  $region47: #{fast_maxout_forward.2} parent=0 // pred_check_branch
    %4193 = sbr.rel (0) target = $region49
  $region48: #{fast_maxout_forward.2} parent=0 // pred_region
    _
  $region49: #{fast_maxout_forward.2} parent=0 // pred_fallthru
    _

</llo_original>
